<compile_context>
chip_gen: v5e
topology: v5e:2x2
jax: 0.10.0
libtpu: 0.0.40
codegen_flags: <defaults>
</compile_context>

<pallas_src>
import functools

import jax
import jax.numpy as jnp
import numpy as np
from jax.experimental import pallas as pl
from jax.experimental.pallas import tpu as pltpu

LN_EPS = 1e-5                        # nn.LayerNorm default eps
_SQRT_2_OVER_PI = 0.7978845608028654


# ----------------------------- in-kernel helpers -----------------------------
def _layernorm(v, g, b):
    mu = jnp.mean(v, axis=-1, keepdims=True)
    d = v - mu
    var = jnp.mean(d * d, axis=-1, keepdims=True)
    return d * jax.lax.rsqrt(var + LN_EPS) * g + b


def _gelu_tanh(x):
    # tanh runs on the (otherwise idle) EUP slot instead of a long VPU
    # compare/select/polynomial erf chain.
    return 0.5 * x * (1.0 + jnp.tanh(_SQRT_2_OVER_PI * (x + 0.044715 * x * x * x)))


def _interval_mask(shape, idx_dim, blk_dim, blk_size, dtype):
    """0/1 mask: 1 iff iota[idx_dim] lies in block number iota[blk_dim] of size
    blk_size.  Built from iota + mul/compare only (no vector integer div)."""
    i = jax.lax.broadcasted_iota(jnp.int32, shape, idx_dim)
    b = jax.lax.broadcasted_iota(jnp.int32, shape, blk_dim)
    return ((i >= b * blk_size) & (i < (b + 1) * blk_size)).astype(dtype)


def _agformer_block(xf, n_batch, n_seq, num_heads, wqkv, wproj, w1, w2, vecs, b1):
    """One AGFormer block (pre-LN MHA + pre-LN MLP, both residual).

    xf   : (n_tok, C) f32 token matrix, rows ordered group-major; attention
           mixes the n_seq positions inside each of the n_batch groups.
    wqkv : (C, 3C) bf16 (attention scale pre-folded into the Q columns).
    wproj: (C, C) bf16.   w1/w2: (C, hidden)/(hidden, C) bf16.
    vecs : (6, C) f32 rows = ln1_g, ln1_b, bproj, ln2_g, ln2_b, b2.
    b1   : (1, hidden) f32.
    """
    n_tok, C = xf.shape
    H = num_heads
    hd = C // H
    M = H * n_seq

    ln1g, ln1b, bproj = vecs[0:1], vecs[1:2], vecs[2:3]
    ln2g, ln2b, b2 = vecs[3:4], vecs[4:5], vecs[5:6]

    # ----------------------------- attention branch --------------------------
    xn = _layernorm(xf, ln1g, ln1b)
    qkv = jnp.dot(xn.astype(jnp.bfloat16), wqkv,
                  preferred_element_type=jnp.float32)             # (n_tok, 3C)
    qkv = qkv.reshape(n_batch, n_seq, 3 * C)
    q = qkv[:, :, 0 * C:1 * C]
    k = qkv[:, :, 1 * C:2 * C]
    v = qkv[:, :, 2 * C:3 * C]

    # Head-selection mask (H, 1, C): row h keeps only head h's channels.
    hsel = _interval_mask((H, 1, C), 2, 0, hd, jnp.float32)

    # K / V expanded to (n_batch, M, C): row m = h*n_seq + j carries only the
    # head-h channels of position j.  All heads' scores then come out of ONE
    # full-width batched matmul instead of an unrolled per-head loop of tiny
    # (n_seq, hd) x (hd, n_seq) MXU pushes.
    kexp = (k[:, None, :, :] * hsel[None]).reshape(n_batch, M, C).astype(jnp.bfloat16)
    vexp = (v[:, None, :, :] * hsel[None]).reshape(n_batch, M, C).astype(jnp.bfloat16)

    s = jnp.einsum('bic,bmc->bim', q.astype(jnp.bfloat16), kexp,
                   preferred_element_type=jnp.float32)            # (nb, n_seq, M)
    # A per-row (all-head) max is a valid stability shift for every head.
    s = s - jnp.max(s, axis=-1, keepdims=True)
    e = jnp.exp(s).reshape(n_tok, M)

    # Per-head softmax denominator = segmented lane sum, done as two exact f32
    # 0/1 matmuls (MXU) rather than a lane->sublane reshape + reduce.
    ones_mh = _interval_mask((M, H), 0, 1, n_seq, jnp.float32)    # (M, H)
    ones_hm = _interval_mask((H, M), 1, 0, n_seq, jnp.float32)    # (H, M)
    denom = jnp.dot(jnp.dot(e, ones_mh, preferred_element_type=jnp.float32),
                    ones_hm, preferred_element_type=jnp.float32)  # (n_tok, M)
    p = (e * pl.reciprocal(denom, approx=True)).reshape(n_batch, n_seq, M)

    o = jnp.einsum('bim,bmc->bic', p.astype(jnp.bfloat16), vexp,
                   preferred_element_type=jnp.float32)            # (nb, n_seq, C)
    xf = xf + bproj + jnp.dot(o.reshape(n_tok, C).astype(jnp.bfloat16), wproj,
                              preferred_element_type=jnp.float32)

    # ------------------------------- MLP branch ------------------------------
    xn2 = _layernorm(xf, ln2g, ln2b)
    h1 = jnp.dot(xn2.astype(jnp.bfloat16), w1,
                 preferred_element_type=jnp.float32) + b1
    h1 = _gelu_tanh(h1)
    h2 = jnp.dot(h1.astype(jnp.bfloat16), w2,
                 preferred_element_type=jnp.float32) + b2
    return xf + h2


def _motion_agformer_kernel(x_ref, wqkv_ref, wproj_ref, w1_ref, w2_ref,
                            vecs_ref, b1_ref, perm_ref, o_ref, *, T, J, num_heads):
    x = x_ref[0].astype(jnp.float32)                      # (T*J, C), frame-major

    # Spatial block: attention over joints J within each frame.
    y = _agformer_block(x, T, J, num_heads,
                        wqkv_ref[0], wproj_ref[0], w1_ref[0], w2_ref[0],
                        vecs_ref[0], b1_ref[0])

    # Relayout frame-major -> joint-major with an exact 0/1 permutation matmul
    # (one MXU push; avoids transpose/einshape lowering on the critical path).
    yt = jnp.dot(perm_ref[0], y, preferred_element_type=jnp.float32)   # (J*T, C)

    # Temporal block: attention over frames T within each joint.
    z = _agformer_block(yt, J, T, num_heads,
                        wqkv_ref[1], wproj_ref[1], w1_ref[1], w2_ref[1],
                        vecs_ref[1], b1_ref[1])

    zs = jnp.dot(perm_ref[1], z, preferred_element_type=jnp.float32)   # (T*J, C)
    o_ref[0] = zs.astype(o_ref.dtype)


# --------------------------------- wrapper ------------------------------------
_VEC_ORDER = ('ln1_g', 'ln1_b', 'bproj', 'ln2_g', 'ln2_b', 'b2')


def motion_agformer_block(x, params, *, num_heads=8):
    """Fused spatial+temporal MotionAGFormer block. x: (B, T, J, C) float32."""
    B, T, J, C = x.shape
    N = T * J
    hd = C // num_heads
    scale = float(hd) ** -0.5

    def pack(p):
        # Fold 1/sqrt(head_dim) into wqkv's Q columns (free constant fold);
        # ship matmul weights in bf16 (halved DMA, MXU-native); keep LN params
        # and biases f32 and packed into one small array.
        qscale = jnp.concatenate([jnp.full((1, C), scale, jnp.float32),
                                  jnp.ones((1, 2 * C), jnp.float32)], axis=1)
        return ((p['wqkv'] * qscale).astype(jnp.bfloat16),
                p['wproj'].astype(jnp.bfloat16),
                p['w1'].astype(jnp.bfloat16),
                p['w2'].astype(jnp.bfloat16),
                jnp.concatenate([p[n] for n in _VEC_ORDER], axis=0),   # (6, C)
                p['b1'].reshape(1, -1))                                # (1, hidden)

    sp, tp = pack(params['spatial']), pack(params['temporal'])
    packed = [jnp.stack([a, b]) for a, b in zip(sp, tp)]   # spatial/temporal stacked
    wqkv_all, wproj_all, w1_all, w2_all, vecs_all, b1_all = packed

    # Exact permutation matrices: row (t*J + j) <-> row (j*T + t).
    src = np.arange(N)
    fwd = np.zeros((N, N), np.float32)
    fwd[(src % J) * T + src // J, src] = 1.0               # frame-major -> joint-major
    perms = jnp.asarray(np.stack([fwd, fwd.T]))            # (2, N, N)

    weights = [wqkv_all, wproj_all, w1_all, w2_all, vecs_all, b1_all, perms]
    x2 = x.reshape(B, N, C)

    kernel = functools.partial(_motion_agformer_kernel, T=T, J=J,
                               num_heads=num_heads)
    out = pl.pallas_call(
        kernel,
        out_shape=jax.ShapeDtypeStruct((B, N, C), x.dtype),
        grid_spec=pltpu.PrefetchScalarGridSpec(
            num_scalar_prefetch=0,
            grid=(B,),
            in_specs=([pl.BlockSpec((1, N, C), lambda b: (b, 0, 0))]
                      + [pl.BlockSpec(w.shape, lambda b: (0, 0, 0))
                         for w in weights]),
            out_specs=pl.BlockSpec((1, N, C), lambda b: (b, 0, 0))),
        compiler_params=pltpu.CompilerParams(
            dimension_semantics=("parallel",)),            # dual-TC chips shard B
    )(x2, *weights)
    return out.reshape(B, T, J, C)


# ----------------------------- parameter init --------------------------------
def init_agformer_params(key, dim, mlp_ratio=4.0):
    hidden = int(dim * mlp_ratio)
    ks = jax.random.split(key, 11)

    def n(k, shape, s=0.02):
        return (s * jax.random.normal(k, shape)).astype(jnp.float32)

    # Linear weights stored pre-transposed as (in, out): y = x @ W (+ b).
    return dict(
        ln1_g=(jnp.ones((1, dim), jnp.float32) + n(ks[0], (1, dim), 0.1)),
        ln1_b=n(ks[1], (1, dim), 0.1),
        wqkv=n(ks[2], (dim, 3 * dim)),          # qkv_bias=False
        wproj=n(ks[3], (dim, dim)),
        bproj=n(ks[4], (1, dim)),
        ln2_g=(jnp.ones((1, dim), jnp.float32) + n(ks[5], (1, dim), 0.1)),
        ln2_b=n(ks[6], (1, dim), 0.1),
        w1=n(ks[7], (dim, hidden)),
        b1=n(ks[8], (1, hidden), 0.1),
        w2=n(ks[9], (hidden, dim)),
        b2=n(ks[10], (1, dim), 0.1),
    )


# ------------------------- pure-JAX reference (checks) -----------------------
def _ln_ref(v, g, b):
    mu = v.mean(-1, keepdims=True)
    var = ((v - mu) ** 2).mean(-1, keepdims=True)
    return (v - mu) / jnp.sqrt(var + LN_EPS) * g + b


def ref_agformer(x, p, mode, num_heads):
    B, T, J, C = x.shape
    hd = C // num_heads
    scale = hd ** -0.5
    xn = _ln_ref(x, p['ln1_g'], p['ln1_b'])
    qkv = xn @ p['wqkv']
    qkv = qkv.reshape(B, T, J, 3, num_heads, hd).transpose(3, 0, 4, 1, 2, 5)
    q, k, v = qkv[0], qkv[1], qkv[2]                       # (B, H, T, J, hd)
    if mode == 'spatial':
        a = jax.nn.softmax(jnp.einsum('bhtik,bhtjk->bhtij', q, k) * scale, axis=-1)
        o = jnp.einsum('bhtij,bhtjk->bhtik', a, v)
        o = o.transpose(0, 2, 3, 1, 4).reshape(B, T, J, C)
    else:
        qt, kt, vt = (z.transpose(0, 1, 3, 2, 4) for z in (q, k, v))  # (B,H,J,T,hd)
        a = jax.nn.softmax(jnp.einsum('bhjik,bhjlk->bhjil', qt, kt) * scale, axis=-1)
        o = jnp.einsum('bhjil,bhjlk->bhjik', a, vt)
        o = o.transpose(0, 3, 2, 1, 4).reshape(B, T, J, C)
    o = o @ p['wproj'] + p['bproj'][0]
    x = x + o
    xn2 = _ln_ref(x, p['ln2_g'], p['ln2_b'])
    h = jax.nn.gelu(xn2 @ p['w1'] + p['b1'][0], approximate=False)
    h = h @ p['w2'] + p['b2'][0]
    return x + h


if __name__ == "__main__":
    B, T, J, C = 2, 8, 16, 32   # dim=32, num_heads=8 -> head_dim=4, mlp_hidden=128
    num_heads = 8

    key = jax.random.PRNGKey(0)
    kx, ks, kt = jax.random.split(key, 3)
    x = jax.random.normal(kx, (B, T, J, C), jnp.float32)
    params = {
        'spatial': init_agformer_params(ks, C),
        'temporal': init_agformer_params(kt, C),
    }

    fn = jax.jit(functools.partial(motion_agformer_block, num_heads=num_heads))
    out = jax.block_until_ready(fn(x, params))

    ref = ref_agformer(ref_agformer(x, params['spatial'], 'spatial', num_heads),
                       params['temporal'], 'temporal', num_heads)
    assert out.shape == (B, T, J, C), out.shape
    max_err = float(jnp.max(jnp.abs(out - ref)))
    assert jnp.allclose(out, ref, rtol=1e-2, atol=1e-2), f"max abs err {max_err}"

    print("KERNEL_OK")
</pallas_src>

<mosaic_0001>
module attributes {stable_mosaic.version = 11 : i64} {
  func.func @_motion_agformer_kernel(%arg0: i32, %arg1: memref<1x128x32xf32, #tpu.memory_space<vmem>>, %arg2: memref<2x32x96xbf16, #tpu.memory_space<vmem>>, %arg3: memref<2x32x32xbf16, #tpu.memory_space<vmem>>, %arg4: memref<2x32x128xbf16, #tpu.memory_space<vmem>>, %arg5: memref<2x128x32xbf16, #tpu.memory_space<vmem>>, %arg6: memref<2x6x32xf32, #tpu.memory_space<vmem>>, %arg7: memref<2x1x128xf32, #tpu.memory_space<vmem>>, %arg8: memref<2x128x128xf32, #tpu.memory_space<vmem>>, %arg9: memref<1x128x32xf32, #tpu.memory_space<vmem>>) attributes {dimension_semantics = [#tpu.dimension_semantics<parallel>], iteration_bounds = array<i64: 2>, scalar_prefetch = 0 : i64, scratch_operands = 0 : i64, tpu.core_type = #tpu.core_type<tc>, window_params = [{transform_indices = @transform_0, window_bounds = array<i64: 1, 128, 32>}, {pipeline_mode = #tpu.pipeline_mode<synchronous>, transform_indices = @transform_1, window_bounds = array<i64: 2, 32, 96>}, {pipeline_mode = #tpu.pipeline_mode<synchronous>, transform_indices = @transform_2, window_bounds = array<i64: 2, 32, 32>}, {pipeline_mode = #tpu.pipeline_mode<synchronous>, transform_indices = @transform_3, window_bounds = array<i64: 2, 32, 128>}, {pipeline_mode = #tpu.pipeline_mode<synchronous>, transform_indices = @transform_4, window_bounds = array<i64: 2, 128, 32>}, {pipeline_mode = #tpu.pipeline_mode<synchronous>, transform_indices = @transform_5, window_bounds = array<i64: 2, 6, 32>}, {pipeline_mode = #tpu.pipeline_mode<synchronous>, transform_indices = @transform_6, window_bounds = array<i64: 2, 1, 128>}, {pipeline_mode = #tpu.pipeline_mode<synchronous>, transform_indices = @transform_7, window_bounds = array<i64: 2, 128, 128>}, {transform_indices = @transform_8, window_bounds = array<i64: 1, 128, 32>}]} {
    %c0 = arith.constant 0 : index
    %c0_0 = arith.constant 0 : index
    %c0_1 = arith.constant 0 : index
    %0 = vector.load %arg1[%c0, %c0_0, %c0_1] : memref<1x128x32xf32, #tpu.memory_space<vmem>>, vector<1x128x32xf32>
    %1 = vector.shape_cast %0 : vector<1x128x32xf32> to vector<128x32xf32>
    %c0_2 = arith.constant 0 : index
    %c0_3 = arith.constant 0 : index
    %c0_4 = arith.constant 0 : index
    %2 = vector.load %arg2[%c0_2, %c0_3, %c0_4] : memref<2x32x96xbf16, #tpu.memory_space<vmem>>, vector<1x32x96xbf16>
    %3 = vector.shape_cast %2 : vector<1x32x96xbf16> to vector<32x96xbf16>
    %c0_5 = arith.constant 0 : index
    %c0_6 = arith.constant 0 : index
    %c0_7 = arith.constant 0 : index
    %4 = vector.load %arg3[%c0_5, %c0_6, %c0_7] : memref<2x32x32xbf16, #tpu.memory_space<vmem>>, vector<1x32x32xbf16>
    %5 = vector.shape_cast %4 : vector<1x32x32xbf16> to vector<32x32xbf16>
    %c0_8 = arith.constant 0 : index
    %c0_9 = arith.constant 0 : index
    %c0_10 = arith.constant 0 : index
    %6 = vector.load %arg4[%c0_8, %c0_9, %c0_10] : memref<2x32x128xbf16, #tpu.memory_space<vmem>>, vector<1x32x128xbf16>
    %7 = vector.shape_cast %6 : vector<1x32x128xbf16> to vector<32x128xbf16>
    %c0_11 = arith.constant 0 : index
    %c0_12 = arith.constant 0 : index
    %c0_13 = arith.constant 0 : index
    %8 = vector.load %arg5[%c0_11, %c0_12, %c0_13] : memref<2x128x32xbf16, #tpu.memory_space<vmem>>, vector<1x128x32xbf16>
    %9 = vector.shape_cast %8 : vector<1x128x32xbf16> to vector<128x32xbf16>
    %c0_14 = arith.constant 0 : index
    %c0_15 = arith.constant 0 : index
    %c0_16 = arith.constant 0 : index
    %10 = vector.load %arg6[%c0_14, %c0_15, %c0_16] : memref<2x6x32xf32, #tpu.memory_space<vmem>>, vector<1x6x32xf32>
    %11 = vector.shape_cast %10 : vector<1x6x32xf32> to vector<6x32xf32>
    %c0_17 = arith.constant 0 : index
    %c0_18 = arith.constant 0 : index
    %c0_19 = arith.constant 0 : index
    %12 = vector.load %arg7[%c0_17, %c0_18, %c0_19] : memref<2x1x128xf32, #tpu.memory_space<vmem>>, vector<1x1x128xf32>
    %13 = vector.shape_cast %12 : vector<1x1x128xf32> to vector<1x128xf32>
    %14 = vector.extract_strided_slice %11 {offsets = [0, 0], sizes = [1, 32], strides = [1, 1]} : vector<6x32xf32> to vector<1x32xf32>
    %15 = vector.extract_strided_slice %11 {offsets = [1, 0], sizes = [1, 32], strides = [1, 1]} : vector<6x32xf32> to vector<1x32xf32>
    %16 = vector.extract_strided_slice %11 {offsets = [2, 0], sizes = [1, 32], strides = [1, 1]} : vector<6x32xf32> to vector<1x32xf32>
    %17 = vector.extract_strided_slice %11 {offsets = [3, 0], sizes = [1, 32], strides = [1, 1]} : vector<6x32xf32> to vector<1x32xf32>
    %18 = vector.extract_strided_slice %11 {offsets = [4, 0], sizes = [1, 32], strides = [1, 1]} : vector<6x32xf32> to vector<1x32xf32>
    %19 = vector.extract_strided_slice %11 {offsets = [5, 0], sizes = [1, 32], strides = [1, 1]} : vector<6x32xf32> to vector<1x32xf32>
    %cst = arith.constant dense<0.000000e+00> : vector<128xf32>
    %20 = vector.multi_reduction <add>, %1, %cst [1] : vector<128x32xf32> to vector<128xf32>
    %21 = vector.shape_cast %20 : vector<128xf32> to vector<128x1xf32>
    %cst_20 = arith.constant 3.200000e+01 : f32
    %22 = vector.broadcast %cst_20 : f32 to vector<128x1xf32>
    %23 = arith.divf %21, %22 : vector<128x1xf32>
    %24 = vector.broadcast %23 : vector<128x1xf32> to vector<128x32xf32>
    %25 = arith.subf %1, %24 : vector<128x32xf32>
    %26 = arith.mulf %25, %25 : vector<128x32xf32>
    %cst_21 = arith.constant dense<0.000000e+00> : vector<128xf32>
    %27 = vector.multi_reduction <add>, %26, %cst_21 [1] : vector<128x32xf32> to vector<128xf32>
    %28 = vector.shape_cast %27 : vector<128xf32> to vector<128x1xf32>
    %cst_22 = arith.constant 3.200000e+01 : f32
    %29 = vector.broadcast %cst_22 : f32 to vector<128x1xf32>
    %30 = arith.divf %28, %29 : vector<128x1xf32>
    %cst_23 = arith.constant 9.99999974E-6 : f32
    %31 = vector.broadcast %cst_23 : f32 to vector<128x1xf32>
    %32 = arith.addf %30, %31 : vector<128x1xf32>
    %33 = math.rsqrt %32 : vector<128x1xf32>
    %34 = vector.broadcast %33 : vector<128x1xf32> to vector<128x32xf32>
    %35 = arith.mulf %25, %34 : vector<128x32xf32>
    %36 = vector.broadcast %14 : vector<1x32xf32> to vector<128x32xf32>
    %37 = arith.mulf %35, %36 : vector<128x32xf32>
    %38 = vector.broadcast %15 : vector<1x32xf32> to vector<128x32xf32>
    %39 = arith.addf %37, %38 : vector<128x32xf32>
    %40 = arith.truncf %39 : vector<128x32xf32> to vector<128x32xbf16>
    %cst_24 = arith.constant dense<0.000000e+00> : vector<128x96xf32>
    %41 = tpu.matmul %40, %3, %cst_24 {dimension_numbers = #tpu.dot_dimension_numbers<[1], [0], [0], [1], [0, 0, 1, 1], [], []>} : vector<128x32xbf16>, vector<32x96xbf16>, vector<128x96xf32> -> vector<128x96xf32>
    %42 = vector.shape_cast %41 : vector<128x96xf32> to vector<8x16x96xf32>
    %43 = vector.extract_strided_slice %42 {offsets = [0, 0, 0], sizes = [8, 16, 32], strides = [1, 1, 1]} : vector<8x16x96xf32> to vector<8x16x32xf32>
    %44 = vector.extract_strided_slice %42 {offsets = [0, 0, 32], sizes = [8, 16, 32], strides = [1, 1, 1]} : vector<8x16x96xf32> to vector<8x16x32xf32>
    %45 = vector.extract_strided_slice %42 {offsets = [0, 0, 64], sizes = [8, 16, 32], strides = [1, 1, 1]} : vector<8x16x96xf32> to vector<8x16x32xf32>
    %46 = tpu.iota {dimensions = array<i32: 2>} : vector<8x1x32xi32>
    %47 = tpu.iota {dimensions = array<i32: 0>} : vector<8x1x32xi32>
    %c4_i32 = arith.constant 4 : i32
    %48 = vector.broadcast %c4_i32 : i32 to vector<8x1x32xi32>
    %49 = arith.muli %47, %48 : vector<8x1x32xi32>
    %50 = arith.cmpi sge, %46, %49 : vector<8x1x32xi32>
    %c1_i32 = arith.constant 1 : i32
    %51 = vector.broadcast %c1_i32 : i32 to vector<8x1x32xi32>
    %52 = arith.addi %47, %51 : vector<8x1x32xi32>
    %c4_i32_25 = arith.constant 4 : i32
    %53 = vector.broadcast %c4_i32_25 : i32 to vector<8x1x32xi32>
    %54 = arith.muli %52, %53 : vector<8x1x32xi32>
    %55 = arith.cmpi slt, %46, %54 : vector<8x1x32xi32>
    %56 = arith.andi %50, %55 : vector<8x1x32xi1>
    %57 = arith.extui %56 : vector<8x1x32xi1> to vector<8x1x32xi32>
    %58 = arith.sitofp %57 : vector<8x1x32xi32> to vector<8x1x32xf32>
    %59 = vector.shape_cast %44 : vector<8x16x32xf32> to vector<8x1x16x32xf32>
    %60 = vector.shape_cast %58 : vector<8x1x32xf32> to vector<1x8x1x32xf32>
    %61 = vector.broadcast %59 : vector<8x1x16x32xf32> to vector<8x8x16x32xf32>
    %62 = vector.broadcast %60 : vector<1x8x1x32xf32> to vector<8x8x16x32xf32>
    %63 = arith.mulf %61, %62 : vector<8x8x16x32xf32>
    %64 = vector.shape_cast %63 : vector<8x8x16x32xf32> to vector<8x128x32xf32>
    %65 = arith.truncf %64 : vector<8x128x32xf32> to vector<8x128x32xbf16>
    %66 = vector.shape_cast %45 : vector<8x16x32xf32> to vector<8x1x16x32xf32>
    %67 = vector.shape_cast %58 : vector<8x1x32xf32> to vector<1x8x1x32xf32>
    %68 = vector.broadcast %66 : vector<8x1x16x32xf32> to vector<8x8x16x32xf32>
    %69 = vector.broadcast %67 : vector<1x8x1x32xf32> to vector<8x8x16x32xf32>
    %70 = arith.mulf %68, %69 : vector<8x8x16x32xf32>
    %71 = vector.shape_cast %70 : vector<8x8x16x32xf32> to vector<8x128x32xf32>
    %72 = arith.truncf %71 : vector<8x128x32xf32> to vector<8x128x32xbf16>
    %73 = arith.truncf %43 : vector<8x16x32xf32> to vector<8x16x32xbf16>
    "tpu.trace_start"() <{level = 10 : i32, message = "bic,bmc->bim"}> : () -> ()
    %cst_26 = arith.constant dense<0.000000e+00> : vector<8x16x128xf32>
    %74 = tpu.matmul %73, %65, %cst_26 {dimension_numbers = #tpu.dot_dimension_numbers<[2], [2], [1], [1], [0, 0, 0, 1, 1, 1], [0], [0]>} : vector<8x16x32xbf16>, vector<8x128x32xbf16>, vector<8x16x128xf32> -> vector<8x16x128xf32>
    "tpu.trace_stop"() : () -> ()
    %cst_27 = arith.constant dense<0xFF800000> : vector<8x16xf32>
    %75 = vector.multi_reduction <maximumf>, %74, %cst_27 [2] : vector<8x16x128xf32> to vector<8x16xf32>
    %76 = vector.shape_cast %75 : vector<8x16xf32> to vector<8x16x1xf32>
    %77 = vector.broadcast %76 : vector<8x16x1xf32> to vector<8x16x128xf32>
    %78 = arith.subf %74, %77 : vector<8x16x128xf32>
    %79 = math.exp %78 : vector<8x16x128xf32>
    %80 = vector.shape_cast %79 : vector<8x16x128xf32> to vector<128x128xf32>
    %81 = tpu.iota {dimensions = array<i32: 0>} : vector<128x8xi32>
    %82 = tpu.iota {dimensions = array<i32: 1>} : vector<128x8xi32>
    %c16_i32 = arith.constant 16 : i32
    %83 = vector.broadcast %c16_i32 : i32 to vector<128x8xi32>
    %84 = arith.muli %82, %83 : vector<128x8xi32>
    %85 = arith.cmpi sge, %81, %84 : vector<128x8xi32>
    %c1_i32_28 = arith.constant 1 : i32
    %86 = vector.broadcast %c1_i32_28 : i32 to vector<128x8xi32>
    %87 = arith.addi %82, %86 : vector<128x8xi32>
    %c16_i32_29 = arith.constant 16 : i32
    %88 = vector.broadcast %c16_i32_29 : i32 to vector<128x8xi32>
    %89 = arith.muli %87, %88 : vector<128x8xi32>
    %90 = arith.cmpi slt, %81, %89 : vector<128x8xi32>
    %91 = arith.andi %85, %90 : vector<128x8xi1>
    %92 = arith.extui %91 : vector<128x8xi1> to vector<128x8xi32>
    %93 = arith.sitofp %92 : vector<128x8xi32> to vector<128x8xf32>
    %94 = tpu.iota {dimensions = array<i32: 1>} : vector<8x128xi32>
    %95 = tpu.iota {dimensions = array<i32: 0>} : vector<8x128xi32>
    %c16_i32_30 = arith.constant 16 : i32
    %96 = vector.broadcast %c16_i32_30 : i32 to vector<8x128xi32>
    %97 = arith.muli %95, %96 : vector<8x128xi32>
    %98 = arith.cmpi sge, %94, %97 : vector<8x128xi32>
    %c1_i32_31 = arith.constant 1 : i32
    %99 = vector.broadcast %c1_i32_31 : i32 to vector<8x128xi32>
    %100 = arith.addi %95, %99 : vector<8x128xi32>
    %c16_i32_32 = arith.constant 16 : i32
    %101 = vector.broadcast %c16_i32_32 : i32 to vector<8x128xi32>
    %102 = arith.muli %100, %101 : vector<8x128xi32>
    %103 = arith.cmpi slt, %94, %102 : vector<8x128xi32>
    %104 = arith.andi %98, %103 : vector<8x128xi1>
    %105 = arith.extui %104 : vector<8x128xi1> to vector<8x128xi32>
    %106 = arith.sitofp %105 : vector<8x128xi32> to vector<8x128xf32>
    %cst_33 = arith.constant dense<0.000000e+00> : vector<128x8xf32>
    %107 = tpu.matmul %80, %93, %cst_33 {dimension_numbers = #tpu.dot_dimension_numbers<[1], [0], [0], [1], [0, 0, 1, 1], [], []>} : vector<128x128xf32>, vector<128x8xf32>, vector<128x8xf32> -> vector<128x8xf32>
    %cst_34 = arith.constant dense<0.000000e+00> : vector<128x128xf32>
    %108 = tpu.matmul %107, %106, %cst_34 {dimension_numbers = #tpu.dot_dimension_numbers<[1], [0], [0], [1], [0, 0, 1, 1], [], []>} : vector<128x8xf32>, vector<8x128xf32>, vector<128x128xf32> -> vector<128x128xf32>
    %109 = tpu.reciprocal %108 {approx = true} : vector<128x128xf32> -> vector<128x128xf32>
    %110 = arith.mulf %80, %109 : vector<128x128xf32>
    %111 = vector.shape_cast %110 : vector<128x128xf32> to vector<8x16x128xf32>
    %112 = arith.truncf %111 : vector<8x16x128xf32> to vector<8x16x128xbf16>
    "tpu.trace_start"() <{level = 10 : i32, message = "bim,bmc->bic"}> : () -> ()
    %cst_35 = arith.constant dense<0.000000e+00> : vector<8x16x32xf32>
    %113 = tpu.matmul %112, %72, %cst_35 {dimension_numbers = #tpu.dot_dimension_numbers<[2], [1], [1], [2], [0, 0, 0, 1, 1, 2], [0], [0]>} : vector<8x16x128xbf16>, vector<8x128x32xbf16>, vector<8x16x32xf32> -> vector<8x16x32xf32>
    "tpu.trace_stop"() : () -> ()
    %114 = vector.broadcast %16 : vector<1x32xf32> to vector<128x32xf32>
    %115 = arith.addf %1, %114 : vector<128x32xf32>
    %116 = vector.shape_cast %113 : vector<8x16x32xf32> to vector<128x32xf32>
    %117 = arith.truncf %116 : vector<128x32xf32> to vector<128x32xbf16>
    %cst_36 = arith.constant dense<0.000000e+00> : vector<128x32xf32>
    %118 = tpu.matmul %117, %5, %cst_36 {dimension_numbers = #tpu.dot_dimension_numbers<[1], [0], [0], [1], [0, 0, 1, 1], [], []>} : vector<128x32xbf16>, vector<32x32xbf16>, vector<128x32xf32> -> vector<128x32xf32>
    %119 = arith.addf %115, %118 : vector<128x32xf32>
    %cst_37 = arith.constant dense<0.000000e+00> : vector<128xf32>
    %120 = vector.multi_reduction <add>, %119, %cst_37 [1] : vector<128x32xf32> to vector<128xf32>
    %121 = vector.shape_cast %120 : vector<128xf32> to vector<128x1xf32>
    %cst_38 = arith.constant 3.200000e+01 : f32
    %122 = vector.broadcast %cst_38 : f32 to vector<128x1xf32>
    %123 = arith.divf %121, %122 : vector<128x1xf32>
    %124 = vector.broadcast %123 : vector<128x1xf32> to vector<128x32xf32>
    %125 = arith.subf %119, %124 : vector<128x32xf32>
    %126 = arith.mulf %125, %125 : vector<128x32xf32>
    %cst_39 = arith.constant dense<0.000000e+00> : vector<128xf32>
    %127 = vector.multi_reduction <add>, %126, %cst_39 [1] : vector<128x32xf32> to vector<128xf32>
    %128 = vector.shape_cast %127 : vector<128xf32> to vector<128x1xf32>
    %cst_40 = arith.constant 3.200000e+01 : f32
    %129 = vector.broadcast %cst_40 : f32 to vector<128x1xf32>
    %130 = arith.divf %128, %129 : vector<128x1xf32>
    %cst_41 = arith.constant 9.99999974E-6 : f32
    %131 = vector.broadcast %cst_41 : f32 to vector<128x1xf32>
    %132 = arith.addf %130, %131 : vector<128x1xf32>
    %133 = math.rsqrt %132 : vector<128x1xf32>
    %134 = vector.broadcast %133 : vector<128x1xf32> to vector<128x32xf32>
    %135 = arith.mulf %125, %134 : vector<128x32xf32>
    %136 = vector.broadcast %17 : vector<1x32xf32> to vector<128x32xf32>
    %137 = arith.mulf %135, %136 : vector<128x32xf32>
    %138 = vector.broadcast %18 : vector<1x32xf32> to vector<128x32xf32>
    %139 = arith.addf %137, %138 : vector<128x32xf32>
    %140 = arith.truncf %139 : vector<128x32xf32> to vector<128x32xbf16>
    %cst_42 = arith.constant dense<0.000000e+00> : vector<128x128xf32>
    %141 = tpu.matmul %140, %7, %cst_42 {dimension_numbers = #tpu.dot_dimension_numbers<[1], [0], [0], [1], [0, 0, 1, 1], [], []>} : vector<128x32xbf16>, vector<32x128xbf16>, vector<128x128xf32> -> vector<128x128xf32>
    %142 = vector.broadcast %13 : vector<1x128xf32> to vector<128x128xf32>
    %143 = arith.addf %141, %142 : vector<128x128xf32>
    %cst_43 = arith.constant 5.000000e-01 : f32
    %144 = vector.broadcast %cst_43 : f32 to vector<128x128xf32>
    %145 = arith.mulf %144, %143 : vector<128x128xf32>
    %cst_44 = arith.constant 4.471500e-02 : f32
    %146 = vector.broadcast %cst_44 : f32 to vector<128x128xf32>
    %147 = arith.mulf %146, %143 : vector<128x128xf32>
    %148 = arith.mulf %147, %143 : vector<128x128xf32>
    %149 = arith.mulf %148, %143 : vector<128x128xf32>
    %150 = arith.addf %143, %149 : vector<128x128xf32>
    %cst_45 = arith.constant 0.797884583 : f32
    %151 = vector.broadcast %cst_45 : f32 to vector<128x128xf32>
    %152 = arith.mulf %151, %150 : vector<128x128xf32>
    %153 = math.tanh %152 : vector<128x128xf32>
    %cst_46 = arith.constant 1.000000e+00 : f32
    %154 = vector.broadcast %cst_46 : f32 to vector<128x128xf32>
    %155 = arith.addf %154, %153 : vector<128x128xf32>
    %156 = arith.mulf %145, %155 : vector<128x128xf32>
    %157 = arith.truncf %156 : vector<128x128xf32> to vector<128x128xbf16>
    %cst_47 = arith.constant dense<0.000000e+00> : vector<128x32xf32>
    %158 = tpu.matmul %157, %9, %cst_47 {dimension_numbers = #tpu.dot_dimension_numbers<[1], [0], [0], [1], [0, 0, 1, 1], [], []>} : vector<128x128xbf16>, vector<128x32xbf16>, vector<128x32xf32> -> vector<128x32xf32>
    %159 = vector.broadcast %19 : vector<1x32xf32> to vector<128x32xf32>
    %160 = arith.addf %158, %159 : vector<128x32xf32>
    %161 = arith.addf %119, %160 : vector<128x32xf32>
    %c0_48 = arith.constant 0 : index
    %c0_49 = arith.constant 0 : index
    %c0_50 = arith.constant 0 : index
    %162 = vector.load %arg8[%c0_48, %c0_49, %c0_50] : memref<2x128x128xf32, #tpu.memory_space<vmem>>, vector<1x128x128xf32>
    %163 = vector.shape_cast %162 : vector<1x128x128xf32> to vector<128x128xf32>
    %cst_51 = arith.constant dense<0.000000e+00> : vector<128x32xf32>
    %164 = tpu.matmul %163, %161, %cst_51 {dimension_numbers = #tpu.dot_dimension_numbers<[1], [0], [0], [1], [0, 0, 1, 1], [], []>} : vector<128x128xf32>, vector<128x32xf32>, vector<128x32xf32> -> vector<128x32xf32>
    %c1 = arith.constant 1 : index
    %c0_52 = arith.constant 0 : index
    %c0_53 = arith.constant 0 : index
    %165 = vector.load %arg2[%c1, %c0_52, %c0_53] : memref<2x32x96xbf16, #tpu.memory_space<vmem>>, vector<1x32x96xbf16>
    %166 = vector.shape_cast %165 : vector<1x32x96xbf16> to vector<32x96xbf16>
    %c1_54 = arith.constant 1 : index
    %c0_55 = arith.constant 0 : index
    %c0_56 = arith.constant 0 : index
    %167 = vector.load %arg3[%c1_54, %c0_55, %c0_56] : memref<2x32x32xbf16, #tpu.memory_space<vmem>>, vector<1x32x32xbf16>
    %168 = vector.shape_cast %167 : vector<1x32x32xbf16> to vector<32x32xbf16>
    %c1_57 = arith.constant 1 : index
    %c0_58 = arith.constant 0 : index
    %c0_59 = arith.constant 0 : index
    %169 = vector.load %arg4[%c1_57, %c0_58, %c0_59] : memref<2x32x128xbf16, #tpu.memory_space<vmem>>, vector<1x32x128xbf16>
    %170 = vector.shape_cast %169 : vector<1x32x128xbf16> to vector<32x128xbf16>
    %c1_60 = arith.constant 1 : index
    %c0_61 = arith.constant 0 : index
    %c0_62 = arith.constant 0 : index
    %171 = vector.load %arg5[%c1_60, %c0_61, %c0_62] : memref<2x128x32xbf16, #tpu.memory_space<vmem>>, vector<1x128x32xbf16>
    %172 = vector.shape_cast %171 : vector<1x128x32xbf16> to vector<128x32xbf16>
    %c1_63 = arith.constant 1 : index
    %c0_64 = arith.constant 0 : index
    %c0_65 = arith.constant 0 : index
    %173 = vector.load %arg6[%c1_63, %c0_64, %c0_65] : memref<2x6x32xf32, #tpu.memory_space<vmem>>, vector<1x6x32xf32>
    %174 = vector.shape_cast %173 : vector<1x6x32xf32> to vector<6x32xf32>
    %c1_66 = arith.constant 1 : index
    %c0_67 = arith.constant 0 : index
    %c0_68 = arith.constant 0 : index
    %175 = vector.load %arg7[%c1_66, %c0_67, %c0_68] : memref<2x1x128xf32, #tpu.memory_space<vmem>>, vector<1x1x128xf32>
    %176 = vector.shape_cast %175 : vector<1x1x128xf32> to vector<1x128xf32>
    %177 = vector.extract_strided_slice %174 {offsets = [0, 0], sizes = [1, 32], strides = [1, 1]} : vector<6x32xf32> to vector<1x32xf32>
    %178 = vector.extract_strided_slice %174 {offsets = [1, 0], sizes = [1, 32], strides = [1, 1]} : vector<6x32xf32> to vector<1x32xf32>
    %179 = vector.extract_strided_slice %174 {offsets = [2, 0], sizes = [1, 32], strides = [1, 1]} : vector<6x32xf32> to vector<1x32xf32>
    %180 = vector.extract_strided_slice %174 {offsets = [3, 0], sizes = [1, 32], strides = [1, 1]} : vector<6x32xf32> to vector<1x32xf32>
    %181 = vector.extract_strided_slice %174 {offsets = [4, 0], sizes = [1, 32], strides = [1, 1]} : vector<6x32xf32> to vector<1x32xf32>
    %182 = vector.extract_strided_slice %174 {offsets = [5, 0], sizes = [1, 32], strides = [1, 1]} : vector<6x32xf32> to vector<1x32xf32>
    %cst_69 = arith.constant dense<0.000000e+00> : vector<128xf32>
    %183 = vector.multi_reduction <add>, %164, %cst_69 [1] : vector<128x32xf32> to vector<128xf32>
    %184 = vector.shape_cast %183 : vector<128xf32> to vector<128x1xf32>
    %cst_70 = arith.constant 3.200000e+01 : f32
    %185 = vector.broadcast %cst_70 : f32 to vector<128x1xf32>
    %186 = arith.divf %184, %185 : vector<128x1xf32>
    %187 = vector.broadcast %186 : vector<128x1xf32> to vector<128x32xf32>
    %188 = arith.subf %164, %187 : vector<128x32xf32>
    %189 = arith.mulf %188, %188 : vector<128x32xf32>
    %cst_71 = arith.constant dense<0.000000e+00> : vector<128xf32>
    %190 = vector.multi_reduction <add>, %189, %cst_71 [1] : vector<128x32xf32> to vector<128xf32>
    %191 = vector.shape_cast %190 : vector<128xf32> to vector<128x1xf32>
    %cst_72 = arith.constant 3.200000e+01 : f32
    %192 = vector.broadcast %cst_72 : f32 to vector<128x1xf32>
    %193 = arith.divf %191, %192 : vector<128x1xf32>
    %cst_73 = arith.constant 9.99999974E-6 : f32
    %194 = vector.broadcast %cst_73 : f32 to vector<128x1xf32>
    %195 = arith.addf %193, %194 : vector<128x1xf32>
    %196 = math.rsqrt %195 : vector<128x1xf32>
    %197 = vector.broadcast %196 : vector<128x1xf32> to vector<128x32xf32>
    %198 = arith.mulf %188, %197 : vector<128x32xf32>
    %199 = vector.broadcast %177 : vector<1x32xf32> to vector<128x32xf32>
    %200 = arith.mulf %198, %199 : vector<128x32xf32>
    %201 = vector.broadcast %178 : vector<1x32xf32> to vector<128x32xf32>
    %202 = arith.addf %200, %201 : vector<128x32xf32>
    %203 = arith.truncf %202 : vector<128x32xf32> to vector<128x32xbf16>
    %cst_74 = arith.constant dense<0.000000e+00> : vector<128x96xf32>
    %204 = tpu.matmul %203, %166, %cst_74 {dimension_numbers = #tpu.dot_dimension_numbers<[1], [0], [0], [1], [0, 0, 1, 1], [], []>} : vector<128x32xbf16>, vector<32x96xbf16>, vector<128x96xf32> -> vector<128x96xf32>
    %205 = vector.shape_cast %204 : vector<128x96xf32> to vector<16x8x96xf32>
    %206 = vector.extract_strided_slice %205 {offsets = [0, 0, 0], sizes = [16, 8, 32], strides = [1, 1, 1]} : vector<16x8x96xf32> to vector<16x8x32xf32>
    %207 = vector.extract_strided_slice %205 {offsets = [0, 0, 32], sizes = [16, 8, 32], strides = [1, 1, 1]} : vector<16x8x96xf32> to vector<16x8x32xf32>
    %208 = vector.extract_strided_slice %205 {offsets = [0, 0, 64], sizes = [16, 8, 32], strides = [1, 1, 1]} : vector<16x8x96xf32> to vector<16x8x32xf32>
    %209 = tpu.iota {dimensions = array<i32: 2>} : vector<8x1x32xi32>
    %210 = tpu.iota {dimensions = array<i32: 0>} : vector<8x1x32xi32>
    %c4_i32_75 = arith.constant 4 : i32
    %211 = vector.broadcast %c4_i32_75 : i32 to vector<8x1x32xi32>
    %212 = arith.muli %210, %211 : vector<8x1x32xi32>
    %213 = arith.cmpi sge, %209, %212 : vector<8x1x32xi32>
    %c1_i32_76 = arith.constant 1 : i32
    %214 = vector.broadcast %c1_i32_76 : i32 to vector<8x1x32xi32>
    %215 = arith.addi %210, %214 : vector<8x1x32xi32>
    %c4_i32_77 = arith.constant 4 : i32
    %216 = vector.broadcast %c4_i32_77 : i32 to vector<8x1x32xi32>
    %217 = arith.muli %215, %216 : vector<8x1x32xi32>
    %218 = arith.cmpi slt, %209, %217 : vector<8x1x32xi32>
    %219 = arith.andi %213, %218 : vector<8x1x32xi1>
    %220 = arith.extui %219 : vector<8x1x32xi1> to vector<8x1x32xi32>
    %221 = arith.sitofp %220 : vector<8x1x32xi32> to vector<8x1x32xf32>
    %222 = vector.shape_cast %207 : vector<16x8x32xf32> to vector<16x1x8x32xf32>
    %223 = vector.shape_cast %221 : vector<8x1x32xf32> to vector<1x8x1x32xf32>
    %224 = vector.broadcast %222 : vector<16x1x8x32xf32> to vector<16x8x8x32xf32>
    %225 = vector.broadcast %223 : vector<1x8x1x32xf32> to vector<16x8x8x32xf32>
    %226 = arith.mulf %224, %225 : vector<16x8x8x32xf32>
    %227 = vector.shape_cast %226 : vector<16x8x8x32xf32> to vector<16x64x32xf32>
    %228 = arith.truncf %227 : vector<16x64x32xf32> to vector<16x64x32xbf16>
    %229 = vector.shape_cast %208 : vector<16x8x32xf32> to vector<16x1x8x32xf32>
    %230 = vector.shape_cast %221 : vector<8x1x32xf32> to vector<1x8x1x32xf32>
    %231 = vector.broadcast %229 : vector<16x1x8x32xf32> to vector<16x8x8x32xf32>
    %232 = vector.broadcast %230 : vector<1x8x1x32xf32> to vector<16x8x8x32xf32>
    %233 = arith.mulf %231, %232 : vector<16x8x8x32xf32>
    %234 = vector.shape_cast %233 : vector<16x8x8x32xf32> to vector<16x64x32xf32>
    %235 = arith.truncf %234 : vector<16x64x32xf32> to vector<16x64x32xbf16>
    %236 = arith.truncf %206 : vector<16x8x32xf32> to vector<16x8x32xbf16>
    "tpu.trace_start"() <{level = 10 : i32, message = "bic,bmc->bim"}> : () -> ()
    %cst_78 = arith.constant dense<0.000000e+00> : vector<16x8x64xf32>
    %237 = tpu.matmul %236, %228, %cst_78 {dimension_numbers = #tpu.dot_dimension_numbers<[2], [2], [1], [1], [0, 0, 0, 1, 1, 1], [0], [0]>} : vector<16x8x32xbf16>, vector<16x64x32xbf16>, vector<16x8x64xf32> -> vector<16x8x64xf32>
    "tpu.trace_stop"() : () -> ()
    %cst_79 = arith.constant dense<0xFF800000> : vector<16x8xf32>
    %238 = vector.multi_reduction <maximumf>, %237, %cst_79 [2] : vector<16x8x64xf32> to vector<16x8xf32>
    %239 = vector.shape_cast %238 : vector<16x8xf32> to vector<16x8x1xf32>
    %240 = vector.broadcast %239 : vector<16x8x1xf32> to vector<16x8x64xf32>
    %241 = arith.subf %237, %240 : vector<16x8x64xf32>
    %242 = math.exp %241 : vector<16x8x64xf32>
    %243 = vector.shape_cast %242 : vector<16x8x64xf32> to vector<128x64xf32>
    %244 = tpu.iota {dimensions = array<i32: 0>} : vector<64x8xi32>
    %245 = tpu.iota {dimensions = array<i32: 1>} : vector<64x8xi32>
    %c8_i32 = arith.constant 8 : i32
    %246 = vector.broadcast %c8_i32 : i32 to vector<64x8xi32>
    %247 = arith.muli %245, %246 : vector<64x8xi32>
    %248 = arith.cmpi sge, %244, %247 : vector<64x8xi32>
    %c1_i32_80 = arith.constant 1 : i32
    %249 = vector.broadcast %c1_i32_80 : i32 to vector<64x8xi32>
    %250 = arith.addi %245, %249 : vector<64x8xi32>
    %c8_i32_81 = arith.constant 8 : i32
    %251 = vector.broadcast %c8_i32_81 : i32 to vector<64x8xi32>
    %252 = arith.muli %250, %251 : vector<64x8xi32>
    %253 = arith.cmpi slt, %244, %252 : vector<64x8xi32>
    %254 = arith.andi %248, %253 : vector<64x8xi1>
    %255 = arith.extui %254 : vector<64x8xi1> to vector<64x8xi32>
    %256 = arith.sitofp %255 : vector<64x8xi32> to vector<64x8xf32>
    %257 = tpu.iota {dimensions = array<i32: 1>} : vector<8x64xi32>
    %258 = tpu.iota {dimensions = array<i32: 0>} : vector<8x64xi32>
    %c8_i32_82 = arith.constant 8 : i32
    %259 = vector.broadcast %c8_i32_82 : i32 to vector<8x64xi32>
    %260 = arith.muli %258, %259 : vector<8x64xi32>
    %261 = arith.cmpi sge, %257, %260 : vector<8x64xi32>
    %c1_i32_83 = arith.constant 1 : i32
    %262 = vector.broadcast %c1_i32_83 : i32 to vector<8x64xi32>
    %263 = arith.addi %258, %262 : vector<8x64xi32>
    %c8_i32_84 = arith.constant 8 : i32
    %264 = vector.broadcast %c8_i32_84 : i32 to vector<8x64xi32>
    %265 = arith.muli %263, %264 : vector<8x64xi32>
    %266 = arith.cmpi slt, %257, %265 : vector<8x64xi32>
    %267 = arith.andi %261, %266 : vector<8x64xi1>
    %268 = arith.extui %267 : vector<8x64xi1> to vector<8x64xi32>
    %269 = arith.sitofp %268 : vector<8x64xi32> to vector<8x64xf32>
    %cst_85 = arith.constant dense<0.000000e+00> : vector<128x8xf32>
    %270 = tpu.matmul %243, %256, %cst_85 {dimension_numbers = #tpu.dot_dimension_numbers<[1], [0], [0], [1], [0, 0, 1, 1], [], []>} : vector<128x64xf32>, vector<64x8xf32>, vector<128x8xf32> -> vector<128x8xf32>
    %cst_86 = arith.constant dense<0.000000e+00> : vector<128x64xf32>
    %271 = tpu.matmul %270, %269, %cst_86 {dimension_numbers = #tpu.dot_dimension_numbers<[1], [0], [0], [1], [0, 0, 1, 1], [], []>} : vector<128x8xf32>, vector<8x64xf32>, vector<128x64xf32> -> vector<128x64xf32>
    %272 = tpu.reciprocal %271 {approx = true} : vector<128x64xf32> -> vector<128x64xf32>
    %273 = arith.mulf %243, %272 : vector<128x64xf32>
    %274 = vector.shape_cast %273 : vector<128x64xf32> to vector<16x8x64xf32>
    %275 = arith.truncf %274 : vector<16x8x64xf32> to vector<16x8x64xbf16>
    "tpu.trace_start"() <{level = 10 : i32, message = "bim,bmc->bic"}> : () -> ()
    %cst_87 = arith.constant dense<0.000000e+00> : vector<16x8x32xf32>
    %276 = tpu.matmul %275, %235, %cst_87 {dimension_numbers = #tpu.dot_dimension_numbers<[2], [1], [1], [2], [0, 0, 0, 1, 1, 2], [0], [0]>} : vector<16x8x64xbf16>, vector<16x64x32xbf16>, vector<16x8x32xf32> -> vector<16x8x32xf32>
    "tpu.trace_stop"() : () -> ()
    %277 = vector.broadcast %179 : vector<1x32xf32> to vector<128x32xf32>
    %278 = arith.addf %164, %277 : vector<128x32xf32>
    %279 = vector.shape_cast %276 : vector<16x8x32xf32> to vector<128x32xf32>
    %280 = arith.truncf %279 : vector<128x32xf32> to vector<128x32xbf16>
    %cst_88 = arith.constant dense<0.000000e+00> : vector<128x32xf32>
    %281 = tpu.matmul %280, %168, %cst_88 {dimension_numbers = #tpu.dot_dimension_numbers<[1], [0], [0], [1], [0, 0, 1, 1], [], []>} : vector<128x32xbf16>, vector<32x32xbf16>, vector<128x32xf32> -> vector<128x32xf32>
    %282 = arith.addf %278, %281 : vector<128x32xf32>
    %cst_89 = arith.constant dense<0.000000e+00> : vector<128xf32>
    %283 = vector.multi_reduction <add>, %282, %cst_89 [1] : vector<128x32xf32> to vector<128xf32>
    %284 = vector.shape_cast %283 : vector<128xf32> to vector<128x1xf32>
    %cst_90 = arith.constant 3.200000e+01 : f32
    %285 = vector.broadcast %cst_90 : f32 to vector<128x1xf32>
    %286 = arith.divf %284, %285 : vector<128x1xf32>
    %287 = vector.broadcast %286 : vector<128x1xf32> to vector<128x32xf32>
    %288 = arith.subf %282, %287 : vector<128x32xf32>
    %289 = arith.mulf %288, %288 : vector<128x32xf32>
    %cst_91 = arith.constant dense<0.000000e+00> : vector<128xf32>
    %290 = vector.multi_reduction <add>, %289, %cst_91 [1] : vector<128x32xf32> to vector<128xf32>
    %291 = vector.shape_cast %290 : vector<128xf32> to vector<128x1xf32>
    %cst_92 = arith.constant 3.200000e+01 : f32
    %292 = vector.broadcast %cst_92 : f32 to vector<128x1xf32>
    %293 = arith.divf %291, %292 : vector<128x1xf32>
    %cst_93 = arith.constant 9.99999974E-6 : f32
    %294 = vector.broadcast %cst_93 : f32 to vector<128x1xf32>
    %295 = arith.addf %293, %294 : vector<128x1xf32>
    %296 = math.rsqrt %295 : vector<128x1xf32>
    %297 = vector.broadcast %296 : vector<128x1xf32> to vector<128x32xf32>
    %298 = arith.mulf %288, %297 : vector<128x32xf32>
    %299 = vector.broadcast %180 : vector<1x32xf32> to vector<128x32xf32>
    %300 = arith.mulf %298, %299 : vector<128x32xf32>
    %301 = vector.broadcast %181 : vector<1x32xf32> to vector<128x32xf32>
    %302 = arith.addf %300, %301 : vector<128x32xf32>
    %303 = arith.truncf %302 : vector<128x32xf32> to vector<128x32xbf16>
    %cst_94 = arith.constant dense<0.000000e+00> : vector<128x128xf32>
    %304 = tpu.matmul %303, %170, %cst_94 {dimension_numbers = #tpu.dot_dimension_numbers<[1], [0], [0], [1], [0, 0, 1, 1], [], []>} : vector<128x32xbf16>, vector<32x128xbf16>, vector<128x128xf32> -> vector<128x128xf32>
    %305 = vector.broadcast %176 : vector<1x128xf32> to vector<128x128xf32>
    %306 = arith.addf %304, %305 : vector<128x128xf32>
    %cst_95 = arith.constant 5.000000e-01 : f32
    %307 = vector.broadcast %cst_95 : f32 to vector<128x128xf32>
    %308 = arith.mulf %307, %306 : vector<128x128xf32>
    %cst_96 = arith.constant 4.471500e-02 : f32
    %309 = vector.broadcast %cst_96 : f32 to vector<128x128xf32>
    %310 = arith.mulf %309, %306 : vector<128x128xf32>
    %311 = arith.mulf %310, %306 : vector<128x128xf32>
    %312 = arith.mulf %311, %306 : vector<128x128xf32>
    %313 = arith.addf %306, %312 : vector<128x128xf32>
    %cst_97 = arith.constant 0.797884583 : f32
    %314 = vector.broadcast %cst_97 : f32 to vector<128x128xf32>
    %315 = arith.mulf %314, %313 : vector<128x128xf32>
    %316 = math.tanh %315 : vector<128x128xf32>
    %cst_98 = arith.constant 1.000000e+00 : f32
    %317 = vector.broadcast %cst_98 : f32 to vector<128x128xf32>
    %318 = arith.addf %317, %316 : vector<128x128xf32>
    %319 = arith.mulf %308, %318 : vector<128x128xf32>
    %320 = arith.truncf %319 : vector<128x128xf32> to vector<128x128xbf16>
    %cst_99 = arith.constant dense<0.000000e+00> : vector<128x32xf32>
    %321 = tpu.matmul %320, %172, %cst_99 {dimension_numbers = #tpu.dot_dimension_numbers<[1], [0], [0], [1], [0, 0, 1, 1], [], []>} : vector<128x128xbf16>, vector<128x32xbf16>, vector<128x32xf32> -> vector<128x32xf32>
    %322 = vector.broadcast %182 : vector<1x32xf32> to vector<128x32xf32>
    %323 = arith.addf %321, %322 : vector<128x32xf32>
    %324 = arith.addf %282, %323 : vector<128x32xf32>
    %c1_100 = arith.constant 1 : index
    %c0_101 = arith.constant 0 : index
    %c0_102 = arith.constant 0 : index
    %325 = vector.load %arg8[%c1_100, %c0_101, %c0_102] : memref<2x128x128xf32, #tpu.memory_space<vmem>>, vector<1x128x128xf32>
    %326 = vector.shape_cast %325 : vector<1x128x128xf32> to vector<128x128xf32>
    %cst_103 = arith.constant dense<0.000000e+00> : vector<128x32xf32>
    %327 = tpu.matmul %326, %324, %cst_103 {dimension_numbers = #tpu.dot_dimension_numbers<[1], [0], [0], [1], [0, 0, 1, 1], [], []>} : vector<128x128xf32>, vector<128x32xf32>, vector<128x32xf32> -> vector<128x32xf32>
    %c0_104 = arith.constant 0 : index
    %c0_105 = arith.constant 0 : index
    %c0_106 = arith.constant 0 : index
    %328 = vector.load %arg9[%c0_104, %c0_105, %c0_106] : memref<1x128x32xf32, #tpu.memory_space<vmem>>, vector<1x128x32xf32>
    %329 = vector.shape_cast %328 : vector<1x128x32xf32> to vector<128x32xf32>
    %330 = vector.shape_cast %327 : vector<128x32xf32> to vector<1x128x32xf32>
    tpu.vector_store %arg9[%c0_104, %c0_105, %c0_106], %330 {strides = array<i32>} : memref<1x128x32xf32, #tpu.memory_space<vmem>>, vector<1x128x32xf32>,
    return
  }
  func.func @transform_0(%arg0: i32) -> (i32, i32, i32) {
    %c0_i32 = arith.constant 0 : i32
    %c0_i32_0 = arith.constant 0 : i32
    %c0_i32_1 = arith.constant 0 : i32
    return %arg0, %c0_i32, %c0_i32_0 : i32, i32, i32
  }
  func.func @transform_1(%arg0: i32) -> (i32, i32, i32) {
    %c0_i32 = arith.constant 0 : i32
    %c0_i32_0 = arith.constant 0 : i32
    %c0_i32_1 = arith.constant 0 : i32
    %c0_i32_2 = arith.constant 0 : i32
    return %c0_i32, %c0_i32_0, %c0_i32_1 : i32, i32, i32
  }
  func.func @transform_2(%arg0: i32) -> (i32, i32, i32) {
    %c0_i32 = arith.constant 0 : i32
    %c0_i32_0 = arith.constant 0 : i32
    %c0_i32_1 = arith.constant 0 : i32
    %c0_i32_2 = arith.constant 0 : i32
    return %c0_i32, %c0_i32_0, %c0_i32_1 : i32, i32, i32
  }
  func.func @transform_3(%arg0: i32) -> (i32, i32, i32) {
    %c0_i32 = arith.constant 0 : i32
    %c0_i32_0 = arith.constant 0 : i32
    %c0_i32_1 = arith.constant 0 : i32
    %c0_i32_2 = arith.constant 0 : i32
    return %c0_i32, %c0_i32_0, %c0_i32_1 : i32, i32, i32
  }
  func.func @transform_4(%arg0: i32) -> (i32, i32, i32) {
    %c0_i32 = arith.constant 0 : i32
    %c0_i32_0 = arith.constant 0 : i32
    %c0_i32_1 = arith.constant 0 : i32
    %c0_i32_2 = arith.constant 0 : i32
    return %c0_i32, %c0_i32_0, %c0_i32_1 : i32, i32, i32
  }
  func.func @transform_5(%arg0: i32) -> (i32, i32, i32) {
    %c0_i32 = arith.constant 0 : i32
    %c0_i32_0 = arith.constant 0 : i32
    %c0_i32_1 = arith.constant 0 : i32
    %c0_i32_2 = arith.constant 0 : i32
    return %c0_i32, %c0_i32_0, %c0_i32_1 : i32, i32, i32
  }
  func.func @transform_6(%arg0: i32) -> (i32, i32, i32) {
    %c0_i32 = arith.constant 0 : i32
    %c0_i32_0 = arith.constant 0 : i32
    %c0_i32_1 = arith.constant 0 : i32
    %c0_i32_2 = arith.constant 0 : i32
    return %c0_i32, %c0_i32_0, %c0_i32_1 : i32, i32, i32
  }
  func.func @transform_7(%arg0: i32) -> (i32, i32, i32) {
    %c0_i32 = arith.constant 0 : i32
    %c0_i32_0 = arith.constant 0 : i32
    %c0_i32_1 = arith.constant 0 : i32
    %c0_i32_2 = arith.constant 0 : i32
    return %c0_i32, %c0_i32_0, %c0_i32_1 : i32, i32, i32
  }
  func.func @transform_8(%arg0: i32) -> (i32, i32, i32) {
    %c0_i32 = arith.constant 0 : i32
    %c0_i32_0 = arith.constant 0 : i32
    %c0_i32_1 = arith.constant 0 : i32
    return %arg0, %c0_i32, %c0_i32_0 : i32, i32, i32
  }
}

</mosaic_0001>

<llo_original>
// kernel: motion_agformer_block.1
$region0: #{motion_agformer_block.1}
  #allocation0 [shape = 'u32[]', space=smem, size = 0x4, offset = 0x4, fixed_abs, tag = 'smem constant byte address 0x4 - core index']
  #allocation1 [shape = 'u32[72,128]{1,0:T(1,128)}', space=vmem, size = 0x9000, scoped, tag = 'internal scratch']
  %s0 = inlined_call_operand.vmem [shape: f32[2,128,32], index: 0, kind: input, shape index: {}]
  %s1 = inlined_call_operand.vmem [shape: bf16[2,32,96], index: 1, kind: input, shape index: {}]
  %s2 = inlined_call_operand.vmem [shape: bf16[2,32,32], index: 2, kind: input, shape index: {}]
  %s3 = inlined_call_operand.vmem [shape: bf16[2,32,128], index: 3, kind: input, shape index: {}]
  %s4 = inlined_call_operand.vmem [shape: bf16[2,128,32], index: 4, kind: input, shape index: {}]
  %s5 = inlined_call_operand.vmem [shape: f32[2,6,32], index: 5, kind: input, shape index: {}]
  %s6 = inlined_call_operand.vmem [shape: f32[2,1,128], index: 6, kind: input, shape index: {}]
  %s7 = inlined_call_operand.hbm [shape: f32[2,128,128], index: 7, kind: input, shape index: {}]
  %s8 = inlined_call_operand.hbm [shape: f32[2,128,32], index: 8, kind: output, shape index: {}]
  %s9 = sld [smem:[#allocation0]]
  $region69: #{motion_agformer_block.1} parent=0
    _
  %s11 = ssub.s32 1, %s9
  %s12 = scalar_select 0, %s11, %s9
  $region1: #{motion_agformer_block.1} parent=0
    #allocation2 [shape = 'u8[131072]{0}', space=vmem, size = 0x20000, scoped, tag = 'input window, operand 7, single buffered']
    #allocation3 [shape = 's32[2]{0}', space=sflag, size = 0x8, scoped, tag = 'scoped memory for motion_agformer_block.1']
    #allocation4 [shape = 's32[2]{0}', space=sflag, size = 0x8, scoped, tag = 'scoped memory for motion_agformer_block.1']
    #allocation5 [shape = 'u8[131072]{0}', space=vmem, size = 0x20000, scoped, tag = 'output window, operand 0']
    %13 = vsyncpa [#allocation3], 0
    %14 = vsyncpa [#allocation4], 0
    %s15 = scalar_lea.sflag [#allocation4], 1
    %16 = vsyncpa %s15, 0
    loop: start=0, step=1, limit=4
    $region2: #{motion_agformer_block.1} parent=1 // loop_pre_header
      _
    $region3: #{motion_agformer_block.1} parent=1 // loop_header
      %s18 = sphi 0, %s22
      %p19 = scmp.ge.s32.totalorder %s18, 4
      %s28 = sphi 0, %s30
      %s31 = sphi 0, %s28
      %s32 = sphi 0, %s31
      %s48 = sphi 0, %s32
      %s52 = sphi 0, %s52
      %s54 = sphi 0, %s52
      %s55 = sphi 0, %s54
      %s69 = sphi 0, %s55
      %s73 = sphi 0, %s73
      %s75 = sphi 0, %s73
      %s76 = sphi 0, %s75
      %s90 = sphi 0, %s76
      %s94 = sphi 0, %s94
      %s96 = sphi 0, %s94
      %s97 = sphi 0, %s96
      %s111 = sphi 0, %s97
      %s115 = sphi 0, %s115
      %s117 = sphi 0, %s115
      %s118 = sphi 0, %s117
      %s132 = sphi 0, %s118
      %s136 = sphi 0, %s136
      %s138 = sphi 0, %s136
      %s139 = sphi 0, %s138
      %s153 = sphi 0, %s139
      %s157 = sphi 0, %s157
      %s159 = sphi 0, %s157
      %s160 = sphi 0, %s159
      %s174 = sphi 0, %s160
      %s178 = sphi 0, %s178
      %s180 = sphi 0, %s178
      %s181 = sphi 0, %s180
      %s195 = sphi 0, %s181
      %s201 = sphi 0, %s203
      %s204 = sphi 0, %s201
      %s205 = sphi 0, %s204
      %s221 = sphi 0, %s205
    $region4: #{motion_agformer_block.1} parent=1 // loop_header_branch
      %21 = sbr.rel (%p19) target = $region8
    $region5: #{motion_agformer_block.1} parent=1 // loop_body
      %s23 = ssub.s32 %s18, 1
      %s24 = ssub.s32 %s18, 2
      %s25 = sadd.s32 %s18, 1
      %s26 = ssub.s32 %s18, %s25
      %p27 = scmp.eq.s32.totalorder %s26, 0
      %s29 = sadd.s32 %s28, 1
      %s30 = scalar_select %p27, %s28, %s29
      %p33 = pneg %p27
      %p34 = scmp.eq.s32.totalorder %s18, 1
      %p35 = por %p33, %p34
      %p36 = scmp.ne.s32.totalorder %s28, %s31
      %p37 = scmp.eq.s32.totalorder %s18, 0
      %p38 = por %p36, %p37
      %p39 = scmp.ne.s32.totalorder %s28, %s31
      %p40 = scmp.eq.s32.totalorder %s23, 1
      %p41 = por %p39, %p40
      %p42 = scmp.ne.s32.totalorder %s31, %s32
      %p43 = scmp.eq.s32.totalorder %s23, 0
      %p44 = por %p42, %p43
      %p45 = scmp.ne.s32.totalorder %s31, %s32
      %p46 = scmp.eq.s32.totalorder %s24, 1
      %p47 = por %p45, %p46
      %p49 = scmp.ne.s32.totalorder %s32, %s48
      %p50 = scmp.eq.s32.totalorder %s24, 0
      %p51 = por %p49, %p50
      %s53 = sadd.s32 %s52, 1
      %p56 = scmp.eq.s32.totalorder %s18, 1
      %p57 = scmp.ne.s32.totalorder %s52, %s54
      %p58 = scmp.eq.s32.totalorder %s18, 0
      %p59 = por %p57, %p58
      %p60 = scmp.ne.s32.totalorder %s52, %s54
      %p61 = scmp.eq.s32.totalorder %s23, 1
      %p62 = por %p60, %p61
      %p63 = scmp.ne.s32.totalorder %s54, %s55
      %p64 = scmp.eq.s32.totalorder %s23, 0
      %p65 = por %p63, %p64
      %p66 = scmp.ne.s32.totalorder %s54, %s55
      %p67 = scmp.eq.s32.totalorder %s24, 1
      %p68 = por %p66, %p67
      %p70 = scmp.ne.s32.totalorder %s55, %s69
      %p71 = scmp.eq.s32.totalorder %s24, 0
      %p72 = por %p70, %p71
      %s74 = sadd.s32 %s73, 1
      %p77 = scmp.eq.s32.totalorder %s18, 1
      %p78 = scmp.ne.s32.totalorder %s73, %s75
      %p79 = scmp.eq.s32.totalorder %s18, 0
      %p80 = por %p78, %p79
      %p81 = scmp.ne.s32.totalorder %s73, %s75
      %p82 = scmp.eq.s32.totalorder %s23, 1
      %p83 = por %p81, %p82
      %p84 = scmp.ne.s32.totalorder %s75, %s76
      %p85 = scmp.eq.s32.totalorder %s23, 0
      %p86 = por %p84, %p85
      %p87 = scmp.ne.s32.totalorder %s75, %s76
      %p88 = scmp.eq.s32.totalorder %s24, 1
      %p89 = por %p87, %p88
      %p91 = scmp.ne.s32.totalorder %s76, %s90
      %p92 = scmp.eq.s32.totalorder %s24, 0
      %p93 = por %p91, %p92
      %s95 = sadd.s32 %s94, 1
      %p98 = scmp.eq.s32.totalorder %s18, 1
      %p99 = scmp.ne.s32.totalorder %s94, %s96
      %p100 = scmp.eq.s32.totalorder %s18, 0
      %p101 = por %p99, %p100
      %p102 = scmp.ne.s32.totalorder %s94, %s96
      %p103 = scmp.eq.s32.totalorder %s23, 1
      %p104 = por %p102, %p103
      %p105 = scmp.ne.s32.totalorder %s96, %s97
      %p106 = scmp.eq.s32.totalorder %s23, 0
      %p107 = por %p105, %p106
      %p108 = scmp.ne.s32.totalorder %s96, %s97
      %p109 = scmp.eq.s32.totalorder %s24, 1
      %p110 = por %p108, %p109
      %p112 = scmp.ne.s32.totalorder %s97, %s111
      %p113 = scmp.eq.s32.totalorder %s24, 0
      %p114 = por %p112, %p113
      %s116 = sadd.s32 %s115, 1
      %p119 = scmp.eq.s32.totalorder %s18, 1
      %p120 = scmp.ne.s32.totalorder %s115, %s117
      %p121 = scmp.eq.s32.totalorder %s18, 0
      %p122 = por %p120, %p121
      %p123 = scmp.ne.s32.totalorder %s115, %s117
      %p124 = scmp.eq.s32.totalorder %s23, 1
      %p125 = por %p123, %p124
      %p126 = scmp.ne.s32.totalorder %s117, %s118
      %p127 = scmp.eq.s32.totalorder %s23, 0
      %p128 = por %p126, %p127
      %p129 = scmp.ne.s32.totalorder %s117, %s118
      %p130 = scmp.eq.s32.totalorder %s24, 1
      %p131 = por %p129, %p130
      %p133 = scmp.ne.s32.totalorder %s118, %s132
      %p134 = scmp.eq.s32.totalorder %s24, 0
      %p135 = por %p133, %p134
      %s137 = sadd.s32 %s136, 1
      %p140 = scmp.eq.s32.totalorder %s18, 1
      %p141 = scmp.ne.s32.totalorder %s136, %s138
      %p142 = scmp.eq.s32.totalorder %s18, 0
      %p143 = por %p141, %p142
      %p144 = scmp.ne.s32.totalorder %s136, %s138
      %p145 = scmp.eq.s32.totalorder %s23, 1
      %p146 = por %p144, %p145
      %p147 = scmp.ne.s32.totalorder %s138, %s139
      %p148 = scmp.eq.s32.totalorder %s23, 0
      %p149 = por %p147, %p148
      %p150 = scmp.ne.s32.totalorder %s138, %s139
      %p151 = scmp.eq.s32.totalorder %s24, 1
      %p152 = por %p150, %p151
      %p154 = scmp.ne.s32.totalorder %s139, %s153
      %p155 = scmp.eq.s32.totalorder %s24, 0
      %p156 = por %p154, %p155
      %s158 = sadd.s32 %s157, 1
      %p161 = scmp.eq.s32.totalorder %s18, 1
      %p162 = scmp.ne.s32.totalorder %s157, %s159
      %p163 = scmp.eq.s32.totalorder %s18, 0
      %p164 = por %p162, %p163
      %p165 = scmp.ne.s32.totalorder %s157, %s159
      %p166 = scmp.eq.s32.totalorder %s23, 1
      %p167 = por %p165, %p166
      %p168 = scmp.ne.s32.totalorder %s159, %s160
      %p169 = scmp.eq.s32.totalorder %s23, 0
      %p170 = por %p168, %p169
      %p171 = scmp.ne.s32.totalorder %s159, %s160
      %p172 = scmp.eq.s32.totalorder %s24, 1
      %p173 = por %p171, %p172
      %p175 = scmp.ne.s32.totalorder %s160, %s174
      %p176 = scmp.eq.s32.totalorder %s24, 0
      %p177 = por %p175, %p176
      %s179 = sadd.s32 %s178, 1
      %p182 = scmp.eq.s32.totalorder %s18, 1
      %p183 = scmp.ne.s32.totalorder %s178, %s180
      %p184 = scmp.eq.s32.totalorder %s18, 0
      %p185 = por %p183, %p184
      %p186 = scmp.ne.s32.totalorder %s178, %s180
      %p187 = scmp.eq.s32.totalorder %s23, 1
      %p188 = por %p186, %p187
      %p189 = scmp.ne.s32.totalorder %s180, %s181
      %p190 = scmp.eq.s32.totalorder %s23, 0
      %p191 = por %p189, %p190
      %p192 = scmp.ne.s32.totalorder %s180, %s181
      %p193 = scmp.eq.s32.totalorder %s24, 1
      %p194 = por %p192, %p193
      %p196 = scmp.ne.s32.totalorder %s181, %s195
      %p197 = scmp.eq.s32.totalorder %s24, 0
      %p198 = por %p196, %p197
      %s199 = ssub.s32 %s18, %s25
      %p200 = scmp.eq.s32.totalorder %s199, 0
      %s202 = sadd.s32 %s201, 1
      %s203 = scalar_select %p200, %s201, %s202
      %p206 = pneg %p200
      %p207 = scmp.eq.s32.totalorder %s18, 1
      %p208 = por %p206, %p207
      %p209 = scmp.ne.s32.totalorder %s201, %s204
      %p210 = scmp.eq.s32.totalorder %s18, 0
      %p211 = por %p209, %p210
      %p212 = scmp.ne.s32.totalorder %s201, %s204
      %p213 = scmp.eq.s32.totalorder %s23, 1
      %p214 = por %p212, %p213
      %p215 = scmp.ne.s32.totalorder %s204, %s205
      %p216 = scmp.eq.s32.totalorder %s23, 0
      %p217 = por %p215, %p216
      %p218 = scmp.ne.s32.totalorder %s204, %s205
      %p219 = scmp.eq.s32.totalorder %s24, 1
      %p220 = por %p218, %p219
      %p222 = scmp.ne.s32.totalorder %s205, %s221
      %p223 = scmp.eq.s32.totalorder %s24, 0
      %p224 = por %p222, %p223
      %p225 = scmp.le.s32.totalorder 1, %s18
      %p226 = scmp.lt.s32.totalorder %s18, 3
      %p227 = pnand %p225, %p226
      %p228 = pneg %p227
      // Predicated region
      $region9: #{motion_agformer_block.1} parent=5 // pred_check
        _
      $region10: #{motion_agformer_block.1} parent=5 // pred_check_branch
        %230 = sbr.rel (%p227) target = $region12
      $region11: #{motion_agformer_block.1} parent=5 // pred_region
        %s231 = ssub.s32 %s18, 1
        // Predicated region
        $region13: #{motion_agformer_block.1} parent=11 // pred_check
          %p232 = pneg %p65
        $region14: #{motion_agformer_block.1} parent=11 // pred_check_branch
          %234 = sbr.rel (%p232) target = $region16
        $region15: #{motion_agformer_block.1} parent=11 // pred_region
          _
        $region16: #{motion_agformer_block.1} parent=11 // pred_fallthru
          _
        // Predicated region
        $region17: #{motion_agformer_block.1} parent=11 // pred_check
          %p235 = pneg %p86
        $region18: #{motion_agformer_block.1} parent=11 // pred_check_branch
          %237 = sbr.rel (%p235) target = $region20
        $region19: #{motion_agformer_block.1} parent=11 // pred_region
          _
        $region20: #{motion_agformer_block.1} parent=11 // pred_fallthru
          _
        // Predicated region
        $region21: #{motion_agformer_block.1} parent=11 // pred_check
          %p238 = pneg %p107
        $region22: #{motion_agformer_block.1} parent=11 // pred_check_branch
          %240 = sbr.rel (%p238) target = $region24
        $region23: #{motion_agformer_block.1} parent=11 // pred_region
          _
        $region24: #{motion_agformer_block.1} parent=11 // pred_fallthru
          _
        // Predicated region
        $region25: #{motion_agformer_block.1} parent=11 // pred_check
          %p241 = pneg %p128
        $region26: #{motion_agformer_block.1} parent=11 // pred_check_branch
          %243 = sbr.rel (%p241) target = $region28
        $region27: #{motion_agformer_block.1} parent=11 // pred_region
          _
        $region28: #{motion_agformer_block.1} parent=11 // pred_fallthru
          _
        // Predicated region
        $region29: #{motion_agformer_block.1} parent=11 // pred_check
          %p244 = pneg %p149
        $region30: #{motion_agformer_block.1} parent=11 // pred_check_branch
          %246 = sbr.rel (%p244) target = $region32
        $region31: #{motion_agformer_block.1} parent=11 // pred_region
          _
        $region32: #{motion_agformer_block.1} parent=11 // pred_fallthru
          _
        // Predicated region
        $region33: #{motion_agformer_block.1} parent=11 // pred_check
          %p247 = pneg %p170
        $region34: #{motion_agformer_block.1} parent=11 // pred_check_branch
          %249 = sbr.rel (%p247) target = $region36
        $region35: #{motion_agformer_block.1} parent=11 // pred_region
          _
        $region36: #{motion_agformer_block.1} parent=11 // pred_fallthru
          _
        // Predicated region
        $region37: #{motion_agformer_block.1} parent=11 // pred_check
          %p250 = pneg %p191
        $region38: #{motion_agformer_block.1} parent=11 // pred_check_branch
          %252 = sbr.rel (%p250) target = $region40
        $region39: #{motion_agformer_block.1} parent=11 // pred_region
          %254 = vsyncadd [#allocation3], 0
          %s255 = sshll.u32 %s7, 4
          %s256 = int_to_ptr.hbm [resolvable:$true] %s255
          %s257 = sshll.u32 [#allocation2], 4
          %s258 = int_to_ptr.vmem [resolvable:$true] %s257
          %263 = dma.hbm_to_vmem [thread:$0]  %s256, 4096, %s258, [#allocation3], 128, 128, 8
        $region40: #{motion_agformer_block.1} parent=11 // pred_fallthru
          _
      $region12: #{motion_agformer_block.1} parent=5 // pred_fallthru
        _
      %p264 = scmp.lt.s32.totalorder %s18, 2
      // Predicated region
      $region41: #{motion_agformer_block.1} parent=5 // pred_check
        %p265 = pneg %p264
      $region42: #{motion_agformer_block.1} parent=5 // pred_check_branch
        %267 = sbr.rel (%p265) target = $region44
      $region43: #{motion_agformer_block.1} parent=5 // pred_region
        // Predicated region
        $region45: #{motion_agformer_block.1} parent=43 // pred_check
          %p268 = pneg %p38
        $region46: #{motion_agformer_block.1} parent=43 // pred_check_branch
          %270 = sbr.rel (%p268) target = $region48
        $region47: #{motion_agformer_block.1} parent=43 // pred_region
          %p271 = scmp.lt.s32.totalorder %s18, 1
          %s272 = scalar_select %p271, %s18, 1
          %s273 = smul.addr %s272, 16
          %s274 = smul.addr %s273, 8
          %s275 = scalar_lea.vmem %s0, %s274
        $region48: #{motion_agformer_block.1} parent=43 // pred_fallthru
          _
      $region44: #{motion_agformer_block.1} parent=5 // pred_fallthru
        _
      %p276 = scmp.le.s32.totalorder 1, %s18
      %p277 = scmp.lt.s32.totalorder %s18, 3
      %p278 = pnand %p276, %p277
      %p279 = pneg %p278
      // Predicated region
      $region49: #{motion_agformer_block.1} parent=5 // pred_check
        _
      $region50: #{motion_agformer_block.1} parent=5 // pred_check_branch
        %281 = sbr.rel (%p278) target = $region52
      $region51: #{motion_agformer_block.1} parent=5 // pred_region
        %s282 = ssub.s32 %s18, 1
        // Predicated region
        $region53: #{motion_agformer_block.1} parent=51 // pred_check
          %p283 = pneg %p191
        $region54: #{motion_agformer_block.1} parent=51 // pred_check_branch
          %285 = sbr.rel (%p283) target = $region56
        $region55: #{motion_agformer_block.1} parent=51 // pred_region
          %287 = dma.done [#allocation3], 4096
        $region56: #{motion_agformer_block.1} parent=51 // pred_fallthru
          _
        %p288 = scmp.lt.s32.totalorder %s23, 1
        %s289 = scalar_select %p288, %s23, 1
        %s290 = smul.addr %s289, 16
        %s291 = smul.addr %s290, 8
        %s292 = scalar_lea.vmem %s0, %s291
        %p293 = pneg %p44
        %p294 = pneg %p41
        %p295 = pneg %p65
        %p296 = pneg %p62
        %p297 = pneg %p86
        %p298 = pneg %p83
        %p299 = pneg %p107
        %p300 = pneg %p104
        %p301 = pneg %p128
        %p302 = pneg %p125
        %p303 = pneg %p149
        %p304 = pneg %p146
        %p305 = pneg %p170
        %p306 = pneg %p167
        %p307 = pneg %p191
        %p308 = pneg %p188
        %p309 = pneg %p217
        %p310 = pneg %p214
        %s311 = sand.u32 %s204, 1
        %s312 = scalar_lea.sflag [#allocation4], %s311
        %s313 = sand.u32 %s204, 1
        %s314 = smul.addr %s313, 128
        %s315 = scalar_lea.vmem [#allocation5], %s314
        %p316 = scmp.lt.s32.totalorder %s23, 1
        %s317 = scalar_select %p316, %s23, 1
        %s318 = smul.addr %s317, 16
        %s319 = smul.addr %s318, 8
        %s320 = scalar_lea.vmem %s0, %s319
        %v322 = vld [vmem:[%s320] sm:$0xff]
        %v323 = vld [vmem:[%s320 + $0x8] sm:$0xff]
        %v324 = vld [vmem:[%s320 + $0x10] sm:$0xff]
        %v325 = vld [vmem:[%s320 + $0x18] sm:$0xff]
        %v326 = vld [vmem:[%s320 + $0x20] sm:$0xff]
        %v327 = vld [vmem:[%s320 + $0x28] sm:$0xff]
        %v328 = vld [vmem:[%s320 + $0x30] sm:$0xff]
        %v329 = vld [vmem:[%s320 + $0x38] sm:$0xff]
        %v330 = vld [vmem:[%s320 + $0x40] sm:$0xff]
        %v331 = vld [vmem:[%s320 + $0x48] sm:$0xff]
        %v332 = vld [vmem:[%s320 + $0x50] sm:$0xff]
        %v333 = vld [vmem:[%s320 + $0x58] sm:$0xff]
        %v334 = vld [vmem:[%s320 + $0x60] sm:$0xff]
        %v335 = vld [vmem:[%s320 + $0x68] sm:$0xff]
        %v336 = vld [vmem:[%s320 + $0x70] sm:$0xff]
        %v337 = vld [vmem:[%s320 + $0x78] sm:$0xff]
        %v338 = vld [vmem:[%s1] sm:$0xf]
        %v339 = vld [vmem:[%s1 + $0x4] sm:$0xf]
        %v340 = vld [vmem:[%s1 + $0x8] sm:$0xf]
        %v341 = vld [vmem:[%s1 + $0xc] sm:$0xf]
        %v342 = vld [vmem:[%s2] sm:$0xf]
        %v343 = vld [vmem:[%s2 + $0x4] sm:$0xf]
        %v344 = vld [vmem:[%s2 + $0x8] sm:$0xf]
        %v345 = vld [vmem:[%s2 + $0xc] sm:$0xf]
        %v346 = vld [vmem:[%s3] sm:$0xf]
        %v347 = vld [vmem:[%s3 + $0x4] sm:$0xf]
        %v348 = vld [vmem:[%s3 + $0x8] sm:$0xf]
        %v349 = vld [vmem:[%s3 + $0xc] sm:$0xf]
        %v350 = vld [vmem:[%s4] sm:$0xf]
        %v351 = vld [vmem:[%s4 + $0x4] sm:$0xf]
        %v352 = vld [vmem:[%s4 + $0x8] sm:$0xf]
        %v353 = vld [vmem:[%s4 + $0xc] sm:$0xf]
        %v354 = vld [vmem:[%s4 + $0x10] sm:$0xf]
        %v355 = vld [vmem:[%s4 + $0x14] sm:$0xf]
        %v356 = vld [vmem:[%s4 + $0x18] sm:$0xf]
        %v357 = vld [vmem:[%s4 + $0x1c] sm:$0xf]
        %v358 = vld [vmem:[%s4 + $0x20] sm:$0xf]
        %v359 = vld [vmem:[%s4 + $0x24] sm:$0xf]
        %v360 = vld [vmem:[%s4 + $0x28] sm:$0xf]
        %v361 = vld [vmem:[%s4 + $0x2c] sm:$0xf]
        %v362 = vld [vmem:[%s4 + $0x30] sm:$0xf]
        %v363 = vld [vmem:[%s4 + $0x34] sm:$0xf]
        %v364 = vld [vmem:[%s4 + $0x38] sm:$0xf]
        %v365 = vld [vmem:[%s4 + $0x3c] sm:$0xf]
        %v366 = vld [vmem:[%s5] sm:$0x3f]
        %v367 = vld [vmem:[%s6] sm:$0x1]
        %vm368 = vcmask 261120
        %v369 = vsel %vm368, %v322, 0.0
        %370 = vadd.xlane.f32.xlu0 %v369
        %v371 = vpop.xlane.xlu0 %370
        %v372 = vsel %vm368, %v323, 0.0
        %373 = vadd.xlane.f32.xlu0 %v372
        %v374 = vpop.xlane.xlu0 %373
        %v375 = vsel %vm368, %v324, 0.0
        %376 = vadd.xlane.f32.xlu0 %v375
        %v377 = vpop.xlane.xlu0 %376
        %v378 = vsel %vm368, %v325, 0.0
        %379 = vadd.xlane.f32.xlu0 %v378
        %v380 = vpop.xlane.xlu0 %379
        %v381 = vsel %vm368, %v326, 0.0
        %382 = vadd.xlane.f32.xlu0 %v381
        %v383 = vpop.xlane.xlu0 %382
        %v384 = vsel %vm368, %v327, 0.0
        %385 = vadd.xlane.f32.xlu0 %v384
        %v386 = vpop.xlane.xlu0 %385
        %v387 = vsel %vm368, %v328, 0.0
        %388 = vadd.xlane.f32.xlu0 %v387
        %v389 = vpop.xlane.xlu0 %388
        %v390 = vsel %vm368, %v329, 0.0
        %391 = vadd.xlane.f32.xlu0 %v390
        %v392 = vpop.xlane.xlu0 %391
        %v393 = vsel %vm368, %v330, 0.0
        %394 = vadd.xlane.f32.xlu0 %v393
        %v395 = vpop.xlane.xlu0 %394
        %v396 = vsel %vm368, %v331, 0.0
        %397 = vadd.xlane.f32.xlu0 %v396
        %v398 = vpop.xlane.xlu0 %397
        %v399 = vsel %vm368, %v332, 0.0
        %400 = vadd.xlane.f32.xlu0 %v399
        %v401 = vpop.xlane.xlu0 %400
        %v402 = vsel %vm368, %v333, 0.0
        %403 = vadd.xlane.f32.xlu0 %v402
        %v404 = vpop.xlane.xlu0 %403
        %v405 = vsel %vm368, %v334, 0.0
        %406 = vadd.xlane.f32.xlu0 %v405
        %v407 = vpop.xlane.xlu0 %406
        %v408 = vsel %vm368, %v335, 0.0
        %409 = vadd.xlane.f32.xlu0 %v408
        %v410 = vpop.xlane.xlu0 %409
        %v411 = vsel %vm368, %v336, 0.0
        %412 = vadd.xlane.f32.xlu0 %v411
        %v413 = vpop.xlane.xlu0 %412
        %v414 = vsel %vm368, %v337, 0.0
        %415 = vadd.xlane.f32.xlu0 %v414
        %v416 = vpop.xlane.xlu0 %415
        %v417 = vrcp.pop 32.0
        %v418 = vmul.f32 32.0, %v417
        %v419 = vsub.f32 1.0, %v418
        %v420 = vmul.f32 %v417, %v419
        %v421 = vadd.f32 %v417, %v420
        %vm422 = vweird.f32 %v417
        %v423 = vsel %vm422, %v417, %v421
        %v424 = vmul.f32 %v371, %v423
        %v425 = vmul.f32 %v374, %v423
        %v426 = vmul.f32 %v377, %v423
        %v427 = vmul.f32 %v380, %v423
        %v428 = vmul.f32 %v383, %v423
        %v429 = vmul.f32 %v386, %v423
        %v430 = vmul.f32 %v389, %v423
        %v431 = vmul.f32 %v392, %v423
        %v432 = vmul.f32 %v395, %v423
        %v433 = vmul.f32 %v398, %v423
        %v434 = vmul.f32 %v401, %v423
        %v435 = vmul.f32 %v404, %v423
        %v436 = vmul.f32 %v407, %v423
        %v437 = vmul.f32 %v410, %v423
        %v438 = vmul.f32 %v413, %v423
        %v439 = vmul.f32 %v416, %v423
        %v440 = vsub.f32 %v322, %v424
        %v441 = vsub.f32 %v323, %v425
        %v442 = vsub.f32 %v324, %v426
        %v443 = vsub.f32 %v325, %v427
        %v444 = vsub.f32 %v326, %v428
        %v445 = vsub.f32 %v327, %v429
        %v446 = vsub.f32 %v328, %v430
        %v447 = vsub.f32 %v329, %v431
        %v448 = vsub.f32 %v330, %v432
        %v449 = vsub.f32 %v331, %v433
        %v450 = vsub.f32 %v332, %v434
        %v451 = vsub.f32 %v333, %v435
        %v452 = vsub.f32 %v334, %v436
        %v453 = vsub.f32 %v335, %v437
        %v454 = vsub.f32 %v336, %v438
        %v455 = vsub.f32 %v337, %v439
        %v456 = vmul.f32 %v440, %v440
        %v457 = vmul.f32 %v441, %v441
        %v458 = vmul.f32 %v442, %v442
        %v459 = vmul.f32 %v443, %v443
        %v460 = vmul.f32 %v444, %v444
        %v461 = vmul.f32 %v445, %v445
        %v462 = vmul.f32 %v446, %v446
        %v463 = vmul.f32 %v447, %v447
        %v464 = vmul.f32 %v448, %v448
        %v465 = vmul.f32 %v449, %v449
        %v466 = vmul.f32 %v450, %v450
        %v467 = vmul.f32 %v451, %v451
        %v468 = vmul.f32 %v452, %v452
        %v469 = vmul.f32 %v453, %v453
        %v470 = vmul.f32 %v454, %v454
        %v471 = vmul.f32 %v455, %v455
        %v472 = vsel %vm368, %v456, 0.0
        %473 = vadd.xlane.f32.xlu0 %v472
        %v474 = vpop.xlane.xlu0 %473
        %v475 = vsel %vm368, %v457, 0.0
        %476 = vadd.xlane.f32.xlu0 %v475
        %v477 = vpop.xlane.xlu0 %476
        %v478 = vsel %vm368, %v458, 0.0
        %479 = vadd.xlane.f32.xlu0 %v478
        %v480 = vpop.xlane.xlu0 %479
        %v481 = vsel %vm368, %v459, 0.0
        %482 = vadd.xlane.f32.xlu0 %v481
        %v483 = vpop.xlane.xlu0 %482
        %v484 = vsel %vm368, %v460, 0.0
        %485 = vadd.xlane.f32.xlu0 %v484
        %v486 = vpop.xlane.xlu0 %485
        %v487 = vsel %vm368, %v461, 0.0
        %488 = vadd.xlane.f32.xlu0 %v487
        %v489 = vpop.xlane.xlu0 %488
        %v490 = vsel %vm368, %v462, 0.0
        %491 = vadd.xlane.f32.xlu0 %v490
        %v492 = vpop.xlane.xlu0 %491
        %v493 = vsel %vm368, %v463, 0.0
        %494 = vadd.xlane.f32.xlu0 %v493
        %v495 = vpop.xlane.xlu0 %494
        %v496 = vsel %vm368, %v464, 0.0
        %497 = vadd.xlane.f32.xlu0 %v496
        %v498 = vpop.xlane.xlu0 %497
        %v499 = vsel %vm368, %v465, 0.0
        %500 = vadd.xlane.f32.xlu0 %v499
        %v501 = vpop.xlane.xlu0 %500
        %v502 = vsel %vm368, %v466, 0.0
        %503 = vadd.xlane.f32.xlu0 %v502
        %v504 = vpop.xlane.xlu0 %503
        %v505 = vsel %vm368, %v467, 0.0
        %506 = vadd.xlane.f32.xlu0 %v505
        %v507 = vpop.xlane.xlu0 %506
        %v508 = vsel %vm368, %v468, 0.0
        %509 = vadd.xlane.f32.xlu0 %v508
        %v510 = vpop.xlane.xlu0 %509
        %v511 = vsel %vm368, %v469, 0.0
        %512 = vadd.xlane.f32.xlu0 %v511
        %v513 = vpop.xlane.xlu0 %512
        %v514 = vsel %vm368, %v470, 0.0
        %515 = vadd.xlane.f32.xlu0 %v514
        %v516 = vpop.xlane.xlu0 %515
        %v517 = vsel %vm368, %v471, 0.0
        %518 = vadd.xlane.f32.xlu0 %v517
        %v519 = vpop.xlane.xlu0 %518
        %v520 = vmul.f32 %v474, %v423
        %v521 = vmul.f32 %v477, %v423
        %v522 = vmul.f32 %v480, %v423
        %v523 = vmul.f32 %v483, %v423
        %v524 = vmul.f32 %v486, %v423
        %v525 = vmul.f32 %v489, %v423
        %v526 = vmul.f32 %v492, %v423
        %v527 = vmul.f32 %v495, %v423
        %v528 = vmul.f32 %v498, %v423
        %v529 = vmul.f32 %v501, %v423
        %v530 = vmul.f32 %v504, %v423
        %v531 = vmul.f32 %v507, %v423
        %v532 = vmul.f32 %v510, %v423
        %v533 = vmul.f32 %v513, %v423
        %v534 = vmul.f32 %v516, %v423
        %v535 = vmul.f32 %v519, %v423
        %v536 = vadd.f32 %v520, 1e-05
        %v537 = vadd.f32 %v521, 1e-05
        %v538 = vadd.f32 %v522, 1e-05
        %v539 = vadd.f32 %v523, 1e-05
        %v540 = vadd.f32 %v524, 1e-05
        %v541 = vadd.f32 %v525, 1e-05
        %v542 = vadd.f32 %v526, 1e-05
        %v543 = vadd.f32 %v527, 1e-05
        %v544 = vadd.f32 %v528, 1e-05
        %v545 = vadd.f32 %v529, 1e-05
        %v546 = vadd.f32 %v530, 1e-05
        %v547 = vadd.f32 %v531, 1e-05
        %v548 = vadd.f32 %v532, 1e-05
        %v549 = vadd.f32 %v533, 1e-05
        %v550 = vadd.f32 %v534, 1e-05
        %v551 = vadd.f32 %v535, 1e-05
        %v552 = vrsqrt.pop %v536
        %v553 = vmul.f32 %v552, %v536
        %v554 = vmul.f32 %v553, %v552
        %v555 = vmul.f32 0.5, %v554
        %v556 = vsub.f32 1.5, %v555
        %v557 = vmul.f32 %v552, %v556
        %vm558 = vweird.f32 %v536
        %vm559 = vweird.f32 %v552
        %vm560 = vmor %vm558, %vm559
        %v561 = vsel %vm560, %v552, %v557
        %v562 = vrsqrt.pop %v537
        %v563 = vmul.f32 %v562, %v537
        %v564 = vmul.f32 %v563, %v562
        %v565 = vmul.f32 0.5, %v564
        %v566 = vsub.f32 1.5, %v565
        %v567 = vmul.f32 %v562, %v566
        %vm568 = vweird.f32 %v537
        %vm569 = vweird.f32 %v562
        %vm570 = vmor %vm568, %vm569
        %v571 = vsel %vm570, %v562, %v567
        %v572 = vrsqrt.pop %v538
        %v573 = vmul.f32 %v572, %v538
        %v574 = vmul.f32 %v573, %v572
        %v575 = vmul.f32 0.5, %v574
        %v576 = vsub.f32 1.5, %v575
        %v577 = vmul.f32 %v572, %v576
        %vm578 = vweird.f32 %v538
        %vm579 = vweird.f32 %v572
        %vm580 = vmor %vm578, %vm579
        %v581 = vsel %vm580, %v572, %v577
        %v582 = vrsqrt.pop %v539
        %v583 = vmul.f32 %v582, %v539
        %v584 = vmul.f32 %v583, %v582
        %v585 = vmul.f32 0.5, %v584
        %v586 = vsub.f32 1.5, %v585
        %v587 = vmul.f32 %v582, %v586
        %vm588 = vweird.f32 %v539
        %vm589 = vweird.f32 %v582
        %vm590 = vmor %vm588, %vm589
        %v591 = vsel %vm590, %v582, %v587
        %v592 = vrsqrt.pop %v540
        %v593 = vmul.f32 %v592, %v540
        %v594 = vmul.f32 %v593, %v592
        %v595 = vmul.f32 0.5, %v594
        %v596 = vsub.f32 1.5, %v595
        %v597 = vmul.f32 %v592, %v596
        %vm598 = vweird.f32 %v540
        %vm599 = vweird.f32 %v592
        %vm600 = vmor %vm598, %vm599
        %v601 = vsel %vm600, %v592, %v597
        %v602 = vrsqrt.pop %v541
        %v603 = vmul.f32 %v602, %v541
        %v604 = vmul.f32 %v603, %v602
        %v605 = vmul.f32 0.5, %v604
        %v606 = vsub.f32 1.5, %v605
        %v607 = vmul.f32 %v602, %v606
        %vm608 = vweird.f32 %v541
        %vm609 = vweird.f32 %v602
        %vm610 = vmor %vm608, %vm609
        %v611 = vsel %vm610, %v602, %v607
        %v612 = vrsqrt.pop %v542
        %v613 = vmul.f32 %v612, %v542
        %v614 = vmul.f32 %v613, %v612
        %v615 = vmul.f32 0.5, %v614
        %v616 = vsub.f32 1.5, %v615
        %v617 = vmul.f32 %v612, %v616
        %vm618 = vweird.f32 %v542
        %vm619 = vweird.f32 %v612
        %vm620 = vmor %vm618, %vm619
        %v621 = vsel %vm620, %v612, %v617
        %v622 = vrsqrt.pop %v543
        %v623 = vmul.f32 %v622, %v543
        %v624 = vmul.f32 %v623, %v622
        %v625 = vmul.f32 0.5, %v624
        %v626 = vsub.f32 1.5, %v625
        %v627 = vmul.f32 %v622, %v626
        %vm628 = vweird.f32 %v543
        %vm629 = vweird.f32 %v622
        %vm630 = vmor %vm628, %vm629
        %v631 = vsel %vm630, %v622, %v627
        %v632 = vrsqrt.pop %v544
        %v633 = vmul.f32 %v632, %v544
        %v634 = vmul.f32 %v633, %v632
        %v635 = vmul.f32 0.5, %v634
        %v636 = vsub.f32 1.5, %v635
        %v637 = vmul.f32 %v632, %v636
        %vm638 = vweird.f32 %v544
        %vm639 = vweird.f32 %v632
        %vm640 = vmor %vm638, %vm639
        %v641 = vsel %vm640, %v632, %v637
        %v642 = vrsqrt.pop %v545
        %v643 = vmul.f32 %v642, %v545
        %v644 = vmul.f32 %v643, %v642
        %v645 = vmul.f32 0.5, %v644
        %v646 = vsub.f32 1.5, %v645
        %v647 = vmul.f32 %v642, %v646
        %vm648 = vweird.f32 %v545
        %vm649 = vweird.f32 %v642
        %vm650 = vmor %vm648, %vm649
        %v651 = vsel %vm650, %v642, %v647
        %v652 = vrsqrt.pop %v546
        %v653 = vmul.f32 %v652, %v546
        %v654 = vmul.f32 %v653, %v652
        %v655 = vmul.f32 0.5, %v654
        %v656 = vsub.f32 1.5, %v655
        %v657 = vmul.f32 %v652, %v656
        %vm658 = vweird.f32 %v546
        %vm659 = vweird.f32 %v652
        %vm660 = vmor %vm658, %vm659
        %v661 = vsel %vm660, %v652, %v657
        %v662 = vrsqrt.pop %v547
        %v663 = vmul.f32 %v662, %v547
        %v664 = vmul.f32 %v663, %v662
        %v665 = vmul.f32 0.5, %v664
        %v666 = vsub.f32 1.5, %v665
        %v667 = vmul.f32 %v662, %v666
        %vm668 = vweird.f32 %v547
        %vm669 = vweird.f32 %v662
        %vm670 = vmor %vm668, %vm669
        %v671 = vsel %vm670, %v662, %v667
        %v672 = vrsqrt.pop %v548
        %v673 = vmul.f32 %v672, %v548
        %v674 = vmul.f32 %v673, %v672
        %v675 = vmul.f32 0.5, %v674
        %v676 = vsub.f32 1.5, %v675
        %v677 = vmul.f32 %v672, %v676
        %vm678 = vweird.f32 %v548
        %vm679 = vweird.f32 %v672
        %vm680 = vmor %vm678, %vm679
        %v681 = vsel %vm680, %v672, %v677
        %v682 = vrsqrt.pop %v549
        %v683 = vmul.f32 %v682, %v549
        %v684 = vmul.f32 %v683, %v682
        %v685 = vmul.f32 0.5, %v684
        %v686 = vsub.f32 1.5, %v685
        %v687 = vmul.f32 %v682, %v686
        %vm688 = vweird.f32 %v549
        %vm689 = vweird.f32 %v682
        %vm690 = vmor %vm688, %vm689
        %v691 = vsel %vm690, %v682, %v687
        %v692 = vrsqrt.pop %v550
        %v693 = vmul.f32 %v692, %v550
        %v694 = vmul.f32 %v693, %v692
        %v695 = vmul.f32 0.5, %v694
        %v696 = vsub.f32 1.5, %v695
        %v697 = vmul.f32 %v692, %v696
        %vm698 = vweird.f32 %v550
        %vm699 = vweird.f32 %v692
        %vm700 = vmor %vm698, %vm699
        %v701 = vsel %vm700, %v692, %v697
        %v702 = vrsqrt.pop %v551
        %v703 = vmul.f32 %v702, %v551
        %v704 = vmul.f32 %v703, %v702
        %v705 = vmul.f32 0.5, %v704
        %v706 = vsub.f32 1.5, %v705
        %v707 = vmul.f32 %v702, %v706
        %vm708 = vweird.f32 %v551
        %vm709 = vweird.f32 %v702
        %vm710 = vmor %vm708, %vm709
        %v711 = vsel %vm710, %v702, %v707
        %v712 = vmul.f32 %v440, %v561
        %v713 = vmul.f32 %v441, %v571
        %v714 = vmul.f32 %v442, %v581
        %v715 = vmul.f32 %v443, %v591
        %v716 = vmul.f32 %v444, %v601
        %v717 = vmul.f32 %v445, %v611
        %v718 = vmul.f32 %v446, %v621
        %v719 = vmul.f32 %v447, %v631
        %v720 = vmul.f32 %v448, %v641
        %v721 = vmul.f32 %v449, %v651
        %v722 = vmul.f32 %v450, %v661
        %v723 = vmul.f32 %v451, %v671
        %v724 = vmul.f32 %v452, %v681
        %v725 = vmul.f32 %v453, %v691
        %v726 = vmul.f32 %v454, %v701
        %v727 = vmul.f32 %v455, %v711
        %v728 = vperm.slane %v366, 0
        %v729 = vmul.f32 %v712, %v728
        %v730 = vmul.f32 %v713, %v728
        %v731 = vmul.f32 %v714, %v728
        %v732 = vmul.f32 %v715, %v728
        %v733 = vmul.f32 %v716, %v728
        %v734 = vmul.f32 %v717, %v728
        %v735 = vmul.f32 %v718, %v728
        %v736 = vmul.f32 %v719, %v728
        %v737 = vmul.f32 %v720, %v728
        %v738 = vmul.f32 %v721, %v728
        %v739 = vmul.f32 %v722, %v728
        %v740 = vmul.f32 %v723, %v728
        %v741 = vmul.f32 %v724, %v728
        %v742 = vmul.f32 %v725, %v728
        %v743 = vmul.f32 %v726, %v728
        %v744 = vmul.f32 %v727, %v728
        %v745 = vperm.slane %v366, 1
        %v746 = vadd.f32 %v729, %v745
        %v747 = vadd.f32 %v730, %v745
        %v748 = vadd.f32 %v731, %v745
        %v749 = vadd.f32 %v732, %v745
        %v750 = vadd.f32 %v733, %v745
        %v751 = vadd.f32 %v734, %v745
        %v752 = vadd.f32 %v735, %v745
        %v753 = vadd.f32 %v736, %v745
        %v754 = vadd.f32 %v737, %v745
        %v755 = vadd.f32 %v738, %v745
        %v756 = vadd.f32 %v739, %v745
        %v757 = vadd.f32 %v740, %v745
        %v758 = vadd.f32 %v741, %v745
        %v759 = vadd.f32 %v742, %v745
        %v760 = vadd.f32 %v743, %v745
        %v761 = vadd.f32 %v744, %v745
        %v762 = vpack.c.bf16 %v747, %v746
        %v763 = vpack.c.bf16 %v749, %v748
        %v764 = vpack.c.bf16 %v751, %v750
        %v765 = vpack.c.bf16 %v753, %v752
        %v766 = vpack.c.bf16 %v755, %v754
        %v767 = vpack.c.bf16 %v757, %v756
        %v768 = vpack.c.bf16 %v759, %v758
        %v769 = vpack.c.bf16 %v761, %v760
        %v774 = vunpack.c.l.b16 %v338
        %v775 = vunpack.c.l.b16 %v339
        %v776 = vunpack.c.l.b16 %v340
        %v777 = vunpack.c.l.b16 %v341
        %v778 = vpack.c.b16 %v775, %v774
        %v779 = vpack.c.b16 %v777, %v776
        %v783 = vsel %vm368, %v762, 0
        %v786 = vsel %vm368, %v763, 0
        %v789 = vsel %vm368, %v764, 0
        %v792 = vsel %vm368, %v765, 0
        %v795 = vsel %vm368, %v766, 0
        %v798 = vsel %vm368, %v767, 0
        %v801 = vsel %vm368, %v768, 0
        %v804 = vsel %vm368, %v769, 0
        %806 = vmatpush.bf16.msra.mxu0 0
        %807 = vmatpush.bf16.msra.mxu0 0
        %808 = vmatpush.bf16.msra.mxu0 0
        %809 = vmatpush.bf16.msra.mxu0 0
        %810 = vmatpush.bf16.msra.mxu0 0
        %811 = vmatpush.bf16.msra.mxu0 0
        %812 = vmatpush.bf16.msra.mxu0 %v779
        %813 = vmatpush.bf16.msra.mxu0 %v778
        %814 = vmatmul.bf16.gmra.mxu0 %v783
        %v815 = vpop.f32.mrf.mxu0
        %v816 = vadd.f32 0.0, %v815
        %v817 = vpop.f32.mrf.mxu0
        %v818 = vadd.f32 0.0, %v817
        %819 = vmatmul.bf16.gmra.mxu0 %v786
        %v820 = vpop.f32.mrf.mxu0
        %v821 = vadd.f32 0.0, %v820
        %v822 = vpop.f32.mrf.mxu0
        %v823 = vadd.f32 0.0, %v822
        %824 = vmatmul.bf16.gmra.mxu0 %v789
        %v825 = vpop.f32.mrf.mxu0
        %v826 = vadd.f32 0.0, %v825
        %v827 = vpop.f32.mrf.mxu0
        %v828 = vadd.f32 0.0, %v827
        %829 = vmatmul.bf16.gmra.mxu0 %v792
        %v830 = vpop.f32.mrf.mxu0
        %v831 = vadd.f32 0.0, %v830
        %v832 = vpop.f32.mrf.mxu0
        %v833 = vadd.f32 0.0, %v832
        %834 = vmatmul.bf16.gmra.mxu0 %v795
        %v835 = vpop.f32.mrf.mxu0
        %v836 = vadd.f32 0.0, %v835
        %v837 = vpop.f32.mrf.mxu0
        %v838 = vadd.f32 0.0, %v837
        %839 = vmatmul.bf16.gmra.mxu0 %v798
        %v840 = vpop.f32.mrf.mxu0
        %v841 = vadd.f32 0.0, %v840
        %v842 = vpop.f32.mrf.mxu0
        %v843 = vadd.f32 0.0, %v842
        %844 = vmatmul.bf16.gmra.mxu0 %v801
        %v845 = vpop.f32.mrf.mxu0
        %v846 = vadd.f32 0.0, %v845
        %v847 = vpop.f32.mrf.mxu0
        %v848 = vadd.f32 0.0, %v847
        %849 = vmatmul.bf16.gmra.mxu0 %v804
        %v850 = vpop.f32.mrf.mxu0
        %v851 = vadd.f32 0.0, %v850
        %v852 = vpop.f32.mrf.mxu0
        %v853 = vadd.f32 0.0, %v852
        %854 = vdwg.mxu0
        %v855 = vlaneseq
        %v856 = vand.u32 %v855, 127
        %vm857 = vcmp.ge.s32.totalorder %v856, 0
        %vm858 = vcmp.ge.s32.totalorder %v856, 4
        %vm859 = vcmp.ge.s32.totalorder %v856, 8
        %vm860 = vcmp.ge.s32.totalorder %v856, 12
        %vm861 = vcmp.ge.s32.totalorder %v856, 16
        %vm862 = vcmp.ge.s32.totalorder %v856, 20
        %vm863 = vcmp.ge.s32.totalorder %v856, 24
        %vm864 = vcmp.ge.s32.totalorder %v856, 28
        %vm865 = vcmp.lt.s32.totalorder %v856, 4
        %vm866 = vcmp.lt.s32.totalorder %v856, 8
        %vm867 = vcmp.lt.s32.totalorder %v856, 12
        %vm868 = vcmp.lt.s32.totalorder %v856, 16
        %vm869 = vcmp.lt.s32.totalorder %v856, 20
        %vm870 = vcmp.lt.s32.totalorder %v856, 24
        %vm871 = vcmp.lt.s32.totalorder %v856, 28
        %vm872 = vcmp.lt.s32.totalorder %v856, 32
        %vm873 = vmand %vm857, %vm865
        %vm874 = vmand %vm858, %vm866
        %vm875 = vmand %vm859, %vm867
        %vm876 = vmand %vm860, %vm868
        %vm877 = vmand %vm861, %vm869
        %vm878 = vmand %vm862, %vm870
        %vm879 = vmand %vm863, %vm871
        %vm880 = vmand %vm864, %vm872
        %v881 = vsel %vm873, 1, 0
        %v882 = vsel %vm874, 1, 0
        %v883 = vsel %vm875, 1, 0
        %v884 = vsel %vm876, 1, 0
        %v885 = vsel %vm877, 1, 0
        %v886 = vsel %vm878, 1, 0
        %v887 = vsel %vm879, 1, 0
        %v888 = vsel %vm880, 1, 0
        %v889 = vcvt.s32.f32 %v881
        %v890 = vcvt.s32.f32 %v882
        %v891 = vcvt.s32.f32 %v883
        %v892 = vcvt.s32.f32 %v884
        %v893 = vcvt.s32.f32 %v885
        %v894 = vcvt.s32.f32 %v886
        %v895 = vcvt.s32.f32 %v887
        %v896 = vcvt.s32.f32 %v888
        %905 = vrot.lane.b32.xlu0 %v889, 32
        %v906 = vpop.permute.xlu0 %905
        %907 = vrot.lane.b32.xlu0 %v890, 32
        %v908 = vpop.permute.xlu0 %907
        %909 = vrot.lane.b32.xlu0 %v891, 32
        %v910 = vpop.permute.xlu0 %909
        %911 = vrot.lane.b32.xlu0 %v892, 32
        %v912 = vpop.permute.xlu0 %911
        %913 = vrot.lane.b32.xlu0 %v893, 32
        %v914 = vpop.permute.xlu0 %913
        %915 = vrot.lane.b32.xlu0 %v894, 32
        %v916 = vpop.permute.xlu0 %915
        %917 = vrot.lane.b32.xlu0 %v895, 32
        %v918 = vpop.permute.xlu0 %917
        %919 = vrot.lane.b32.xlu0 %v896, 32
        %v920 = vpop.permute.xlu0 %919
        %v929 = vmul.f32 %v816, %v906
        %v930 = vmul.f32 %v818, %v906
        %v931 = vmul.f32 %v816, %v908
        %v932 = vmul.f32 %v818, %v908
        %v933 = vmul.f32 %v816, %v910
        %v934 = vmul.f32 %v818, %v910
        %v935 = vmul.f32 %v816, %v912
        %v936 = vmul.f32 %v818, %v912
        %v937 = vmul.f32 %v816, %v914
        %v938 = vmul.f32 %v818, %v914
        %v939 = vmul.f32 %v816, %v916
        %v940 = vmul.f32 %v818, %v916
        %v941 = vmul.f32 %v816, %v918
        %v942 = vmul.f32 %v818, %v918
        %v943 = vmul.f32 %v816, %v920
        %v944 = vmul.f32 %v818, %v920
        %v945 = vmul.f32 %v821, %v906
        %v946 = vmul.f32 %v823, %v906
        %v947 = vmul.f32 %v821, %v908
        %v948 = vmul.f32 %v823, %v908
        %v949 = vmul.f32 %v821, %v910
        %v950 = vmul.f32 %v823, %v910
        %v951 = vmul.f32 %v821, %v912
        %v952 = vmul.f32 %v823, %v912
        %v953 = vmul.f32 %v821, %v914
        %v954 = vmul.f32 %v823, %v914
        %v955 = vmul.f32 %v821, %v916
        %v956 = vmul.f32 %v823, %v916
        %v957 = vmul.f32 %v821, %v918
        %v958 = vmul.f32 %v823, %v918
        %v959 = vmul.f32 %v821, %v920
        %v960 = vmul.f32 %v823, %v920
        %v961 = vmul.f32 %v826, %v906
        %v962 = vmul.f32 %v828, %v906
        %v963 = vmul.f32 %v826, %v908
        %v964 = vmul.f32 %v828, %v908
        %v965 = vmul.f32 %v826, %v910
        %v966 = vmul.f32 %v828, %v910
        %v967 = vmul.f32 %v826, %v912
        %v968 = vmul.f32 %v828, %v912
        %v969 = vmul.f32 %v826, %v914
        %v970 = vmul.f32 %v828, %v914
        %v971 = vmul.f32 %v826, %v916
        %v972 = vmul.f32 %v828, %v916
        %v973 = vmul.f32 %v826, %v918
        %v974 = vmul.f32 %v828, %v918
        %v975 = vmul.f32 %v826, %v920
        %v976 = vmul.f32 %v828, %v920
        %v977 = vmul.f32 %v831, %v906
        %v978 = vmul.f32 %v833, %v906
        %v979 = vmul.f32 %v831, %v908
        %v980 = vmul.f32 %v833, %v908
        %v981 = vmul.f32 %v831, %v910
        %v982 = vmul.f32 %v833, %v910
        %v983 = vmul.f32 %v831, %v912
        %v984 = vmul.f32 %v833, %v912
        %v985 = vmul.f32 %v831, %v914
        %v986 = vmul.f32 %v833, %v914
        %v987 = vmul.f32 %v831, %v916
        %v988 = vmul.f32 %v833, %v916
        %v989 = vmul.f32 %v831, %v918
        %v990 = vmul.f32 %v833, %v918
        %v991 = vmul.f32 %v831, %v920
        %v992 = vmul.f32 %v833, %v920
        %v993 = vmul.f32 %v836, %v906
        %v994 = vmul.f32 %v838, %v906
        %v995 = vmul.f32 %v836, %v908
        %v996 = vmul.f32 %v838, %v908
        %v997 = vmul.f32 %v836, %v910
        %v998 = vmul.f32 %v838, %v910
        %v999 = vmul.f32 %v836, %v912
        %v1000 = vmul.f32 %v838, %v912
        %v1001 = vmul.f32 %v836, %v914
        %v1002 = vmul.f32 %v838, %v914
        %v1003 = vmul.f32 %v836, %v916
        %v1004 = vmul.f32 %v838, %v916
        %v1005 = vmul.f32 %v836, %v918
        %v1006 = vmul.f32 %v838, %v918
        %v1007 = vmul.f32 %v836, %v920
        %v1008 = vmul.f32 %v838, %v920
        %v1009 = vmul.f32 %v841, %v906
        %v1010 = vmul.f32 %v843, %v906
        %v1011 = vmul.f32 %v841, %v908
        %v1012 = vmul.f32 %v843, %v908
        %v1013 = vmul.f32 %v841, %v910
        %v1014 = vmul.f32 %v843, %v910
        %v1015 = vmul.f32 %v841, %v912
        %v1016 = vmul.f32 %v843, %v912
        %v1017 = vmul.f32 %v841, %v914
        %v1018 = vmul.f32 %v843, %v914
        %v1019 = vmul.f32 %v841, %v916
        %v1020 = vmul.f32 %v843, %v916
        %v1021 = vmul.f32 %v841, %v918
        %v1022 = vmul.f32 %v843, %v918
        %v1023 = vmul.f32 %v841, %v920
        %v1024 = vmul.f32 %v843, %v920
        %v1025 = vmul.f32 %v846, %v906
        %v1026 = vmul.f32 %v848, %v906
        %v1027 = vmul.f32 %v846, %v908
        %v1028 = vmul.f32 %v848, %v908
        %v1029 = vmul.f32 %v846, %v910
        %v1030 = vmul.f32 %v848, %v910
        %v1031 = vmul.f32 %v846, %v912
        %v1032 = vmul.f32 %v848, %v912
        %v1033 = vmul.f32 %v846, %v914
        %v1034 = vmul.f32 %v848, %v914
        %v1035 = vmul.f32 %v846, %v916
        %v1036 = vmul.f32 %v848, %v916
        %v1037 = vmul.f32 %v846, %v918
        %v1038 = vmul.f32 %v848, %v918
        %v1039 = vmul.f32 %v846, %v920
        %v1040 = vmul.f32 %v848, %v920
        %v1041 = vmul.f32 %v851, %v906
        %v1042 = vmul.f32 %v853, %v906
        %v1043 = vmul.f32 %v851, %v908
        %v1044 = vmul.f32 %v853, %v908
        %v1045 = vmul.f32 %v851, %v910
        %v1046 = vmul.f32 %v853, %v910
        %v1047 = vmul.f32 %v851, %v912
        %v1048 = vmul.f32 %v853, %v912
        %v1049 = vmul.f32 %v851, %v914
        %v1050 = vmul.f32 %v853, %v914
        %v1051 = vmul.f32 %v851, %v916
        %v1052 = vmul.f32 %v853, %v916
        %v1053 = vmul.f32 %v851, %v918
        %v1054 = vmul.f32 %v853, %v918
        %v1055 = vmul.f32 %v851, %v920
        %v1056 = vmul.f32 %v853, %v920
        %v1057 = vpack.c.bf16 %v929, %v929
        %v1058 = vpack.c.bf16 %v930, %v930
        %v1059 = vpack.c.bf16 %v931, %v931
        %v1060 = vpack.c.bf16 %v932, %v932
        %v1061 = vpack.c.bf16 %v933, %v933
        %v1062 = vpack.c.bf16 %v934, %v934
        %v1063 = vpack.c.bf16 %v935, %v935
        %v1064 = vpack.c.bf16 %v936, %v936
        %v1065 = vpack.c.bf16 %v937, %v937
        %v1066 = vpack.c.bf16 %v938, %v938
        %v1067 = vpack.c.bf16 %v939, %v939
        %v1068 = vpack.c.bf16 %v940, %v940
        %v1069 = vpack.c.bf16 %v941, %v941
        %v1070 = vpack.c.bf16 %v942, %v942
        %v1071 = vpack.c.bf16 %v943, %v943
        %v1072 = vpack.c.bf16 %v944, %v944
        %v1073 = vpack.c.bf16 %v945, %v945
        %v1074 = vpack.c.bf16 %v946, %v946
        %v1075 = vpack.c.bf16 %v947, %v947
        %v1076 = vpack.c.bf16 %v948, %v948
        %v1077 = vpack.c.bf16 %v949, %v949
        %v1078 = vpack.c.bf16 %v950, %v950
        %v1079 = vpack.c.bf16 %v951, %v951
        %v1080 = vpack.c.bf16 %v952, %v952
        %v1081 = vpack.c.bf16 %v953, %v953
        %v1082 = vpack.c.bf16 %v954, %v954
        %v1083 = vpack.c.bf16 %v955, %v955
        %v1084 = vpack.c.bf16 %v956, %v956
        %v1085 = vpack.c.bf16 %v957, %v957
        %v1086 = vpack.c.bf16 %v958, %v958
        %v1087 = vpack.c.bf16 %v959, %v959
        %v1088 = vpack.c.bf16 %v960, %v960
        %v1089 = vpack.c.bf16 %v961, %v961
        %v1090 = vpack.c.bf16 %v962, %v962
        %v1091 = vpack.c.bf16 %v963, %v963
        %v1092 = vpack.c.bf16 %v964, %v964
        %v1093 = vpack.c.bf16 %v965, %v965
        %v1094 = vpack.c.bf16 %v966, %v966
        %v1095 = vpack.c.bf16 %v967, %v967
        %v1096 = vpack.c.bf16 %v968, %v968
        %v1097 = vpack.c.bf16 %v969, %v969
        %v1098 = vpack.c.bf16 %v970, %v970
        %v1099 = vpack.c.bf16 %v971, %v971
        %v1100 = vpack.c.bf16 %v972, %v972
        %v1101 = vpack.c.bf16 %v973, %v973
        %v1102 = vpack.c.bf16 %v974, %v974
        %v1103 = vpack.c.bf16 %v975, %v975
        %v1104 = vpack.c.bf16 %v976, %v976
        %v1105 = vpack.c.bf16 %v977, %v977
        %v1106 = vpack.c.bf16 %v978, %v978
        %v1107 = vpack.c.bf16 %v979, %v979
        %v1108 = vpack.c.bf16 %v980, %v980
        %v1109 = vpack.c.bf16 %v981, %v981
        %v1110 = vpack.c.bf16 %v982, %v982
        %v1111 = vpack.c.bf16 %v983, %v983
        %v1112 = vpack.c.bf16 %v984, %v984
        %v1113 = vpack.c.bf16 %v985, %v985
        %v1114 = vpack.c.bf16 %v986, %v986
        %v1115 = vpack.c.bf16 %v987, %v987
        %v1116 = vpack.c.bf16 %v988, %v988
        %v1117 = vpack.c.bf16 %v989, %v989
        %v1118 = vpack.c.bf16 %v990, %v990
        %v1119 = vpack.c.bf16 %v991, %v991
        %v1120 = vpack.c.bf16 %v992, %v992
        %v1121 = vpack.c.bf16 %v993, %v993
        %v1122 = vpack.c.bf16 %v994, %v994
        %v1123 = vpack.c.bf16 %v995, %v995
        %v1124 = vpack.c.bf16 %v996, %v996
        %v1125 = vpack.c.bf16 %v997, %v997
        %v1126 = vpack.c.bf16 %v998, %v998
        %v1127 = vpack.c.bf16 %v999, %v999
        %v1128 = vpack.c.bf16 %v1000, %v1000
        %v1129 = vpack.c.bf16 %v1001, %v1001
        %v1130 = vpack.c.bf16 %v1002, %v1002
        %v1131 = vpack.c.bf16 %v1003, %v1003
        %v1132 = vpack.c.bf16 %v1004, %v1004
        %v1133 = vpack.c.bf16 %v1005, %v1005
        %v1134 = vpack.c.bf16 %v1006, %v1006
        %v1135 = vpack.c.bf16 %v1007, %v1007
        %v1136 = vpack.c.bf16 %v1008, %v1008
        %v1137 = vpack.c.bf16 %v1009, %v1009
        %v1138 = vpack.c.bf16 %v1010, %v1010
        %v1139 = vpack.c.bf16 %v1011, %v1011
        %v1140 = vpack.c.bf16 %v1012, %v1012
        %v1141 = vpack.c.bf16 %v1013, %v1013
        %v1142 = vpack.c.bf16 %v1014, %v1014
        %v1143 = vpack.c.bf16 %v1015, %v1015
        %v1144 = vpack.c.bf16 %v1016, %v1016
        %v1145 = vpack.c.bf16 %v1017, %v1017
        %v1146 = vpack.c.bf16 %v1018, %v1018
        %v1147 = vpack.c.bf16 %v1019, %v1019
        %v1148 = vpack.c.bf16 %v1020, %v1020
        %v1149 = vpack.c.bf16 %v1021, %v1021
        %v1150 = vpack.c.bf16 %v1022, %v1022
        %v1151 = vpack.c.bf16 %v1023, %v1023
        %v1152 = vpack.c.bf16 %v1024, %v1024
        %v1153 = vpack.c.bf16 %v1025, %v1025
        %v1154 = vpack.c.bf16 %v1026, %v1026
        %v1155 = vpack.c.bf16 %v1027, %v1027
        %v1156 = vpack.c.bf16 %v1028, %v1028
        %v1157 = vpack.c.bf16 %v1029, %v1029
        %v1158 = vpack.c.bf16 %v1030, %v1030
        %v1159 = vpack.c.bf16 %v1031, %v1031
        %v1160 = vpack.c.bf16 %v1032, %v1032
        %v1161 = vpack.c.bf16 %v1033, %v1033
        %v1162 = vpack.c.bf16 %v1034, %v1034
        %v1163 = vpack.c.bf16 %v1035, %v1035
        %v1164 = vpack.c.bf16 %v1036, %v1036
        %v1165 = vpack.c.bf16 %v1037, %v1037
        %v1166 = vpack.c.bf16 %v1038, %v1038
        %v1167 = vpack.c.bf16 %v1039, %v1039
        %v1168 = vpack.c.bf16 %v1040, %v1040
        %v1169 = vpack.c.bf16 %v1041, %v1041
        %v1170 = vpack.c.bf16 %v1042, %v1042
        %v1171 = vpack.c.bf16 %v1043, %v1043
        %v1172 = vpack.c.bf16 %v1044, %v1044
        %v1173 = vpack.c.bf16 %v1045, %v1045
        %v1174 = vpack.c.bf16 %v1046, %v1046
        %v1175 = vpack.c.bf16 %v1047, %v1047
        %v1176 = vpack.c.bf16 %v1048, %v1048
        %v1177 = vpack.c.bf16 %v1049, %v1049
        %v1178 = vpack.c.bf16 %v1050, %v1050
        %v1179 = vpack.c.bf16 %v1051, %v1051
        %v1180 = vpack.c.bf16 %v1052, %v1052
        %v1181 = vpack.c.bf16 %v1053, %v1053
        %v1182 = vpack.c.bf16 %v1054, %v1054
        %v1183 = vpack.c.bf16 %v1055, %v1055
        %v1184 = vpack.c.bf16 %v1056, %v1056
        %1185 = vrot.lane.b32.xlu0 %v889, 64
        %v1186 = vpop.permute.xlu0 %1185
        %1187 = vrot.lane.b32.xlu0 %v890, 64
        %v1188 = vpop.permute.xlu0 %1187
        %1189 = vrot.lane.b32.xlu0 %v891, 64
        %v1190 = vpop.permute.xlu0 %1189
        %1191 = vrot.lane.b32.xlu0 %v892, 64
        %v1192 = vpop.permute.xlu0 %1191
        %1193 = vrot.lane.b32.xlu0 %v893, 64
        %v1194 = vpop.permute.xlu0 %1193
        %1195 = vrot.lane.b32.xlu0 %v894, 64
        %v1196 = vpop.permute.xlu0 %1195
        %1197 = vrot.lane.b32.xlu0 %v895, 64
        %v1198 = vpop.permute.xlu0 %1197
        %1199 = vrot.lane.b32.xlu0 %v896, 64
        %v1200 = vpop.permute.xlu0 %1199
        %v1209 = vmul.f32 %v816, %v1186
        %v1210 = vmul.f32 %v818, %v1186
        %v1211 = vmul.f32 %v816, %v1188
        %v1212 = vmul.f32 %v818, %v1188
        %v1213 = vmul.f32 %v816, %v1190
        %v1214 = vmul.f32 %v818, %v1190
        %v1215 = vmul.f32 %v816, %v1192
        %v1216 = vmul.f32 %v818, %v1192
        %v1217 = vmul.f32 %v816, %v1194
        %v1218 = vmul.f32 %v818, %v1194
        %v1219 = vmul.f32 %v816, %v1196
        %v1220 = vmul.f32 %v818, %v1196
        %v1221 = vmul.f32 %v816, %v1198
        %v1222 = vmul.f32 %v818, %v1198
        %v1223 = vmul.f32 %v816, %v1200
        %v1224 = vmul.f32 %v818, %v1200
        %v1225 = vmul.f32 %v821, %v1186
        %v1226 = vmul.f32 %v823, %v1186
        %v1227 = vmul.f32 %v821, %v1188
        %v1228 = vmul.f32 %v823, %v1188
        %v1229 = vmul.f32 %v821, %v1190
        %v1230 = vmul.f32 %v823, %v1190
        %v1231 = vmul.f32 %v821, %v1192
        %v1232 = vmul.f32 %v823, %v1192
        %v1233 = vmul.f32 %v821, %v1194
        %v1234 = vmul.f32 %v823, %v1194
        %v1235 = vmul.f32 %v821, %v1196
        %v1236 = vmul.f32 %v823, %v1196
        %v1237 = vmul.f32 %v821, %v1198
        %v1238 = vmul.f32 %v823, %v1198
        %v1239 = vmul.f32 %v821, %v1200
        %v1240 = vmul.f32 %v823, %v1200
        %v1241 = vmul.f32 %v826, %v1186
        %v1242 = vmul.f32 %v828, %v1186
        %v1243 = vmul.f32 %v826, %v1188
        %v1244 = vmul.f32 %v828, %v1188
        %v1245 = vmul.f32 %v826, %v1190
        %v1246 = vmul.f32 %v828, %v1190
        %v1247 = vmul.f32 %v826, %v1192
        %v1248 = vmul.f32 %v828, %v1192
        %v1249 = vmul.f32 %v826, %v1194
        %v1250 = vmul.f32 %v828, %v1194
        %v1251 = vmul.f32 %v826, %v1196
        %v1252 = vmul.f32 %v828, %v1196
        %v1253 = vmul.f32 %v826, %v1198
        %v1254 = vmul.f32 %v828, %v1198
        %v1255 = vmul.f32 %v826, %v1200
        %v1256 = vmul.f32 %v828, %v1200
        %v1257 = vmul.f32 %v831, %v1186
        %v1258 = vmul.f32 %v833, %v1186
        %v1259 = vmul.f32 %v831, %v1188
        %v1260 = vmul.f32 %v833, %v1188
        %v1261 = vmul.f32 %v831, %v1190
        %v1262 = vmul.f32 %v833, %v1190
        %v1263 = vmul.f32 %v831, %v1192
        %v1264 = vmul.f32 %v833, %v1192
        %v1265 = vmul.f32 %v831, %v1194
        %v1266 = vmul.f32 %v833, %v1194
        %v1267 = vmul.f32 %v831, %v1196
        %v1268 = vmul.f32 %v833, %v1196
        %v1269 = vmul.f32 %v831, %v1198
        %v1270 = vmul.f32 %v833, %v1198
        %v1271 = vmul.f32 %v831, %v1200
        %v1272 = vmul.f32 %v833, %v1200
        %v1273 = vmul.f32 %v836, %v1186
        %v1274 = vmul.f32 %v838, %v1186
        %v1275 = vmul.f32 %v836, %v1188
        %v1276 = vmul.f32 %v838, %v1188
        %v1277 = vmul.f32 %v836, %v1190
        %v1278 = vmul.f32 %v838, %v1190
        %v1279 = vmul.f32 %v836, %v1192
        %v1280 = vmul.f32 %v838, %v1192
        %v1281 = vmul.f32 %v836, %v1194
        %v1282 = vmul.f32 %v838, %v1194
        %v1283 = vmul.f32 %v836, %v1196
        %v1284 = vmul.f32 %v838, %v1196
        %v1285 = vmul.f32 %v836, %v1198
        %v1286 = vmul.f32 %v838, %v1198
        %v1287 = vmul.f32 %v836, %v1200
        %v1288 = vmul.f32 %v838, %v1200
        %v1289 = vmul.f32 %v841, %v1186
        %v1290 = vmul.f32 %v843, %v1186
        %v1291 = vmul.f32 %v841, %v1188
        %v1292 = vmul.f32 %v843, %v1188
        %v1293 = vmul.f32 %v841, %v1190
        %v1294 = vmul.f32 %v843, %v1190
        %v1295 = vmul.f32 %v841, %v1192
        %v1296 = vmul.f32 %v843, %v1192
        %v1297 = vmul.f32 %v841, %v1194
        %v1298 = vmul.f32 %v843, %v1194
        %v1299 = vmul.f32 %v841, %v1196
        %v1300 = vmul.f32 %v843, %v1196
        %v1301 = vmul.f32 %v841, %v1198
        %v1302 = vmul.f32 %v843, %v1198
        %v1303 = vmul.f32 %v841, %v1200
        %v1304 = vmul.f32 %v843, %v1200
        %v1305 = vmul.f32 %v846, %v1186
        %v1306 = vmul.f32 %v848, %v1186
        %v1307 = vmul.f32 %v846, %v1188
        %v1308 = vmul.f32 %v848, %v1188
        %v1309 = vmul.f32 %v846, %v1190
        %v1310 = vmul.f32 %v848, %v1190
        %v1311 = vmul.f32 %v846, %v1192
        %v1312 = vmul.f32 %v848, %v1192
        %v1313 = vmul.f32 %v846, %v1194
        %v1314 = vmul.f32 %v848, %v1194
        %v1315 = vmul.f32 %v846, %v1196
        %v1316 = vmul.f32 %v848, %v1196
        %v1317 = vmul.f32 %v846, %v1198
        %v1318 = vmul.f32 %v848, %v1198
        %v1319 = vmul.f32 %v846, %v1200
        %v1320 = vmul.f32 %v848, %v1200
        %v1321 = vmul.f32 %v851, %v1186
        %v1322 = vmul.f32 %v853, %v1186
        %v1323 = vmul.f32 %v851, %v1188
        %v1324 = vmul.f32 %v853, %v1188
        %v1325 = vmul.f32 %v851, %v1190
        %v1326 = vmul.f32 %v853, %v1190
        %v1327 = vmul.f32 %v851, %v1192
        %v1328 = vmul.f32 %v853, %v1192
        %v1329 = vmul.f32 %v851, %v1194
        %v1330 = vmul.f32 %v853, %v1194
        %v1331 = vmul.f32 %v851, %v1196
        %v1332 = vmul.f32 %v853, %v1196
        %v1333 = vmul.f32 %v851, %v1198
        %v1334 = vmul.f32 %v853, %v1198
        %v1335 = vmul.f32 %v851, %v1200
        %v1336 = vmul.f32 %v853, %v1200
        %v1337 = vpack.c.bf16 %v1209, %v1209
        %v1338 = vpack.c.bf16 %v1210, %v1210
        %v1339 = vpack.c.bf16 %v1211, %v1211
        %v1340 = vpack.c.bf16 %v1212, %v1212
        %v1341 = vpack.c.bf16 %v1213, %v1213
        %v1342 = vpack.c.bf16 %v1214, %v1214
        %v1343 = vpack.c.bf16 %v1215, %v1215
        %v1344 = vpack.c.bf16 %v1216, %v1216
        %v1345 = vpack.c.bf16 %v1217, %v1217
        %v1346 = vpack.c.bf16 %v1218, %v1218
        %v1347 = vpack.c.bf16 %v1219, %v1219
        %v1348 = vpack.c.bf16 %v1220, %v1220
        %v1349 = vpack.c.bf16 %v1221, %v1221
        %v1350 = vpack.c.bf16 %v1222, %v1222
        %v1351 = vpack.c.bf16 %v1223, %v1223
        %v1352 = vpack.c.bf16 %v1224, %v1224
        %v1353 = vpack.c.bf16 %v1225, %v1225
        %v1354 = vpack.c.bf16 %v1226, %v1226
        %v1355 = vpack.c.bf16 %v1227, %v1227
        %v1356 = vpack.c.bf16 %v1228, %v1228
        %v1357 = vpack.c.bf16 %v1229, %v1229
        %v1358 = vpack.c.bf16 %v1230, %v1230
        %v1359 = vpack.c.bf16 %v1231, %v1231
        %v1360 = vpack.c.bf16 %v1232, %v1232
        %v1361 = vpack.c.bf16 %v1233, %v1233
        %v1362 = vpack.c.bf16 %v1234, %v1234
        %v1363 = vpack.c.bf16 %v1235, %v1235
        %v1364 = vpack.c.bf16 %v1236, %v1236
        %v1365 = vpack.c.bf16 %v1237, %v1237
        %v1366 = vpack.c.bf16 %v1238, %v1238
        %v1367 = vpack.c.bf16 %v1239, %v1239
        %v1368 = vpack.c.bf16 %v1240, %v1240
        %v1369 = vpack.c.bf16 %v1241, %v1241
        %v1370 = vpack.c.bf16 %v1242, %v1242
        %v1371 = vpack.c.bf16 %v1243, %v1243
        %v1372 = vpack.c.bf16 %v1244, %v1244
        %v1373 = vpack.c.bf16 %v1245, %v1245
        %v1374 = vpack.c.bf16 %v1246, %v1246
        %v1375 = vpack.c.bf16 %v1247, %v1247
        %v1376 = vpack.c.bf16 %v1248, %v1248
        %v1377 = vpack.c.bf16 %v1249, %v1249
        %v1378 = vpack.c.bf16 %v1250, %v1250
        %v1379 = vpack.c.bf16 %v1251, %v1251
        %v1380 = vpack.c.bf16 %v1252, %v1252
        %v1381 = vpack.c.bf16 %v1253, %v1253
        %v1382 = vpack.c.bf16 %v1254, %v1254
        %v1383 = vpack.c.bf16 %v1255, %v1255
        %v1384 = vpack.c.bf16 %v1256, %v1256
        %v1385 = vpack.c.bf16 %v1257, %v1257
        %v1386 = vpack.c.bf16 %v1258, %v1258
        %v1387 = vpack.c.bf16 %v1259, %v1259
        %v1388 = vpack.c.bf16 %v1260, %v1260
        %v1389 = vpack.c.bf16 %v1261, %v1261
        %v1390 = vpack.c.bf16 %v1262, %v1262
        %v1391 = vpack.c.bf16 %v1263, %v1263
        %v1392 = vpack.c.bf16 %v1264, %v1264
        %v1393 = vpack.c.bf16 %v1265, %v1265
        %v1394 = vpack.c.bf16 %v1266, %v1266
        %v1395 = vpack.c.bf16 %v1267, %v1267
        %v1396 = vpack.c.bf16 %v1268, %v1268
        %v1397 = vpack.c.bf16 %v1269, %v1269
        %v1398 = vpack.c.bf16 %v1270, %v1270
        %v1399 = vpack.c.bf16 %v1271, %v1271
        %v1400 = vpack.c.bf16 %v1272, %v1272
        %v1401 = vpack.c.bf16 %v1273, %v1273
        %v1402 = vpack.c.bf16 %v1274, %v1274
        %v1403 = vpack.c.bf16 %v1275, %v1275
        %v1404 = vpack.c.bf16 %v1276, %v1276
        %v1405 = vpack.c.bf16 %v1277, %v1277
        %v1406 = vpack.c.bf16 %v1278, %v1278
        %v1407 = vpack.c.bf16 %v1279, %v1279
        %v1408 = vpack.c.bf16 %v1280, %v1280
        %v1409 = vpack.c.bf16 %v1281, %v1281
        %v1410 = vpack.c.bf16 %v1282, %v1282
        %v1411 = vpack.c.bf16 %v1283, %v1283
        %v1412 = vpack.c.bf16 %v1284, %v1284
        %v1413 = vpack.c.bf16 %v1285, %v1285
        %v1414 = vpack.c.bf16 %v1286, %v1286
        %v1415 = vpack.c.bf16 %v1287, %v1287
        %v1416 = vpack.c.bf16 %v1288, %v1288
        %v1417 = vpack.c.bf16 %v1289, %v1289
        %v1418 = vpack.c.bf16 %v1290, %v1290
        %v1419 = vpack.c.bf16 %v1291, %v1291
        %v1420 = vpack.c.bf16 %v1292, %v1292
        %v1421 = vpack.c.bf16 %v1293, %v1293
        %v1422 = vpack.c.bf16 %v1294, %v1294
        %v1423 = vpack.c.bf16 %v1295, %v1295
        %v1424 = vpack.c.bf16 %v1296, %v1296
        %v1425 = vpack.c.bf16 %v1297, %v1297
        %v1426 = vpack.c.bf16 %v1298, %v1298
        %v1427 = vpack.c.bf16 %v1299, %v1299
        %v1428 = vpack.c.bf16 %v1300, %v1300
        %v1429 = vpack.c.bf16 %v1301, %v1301
        %v1430 = vpack.c.bf16 %v1302, %v1302
        %v1431 = vpack.c.bf16 %v1303, %v1303
        %v1432 = vpack.c.bf16 %v1304, %v1304
        %v1433 = vpack.c.bf16 %v1305, %v1305
        %v1434 = vpack.c.bf16 %v1306, %v1306
        %v1435 = vpack.c.bf16 %v1307, %v1307
        %v1436 = vpack.c.bf16 %v1308, %v1308
        %v1437 = vpack.c.bf16 %v1309, %v1309
        %v1438 = vpack.c.bf16 %v1310, %v1310
        %v1439 = vpack.c.bf16 %v1311, %v1311
        %v1440 = vpack.c.bf16 %v1312, %v1312
        %v1441 = vpack.c.bf16 %v1313, %v1313
        %v1442 = vpack.c.bf16 %v1314, %v1314
        %v1443 = vpack.c.bf16 %v1315, %v1315
        %v1444 = vpack.c.bf16 %v1316, %v1316
        %v1445 = vpack.c.bf16 %v1317, %v1317
        %v1446 = vpack.c.bf16 %v1318, %v1318
        %v1447 = vpack.c.bf16 %v1319, %v1319
        %v1448 = vpack.c.bf16 %v1320, %v1320
        %v1449 = vpack.c.bf16 %v1321, %v1321
        %v1450 = vpack.c.bf16 %v1322, %v1322
        %v1451 = vpack.c.bf16 %v1323, %v1323
        %v1452 = vpack.c.bf16 %v1324, %v1324
        %v1453 = vpack.c.bf16 %v1325, %v1325
        %v1454 = vpack.c.bf16 %v1326, %v1326
        %v1455 = vpack.c.bf16 %v1327, %v1327
        %v1456 = vpack.c.bf16 %v1328, %v1328
        %v1457 = vpack.c.bf16 %v1329, %v1329
        %v1458 = vpack.c.bf16 %v1330, %v1330
        %v1459 = vpack.c.bf16 %v1331, %v1331
        %v1460 = vpack.c.bf16 %v1332, %v1332
        %v1461 = vpack.c.bf16 %v1333, %v1333
        %v1462 = vpack.c.bf16 %v1334, %v1334
        %v1463 = vpack.c.bf16 %v1335, %v1335
        %v1464 = vpack.c.bf16 %v1336, %v1336
        %v1465 = vpack.c.bf16 %v816, %v816
        %v1466 = vpack.c.bf16 %v818, %v818
        %v1467 = vpack.c.bf16 %v821, %v821
        %v1468 = vpack.c.bf16 %v823, %v823
        %v1469 = vpack.c.bf16 %v826, %v826
        %v1470 = vpack.c.bf16 %v828, %v828
        %v1471 = vpack.c.bf16 %v831, %v831
        %v1472 = vpack.c.bf16 %v833, %v833
        %v1473 = vpack.c.bf16 %v836, %v836
        %v1474 = vpack.c.bf16 %v838, %v838
        %v1475 = vpack.c.bf16 %v841, %v841
        %v1476 = vpack.c.bf16 %v843, %v843
        %v1477 = vpack.c.bf16 %v846, %v846
        %v1478 = vpack.c.bf16 %v848, %v848
        %v1479 = vpack.c.bf16 %v851, %v851
        %v1480 = vpack.c.bf16 %v853, %v853
        %v1483 = vunpack.c.l.b16 %v1465
        %v1484 = vunpack.c.l.b16 %v1466
        %v1485 = vpack.c.b16 %v1484, %v1483
        %v1502 = vunpack.c.l.b16 %v1057
        %v1503 = vunpack.c.l.b16 %v1058
        %v1504 = vunpack.c.l.b16 %v1059
        %v1505 = vunpack.c.l.b16 %v1060
        %v1506 = vunpack.c.l.b16 %v1061
        %v1507 = vunpack.c.l.b16 %v1062
        %v1508 = vunpack.c.l.b16 %v1063
        %v1509 = vunpack.c.l.b16 %v1064
        %v1510 = vunpack.c.l.b16 %v1065
        %v1511 = vunpack.c.l.b16 %v1066
        %v1512 = vunpack.c.l.b16 %v1067
        %v1513 = vunpack.c.l.b16 %v1068
        %v1514 = vunpack.c.l.b16 %v1069
        %v1515 = vunpack.c.l.b16 %v1070
        %v1516 = vunpack.c.l.b16 %v1071
        %v1517 = vunpack.c.l.b16 %v1072
        %v1518 = vpack.c.b16 %v1503, %v1502
        %v1519 = vpack.c.b16 %v1505, %v1504
        %v1520 = vpack.c.b16 %v1507, %v1506
        %v1521 = vpack.c.b16 %v1509, %v1508
        %v1522 = vpack.c.b16 %v1511, %v1510
        %v1523 = vpack.c.b16 %v1513, %v1512
        %v1524 = vpack.c.b16 %v1515, %v1514
        %v1525 = vpack.c.b16 %v1517, %v1516
        %1526 = vrot.lane.b32.xlu0 %v1518, 96
        %v1527 = vpop.permute.xlu0 %1526
        %1528 = vrot.lane.b32.xlu0 %v1519, 96
        %v1529 = vpop.permute.xlu0 %1528
        %1530 = vrot.lane.b32.xlu0 %v1520, 96
        %v1531 = vpop.permute.xlu0 %1530
        %1532 = vrot.lane.b32.xlu0 %v1521, 96
        %v1533 = vpop.permute.xlu0 %1532
        %1534 = vrot.lane.b32.xlu0 %v1522, 96
        %v1535 = vpop.permute.xlu0 %1534
        %1536 = vrot.lane.b32.xlu0 %v1523, 96
        %v1537 = vpop.permute.xlu0 %1536
        %1538 = vrot.lane.b32.xlu0 %v1524, 96
        %v1539 = vpop.permute.xlu0 %1538
        %1540 = vrot.lane.b32.xlu0 %v1525, 96
        %v1541 = vpop.permute.xlu0 %1540
        %v1543 = vsel %vm368, %v1485, 0
        %v1546 = vsel %vm368, %v1527, 0
        %v1549 = vsel %vm368, %v1529, 0
        %v1552 = vsel %vm368, %v1531, 0
        %v1555 = vsel %vm368, %v1533, 0
        %v1558 = vsel %vm368, %v1535, 0
        %v1561 = vsel %vm368, %v1537, 0
        %v1564 = vsel %vm368, %v1539, 0
        %v1567 = vsel %vm368, %v1541, 0
        %1569 = vmatpush.bf16.xpose.msra.mxu0 %v1567
        %1570 = vmatpush.bf16.xpose.msra.mxu0 %v1564
        %1571 = vmatpush.bf16.xpose.msra.mxu0 %v1561
        %1572 = vmatpush.bf16.xpose.msra.mxu0 %v1558
        %1573 = vmatpush.bf16.xpose.msra.mxu0 %v1555
        %1574 = vmatpush.bf16.xpose.msra.mxu0 %v1552
        %1575 = vmatpush.bf16.xpose.msra.mxu0 %v1549
        %1576 = vmatpush.bf16.xpose.msra.mxu0 %v1546
        %1577 = vmatmul.bf16.gmra.mxu0 %v1543
        %v1578 = vpop.f32.mrf.mxu0
        %v1579 = vadd.f32 0.0, %v1578
        %v1580 = vpop.f32.mrf.mxu0
        %v1581 = vadd.f32 0.0, %v1580
        %1582 = vdwg.mxu0
        %v1585 = vunpack.c.l.b16 %v1467
        %v1586 = vunpack.c.l.b16 %v1468
        %v1587 = vpack.c.b16 %v1586, %v1585
        %v1604 = vunpack.c.l.b16 %v1073
        %v1605 = vunpack.c.l.b16 %v1074
        %v1606 = vunpack.c.l.b16 %v1075
        %v1607 = vunpack.c.l.b16 %v1076
        %v1608 = vunpack.c.l.b16 %v1077
        %v1609 = vunpack.c.l.b16 %v1078
        %v1610 = vunpack.c.l.b16 %v1079
        %v1611 = vunpack.c.l.b16 %v1080
        %v1612 = vunpack.c.l.b16 %v1081
        %v1613 = vunpack.c.l.b16 %v1082
        %v1614 = vunpack.c.l.b16 %v1083
        %v1615 = vunpack.c.l.b16 %v1084
        %v1616 = vunpack.c.l.b16 %v1085
        %v1617 = vunpack.c.l.b16 %v1086
        %v1618 = vunpack.c.l.b16 %v1087
        %v1619 = vunpack.c.l.b16 %v1088
        %v1620 = vpack.c.b16 %v1605, %v1604
        %v1621 = vpack.c.b16 %v1607, %v1606
        %v1622 = vpack.c.b16 %v1609, %v1608
        %v1623 = vpack.c.b16 %v1611, %v1610
        %v1624 = vpack.c.b16 %v1613, %v1612
        %v1625 = vpack.c.b16 %v1615, %v1614
        %v1626 = vpack.c.b16 %v1617, %v1616
        %v1627 = vpack.c.b16 %v1619, %v1618
        %1628 = vrot.lane.b32.xlu0 %v1620, 96
        %v1629 = vpop.permute.xlu0 %1628
        %1630 = vrot.lane.b32.xlu0 %v1621, 96
        %v1631 = vpop.permute.xlu0 %1630
        %1632 = vrot.lane.b32.xlu0 %v1622, 96
        %v1633 = vpop.permute.xlu0 %1632
        %1634 = vrot.lane.b32.xlu0 %v1623, 96
        %v1635 = vpop.permute.xlu0 %1634
        %1636 = vrot.lane.b32.xlu0 %v1624, 96
        %v1637 = vpop.permute.xlu0 %1636
        %1638 = vrot.lane.b32.xlu0 %v1625, 96
        %v1639 = vpop.permute.xlu0 %1638
        %1640 = vrot.lane.b32.xlu0 %v1626, 96
        %v1641 = vpop.permute.xlu0 %1640
        %1642 = vrot.lane.b32.xlu0 %v1627, 96
        %v1643 = vpop.permute.xlu0 %1642
        %v1645 = vsel %vm368, %v1587, 0
        %v1648 = vsel %vm368, %v1629, 0
        %v1651 = vsel %vm368, %v1631, 0
        %v1654 = vsel %vm368, %v1633, 0
        %v1657 = vsel %vm368, %v1635, 0
        %v1660 = vsel %vm368, %v1637, 0
        %v1663 = vsel %vm368, %v1639, 0
        %v1666 = vsel %vm368, %v1641, 0
        %v1669 = vsel %vm368, %v1643, 0
        %1671 = vmatpush.bf16.xpose.msra.mxu0 %v1669
        %1672 = vmatpush.bf16.xpose.msra.mxu0 %v1666
        %1673 = vmatpush.bf16.xpose.msra.mxu0 %v1663
        %1674 = vmatpush.bf16.xpose.msra.mxu0 %v1660
        %1675 = vmatpush.bf16.xpose.msra.mxu0 %v1657
        %1676 = vmatpush.bf16.xpose.msra.mxu0 %v1654
        %1677 = vmatpush.bf16.xpose.msra.mxu0 %v1651
        %1678 = vmatpush.bf16.xpose.msra.mxu0 %v1648
        %1679 = vmatmul.bf16.gmra.mxu0 %v1645
        %v1680 = vpop.f32.mrf.mxu0
        %v1681 = vadd.f32 0.0, %v1680
        %v1682 = vpop.f32.mrf.mxu0
        %v1683 = vadd.f32 0.0, %v1682
        %1684 = vdwg.mxu0
        %v1687 = vunpack.c.l.b16 %v1469
        %v1688 = vunpack.c.l.b16 %v1470
        %v1689 = vpack.c.b16 %v1688, %v1687
        %v1706 = vunpack.c.l.b16 %v1089
        %v1707 = vunpack.c.l.b16 %v1090
        %v1708 = vunpack.c.l.b16 %v1091
        %v1709 = vunpack.c.l.b16 %v1092
        %v1710 = vunpack.c.l.b16 %v1093
        %v1711 = vunpack.c.l.b16 %v1094
        %v1712 = vunpack.c.l.b16 %v1095
        %v1713 = vunpack.c.l.b16 %v1096
        %v1714 = vunpack.c.l.b16 %v1097
        %v1715 = vunpack.c.l.b16 %v1098
        %v1716 = vunpack.c.l.b16 %v1099
        %v1717 = vunpack.c.l.b16 %v1100
        %v1718 = vunpack.c.l.b16 %v1101
        %v1719 = vunpack.c.l.b16 %v1102
        %v1720 = vunpack.c.l.b16 %v1103
        %v1721 = vunpack.c.l.b16 %v1104
        %v1722 = vpack.c.b16 %v1707, %v1706
        %v1723 = vpack.c.b16 %v1709, %v1708
        %v1724 = vpack.c.b16 %v1711, %v1710
        %v1725 = vpack.c.b16 %v1713, %v1712
        %v1726 = vpack.c.b16 %v1715, %v1714
        %v1727 = vpack.c.b16 %v1717, %v1716
        %v1728 = vpack.c.b16 %v1719, %v1718
        %v1729 = vpack.c.b16 %v1721, %v1720
        %1730 = vrot.lane.b32.xlu0 %v1722, 96
        %v1731 = vpop.permute.xlu0 %1730
        %1732 = vrot.lane.b32.xlu0 %v1723, 96
        %v1733 = vpop.permute.xlu0 %1732
        %1734 = vrot.lane.b32.xlu0 %v1724, 96
        %v1735 = vpop.permute.xlu0 %1734
        %1736 = vrot.lane.b32.xlu0 %v1725, 96
        %v1737 = vpop.permute.xlu0 %1736
        %1738 = vrot.lane.b32.xlu0 %v1726, 96
        %v1739 = vpop.permute.xlu0 %1738
        %1740 = vrot.lane.b32.xlu0 %v1727, 96
        %v1741 = vpop.permute.xlu0 %1740
        %1742 = vrot.lane.b32.xlu0 %v1728, 96
        %v1743 = vpop.permute.xlu0 %1742
        %1744 = vrot.lane.b32.xlu0 %v1729, 96
        %v1745 = vpop.permute.xlu0 %1744
        %v1747 = vsel %vm368, %v1689, 0
        %v1750 = vsel %vm368, %v1731, 0
        %v1753 = vsel %vm368, %v1733, 0
        %v1756 = vsel %vm368, %v1735, 0
        %v1759 = vsel %vm368, %v1737, 0
        %v1762 = vsel %vm368, %v1739, 0
        %v1765 = vsel %vm368, %v1741, 0
        %v1768 = vsel %vm368, %v1743, 0
        %v1771 = vsel %vm368, %v1745, 0
        %1773 = vmatpush.bf16.xpose.msra.mxu0 %v1771
        %1774 = vmatpush.bf16.xpose.msra.mxu0 %v1768
        %1775 = vmatpush.bf16.xpose.msra.mxu0 %v1765
        %1776 = vmatpush.bf16.xpose.msra.mxu0 %v1762
        %1777 = vmatpush.bf16.xpose.msra.mxu0 %v1759
        %1778 = vmatpush.bf16.xpose.msra.mxu0 %v1756
        %1779 = vmatpush.bf16.xpose.msra.mxu0 %v1753
        %1780 = vmatpush.bf16.xpose.msra.mxu0 %v1750
        %1781 = vmatmul.bf16.gmra.mxu0 %v1747
        %v1782 = vpop.f32.mrf.mxu0
        %v1783 = vadd.f32 0.0, %v1782
        %v1784 = vpop.f32.mrf.mxu0
        %v1785 = vadd.f32 0.0, %v1784
        %1786 = vdwg.mxu0
        %v1789 = vunpack.c.l.b16 %v1471
        %v1790 = vunpack.c.l.b16 %v1472
        %v1791 = vpack.c.b16 %v1790, %v1789
        %v1808 = vunpack.c.l.b16 %v1105
        %v1809 = vunpack.c.l.b16 %v1106
        %v1810 = vunpack.c.l.b16 %v1107
        %v1811 = vunpack.c.l.b16 %v1108
        %v1812 = vunpack.c.l.b16 %v1109
        %v1813 = vunpack.c.l.b16 %v1110
        %v1814 = vunpack.c.l.b16 %v1111
        %v1815 = vunpack.c.l.b16 %v1112
        %v1816 = vunpack.c.l.b16 %v1113
        %v1817 = vunpack.c.l.b16 %v1114
        %v1818 = vunpack.c.l.b16 %v1115
        %v1819 = vunpack.c.l.b16 %v1116
        %v1820 = vunpack.c.l.b16 %v1117
        %v1821 = vunpack.c.l.b16 %v1118
        %v1822 = vunpack.c.l.b16 %v1119
        %v1823 = vunpack.c.l.b16 %v1120
        %v1824 = vpack.c.b16 %v1809, %v1808
        %v1825 = vpack.c.b16 %v1811, %v1810
        %v1826 = vpack.c.b16 %v1813, %v1812
        %v1827 = vpack.c.b16 %v1815, %v1814
        %v1828 = vpack.c.b16 %v1817, %v1816
        %v1829 = vpack.c.b16 %v1819, %v1818
        %v1830 = vpack.c.b16 %v1821, %v1820
        %v1831 = vpack.c.b16 %v1823, %v1822
        %1832 = vrot.lane.b32.xlu0 %v1824, 96
        %v1833 = vpop.permute.xlu0 %1832
        %1834 = vrot.lane.b32.xlu0 %v1825, 96
        %v1835 = vpop.permute.xlu0 %1834
        %1836 = vrot.lane.b32.xlu0 %v1826, 96
        %v1837 = vpop.permute.xlu0 %1836
        %1838 = vrot.lane.b32.xlu0 %v1827, 96
        %v1839 = vpop.permute.xlu0 %1838
        %1840 = vrot.lane.b32.xlu0 %v1828, 96
        %v1841 = vpop.permute.xlu0 %1840
        %1842 = vrot.lane.b32.xlu0 %v1829, 96
        %v1843 = vpop.permute.xlu0 %1842
        %1844 = vrot.lane.b32.xlu0 %v1830, 96
        %v1845 = vpop.permute.xlu0 %1844
        %1846 = vrot.lane.b32.xlu0 %v1831, 96
        %v1847 = vpop.permute.xlu0 %1846
        %v1849 = vsel %vm368, %v1791, 0
        %v1852 = vsel %vm368, %v1833, 0
        %v1855 = vsel %vm368, %v1835, 0
        %v1858 = vsel %vm368, %v1837, 0
        %v1861 = vsel %vm368, %v1839, 0
        %v1864 = vsel %vm368, %v1841, 0
        %v1867 = vsel %vm368, %v1843, 0
        %v1870 = vsel %vm368, %v1845, 0
        %v1873 = vsel %vm368, %v1847, 0
        %1875 = vmatpush.bf16.xpose.msra.mxu0 %v1873
        %1876 = vmatpush.bf16.xpose.msra.mxu0 %v1870
        %1877 = vmatpush.bf16.xpose.msra.mxu0 %v1867
        %1878 = vmatpush.bf16.xpose.msra.mxu0 %v1864
        %1879 = vmatpush.bf16.xpose.msra.mxu0 %v1861
        %1880 = vmatpush.bf16.xpose.msra.mxu0 %v1858
        %1881 = vmatpush.bf16.xpose.msra.mxu0 %v1855
        %1882 = vmatpush.bf16.xpose.msra.mxu0 %v1852
        %1883 = vmatmul.bf16.gmra.mxu0 %v1849
        %v1884 = vpop.f32.mrf.mxu0
        %v1885 = vadd.f32 0.0, %v1884
        %v1886 = vpop.f32.mrf.mxu0
        %v1887 = vadd.f32 0.0, %v1886
        %1888 = vdwg.mxu0
        %v1891 = vunpack.c.l.b16 %v1473
        %v1892 = vunpack.c.l.b16 %v1474
        %v1893 = vpack.c.b16 %v1892, %v1891
        %v1910 = vunpack.c.l.b16 %v1121
        %v1911 = vunpack.c.l.b16 %v1122
        %v1912 = vunpack.c.l.b16 %v1123
        %v1913 = vunpack.c.l.b16 %v1124
        %v1914 = vunpack.c.l.b16 %v1125
        %v1915 = vunpack.c.l.b16 %v1126
        %v1916 = vunpack.c.l.b16 %v1127
        %v1917 = vunpack.c.l.b16 %v1128
        %v1918 = vunpack.c.l.b16 %v1129
        %v1919 = vunpack.c.l.b16 %v1130
        %v1920 = vunpack.c.l.b16 %v1131
        %v1921 = vunpack.c.l.b16 %v1132
        %v1922 = vunpack.c.l.b16 %v1133
        %v1923 = vunpack.c.l.b16 %v1134
        %v1924 = vunpack.c.l.b16 %v1135
        %v1925 = vunpack.c.l.b16 %v1136
        %v1926 = vpack.c.b16 %v1911, %v1910
        %v1927 = vpack.c.b16 %v1913, %v1912
        %v1928 = vpack.c.b16 %v1915, %v1914
        %v1929 = vpack.c.b16 %v1917, %v1916
        %v1930 = vpack.c.b16 %v1919, %v1918
        %v1931 = vpack.c.b16 %v1921, %v1920
        %v1932 = vpack.c.b16 %v1923, %v1922
        %v1933 = vpack.c.b16 %v1925, %v1924
        %1934 = vrot.lane.b32.xlu0 %v1926, 96
        %v1935 = vpop.permute.xlu0 %1934
        %1936 = vrot.lane.b32.xlu0 %v1927, 96
        %v1937 = vpop.permute.xlu0 %1936
        %1938 = vrot.lane.b32.xlu0 %v1928, 96
        %v1939 = vpop.permute.xlu0 %1938
        %1940 = vrot.lane.b32.xlu0 %v1929, 96
        %v1941 = vpop.permute.xlu0 %1940
        %1942 = vrot.lane.b32.xlu0 %v1930, 96
        %v1943 = vpop.permute.xlu0 %1942
        %1944 = vrot.lane.b32.xlu0 %v1931, 96
        %v1945 = vpop.permute.xlu0 %1944
        %1946 = vrot.lane.b32.xlu0 %v1932, 96
        %v1947 = vpop.permute.xlu0 %1946
        %1948 = vrot.lane.b32.xlu0 %v1933, 96
        %v1949 = vpop.permute.xlu0 %1948
        %v1951 = vsel %vm368, %v1893, 0
        %v1954 = vsel %vm368, %v1935, 0
        %v1957 = vsel %vm368, %v1937, 0
        %v1960 = vsel %vm368, %v1939, 0
        %v1963 = vsel %vm368, %v1941, 0
        %v1966 = vsel %vm368, %v1943, 0
        %v1969 = vsel %vm368, %v1945, 0
        %v1972 = vsel %vm368, %v1947, 0
        %v1975 = vsel %vm368, %v1949, 0
        %1977 = vmatpush.bf16.xpose.msra.mxu0 %v1975
        %1978 = vmatpush.bf16.xpose.msra.mxu0 %v1972
        %1979 = vmatpush.bf16.xpose.msra.mxu0 %v1969
        %1980 = vmatpush.bf16.xpose.msra.mxu0 %v1966
        %1981 = vmatpush.bf16.xpose.msra.mxu0 %v1963
        %1982 = vmatpush.bf16.xpose.msra.mxu0 %v1960
        %1983 = vmatpush.bf16.xpose.msra.mxu0 %v1957
        %1984 = vmatpush.bf16.xpose.msra.mxu0 %v1954
        %1985 = vmatmul.bf16.gmra.mxu0 %v1951
        %v1986 = vpop.f32.mrf.mxu0
        %v1987 = vadd.f32 0.0, %v1986
        %v1988 = vpop.f32.mrf.mxu0
        %v1989 = vadd.f32 0.0, %v1988
        %1990 = vdwg.mxu0
        %v1993 = vunpack.c.l.b16 %v1475
        %v1994 = vunpack.c.l.b16 %v1476
        %v1995 = vpack.c.b16 %v1994, %v1993
        %v2012 = vunpack.c.l.b16 %v1137
        %v2013 = vunpack.c.l.b16 %v1138
        %v2014 = vunpack.c.l.b16 %v1139
        %v2015 = vunpack.c.l.b16 %v1140
        %v2016 = vunpack.c.l.b16 %v1141
        %v2017 = vunpack.c.l.b16 %v1142
        %v2018 = vunpack.c.l.b16 %v1143
        %v2019 = vunpack.c.l.b16 %v1144
        %v2020 = vunpack.c.l.b16 %v1145
        %v2021 = vunpack.c.l.b16 %v1146
        %v2022 = vunpack.c.l.b16 %v1147
        %v2023 = vunpack.c.l.b16 %v1148
        %v2024 = vunpack.c.l.b16 %v1149
        %v2025 = vunpack.c.l.b16 %v1150
        %v2026 = vunpack.c.l.b16 %v1151
        %v2027 = vunpack.c.l.b16 %v1152
        %v2028 = vpack.c.b16 %v2013, %v2012
        %v2029 = vpack.c.b16 %v2015, %v2014
        %v2030 = vpack.c.b16 %v2017, %v2016
        %v2031 = vpack.c.b16 %v2019, %v2018
        %v2032 = vpack.c.b16 %v2021, %v2020
        %v2033 = vpack.c.b16 %v2023, %v2022
        %v2034 = vpack.c.b16 %v2025, %v2024
        %v2035 = vpack.c.b16 %v2027, %v2026
        %2036 = vrot.lane.b32.xlu0 %v2028, 96
        %v2037 = vpop.permute.xlu0 %2036
        %2038 = vrot.lane.b32.xlu0 %v2029, 96
        %v2039 = vpop.permute.xlu0 %2038
        %2040 = vrot.lane.b32.xlu0 %v2030, 96
        %v2041 = vpop.permute.xlu0 %2040
        %2042 = vrot.lane.b32.xlu0 %v2031, 96
        %v2043 = vpop.permute.xlu0 %2042
        %2044 = vrot.lane.b32.xlu0 %v2032, 96
        %v2045 = vpop.permute.xlu0 %2044
        %2046 = vrot.lane.b32.xlu0 %v2033, 96
        %v2047 = vpop.permute.xlu0 %2046
        %2048 = vrot.lane.b32.xlu0 %v2034, 96
        %v2049 = vpop.permute.xlu0 %2048
        %2050 = vrot.lane.b32.xlu0 %v2035, 96
        %v2051 = vpop.permute.xlu0 %2050
        %v2053 = vsel %vm368, %v1995, 0
        %v2056 = vsel %vm368, %v2037, 0
        %v2059 = vsel %vm368, %v2039, 0
        %v2062 = vsel %vm368, %v2041, 0
        %v2065 = vsel %vm368, %v2043, 0
        %v2068 = vsel %vm368, %v2045, 0
        %v2071 = vsel %vm368, %v2047, 0
        %v2074 = vsel %vm368, %v2049, 0
        %v2077 = vsel %vm368, %v2051, 0
        %2079 = vmatpush.bf16.xpose.msra.mxu0 %v2077
        %2080 = vmatpush.bf16.xpose.msra.mxu0 %v2074
        %2081 = vmatpush.bf16.xpose.msra.mxu0 %v2071
        %2082 = vmatpush.bf16.xpose.msra.mxu0 %v2068
        %2083 = vmatpush.bf16.xpose.msra.mxu0 %v2065
        %2084 = vmatpush.bf16.xpose.msra.mxu0 %v2062
        %2085 = vmatpush.bf16.xpose.msra.mxu0 %v2059
        %2086 = vmatpush.bf16.xpose.msra.mxu0 %v2056
        %2087 = vmatmul.bf16.gmra.mxu0 %v2053
        %v2088 = vpop.f32.mrf.mxu0
        %v2089 = vadd.f32 0.0, %v2088
        %v2090 = vpop.f32.mrf.mxu0
        %v2091 = vadd.f32 0.0, %v2090
        %2092 = vdwg.mxu0
        %v2095 = vunpack.c.l.b16 %v1477
        %v2096 = vunpack.c.l.b16 %v1478
        %v2097 = vpack.c.b16 %v2096, %v2095
        %v2114 = vunpack.c.l.b16 %v1153
        %v2115 = vunpack.c.l.b16 %v1154
        %v2116 = vunpack.c.l.b16 %v1155
        %v2117 = vunpack.c.l.b16 %v1156
        %v2118 = vunpack.c.l.b16 %v1157
        %v2119 = vunpack.c.l.b16 %v1158
        %v2120 = vunpack.c.l.b16 %v1159
        %v2121 = vunpack.c.l.b16 %v1160
        %v2122 = vunpack.c.l.b16 %v1161
        %v2123 = vunpack.c.l.b16 %v1162
        %v2124 = vunpack.c.l.b16 %v1163
        %v2125 = vunpack.c.l.b16 %v1164
        %v2126 = vunpack.c.l.b16 %v1165
        %v2127 = vunpack.c.l.b16 %v1166
        %v2128 = vunpack.c.l.b16 %v1167
        %v2129 = vunpack.c.l.b16 %v1168
        %v2130 = vpack.c.b16 %v2115, %v2114
        %v2131 = vpack.c.b16 %v2117, %v2116
        %v2132 = vpack.c.b16 %v2119, %v2118
        %v2133 = vpack.c.b16 %v2121, %v2120
        %v2134 = vpack.c.b16 %v2123, %v2122
        %v2135 = vpack.c.b16 %v2125, %v2124
        %v2136 = vpack.c.b16 %v2127, %v2126
        %v2137 = vpack.c.b16 %v2129, %v2128
        %2138 = vrot.lane.b32.xlu0 %v2130, 96
        %v2139 = vpop.permute.xlu0 %2138
        %2140 = vrot.lane.b32.xlu0 %v2131, 96
        %v2141 = vpop.permute.xlu0 %2140
        %2142 = vrot.lane.b32.xlu0 %v2132, 96
        %v2143 = vpop.permute.xlu0 %2142
        %2144 = vrot.lane.b32.xlu0 %v2133, 96
        %v2145 = vpop.permute.xlu0 %2144
        %2146 = vrot.lane.b32.xlu0 %v2134, 96
        %v2147 = vpop.permute.xlu0 %2146
        %2148 = vrot.lane.b32.xlu0 %v2135, 96
        %v2149 = vpop.permute.xlu0 %2148
        %2150 = vrot.lane.b32.xlu0 %v2136, 96
        %v2151 = vpop.permute.xlu0 %2150
        %2152 = vrot.lane.b32.xlu0 %v2137, 96
        %v2153 = vpop.permute.xlu0 %2152
        %v2155 = vsel %vm368, %v2097, 0
        %v2158 = vsel %vm368, %v2139, 0
        %v2161 = vsel %vm368, %v2141, 0
        %v2164 = vsel %vm368, %v2143, 0
        %v2167 = vsel %vm368, %v2145, 0
        %v2170 = vsel %vm368, %v2147, 0
        %v2173 = vsel %vm368, %v2149, 0
        %v2176 = vsel %vm368, %v2151, 0
        %v2179 = vsel %vm368, %v2153, 0
        %2181 = vmatpush.bf16.xpose.msra.mxu0 %v2179
        %2182 = vmatpush.bf16.xpose.msra.mxu0 %v2176
        %2183 = vmatpush.bf16.xpose.msra.mxu0 %v2173
        %2184 = vmatpush.bf16.xpose.msra.mxu0 %v2170
        %2185 = vmatpush.bf16.xpose.msra.mxu0 %v2167
        %2186 = vmatpush.bf16.xpose.msra.mxu0 %v2164
        %2187 = vmatpush.bf16.xpose.msra.mxu0 %v2161
        %2188 = vmatpush.bf16.xpose.msra.mxu0 %v2158
        %2189 = vmatmul.bf16.gmra.mxu0 %v2155
        %v2190 = vpop.f32.mrf.mxu0
        %v2191 = vadd.f32 0.0, %v2190
        %v2192 = vpop.f32.mrf.mxu0
        %v2193 = vadd.f32 0.0, %v2192
        %2194 = vdwg.mxu0
        %v2197 = vunpack.c.l.b16 %v1479
        %v2198 = vunpack.c.l.b16 %v1480
        %v2199 = vpack.c.b16 %v2198, %v2197
        %v2216 = vunpack.c.l.b16 %v1169
        %v2217 = vunpack.c.l.b16 %v1170
        %v2218 = vunpack.c.l.b16 %v1171
        %v2219 = vunpack.c.l.b16 %v1172
        %v2220 = vunpack.c.l.b16 %v1173
        %v2221 = vunpack.c.l.b16 %v1174
        %v2222 = vunpack.c.l.b16 %v1175
        %v2223 = vunpack.c.l.b16 %v1176
        %v2224 = vunpack.c.l.b16 %v1177
        %v2225 = vunpack.c.l.b16 %v1178
        %v2226 = vunpack.c.l.b16 %v1179
        %v2227 = vunpack.c.l.b16 %v1180
        %v2228 = vunpack.c.l.b16 %v1181
        %v2229 = vunpack.c.l.b16 %v1182
        %v2230 = vunpack.c.l.b16 %v1183
        %v2231 = vunpack.c.l.b16 %v1184
        %v2232 = vpack.c.b16 %v2217, %v2216
        %v2233 = vpack.c.b16 %v2219, %v2218
        %v2234 = vpack.c.b16 %v2221, %v2220
        %v2235 = vpack.c.b16 %v2223, %v2222
        %v2236 = vpack.c.b16 %v2225, %v2224
        %v2237 = vpack.c.b16 %v2227, %v2226
        %v2238 = vpack.c.b16 %v2229, %v2228
        %v2239 = vpack.c.b16 %v2231, %v2230
        %2240 = vrot.lane.b32.xlu0 %v2232, 96
        %v2241 = vpop.permute.xlu0 %2240
        %2242 = vrot.lane.b32.xlu0 %v2233, 96
        %v2243 = vpop.permute.xlu0 %2242
        %2244 = vrot.lane.b32.xlu0 %v2234, 96
        %v2245 = vpop.permute.xlu0 %2244
        %2246 = vrot.lane.b32.xlu0 %v2235, 96
        %v2247 = vpop.permute.xlu0 %2246
        %2248 = vrot.lane.b32.xlu0 %v2236, 96
        %v2249 = vpop.permute.xlu0 %2248
        %2250 = vrot.lane.b32.xlu0 %v2237, 96
        %v2251 = vpop.permute.xlu0 %2250
        %2252 = vrot.lane.b32.xlu0 %v2238, 96
        %v2253 = vpop.permute.xlu0 %2252
        %2254 = vrot.lane.b32.xlu0 %v2239, 96
        %v2255 = vpop.permute.xlu0 %2254
        %v2257 = vsel %vm368, %v2199, 0
        %v2260 = vsel %vm368, %v2241, 0
        %v2263 = vsel %vm368, %v2243, 0
        %v2266 = vsel %vm368, %v2245, 0
        %v2269 = vsel %vm368, %v2247, 0
        %v2272 = vsel %vm368, %v2249, 0
        %v2275 = vsel %vm368, %v2251, 0
        %v2278 = vsel %vm368, %v2253, 0
        %v2281 = vsel %vm368, %v2255, 0
        %2283 = vmatpush.bf16.xpose.msra.mxu0 %v2281
        %2284 = vmatpush.bf16.xpose.msra.mxu0 %v2278
        %2285 = vmatpush.bf16.xpose.msra.mxu0 %v2275
        %2286 = vmatpush.bf16.xpose.msra.mxu0 %v2272
        %2287 = vmatpush.bf16.xpose.msra.mxu0 %v2269
        %2288 = vmatpush.bf16.xpose.msra.mxu0 %v2266
        %2289 = vmatpush.bf16.xpose.msra.mxu0 %v2263
        %2290 = vmatpush.bf16.xpose.msra.mxu0 %v2260
        %2291 = vmatmul.bf16.gmra.mxu0 %v2257
        %v2292 = vpop.f32.mrf.mxu0
        %v2293 = vadd.f32 0.0, %v2292
        %v2294 = vpop.f32.mrf.mxu0
        %v2295 = vadd.f32 0.0, %v2294
        %2296 = vdwg.mxu0
        %2297 = vmax.xlane.f32.xlu0 %v1579
        %v2298 = vpop.xlane.xlu0 %2297
        %2299 = vmax.xlane.f32.xlu0 %v1581
        %v2300 = vpop.xlane.xlu0 %2299
        %2301 = vmax.xlane.f32.xlu0 %v1681
        %v2302 = vpop.xlane.xlu0 %2301
        %2303 = vmax.xlane.f32.xlu0 %v1683
        %v2304 = vpop.xlane.xlu0 %2303
        %2305 = vmax.xlane.f32.xlu0 %v1783
        %v2306 = vpop.xlane.xlu0 %2305
        %2307 = vmax.xlane.f32.xlu0 %v1785
        %v2308 = vpop.xlane.xlu0 %2307
        %2309 = vmax.xlane.f32.xlu0 %v1885
        %v2310 = vpop.xlane.xlu0 %2309
        %2311 = vmax.xlane.f32.xlu0 %v1887
        %v2312 = vpop.xlane.xlu0 %2311
        %2313 = vmax.xlane.f32.xlu0 %v1987
        %v2314 = vpop.xlane.xlu0 %2313
        %2315 = vmax.xlane.f32.xlu0 %v1989
        %v2316 = vpop.xlane.xlu0 %2315
        %2317 = vmax.xlane.f32.xlu0 %v2089
        %v2318 = vpop.xlane.xlu0 %2317
        %2319 = vmax.xlane.f32.xlu0 %v2091
        %v2320 = vpop.xlane.xlu0 %2319
        %2321 = vmax.xlane.f32.xlu0 %v2191
        %v2322 = vpop.xlane.xlu0 %2321
        %2323 = vmax.xlane.f32.xlu0 %v2193
        %v2324 = vpop.xlane.xlu0 %2323
        %2325 = vmax.xlane.f32.xlu0 %v2293
        %v2326 = vpop.xlane.xlu0 %2325
        %2327 = vmax.xlane.f32.xlu0 %v2295
        %v2328 = vpop.xlane.xlu0 %2327
        %v2329 = vsub.f32 %v1579, %v2298
        %v2330 = vsub.f32 %v1581, %v2300
        %v2331 = vsub.f32 %v1681, %v2302
        %v2332 = vsub.f32 %v1683, %v2304
        %v2333 = vsub.f32 %v1783, %v2306
        %v2334 = vsub.f32 %v1785, %v2308
        %v2335 = vsub.f32 %v1885, %v2310
        %v2336 = vsub.f32 %v1887, %v2312
        %v2337 = vsub.f32 %v1987, %v2314
        %v2338 = vsub.f32 %v1989, %v2316
        %v2339 = vsub.f32 %v2089, %v2318
        %v2340 = vsub.f32 %v2091, %v2320
        %v2341 = vsub.f32 %v2191, %v2322
        %v2342 = vsub.f32 %v2193, %v2324
        %v2343 = vsub.f32 %v2293, %v2326
        %v2344 = vsub.f32 %v2295, %v2328
        %v2345 = vmul.f32 %v2329, 1.442695
        %v2346 = vpow.pop %v2345
        %v2347 = vmul.f32 %v2330, 1.442695
        %v2348 = vpow.pop %v2347
        %v2349 = vmul.f32 %v2331, 1.442695
        %v2350 = vpow.pop %v2349
        %v2351 = vmul.f32 %v2332, 1.442695
        %v2352 = vpow.pop %v2351
        %v2353 = vmul.f32 %v2333, 1.442695
        %v2354 = vpow.pop %v2353
        %v2355 = vmul.f32 %v2334, 1.442695
        %v2356 = vpow.pop %v2355
        %v2357 = vmul.f32 %v2335, 1.442695
        %v2358 = vpow.pop %v2357
        %v2359 = vmul.f32 %v2336, 1.442695
        %v2360 = vpow.pop %v2359
        %v2361 = vmul.f32 %v2337, 1.442695
        %v2362 = vpow.pop %v2361
        %v2363 = vmul.f32 %v2338, 1.442695
        %v2364 = vpow.pop %v2363
        %v2365 = vmul.f32 %v2339, 1.442695
        %v2366 = vpow.pop %v2365
        %v2367 = vmul.f32 %v2340, 1.442695
        %v2368 = vpow.pop %v2367
        %v2369 = vmul.f32 %v2341, 1.442695
        %v2370 = vpow.pop %v2369
        %v2371 = vmul.f32 %v2342, 1.442695
        %v2372 = vpow.pop %v2371
        %v2373 = vmul.f32 %v2343, 1.442695
        %v2374 = vpow.pop %v2373
        %v2375 = vmul.f32 %v2344, 1.442695
        %v2376 = vpow.pop %v2375
        %v2377 = vlaneseq
        %v2378 = vshrl.u32 %v2377, 7
        %v2379 = vadd.s32 %v2378, 8
        %v2380 = vadd.s32 %v2378, 16
        %v2381 = vadd.s32 %v2378, 24
        %v2382 = vadd.s32 %v2378, 32
        %v2383 = vadd.s32 %v2378, 40
        %v2384 = vadd.s32 %v2378, 48
        %v2385 = vadd.s32 %v2378, 56
        %v2386 = vadd.s32 %v2378, 64
        %v2387 = vadd.s32 %v2378, 72
        %v2388 = vadd.s32 %v2378, 80
        %v2389 = vadd.s32 %v2378, 88
        %v2390 = vadd.s32 %v2378, 96
        %v2391 = vadd.s32 %v2378, 104
        %v2392 = vadd.s32 %v2378, 112
        %v2393 = vadd.s32 %v2378, 120
        %v2394 = vmul.u32 %v856, 16
        %vm2395 = vcmp.ge.s32.totalorder %v2378, %v2394
        %vm2396 = vcmp.ge.s32.totalorder %v2379, %v2394
        %vm2397 = vcmp.ge.s32.totalorder %v2380, %v2394
        %vm2398 = vcmp.ge.s32.totalorder %v2381, %v2394
        %vm2399 = vcmp.ge.s32.totalorder %v2382, %v2394
        %vm2400 = vcmp.ge.s32.totalorder %v2383, %v2394
        %vm2401 = vcmp.ge.s32.totalorder %v2384, %v2394
        %vm2402 = vcmp.ge.s32.totalorder %v2385, %v2394
        %vm2403 = vcmp.ge.s32.totalorder %v2386, %v2394
        %vm2404 = vcmp.ge.s32.totalorder %v2387, %v2394
        %vm2405 = vcmp.ge.s32.totalorder %v2388, %v2394
        %vm2406 = vcmp.ge.s32.totalorder %v2389, %v2394
        %vm2407 = vcmp.ge.s32.totalorder %v2390, %v2394
        %vm2408 = vcmp.ge.s32.totalorder %v2391, %v2394
        %vm2409 = vcmp.ge.s32.totalorder %v2392, %v2394
        %vm2410 = vcmp.ge.s32.totalorder %v2393, %v2394
        %v2411 = vadd.s32 %v856, 1
        %v2412 = vmul.u32 %v2411, 16
        %vm2413 = vcmp.lt.s32.totalorder %v2378, %v2412
        %vm2414 = vcmp.lt.s32.totalorder %v2379, %v2412
        %vm2415 = vcmp.lt.s32.totalorder %v2380, %v2412
        %vm2416 = vcmp.lt.s32.totalorder %v2381, %v2412
        %vm2417 = vcmp.lt.s32.totalorder %v2382, %v2412
        %vm2418 = vcmp.lt.s32.totalorder %v2383, %v2412
        %vm2419 = vcmp.lt.s32.totalorder %v2384, %v2412
        %vm2420 = vcmp.lt.s32.totalorder %v2385, %v2412
        %vm2421 = vcmp.lt.s32.totalorder %v2386, %v2412
        %vm2422 = vcmp.lt.s32.totalorder %v2387, %v2412
        %vm2423 = vcmp.lt.s32.totalorder %v2388, %v2412
        %vm2424 = vcmp.lt.s32.totalorder %v2389, %v2412
        %vm2425 = vcmp.lt.s32.totalorder %v2390, %v2412
        %vm2426 = vcmp.lt.s32.totalorder %v2391, %v2412
        %vm2427 = vcmp.lt.s32.totalorder %v2392, %v2412
        %vm2428 = vcmp.lt.s32.totalorder %v2393, %v2412
        %vm2429 = vmand %vm2395, %vm2413
        %vm2430 = vmand %vm2396, %vm2414
        %vm2431 = vmand %vm2397, %vm2415
        %vm2432 = vmand %vm2398, %vm2416
        %vm2433 = vmand %vm2399, %vm2417
        %vm2434 = vmand %vm2400, %vm2418
        %vm2435 = vmand %vm2401, %vm2419
        %vm2436 = vmand %vm2402, %vm2420
        %vm2437 = vmand %vm2403, %vm2421
        %vm2438 = vmand %vm2404, %vm2422
        %vm2439 = vmand %vm2405, %vm2423
        %vm2440 = vmand %vm2406, %vm2424
        %vm2441 = vmand %vm2407, %vm2425
        %vm2442 = vmand %vm2408, %vm2426
        %vm2443 = vmand %vm2409, %vm2427
        %vm2444 = vmand %vm2410, %vm2428
        %v2445 = vsel %vm2429, 1, 0
        %v2446 = vsel %vm2430, 1, 0
        %v2447 = vsel %vm2431, 1, 0
        %v2448 = vsel %vm2432, 1, 0
        %v2449 = vsel %vm2433, 1, 0
        %v2450 = vsel %vm2434, 1, 0
        %v2451 = vsel %vm2435, 1, 0
        %v2452 = vsel %vm2436, 1, 0
        %v2453 = vsel %vm2437, 1, 0
        %v2454 = vsel %vm2438, 1, 0
        %v2455 = vsel %vm2439, 1, 0
        %v2456 = vsel %vm2440, 1, 0
        %v2457 = vsel %vm2441, 1, 0
        %v2458 = vsel %vm2442, 1, 0
        %v2459 = vsel %vm2443, 1, 0
        %v2460 = vsel %vm2444, 1, 0
        %v2461 = vcvt.s32.f32 %v2445
        %v2462 = vcvt.s32.f32 %v2446
        %v2463 = vcvt.s32.f32 %v2447
        %v2464 = vcvt.s32.f32 %v2448
        %v2465 = vcvt.s32.f32 %v2449
        %v2466 = vcvt.s32.f32 %v2450
        %v2467 = vcvt.s32.f32 %v2451
        %v2468 = vcvt.s32.f32 %v2452
        %v2469 = vcvt.s32.f32 %v2453
        %v2470 = vcvt.s32.f32 %v2454
        %v2471 = vcvt.s32.f32 %v2455
        %v2472 = vcvt.s32.f32 %v2456
        %v2473 = vcvt.s32.f32 %v2457
        %v2474 = vcvt.s32.f32 %v2458
        %v2475 = vcvt.s32.f32 %v2459
        %v2476 = vcvt.s32.f32 %v2460
        %v2477 = vmul.u32 %v2378, 16
        %vm2478 = vcmp.ge.s32.totalorder %v856, %v2477
        %v2479 = vadd.s32 %v2378, 1
        %v2480 = vmul.u32 %v2479, 16
        %vm2481 = vcmp.lt.s32.totalorder %v856, %v2480
        %vm2482 = vmand %vm2478, %vm2481
        %v2483 = vsel %vm2482, 1, 0
        %v2484 = vcvt.s32.f32 %v2483
        %2485 = vmatpush.msra.mxu0 %v2476
        %2486 = vmatpush.msra.mxu0 %v2475
        %2487 = vmatpush.msra.mxu0 %v2474
        %2488 = vmatpush.msra.mxu0 %v2473
        %2489 = vmatpush.msra.mxu0 %v2472
        %2490 = vmatpush.msra.mxu0 %v2471
        %2491 = vmatpush.msra.mxu0 %v2470
        %2492 = vmatpush.msra.mxu0 %v2469
        %2493 = vmatpush.msra.mxu0 %v2468
        %2494 = vmatpush.msra.mxu0 %v2467
        %2495 = vmatpush.msra.mxu0 %v2466
        %2496 = vmatpush.msra.mxu0 %v2465
        %2497 = vmatpush.msra.mxu0 %v2464
        %2498 = vmatpush.msra.mxu0 %v2463
        %2499 = vmatpush.msra.mxu0 %v2462
        %2500 = vmatpush.msra.mxu0 %v2461
        %2501 = vmatmul.f32.gmra.mxu0 %v2346
        %v2502 = vpop.f32.mrf.mxu0
        %v2503 = vadd.f32 0.0, %v2502
        %2504 = vmatmul.f32.gmra.mxu0 %v2348
        %v2505 = vpop.f32.mrf.mxu0
        %v2506 = vadd.f32 0.0, %v2505
        %2507 = vmatmul.f32.gmra.mxu0 %v2350
        %v2508 = vpop.f32.mrf.mxu0
        %v2509 = vadd.f32 0.0, %v2508
        %2510 = vmatmul.f32.gmra.mxu0 %v2352
        %v2511 = vpop.f32.mrf.mxu0
        %v2512 = vadd.f32 0.0, %v2511
        %2513 = vmatmul.f32.gmra.mxu0 %v2354
        %v2514 = vpop.f32.mrf.mxu0
        %v2515 = vadd.f32 0.0, %v2514
        %2516 = vmatmul.f32.gmra.mxu0 %v2356
        %v2517 = vpop.f32.mrf.mxu0
        %v2518 = vadd.f32 0.0, %v2517
        %2519 = vmatmul.f32.gmra.mxu0 %v2358
        %v2520 = vpop.f32.mrf.mxu0
        %v2521 = vadd.f32 0.0, %v2520
        %2522 = vmatmul.f32.gmra.mxu0 %v2360
        %v2523 = vpop.f32.mrf.mxu0
        %v2524 = vadd.f32 0.0, %v2523
        %2525 = vmatmul.f32.gmra.mxu0 %v2362
        %v2526 = vpop.f32.mrf.mxu0
        %v2527 = vadd.f32 0.0, %v2526
        %2528 = vmatmul.f32.gmra.mxu0 %v2364
        %v2529 = vpop.f32.mrf.mxu0
        %v2530 = vadd.f32 0.0, %v2529
        %2531 = vmatmul.f32.gmra.mxu0 %v2366
        %v2532 = vpop.f32.mrf.mxu0
        %v2533 = vadd.f32 0.0, %v2532
        %2534 = vmatmul.f32.gmra.mxu0 %v2368
        %v2535 = vpop.f32.mrf.mxu0
        %v2536 = vadd.f32 0.0, %v2535
        %2537 = vmatmul.f32.gmra.mxu0 %v2370
        %v2538 = vpop.f32.mrf.mxu0
        %v2539 = vadd.f32 0.0, %v2538
        %2540 = vmatmul.f32.gmra.mxu0 %v2372
        %v2541 = vpop.f32.mrf.mxu0
        %v2542 = vadd.f32 0.0, %v2541
        %2543 = vmatmul.f32.gmra.mxu0 %v2374
        %v2544 = vpop.f32.mrf.mxu0
        %v2545 = vadd.f32 0.0, %v2544
        %2546 = vmatmul.f32.gmra.mxu0 %v2376
        %v2547 = vpop.f32.mrf.mxu0
        %v2548 = vadd.f32 0.0, %v2547
        %2549 = vdwg.mxu0
        %vm2550 = vcmask 64512
        %v2552 = vsel %vm2550, %v2503, 0
        %v2555 = vsel %vm2550, %v2506, 0
        %v2558 = vsel %vm2550, %v2509, 0
        %v2561 = vsel %vm2550, %v2512, 0
        %v2564 = vsel %vm2550, %v2515, 0
        %v2567 = vsel %vm2550, %v2518, 0
        %v2570 = vsel %vm2550, %v2521, 0
        %v2573 = vsel %vm2550, %v2524, 0
        %v2576 = vsel %vm2550, %v2527, 0
        %v2579 = vsel %vm2550, %v2530, 0
        %v2582 = vsel %vm2550, %v2533, 0
        %v2585 = vsel %vm2550, %v2536, 0
        %v2588 = vsel %vm2550, %v2539, 0
        %v2591 = vsel %vm2550, %v2542, 0
        %v2594 = vsel %vm2550, %v2545, 0
        %v2597 = vsel %vm2550, %v2548, 0
        %2599 = vmatpush.msra.mxu0 0.0
        %2600 = vmatpush.msra.mxu0 0.0
        %2601 = vmatpush.msra.mxu0 0.0
        %2602 = vmatpush.msra.mxu0 0.0
        %2603 = vmatpush.msra.mxu0 0.0
        %2604 = vmatpush.msra.mxu0 0.0
        %2605 = vmatpush.msra.mxu0 0.0
        %2606 = vmatpush.msra.mxu0 0.0
        %2607 = vmatpush.msra.mxu0 0.0
        %2608 = vmatpush.msra.mxu0 0.0
        %2609 = vmatpush.msra.mxu0 0.0
        %2610 = vmatpush.msra.mxu0 0.0
        %2611 = vmatpush.msra.mxu0 0.0
        %2612 = vmatpush.msra.mxu0 0.0
        %2613 = vmatpush.msra.mxu0 0.0
        %2614 = vmatpush.msra.mxu0 %v2484
        %2615 = vmatmul.f32.gmra.mxu0 %v2552
        %v2616 = vpop.f32.mrf.mxu0
        %v2617 = vadd.f32 0.0, %v2616
        %2618 = vmatmul.f32.gmra.mxu0 %v2555
        %v2619 = vpop.f32.mrf.mxu0
        %v2620 = vadd.f32 0.0, %v2619
        %2621 = vmatmul.f32.gmra.mxu0 %v2558
        %v2622 = vpop.f32.mrf.mxu0
        %v2623 = vadd.f32 0.0, %v2622
        %2624 = vmatmul.f32.gmra.mxu0 %v2561
        %v2625 = vpop.f32.mrf.mxu0
        %v2626 = vadd.f32 0.0, %v2625
        %2627 = vmatmul.f32.gmra.mxu0 %v2564
        %v2628 = vpop.f32.mrf.mxu0
        %v2629 = vadd.f32 0.0, %v2628
        %2630 = vmatmul.f32.gmra.mxu0 %v2567
        %v2631 = vpop.f32.mrf.mxu0
        %v2632 = vadd.f32 0.0, %v2631
        %2633 = vmatmul.f32.gmra.mxu0 %v2570
        %v2634 = vpop.f32.mrf.mxu0
        %v2635 = vadd.f32 0.0, %v2634
        %2636 = vmatmul.f32.gmra.mxu0 %v2573
        %v2637 = vpop.f32.mrf.mxu0
        %v2638 = vadd.f32 0.0, %v2637
        %2639 = vmatmul.f32.gmra.mxu0 %v2576
        %v2640 = vpop.f32.mrf.mxu0
        %v2641 = vadd.f32 0.0, %v2640
        %2642 = vmatmul.f32.gmra.mxu0 %v2579
        %v2643 = vpop.f32.mrf.mxu0
        %v2644 = vadd.f32 0.0, %v2643
        %2645 = vmatmul.f32.gmra.mxu0 %v2582
        %v2646 = vpop.f32.mrf.mxu0
        %v2647 = vadd.f32 0.0, %v2646
        %2648 = vmatmul.f32.gmra.mxu0 %v2585
        %v2649 = vpop.f32.mrf.mxu0
        %v2650 = vadd.f32 0.0, %v2649
        %2651 = vmatmul.f32.gmra.mxu0 %v2588
        %v2652 = vpop.f32.mrf.mxu0
        %v2653 = vadd.f32 0.0, %v2652
        %2654 = vmatmul.f32.gmra.mxu0 %v2591
        %v2655 = vpop.f32.mrf.mxu0
        %v2656 = vadd.f32 0.0, %v2655
        %2657 = vmatmul.f32.gmra.mxu0 %v2594
        %v2658 = vpop.f32.mrf.mxu0
        %v2659 = vadd.f32 0.0, %v2658
        %2660 = vmatmul.f32.gmra.mxu0 %v2597
        %v2661 = vpop.f32.mrf.mxu0
        %v2662 = vadd.f32 0.0, %v2661
        %2663 = vdwg.mxu0
        %v2664 = vrcp.pop %v2617
        %v2665 = vrcp.pop %v2620
        %v2666 = vrcp.pop %v2623
        %v2667 = vrcp.pop %v2626
        %v2668 = vrcp.pop %v2629
        %v2669 = vrcp.pop %v2632
        %v2670 = vrcp.pop %v2635
        %v2671 = vrcp.pop %v2638
        %v2672 = vrcp.pop %v2641
        %v2673 = vrcp.pop %v2644
        %v2674 = vrcp.pop %v2647
        %v2675 = vrcp.pop %v2650
        %v2676 = vrcp.pop %v2653
        %v2677 = vrcp.pop %v2656
        %v2678 = vrcp.pop %v2659
        %v2679 = vrcp.pop %v2662
        %v2680 = vmul.f32 %v2346, %v2664
        %v2681 = vmul.f32 %v2348, %v2665
        %v2682 = vmul.f32 %v2350, %v2666
        %v2683 = vmul.f32 %v2352, %v2667
        %v2684 = vmul.f32 %v2354, %v2668
        %v2685 = vmul.f32 %v2356, %v2669
        %v2686 = vmul.f32 %v2358, %v2670
        %v2687 = vmul.f32 %v2360, %v2671
        %v2688 = vmul.f32 %v2362, %v2672
        %v2689 = vmul.f32 %v2364, %v2673
        %v2690 = vmul.f32 %v2366, %v2674
        %v2691 = vmul.f32 %v2368, %v2675
        %v2692 = vmul.f32 %v2370, %v2676
        %v2693 = vmul.f32 %v2372, %v2677
        %v2694 = vmul.f32 %v2374, %v2678
        %v2695 = vmul.f32 %v2376, %v2679
        %v2696 = vpack.c.bf16 %v2680, %v2680
        %v2697 = vpack.c.bf16 %v2681, %v2681
        %v2698 = vpack.c.bf16 %v2682, %v2682
        %v2699 = vpack.c.bf16 %v2683, %v2683
        %v2700 = vpack.c.bf16 %v2684, %v2684
        %v2701 = vpack.c.bf16 %v2685, %v2685
        %v2702 = vpack.c.bf16 %v2686, %v2686
        %v2703 = vpack.c.bf16 %v2687, %v2687
        %v2704 = vpack.c.bf16 %v2688, %v2688
        %v2705 = vpack.c.bf16 %v2689, %v2689
        %v2706 = vpack.c.bf16 %v2690, %v2690
        %v2707 = vpack.c.bf16 %v2691, %v2691
        %v2708 = vpack.c.bf16 %v2692, %v2692
        %v2709 = vpack.c.bf16 %v2693, %v2693
        %v2710 = vpack.c.bf16 %v2694, %v2694
        %v2711 = vpack.c.bf16 %v2695, %v2695
        %v2714 = vunpack.c.l.b16 %v2696
        %v2715 = vunpack.c.l.b16 %v2697
        %v2716 = vpack.c.b16 %v2715, %v2714
        %v2734 = vunpack.c.l.b16 %v1337
        %v2735 = vunpack.c.l.b16 %v1338
        %v2736 = vunpack.c.l.b16 %v1339
        %v2737 = vunpack.c.l.b16 %v1340
        %v2738 = vunpack.c.l.b16 %v1341
        %v2739 = vunpack.c.l.b16 %v1342
        %v2740 = vunpack.c.l.b16 %v1343
        %v2741 = vunpack.c.l.b16 %v1344
        %v2742 = vunpack.c.l.b16 %v1345
        %v2743 = vunpack.c.l.b16 %v1346
        %v2744 = vunpack.c.l.b16 %v1347
        %v2745 = vunpack.c.l.b16 %v1348
        %v2746 = vunpack.c.l.b16 %v1349
        %v2747 = vunpack.c.l.b16 %v1350
        %v2748 = vunpack.c.l.b16 %v1351
        %v2749 = vunpack.c.l.b16 %v1352
        %v2750 = vpack.c.b16 %v2735, %v2734
        %v2751 = vpack.c.b16 %v2737, %v2736
        %v2752 = vpack.c.b16 %v2739, %v2738
        %v2753 = vpack.c.b16 %v2741, %v2740
        %v2754 = vpack.c.b16 %v2743, %v2742
        %v2755 = vpack.c.b16 %v2745, %v2744
        %v2756 = vpack.c.b16 %v2747, %v2746
        %v2757 = vpack.c.b16 %v2749, %v2748
        %2758 = vrot.lane.b32.xlu0 %v2750, 64
        %v2759 = vpop.permute.xlu0 %2758
        %2760 = vrot.lane.b32.xlu0 %v2751, 64
        %v2761 = vpop.permute.xlu0 %2760
        %2762 = vrot.lane.b32.xlu0 %v2752, 64
        %v2763 = vpop.permute.xlu0 %2762
        %2764 = vrot.lane.b32.xlu0 %v2753, 64
        %v2765 = vpop.permute.xlu0 %2764
        %2766 = vrot.lane.b32.xlu0 %v2754, 64
        %v2767 = vpop.permute.xlu0 %2766
        %2768 = vrot.lane.b32.xlu0 %v2755, 64
        %v2769 = vpop.permute.xlu0 %2768
        %2770 = vrot.lane.b32.xlu0 %v2756, 64
        %v2771 = vpop.permute.xlu0 %2770
        %2772 = vrot.lane.b32.xlu0 %v2757, 64
        %v2773 = vpop.permute.xlu0 %2772
        %2782 = vmatpush.bf16.msra.mxu0 %v2773
        %2783 = vmatpush.bf16.msra.mxu0 %v2771
        %2784 = vmatpush.bf16.msra.mxu0 %v2769
        %2785 = vmatpush.bf16.msra.mxu0 %v2767
        %2786 = vmatpush.bf16.msra.mxu0 %v2765
        %2787 = vmatpush.bf16.msra.mxu0 %v2763
        %2788 = vmatpush.bf16.msra.mxu0 %v2761
        %2789 = vmatpush.bf16.msra.mxu0 %v2759
        %2790 = vmatmul.bf16.gmra.mxu0 %v2716
        %v2791 = vpop.f32.mrf.mxu0
        %v2792 = vadd.f32 0.0, %v2791
        %v2793 = vpop.f32.mrf.mxu0
        %v2794 = vadd.f32 0.0, %v2793
        %2795 = vdwg.mxu0
        %v2798 = vunpack.c.l.b16 %v2698
        %v2799 = vunpack.c.l.b16 %v2699
        %v2800 = vpack.c.b16 %v2799, %v2798
        %v2818 = vunpack.c.l.b16 %v1353
        %v2819 = vunpack.c.l.b16 %v1354
        %v2820 = vunpack.c.l.b16 %v1355
        %v2821 = vunpack.c.l.b16 %v1356
        %v2822 = vunpack.c.l.b16 %v1357
        %v2823 = vunpack.c.l.b16 %v1358
        %v2824 = vunpack.c.l.b16 %v1359
        %v2825 = vunpack.c.l.b16 %v1360
        %v2826 = vunpack.c.l.b16 %v1361
        %v2827 = vunpack.c.l.b16 %v1362
        %v2828 = vunpack.c.l.b16 %v1363
        %v2829 = vunpack.c.l.b16 %v1364
        %v2830 = vunpack.c.l.b16 %v1365
        %v2831 = vunpack.c.l.b16 %v1366
        %v2832 = vunpack.c.l.b16 %v1367
        %v2833 = vunpack.c.l.b16 %v1368
        %v2834 = vpack.c.b16 %v2819, %v2818
        %v2835 = vpack.c.b16 %v2821, %v2820
        %v2836 = vpack.c.b16 %v2823, %v2822
        %v2837 = vpack.c.b16 %v2825, %v2824
        %v2838 = vpack.c.b16 %v2827, %v2826
        %v2839 = vpack.c.b16 %v2829, %v2828
        %v2840 = vpack.c.b16 %v2831, %v2830
        %v2841 = vpack.c.b16 %v2833, %v2832
        %2842 = vrot.lane.b32.xlu0 %v2834, 64
        %v2843 = vpop.permute.xlu0 %2842
        %2844 = vrot.lane.b32.xlu0 %v2835, 64
        %v2845 = vpop.permute.xlu0 %2844
        %2846 = vrot.lane.b32.xlu0 %v2836, 64
        %v2847 = vpop.permute.xlu0 %2846
        %2848 = vrot.lane.b32.xlu0 %v2837, 64
        %v2849 = vpop.permute.xlu0 %2848
        %2850 = vrot.lane.b32.xlu0 %v2838, 64
        %v2851 = vpop.permute.xlu0 %2850
        %2852 = vrot.lane.b32.xlu0 %v2839, 64
        %v2853 = vpop.permute.xlu0 %2852
        %2854 = vrot.lane.b32.xlu0 %v2840, 64
        %v2855 = vpop.permute.xlu0 %2854
        %2856 = vrot.lane.b32.xlu0 %v2841, 64
        %v2857 = vpop.permute.xlu0 %2856
        %2866 = vmatpush.bf16.msra.mxu0 %v2857
        %2867 = vmatpush.bf16.msra.mxu0 %v2855
        %2868 = vmatpush.bf16.msra.mxu0 %v2853
        %2869 = vmatpush.bf16.msra.mxu0 %v2851
        %2870 = vmatpush.bf16.msra.mxu0 %v2849
        %2871 = vmatpush.bf16.msra.mxu0 %v2847
        %2872 = vmatpush.bf16.msra.mxu0 %v2845
        %2873 = vmatpush.bf16.msra.mxu0 %v2843
        %2874 = vmatmul.bf16.gmra.mxu0 %v2800
        %v2875 = vpop.f32.mrf.mxu0
        %v2876 = vadd.f32 0.0, %v2875
        %v2877 = vpop.f32.mrf.mxu0
        %v2878 = vadd.f32 0.0, %v2877
        %2879 = vdwg.mxu0
        %v2882 = vunpack.c.l.b16 %v2700
        %v2883 = vunpack.c.l.b16 %v2701
        %v2884 = vpack.c.b16 %v2883, %v2882
        %v2902 = vunpack.c.l.b16 %v1369
        %v2903 = vunpack.c.l.b16 %v1370
        %v2904 = vunpack.c.l.b16 %v1371
        %v2905 = vunpack.c.l.b16 %v1372
        %v2906 = vunpack.c.l.b16 %v1373
        %v2907 = vunpack.c.l.b16 %v1374
        %v2908 = vunpack.c.l.b16 %v1375
        %v2909 = vunpack.c.l.b16 %v1376
        %v2910 = vunpack.c.l.b16 %v1377
        %v2911 = vunpack.c.l.b16 %v1378
        %v2912 = vunpack.c.l.b16 %v1379
        %v2913 = vunpack.c.l.b16 %v1380
        %v2914 = vunpack.c.l.b16 %v1381
        %v2915 = vunpack.c.l.b16 %v1382
        %v2916 = vunpack.c.l.b16 %v1383
        %v2917 = vunpack.c.l.b16 %v1384
        %v2918 = vpack.c.b16 %v2903, %v2902
        %v2919 = vpack.c.b16 %v2905, %v2904
        %v2920 = vpack.c.b16 %v2907, %v2906
        %v2921 = vpack.c.b16 %v2909, %v2908
        %v2922 = vpack.c.b16 %v2911, %v2910
        %v2923 = vpack.c.b16 %v2913, %v2912
        %v2924 = vpack.c.b16 %v2915, %v2914
        %v2925 = vpack.c.b16 %v2917, %v2916
        %2926 = vrot.lane.b32.xlu0 %v2918, 64
        %v2927 = vpop.permute.xlu0 %2926
        %2928 = vrot.lane.b32.xlu0 %v2919, 64
        %v2929 = vpop.permute.xlu0 %2928
        %2930 = vrot.lane.b32.xlu0 %v2920, 64
        %v2931 = vpop.permute.xlu0 %2930
        %2932 = vrot.lane.b32.xlu0 %v2921, 64
        %v2933 = vpop.permute.xlu0 %2932
        %2934 = vrot.lane.b32.xlu0 %v2922, 64
        %v2935 = vpop.permute.xlu0 %2934
        %2936 = vrot.lane.b32.xlu0 %v2923, 64
        %v2937 = vpop.permute.xlu0 %2936
        %2938 = vrot.lane.b32.xlu0 %v2924, 64
        %v2939 = vpop.permute.xlu0 %2938
        %2940 = vrot.lane.b32.xlu0 %v2925, 64
        %v2941 = vpop.permute.xlu0 %2940
        %2950 = vmatpush.bf16.msra.mxu0 %v2941
        %2951 = vmatpush.bf16.msra.mxu0 %v2939
        %2952 = vmatpush.bf16.msra.mxu0 %v2937
        %2953 = vmatpush.bf16.msra.mxu0 %v2935
        %2954 = vmatpush.bf16.msra.mxu0 %v2933
        %2955 = vmatpush.bf16.msra.mxu0 %v2931
        %2956 = vmatpush.bf16.msra.mxu0 %v2929
        %2957 = vmatpush.bf16.msra.mxu0 %v2927
        %2958 = vmatmul.bf16.gmra.mxu0 %v2884
        %v2959 = vpop.f32.mrf.mxu0
        %v2960 = vadd.f32 0.0, %v2959
        %v2961 = vpop.f32.mrf.mxu0
        %v2962 = vadd.f32 0.0, %v2961
        %2963 = vdwg.mxu0
        %v2966 = vunpack.c.l.b16 %v2702
        %v2967 = vunpack.c.l.b16 %v2703
        %v2968 = vpack.c.b16 %v2967, %v2966
        %v2986 = vunpack.c.l.b16 %v1385
        %v2987 = vunpack.c.l.b16 %v1386
        %v2988 = vunpack.c.l.b16 %v1387
        %v2989 = vunpack.c.l.b16 %v1388
        %v2990 = vunpack.c.l.b16 %v1389
        %v2991 = vunpack.c.l.b16 %v1390
        %v2992 = vunpack.c.l.b16 %v1391
        %v2993 = vunpack.c.l.b16 %v1392
        %v2994 = vunpack.c.l.b16 %v1393
        %v2995 = vunpack.c.l.b16 %v1394
        %v2996 = vunpack.c.l.b16 %v1395
        %v2997 = vunpack.c.l.b16 %v1396
        %v2998 = vunpack.c.l.b16 %v1397
        %v2999 = vunpack.c.l.b16 %v1398
        %v3000 = vunpack.c.l.b16 %v1399
        %v3001 = vunpack.c.l.b16 %v1400
        %v3002 = vpack.c.b16 %v2987, %v2986
        %v3003 = vpack.c.b16 %v2989, %v2988
        %v3004 = vpack.c.b16 %v2991, %v2990
        %v3005 = vpack.c.b16 %v2993, %v2992
        %v3006 = vpack.c.b16 %v2995, %v2994
        %v3007 = vpack.c.b16 %v2997, %v2996
        %v3008 = vpack.c.b16 %v2999, %v2998
        %v3009 = vpack.c.b16 %v3001, %v3000
        %3010 = vrot.lane.b32.xlu0 %v3002, 64
        %v3011 = vpop.permute.xlu0 %3010
        %3012 = vrot.lane.b32.xlu0 %v3003, 64
        %v3013 = vpop.permute.xlu0 %3012
        %3014 = vrot.lane.b32.xlu0 %v3004, 64
        %v3015 = vpop.permute.xlu0 %3014
        %3016 = vrot.lane.b32.xlu0 %v3005, 64
        %v3017 = vpop.permute.xlu0 %3016
        %3018 = vrot.lane.b32.xlu0 %v3006, 64
        %v3019 = vpop.permute.xlu0 %3018
        %3020 = vrot.lane.b32.xlu0 %v3007, 64
        %v3021 = vpop.permute.xlu0 %3020
        %3022 = vrot.lane.b32.xlu0 %v3008, 64
        %v3023 = vpop.permute.xlu0 %3022
        %3024 = vrot.lane.b32.xlu0 %v3009, 64
        %v3025 = vpop.permute.xlu0 %3024
        %3034 = vmatpush.bf16.msra.mxu0 %v3025
        %3035 = vmatpush.bf16.msra.mxu0 %v3023
        %3036 = vmatpush.bf16.msra.mxu0 %v3021
        %3037 = vmatpush.bf16.msra.mxu0 %v3019
        %3038 = vmatpush.bf16.msra.mxu0 %v3017
        %3039 = vmatpush.bf16.msra.mxu0 %v3015
        %3040 = vmatpush.bf16.msra.mxu0 %v3013
        %3041 = vmatpush.bf16.msra.mxu0 %v3011
        %3042 = vmatmul.bf16.gmra.mxu0 %v2968
        %v3043 = vpop.f32.mrf.mxu0
        %v3044 = vadd.f32 0.0, %v3043
        %v3045 = vpop.f32.mrf.mxu0
        %v3046 = vadd.f32 0.0, %v3045
        %3047 = vdwg.mxu0
        %v3050 = vunpack.c.l.b16 %v2704
        %v3051 = vunpack.c.l.b16 %v2705
        %v3052 = vpack.c.b16 %v3051, %v3050
        %v3070 = vunpack.c.l.b16 %v1401
        %v3071 = vunpack.c.l.b16 %v1402
        %v3072 = vunpack.c.l.b16 %v1403
        %v3073 = vunpack.c.l.b16 %v1404
        %v3074 = vunpack.c.l.b16 %v1405
        %v3075 = vunpack.c.l.b16 %v1406
        %v3076 = vunpack.c.l.b16 %v1407
        %v3077 = vunpack.c.l.b16 %v1408
        %v3078 = vunpack.c.l.b16 %v1409
        %v3079 = vunpack.c.l.b16 %v1410
        %v3080 = vunpack.c.l.b16 %v1411
        %v3081 = vunpack.c.l.b16 %v1412
        %v3082 = vunpack.c.l.b16 %v1413
        %v3083 = vunpack.c.l.b16 %v1414
        %v3084 = vunpack.c.l.b16 %v1415
        %v3085 = vunpack.c.l.b16 %v1416
        %v3086 = vpack.c.b16 %v3071, %v3070
        %v3087 = vpack.c.b16 %v3073, %v3072
        %v3088 = vpack.c.b16 %v3075, %v3074
        %v3089 = vpack.c.b16 %v3077, %v3076
        %v3090 = vpack.c.b16 %v3079, %v3078
        %v3091 = vpack.c.b16 %v3081, %v3080
        %v3092 = vpack.c.b16 %v3083, %v3082
        %v3093 = vpack.c.b16 %v3085, %v3084
        %3094 = vrot.lane.b32.xlu0 %v3086, 64
        %v3095 = vpop.permute.xlu0 %3094
        %3096 = vrot.lane.b32.xlu0 %v3087, 64
        %v3097 = vpop.permute.xlu0 %3096
        %3098 = vrot.lane.b32.xlu0 %v3088, 64
        %v3099 = vpop.permute.xlu0 %3098
        %3100 = vrot.lane.b32.xlu0 %v3089, 64
        %v3101 = vpop.permute.xlu0 %3100
        %3102 = vrot.lane.b32.xlu0 %v3090, 64
        %v3103 = vpop.permute.xlu0 %3102
        %3104 = vrot.lane.b32.xlu0 %v3091, 64
        %v3105 = vpop.permute.xlu0 %3104
        %3106 = vrot.lane.b32.xlu0 %v3092, 64
        %v3107 = vpop.permute.xlu0 %3106
        %3108 = vrot.lane.b32.xlu0 %v3093, 64
        %v3109 = vpop.permute.xlu0 %3108
        %3118 = vmatpush.bf16.msra.mxu0 %v3109
        %3119 = vmatpush.bf16.msra.mxu0 %v3107
        %3120 = vmatpush.bf16.msra.mxu0 %v3105
        %3121 = vmatpush.bf16.msra.mxu0 %v3103
        %3122 = vmatpush.bf16.msra.mxu0 %v3101
        %3123 = vmatpush.bf16.msra.mxu0 %v3099
        %3124 = vmatpush.bf16.msra.mxu0 %v3097
        %3125 = vmatpush.bf16.msra.mxu0 %v3095
        %3126 = vmatmul.bf16.gmra.mxu0 %v3052
        %v3127 = vpop.f32.mrf.mxu0
        %v3128 = vadd.f32 0.0, %v3127
        %v3129 = vpop.f32.mrf.mxu0
        %v3130 = vadd.f32 0.0, %v3129
        %3131 = vdwg.mxu0
        %v3134 = vunpack.c.l.b16 %v2706
        %v3135 = vunpack.c.l.b16 %v2707
        %v3136 = vpack.c.b16 %v3135, %v3134
        %v3154 = vunpack.c.l.b16 %v1417
        %v3155 = vunpack.c.l.b16 %v1418
        %v3156 = vunpack.c.l.b16 %v1419
        %v3157 = vunpack.c.l.b16 %v1420
        %v3158 = vunpack.c.l.b16 %v1421
        %v3159 = vunpack.c.l.b16 %v1422
        %v3160 = vunpack.c.l.b16 %v1423
        %v3161 = vunpack.c.l.b16 %v1424
        %v3162 = vunpack.c.l.b16 %v1425
        %v3163 = vunpack.c.l.b16 %v1426
        %v3164 = vunpack.c.l.b16 %v1427
        %v3165 = vunpack.c.l.b16 %v1428
        %v3166 = vunpack.c.l.b16 %v1429
        %v3167 = vunpack.c.l.b16 %v1430
        %v3168 = vunpack.c.l.b16 %v1431
        %v3169 = vunpack.c.l.b16 %v1432
        %v3170 = vpack.c.b16 %v3155, %v3154
        %v3171 = vpack.c.b16 %v3157, %v3156
        %v3172 = vpack.c.b16 %v3159, %v3158
        %v3173 = vpack.c.b16 %v3161, %v3160
        %v3174 = vpack.c.b16 %v3163, %v3162
        %v3175 = vpack.c.b16 %v3165, %v3164
        %v3176 = vpack.c.b16 %v3167, %v3166
        %v3177 = vpack.c.b16 %v3169, %v3168
        %3178 = vrot.lane.b32.xlu0 %v3170, 64
        %v3179 = vpop.permute.xlu0 %3178
        %3180 = vrot.lane.b32.xlu0 %v3171, 64
        %v3181 = vpop.permute.xlu0 %3180
        %3182 = vrot.lane.b32.xlu0 %v3172, 64
        %v3183 = vpop.permute.xlu0 %3182
        %3184 = vrot.lane.b32.xlu0 %v3173, 64
        %v3185 = vpop.permute.xlu0 %3184
        %3186 = vrot.lane.b32.xlu0 %v3174, 64
        %v3187 = vpop.permute.xlu0 %3186
        %3188 = vrot.lane.b32.xlu0 %v3175, 64
        %v3189 = vpop.permute.xlu0 %3188
        %3190 = vrot.lane.b32.xlu0 %v3176, 64
        %v3191 = vpop.permute.xlu0 %3190
        %3192 = vrot.lane.b32.xlu0 %v3177, 64
        %v3193 = vpop.permute.xlu0 %3192
        %3202 = vmatpush.bf16.msra.mxu0 %v3193
        %3203 = vmatpush.bf16.msra.mxu0 %v3191
        %3204 = vmatpush.bf16.msra.mxu0 %v3189
        %3205 = vmatpush.bf16.msra.mxu0 %v3187
        %3206 = vmatpush.bf16.msra.mxu0 %v3185
        %3207 = vmatpush.bf16.msra.mxu0 %v3183
        %3208 = vmatpush.bf16.msra.mxu0 %v3181
        %3209 = vmatpush.bf16.msra.mxu0 %v3179
        %3210 = vmatmul.bf16.gmra.mxu0 %v3136
        %v3211 = vpop.f32.mrf.mxu0
        %v3212 = vadd.f32 0.0, %v3211
        %v3213 = vpop.f32.mrf.mxu0
        %v3214 = vadd.f32 0.0, %v3213
        %3215 = vdwg.mxu0
        %v3218 = vunpack.c.l.b16 %v2708
        %v3219 = vunpack.c.l.b16 %v2709
        %v3220 = vpack.c.b16 %v3219, %v3218
        %v3238 = vunpack.c.l.b16 %v1433
        %v3239 = vunpack.c.l.b16 %v1434
        %v3240 = vunpack.c.l.b16 %v1435
        %v3241 = vunpack.c.l.b16 %v1436
        %v3242 = vunpack.c.l.b16 %v1437
        %v3243 = vunpack.c.l.b16 %v1438
        %v3244 = vunpack.c.l.b16 %v1439
        %v3245 = vunpack.c.l.b16 %v1440
        %v3246 = vunpack.c.l.b16 %v1441
        %v3247 = vunpack.c.l.b16 %v1442
        %v3248 = vunpack.c.l.b16 %v1443
        %v3249 = vunpack.c.l.b16 %v1444
        %v3250 = vunpack.c.l.b16 %v1445
        %v3251 = vunpack.c.l.b16 %v1446
        %v3252 = vunpack.c.l.b16 %v1447
        %v3253 = vunpack.c.l.b16 %v1448
        %v3254 = vpack.c.b16 %v3239, %v3238
        %v3255 = vpack.c.b16 %v3241, %v3240
        %v3256 = vpack.c.b16 %v3243, %v3242
        %v3257 = vpack.c.b16 %v3245, %v3244
        %v3258 = vpack.c.b16 %v3247, %v3246
        %v3259 = vpack.c.b16 %v3249, %v3248
        %v3260 = vpack.c.b16 %v3251, %v3250
        %v3261 = vpack.c.b16 %v3253, %v3252
        %3262 = vrot.lane.b32.xlu0 %v3254, 64
        %v3263 = vpop.permute.xlu0 %3262
        %3264 = vrot.lane.b32.xlu0 %v3255, 64
        %v3265 = vpop.permute.xlu0 %3264
        %3266 = vrot.lane.b32.xlu0 %v3256, 64
        %v3267 = vpop.permute.xlu0 %3266
        %3268 = vrot.lane.b32.xlu0 %v3257, 64
        %v3269 = vpop.permute.xlu0 %3268
        %3270 = vrot.lane.b32.xlu0 %v3258, 64
        %v3271 = vpop.permute.xlu0 %3270
        %3272 = vrot.lane.b32.xlu0 %v3259, 64
        %v3273 = vpop.permute.xlu0 %3272
        %3274 = vrot.lane.b32.xlu0 %v3260, 64
        %v3275 = vpop.permute.xlu0 %3274
        %3276 = vrot.lane.b32.xlu0 %v3261, 64
        %v3277 = vpop.permute.xlu0 %3276
        %3286 = vmatpush.bf16.msra.mxu0 %v3277
        %3287 = vmatpush.bf16.msra.mxu0 %v3275
        %3288 = vmatpush.bf16.msra.mxu0 %v3273
        %3289 = vmatpush.bf16.msra.mxu0 %v3271
        %3290 = vmatpush.bf16.msra.mxu0 %v3269
        %3291 = vmatpush.bf16.msra.mxu0 %v3267
        %3292 = vmatpush.bf16.msra.mxu0 %v3265
        %3293 = vmatpush.bf16.msra.mxu0 %v3263
        %3294 = vmatmul.bf16.gmra.mxu0 %v3220
        %v3295 = vpop.f32.mrf.mxu0
        %v3296 = vadd.f32 0.0, %v3295
        %v3297 = vpop.f32.mrf.mxu0
        %v3298 = vadd.f32 0.0, %v3297
        %3299 = vdwg.mxu0
        %v3302 = vunpack.c.l.b16 %v2710
        %v3303 = vunpack.c.l.b16 %v2711
        %v3304 = vpack.c.b16 %v3303, %v3302
        %v3322 = vunpack.c.l.b16 %v1449
        %v3323 = vunpack.c.l.b16 %v1450
        %v3324 = vunpack.c.l.b16 %v1451
        %v3325 = vunpack.c.l.b16 %v1452
        %v3326 = vunpack.c.l.b16 %v1453
        %v3327 = vunpack.c.l.b16 %v1454
        %v3328 = vunpack.c.l.b16 %v1455
        %v3329 = vunpack.c.l.b16 %v1456
        %v3330 = vunpack.c.l.b16 %v1457
        %v3331 = vunpack.c.l.b16 %v1458
        %v3332 = vunpack.c.l.b16 %v1459
        %v3333 = vunpack.c.l.b16 %v1460
        %v3334 = vunpack.c.l.b16 %v1461
        %v3335 = vunpack.c.l.b16 %v1462
        %v3336 = vunpack.c.l.b16 %v1463
        %v3337 = vunpack.c.l.b16 %v1464
        %v3338 = vpack.c.b16 %v3323, %v3322
        %v3339 = vpack.c.b16 %v3325, %v3324
        %v3340 = vpack.c.b16 %v3327, %v3326
        %v3341 = vpack.c.b16 %v3329, %v3328
        %v3342 = vpack.c.b16 %v3331, %v3330
        %v3343 = vpack.c.b16 %v3333, %v3332
        %v3344 = vpack.c.b16 %v3335, %v3334
        %v3345 = vpack.c.b16 %v3337, %v3336
        %3346 = vrot.lane.b32.xlu0 %v3338, 64
        %v3347 = vpop.permute.xlu0 %3346
        %3348 = vrot.lane.b32.xlu0 %v3339, 64
        %v3349 = vpop.permute.xlu0 %3348
        %3350 = vrot.lane.b32.xlu0 %v3340, 64
        %v3351 = vpop.permute.xlu0 %3350
        %3352 = vrot.lane.b32.xlu0 %v3341, 64
        %v3353 = vpop.permute.xlu0 %3352
        %3354 = vrot.lane.b32.xlu0 %v3342, 64
        %v3355 = vpop.permute.xlu0 %3354
        %3356 = vrot.lane.b32.xlu0 %v3343, 64
        %v3357 = vpop.permute.xlu0 %3356
        %3358 = vrot.lane.b32.xlu0 %v3344, 64
        %v3359 = vpop.permute.xlu0 %3358
        %3360 = vrot.lane.b32.xlu0 %v3345, 64
        %v3361 = vpop.permute.xlu0 %3360
        %3370 = vmatpush.bf16.msra.mxu0 %v3361
        %3371 = vmatpush.bf16.msra.mxu0 %v3359
        %3372 = vmatpush.bf16.msra.mxu0 %v3357
        %3373 = vmatpush.bf16.msra.mxu0 %v3355
        %3374 = vmatpush.bf16.msra.mxu0 %v3353
        %3375 = vmatpush.bf16.msra.mxu0 %v3351
        %3376 = vmatpush.bf16.msra.mxu0 %v3349
        %3377 = vmatpush.bf16.msra.mxu0 %v3347
        %3378 = vmatmul.bf16.gmra.mxu0 %v3304
        %v3379 = vpop.f32.mrf.mxu0
        %v3380 = vadd.f32 0.0, %v3379
        %v3381 = vpop.f32.mrf.mxu0
        %v3382 = vadd.f32 0.0, %v3381
        %3383 = vdwg.mxu0
        %v3384 = vperm.slane %v366, 2
        %v3385 = vadd.f32 %v322, %v3384
        %v3386 = vadd.f32 %v323, %v3384
        %v3387 = vadd.f32 %v324, %v3384
        %v3388 = vadd.f32 %v325, %v3384
        %v3389 = vadd.f32 %v326, %v3384
        %v3390 = vadd.f32 %v327, %v3384
        %v3391 = vadd.f32 %v328, %v3384
        %v3392 = vadd.f32 %v329, %v3384
        %v3393 = vadd.f32 %v330, %v3384
        %v3394 = vadd.f32 %v331, %v3384
        %v3395 = vadd.f32 %v332, %v3384
        %v3396 = vadd.f32 %v333, %v3384
        %v3397 = vadd.f32 %v334, %v3384
        %v3398 = vadd.f32 %v335, %v3384
        %v3399 = vadd.f32 %v336, %v3384
        %v3400 = vadd.f32 %v337, %v3384
        %v3401 = vpack.c.bf16 %v2794, %v2792
        %v3402 = vpack.c.bf16 %v2878, %v2876
        %v3403 = vpack.c.bf16 %v2962, %v2960
        %v3404 = vpack.c.bf16 %v3046, %v3044
        %v3405 = vpack.c.bf16 %v3130, %v3128
        %v3406 = vpack.c.bf16 %v3214, %v3212
        %v3407 = vpack.c.bf16 %v3298, %v3296
        %v3408 = vpack.c.bf16 %v3382, %v3380
        %v3413 = vunpack.c.l.b16 %v342
        %v3414 = vunpack.c.l.b16 %v343
        %v3415 = vunpack.c.l.b16 %v344
        %v3416 = vunpack.c.l.b16 %v345
        %v3417 = vpack.c.b16 %v3414, %v3413
        %v3418 = vpack.c.b16 %v3416, %v3415
        %v3422 = vsel %vm368, %v3401, 0
        %v3425 = vsel %vm368, %v3402, 0
        %v3428 = vsel %vm368, %v3403, 0
        %v3431 = vsel %vm368, %v3404, 0
        %v3434 = vsel %vm368, %v3405, 0
        %v3437 = vsel %vm368, %v3406, 0
        %v3440 = vsel %vm368, %v3407, 0
        %v3443 = vsel %vm368, %v3408, 0
        %3445 = vmatpush.bf16.msra.mxu0 0
        %3446 = vmatpush.bf16.msra.mxu0 0
        %3447 = vmatpush.bf16.msra.mxu0 0
        %3448 = vmatpush.bf16.msra.mxu0 0
        %3449 = vmatpush.bf16.msra.mxu0 0
        %3450 = vmatpush.bf16.msra.mxu0 0
        %3451 = vmatpush.bf16.msra.mxu0 %v3418
        %3452 = vmatpush.bf16.msra.mxu0 %v3417
        %3453 = vmatmul.bf16.gmra.mxu0 %v3422
        %v3454 = vpop.f32.mrf.mxu0
        %v3455 = vadd.f32 0.0, %v3454
        %v3456 = vpop.f32.mrf.mxu0
        %v3457 = vadd.f32 0.0, %v3456
        %3458 = vmatmul.bf16.gmra.mxu0 %v3425
        %v3459 = vpop.f32.mrf.mxu0
        %v3460 = vadd.f32 0.0, %v3459
        %v3461 = vpop.f32.mrf.mxu0
        %v3462 = vadd.f32 0.0, %v3461
        %3463 = vmatmul.bf16.gmra.mxu0 %v3428
        %v3464 = vpop.f32.mrf.mxu0
        %v3465 = vadd.f32 0.0, %v3464
        %v3466 = vpop.f32.mrf.mxu0
        %v3467 = vadd.f32 0.0, %v3466
        %3468 = vmatmul.bf16.gmra.mxu0 %v3431
        %v3469 = vpop.f32.mrf.mxu0
        %v3470 = vadd.f32 0.0, %v3469
        %v3471 = vpop.f32.mrf.mxu0
        %v3472 = vadd.f32 0.0, %v3471
        %3473 = vmatmul.bf16.gmra.mxu0 %v3434
        %v3474 = vpop.f32.mrf.mxu0
        %v3475 = vadd.f32 0.0, %v3474
        %v3476 = vpop.f32.mrf.mxu0
        %v3477 = vadd.f32 0.0, %v3476
        %3478 = vmatmul.bf16.gmra.mxu0 %v3437
        %v3479 = vpop.f32.mrf.mxu0
        %v3480 = vadd.f32 0.0, %v3479
        %v3481 = vpop.f32.mrf.mxu0
        %v3482 = vadd.f32 0.0, %v3481
        %3483 = vmatmul.bf16.gmra.mxu0 %v3440
        %v3484 = vpop.f32.mrf.mxu0
        %v3485 = vadd.f32 0.0, %v3484
        %v3486 = vpop.f32.mrf.mxu0
        %v3487 = vadd.f32 0.0, %v3486
        %3488 = vmatmul.bf16.gmra.mxu0 %v3443
        %v3489 = vpop.f32.mrf.mxu0
        %v3490 = vadd.f32 0.0, %v3489
        %v3491 = vpop.f32.mrf.mxu0
        %v3492 = vadd.f32 0.0, %v3491
        %3493 = vdwg.mxu0
        %v3494 = vadd.f32 %v3385, %v3455
        %v3495 = vadd.f32 %v3386, %v3457
        %v3496 = vadd.f32 %v3387, %v3460
        %v3497 = vadd.f32 %v3388, %v3462
        %v3498 = vadd.f32 %v3389, %v3465
        %v3499 = vadd.f32 %v3390, %v3467
        %v3500 = vadd.f32 %v3391, %v3470
        %v3501 = vadd.f32 %v3392, %v3472
        %v3502 = vadd.f32 %v3393, %v3475
        %v3503 = vadd.f32 %v3394, %v3477
        %v3504 = vadd.f32 %v3395, %v3480
        %v3505 = vadd.f32 %v3396, %v3482
        %v3506 = vadd.f32 %v3397, %v3485
        %v3507 = vadd.f32 %v3398, %v3487
        %v3508 = vadd.f32 %v3399, %v3490
        %v3509 = vadd.f32 %v3400, %v3492
        %v3510 = vsel %vm368, %v3494, 0.0
        %3511 = vadd.xlane.f32.xlu0 %v3510
        %v3512 = vpop.xlane.xlu0 %3511
        %v3513 = vsel %vm368, %v3495, 0.0
        %3514 = vadd.xlane.f32.xlu0 %v3513
        %v3515 = vpop.xlane.xlu0 %3514
        %v3516 = vsel %vm368, %v3496, 0.0
        %3517 = vadd.xlane.f32.xlu0 %v3516
        %v3518 = vpop.xlane.xlu0 %3517
        %v3519 = vsel %vm368, %v3497, 0.0
        %3520 = vadd.xlane.f32.xlu0 %v3519
        %v3521 = vpop.xlane.xlu0 %3520
        %v3522 = vsel %vm368, %v3498, 0.0
        %3523 = vadd.xlane.f32.xlu0 %v3522
        %v3524 = vpop.xlane.xlu0 %3523
        %v3525 = vsel %vm368, %v3499, 0.0
        %3526 = vadd.xlane.f32.xlu0 %v3525
        %v3527 = vpop.xlane.xlu0 %3526
        %v3528 = vsel %vm368, %v3500, 0.0
        %3529 = vadd.xlane.f32.xlu0 %v3528
        %v3530 = vpop.xlane.xlu0 %3529
        %v3531 = vsel %vm368, %v3501, 0.0
        %3532 = vadd.xlane.f32.xlu0 %v3531
        %v3533 = vpop.xlane.xlu0 %3532
        %v3534 = vsel %vm368, %v3502, 0.0
        %3535 = vadd.xlane.f32.xlu0 %v3534
        %v3536 = vpop.xlane.xlu0 %3535
        %v3537 = vsel %vm368, %v3503, 0.0
        %3538 = vadd.xlane.f32.xlu0 %v3537
        %v3539 = vpop.xlane.xlu0 %3538
        %v3540 = vsel %vm368, %v3504, 0.0
        %3541 = vadd.xlane.f32.xlu0 %v3540
        %v3542 = vpop.xlane.xlu0 %3541
        %v3543 = vsel %vm368, %v3505, 0.0
        %3544 = vadd.xlane.f32.xlu0 %v3543
        %v3545 = vpop.xlane.xlu0 %3544
        %v3546 = vsel %vm368, %v3506, 0.0
        %3547 = vadd.xlane.f32.xlu0 %v3546
        %v3548 = vpop.xlane.xlu0 %3547
        %v3549 = vsel %vm368, %v3507, 0.0
        %3550 = vadd.xlane.f32.xlu0 %v3549
        %v3551 = vpop.xlane.xlu0 %3550
        %v3552 = vsel %vm368, %v3508, 0.0
        %3553 = vadd.xlane.f32.xlu0 %v3552
        %v3554 = vpop.xlane.xlu0 %3553
        %v3555 = vsel %vm368, %v3509, 0.0
        %3556 = vadd.xlane.f32.xlu0 %v3555
        %v3557 = vpop.xlane.xlu0 %3556
        %v3558 = vmul.f32 %v3512, %v423
        %v3559 = vmul.f32 %v3515, %v423
        %v3560 = vmul.f32 %v3518, %v423
        %v3561 = vmul.f32 %v3521, %v423
        %v3562 = vmul.f32 %v3524, %v423
        %v3563 = vmul.f32 %v3527, %v423
        %v3564 = vmul.f32 %v3530, %v423
        %v3565 = vmul.f32 %v3533, %v423
        %v3566 = vmul.f32 %v3536, %v423
        %v3567 = vmul.f32 %v3539, %v423
        %v3568 = vmul.f32 %v3542, %v423
        %v3569 = vmul.f32 %v3545, %v423
        %v3570 = vmul.f32 %v3548, %v423
        %v3571 = vmul.f32 %v3551, %v423
        %v3572 = vmul.f32 %v3554, %v423
        %v3573 = vmul.f32 %v3557, %v423
        %v3574 = vsub.f32 %v3494, %v3558
        %v3575 = vsub.f32 %v3495, %v3559
        %v3576 = vsub.f32 %v3496, %v3560
        %v3577 = vsub.f32 %v3497, %v3561
        %v3578 = vsub.f32 %v3498, %v3562
        %v3579 = vsub.f32 %v3499, %v3563
        %v3580 = vsub.f32 %v3500, %v3564
        %v3581 = vsub.f32 %v3501, %v3565
        %v3582 = vsub.f32 %v3502, %v3566
        %v3583 = vsub.f32 %v3503, %v3567
        %v3584 = vsub.f32 %v3504, %v3568
        %v3585 = vsub.f32 %v3505, %v3569
        %v3586 = vsub.f32 %v3506, %v3570
        %v3587 = vsub.f32 %v3507, %v3571
        %v3588 = vsub.f32 %v3508, %v3572
        %v3589 = vsub.f32 %v3509, %v3573
        %v3590 = vmul.f32 %v3574, %v3574
        %v3591 = vmul.f32 %v3575, %v3575
        %v3592 = vmul.f32 %v3576, %v3576
        %v3593 = vmul.f32 %v3577, %v3577
        %v3594 = vmul.f32 %v3578, %v3578
        %v3595 = vmul.f32 %v3579, %v3579
        %v3596 = vmul.f32 %v3580, %v3580
        %v3597 = vmul.f32 %v3581, %v3581
        %v3598 = vmul.f32 %v3582, %v3582
        %v3599 = vmul.f32 %v3583, %v3583
        %v3600 = vmul.f32 %v3584, %v3584
        %v3601 = vmul.f32 %v3585, %v3585
        %v3602 = vmul.f32 %v3586, %v3586
        %v3603 = vmul.f32 %v3587, %v3587
        %v3604 = vmul.f32 %v3588, %v3588
        %v3605 = vmul.f32 %v3589, %v3589
        %v3606 = vsel %vm368, %v3590, 0.0
        %3607 = vadd.xlane.f32.xlu0 %v3606
        %v3608 = vpop.xlane.xlu0 %3607
        %v3609 = vsel %vm368, %v3591, 0.0
        %3610 = vadd.xlane.f32.xlu0 %v3609
        %v3611 = vpop.xlane.xlu0 %3610
        %v3612 = vsel %vm368, %v3592, 0.0
        %3613 = vadd.xlane.f32.xlu0 %v3612
        %v3614 = vpop.xlane.xlu0 %3613
        %v3615 = vsel %vm368, %v3593, 0.0
        %3616 = vadd.xlane.f32.xlu0 %v3615
        %v3617 = vpop.xlane.xlu0 %3616
        %v3618 = vsel %vm368, %v3594, 0.0
        %3619 = vadd.xlane.f32.xlu0 %v3618
        %v3620 = vpop.xlane.xlu0 %3619
        %v3621 = vsel %vm368, %v3595, 0.0
        %3622 = vadd.xlane.f32.xlu0 %v3621
        %v3623 = vpop.xlane.xlu0 %3622
        %v3624 = vsel %vm368, %v3596, 0.0
        %3625 = vadd.xlane.f32.xlu0 %v3624
        %v3626 = vpop.xlane.xlu0 %3625
        %v3627 = vsel %vm368, %v3597, 0.0
        %3628 = vadd.xlane.f32.xlu0 %v3627
        %v3629 = vpop.xlane.xlu0 %3628
        %v3630 = vsel %vm368, %v3598, 0.0
        %3631 = vadd.xlane.f32.xlu0 %v3630
        %v3632 = vpop.xlane.xlu0 %3631
        %v3633 = vsel %vm368, %v3599, 0.0
        %3634 = vadd.xlane.f32.xlu0 %v3633
        %v3635 = vpop.xlane.xlu0 %3634
        %v3636 = vsel %vm368, %v3600, 0.0
        %3637 = vadd.xlane.f32.xlu0 %v3636
        %v3638 = vpop.xlane.xlu0 %3637
        %v3639 = vsel %vm368, %v3601, 0.0
        %3640 = vadd.xlane.f32.xlu0 %v3639
        %v3641 = vpop.xlane.xlu0 %3640
        %v3642 = vsel %vm368, %v3602, 0.0
        %3643 = vadd.xlane.f32.xlu0 %v3642
        %v3644 = vpop.xlane.xlu0 %3643
        %v3645 = vsel %vm368, %v3603, 0.0
        %3646 = vadd.xlane.f32.xlu0 %v3645
        %v3647 = vpop.xlane.xlu0 %3646
        %v3648 = vsel %vm368, %v3604, 0.0
        %3649 = vadd.xlane.f32.xlu0 %v3648
        %v3650 = vpop.xlane.xlu0 %3649
        %v3651 = vsel %vm368, %v3605, 0.0
        %3652 = vadd.xlane.f32.xlu0 %v3651
        %v3653 = vpop.xlane.xlu0 %3652
        %v3654 = vmul.f32 %v3608, %v423
        %v3655 = vmul.f32 %v3611, %v423
        %v3656 = vmul.f32 %v3614, %v423
        %v3657 = vmul.f32 %v3617, %v423
        %v3658 = vmul.f32 %v3620, %v423
        %v3659 = vmul.f32 %v3623, %v423
        %v3660 = vmul.f32 %v3626, %v423
        %v3661 = vmul.f32 %v3629, %v423
        %v3662 = vmul.f32 %v3632, %v423
        %v3663 = vmul.f32 %v3635, %v423
        %v3664 = vmul.f32 %v3638, %v423
        %v3665 = vmul.f32 %v3641, %v423
        %v3666 = vmul.f32 %v3644, %v423
        %v3667 = vmul.f32 %v3647, %v423
        %v3668 = vmul.f32 %v3650, %v423
        %v3669 = vmul.f32 %v3653, %v423
        %v3670 = vadd.f32 %v3654, 1e-05
        %v3671 = vadd.f32 %v3655, 1e-05
        %v3672 = vadd.f32 %v3656, 1e-05
        %v3673 = vadd.f32 %v3657, 1e-05
        %v3674 = vadd.f32 %v3658, 1e-05
        %v3675 = vadd.f32 %v3659, 1e-05
        %v3676 = vadd.f32 %v3660, 1e-05
        %v3677 = vadd.f32 %v3661, 1e-05
        %v3678 = vadd.f32 %v3662, 1e-05
        %v3679 = vadd.f32 %v3663, 1e-05
        %v3680 = vadd.f32 %v3664, 1e-05
        %v3681 = vadd.f32 %v3665, 1e-05
        %v3682 = vadd.f32 %v3666, 1e-05
        %v3683 = vadd.f32 %v3667, 1e-05
        %v3684 = vadd.f32 %v3668, 1e-05
        %v3685 = vadd.f32 %v3669, 1e-05
        %v3686 = vrsqrt.pop %v3670
        %v3687 = vmul.f32 %v3686, %v3670
        %v3688 = vmul.f32 %v3687, %v3686
        %v3689 = vmul.f32 0.5, %v3688
        %v3690 = vsub.f32 1.5, %v3689
        %v3691 = vmul.f32 %v3686, %v3690
        %vm3692 = vweird.f32 %v3670
        %vm3693 = vweird.f32 %v3686
        %vm3694 = vmor %vm3692, %vm3693
        %v3695 = vsel %vm3694, %v3686, %v3691
        %v3696 = vrsqrt.pop %v3671
        %v3697 = vmul.f32 %v3696, %v3671
        %v3698 = vmul.f32 %v3697, %v3696
        %v3699 = vmul.f32 0.5, %v3698
        %v3700 = vsub.f32 1.5, %v3699
        %v3701 = vmul.f32 %v3696, %v3700
        %vm3702 = vweird.f32 %v3671
        %vm3703 = vweird.f32 %v3696
        %vm3704 = vmor %vm3702, %vm3703
        %v3705 = vsel %vm3704, %v3696, %v3701
        %v3706 = vrsqrt.pop %v3672
        %v3707 = vmul.f32 %v3706, %v3672
        %v3708 = vmul.f32 %v3707, %v3706
        %v3709 = vmul.f32 0.5, %v3708
        %v3710 = vsub.f32 1.5, %v3709
        %v3711 = vmul.f32 %v3706, %v3710
        %vm3712 = vweird.f32 %v3672
        %vm3713 = vweird.f32 %v3706
        %vm3714 = vmor %vm3712, %vm3713
        %v3715 = vsel %vm3714, %v3706, %v3711
        %v3716 = vrsqrt.pop %v3673
        %v3717 = vmul.f32 %v3716, %v3673
        %v3718 = vmul.f32 %v3717, %v3716
        %v3719 = vmul.f32 0.5, %v3718
        %v3720 = vsub.f32 1.5, %v3719
        %v3721 = vmul.f32 %v3716, %v3720
        %vm3722 = vweird.f32 %v3673
        %vm3723 = vweird.f32 %v3716
        %vm3724 = vmor %vm3722, %vm3723
        %v3725 = vsel %vm3724, %v3716, %v3721
        %v3726 = vrsqrt.pop %v3674
        %v3727 = vmul.f32 %v3726, %v3674
        %v3728 = vmul.f32 %v3727, %v3726
        %v3729 = vmul.f32 0.5, %v3728
        %v3730 = vsub.f32 1.5, %v3729
        %v3731 = vmul.f32 %v3726, %v3730
        %vm3732 = vweird.f32 %v3674
        %vm3733 = vweird.f32 %v3726
        %vm3734 = vmor %vm3732, %vm3733
        %v3735 = vsel %vm3734, %v3726, %v3731
        %v3736 = vrsqrt.pop %v3675
        %v3737 = vmul.f32 %v3736, %v3675
        %v3738 = vmul.f32 %v3737, %v3736
        %v3739 = vmul.f32 0.5, %v3738
        %v3740 = vsub.f32 1.5, %v3739
        %v3741 = vmul.f32 %v3736, %v3740
        %vm3742 = vweird.f32 %v3675
        %vm3743 = vweird.f32 %v3736
        %vm3744 = vmor %vm3742, %vm3743
        %v3745 = vsel %vm3744, %v3736, %v3741
        %v3746 = vrsqrt.pop %v3676
        %v3747 = vmul.f32 %v3746, %v3676
        %v3748 = vmul.f32 %v3747, %v3746
        %v3749 = vmul.f32 0.5, %v3748
        %v3750 = vsub.f32 1.5, %v3749
        %v3751 = vmul.f32 %v3746, %v3750
        %vm3752 = vweird.f32 %v3676
        %vm3753 = vweird.f32 %v3746
        %vm3754 = vmor %vm3752, %vm3753
        %v3755 = vsel %vm3754, %v3746, %v3751
        %v3756 = vrsqrt.pop %v3677
        %v3757 = vmul.f32 %v3756, %v3677
        %v3758 = vmul.f32 %v3757, %v3756
        %v3759 = vmul.f32 0.5, %v3758
        %v3760 = vsub.f32 1.5, %v3759
        %v3761 = vmul.f32 %v3756, %v3760
        %vm3762 = vweird.f32 %v3677
        %vm3763 = vweird.f32 %v3756
        %vm3764 = vmor %vm3762, %vm3763
        %v3765 = vsel %vm3764, %v3756, %v3761
        %v3766 = vrsqrt.pop %v3678
        %v3767 = vmul.f32 %v3766, %v3678
        %v3768 = vmul.f32 %v3767, %v3766
        %v3769 = vmul.f32 0.5, %v3768
        %v3770 = vsub.f32 1.5, %v3769
        %v3771 = vmul.f32 %v3766, %v3770
        %vm3772 = vweird.f32 %v3678
        %vm3773 = vweird.f32 %v3766
        %vm3774 = vmor %vm3772, %vm3773
        %v3775 = vsel %vm3774, %v3766, %v3771
        %v3776 = vrsqrt.pop %v3679
        %v3777 = vmul.f32 %v3776, %v3679
        %v3778 = vmul.f32 %v3777, %v3776
        %v3779 = vmul.f32 0.5, %v3778
        %v3780 = vsub.f32 1.5, %v3779
        %v3781 = vmul.f32 %v3776, %v3780
        %vm3782 = vweird.f32 %v3679
        %vm3783 = vweird.f32 %v3776
        %vm3784 = vmor %vm3782, %vm3783
        %v3785 = vsel %vm3784, %v3776, %v3781
        %v3786 = vrsqrt.pop %v3680
        %v3787 = vmul.f32 %v3786, %v3680
        %v3788 = vmul.f32 %v3787, %v3786
        %v3789 = vmul.f32 0.5, %v3788
        %v3790 = vsub.f32 1.5, %v3789
        %v3791 = vmul.f32 %v3786, %v3790
        %vm3792 = vweird.f32 %v3680
        %vm3793 = vweird.f32 %v3786
        %vm3794 = vmor %vm3792, %vm3793
        %v3795 = vsel %vm3794, %v3786, %v3791
        %v3796 = vrsqrt.pop %v3681
        %v3797 = vmul.f32 %v3796, %v3681
        %v3798 = vmul.f32 %v3797, %v3796
        %v3799 = vmul.f32 0.5, %v3798
        %v3800 = vsub.f32 1.5, %v3799
        %v3801 = vmul.f32 %v3796, %v3800
        %vm3802 = vweird.f32 %v3681
        %vm3803 = vweird.f32 %v3796
        %vm3804 = vmor %vm3802, %vm3803
        %v3805 = vsel %vm3804, %v3796, %v3801
        %v3806 = vrsqrt.pop %v3682
        %v3807 = vmul.f32 %v3806, %v3682
        %v3808 = vmul.f32 %v3807, %v3806
        %v3809 = vmul.f32 0.5, %v3808
        %v3810 = vsub.f32 1.5, %v3809
        %v3811 = vmul.f32 %v3806, %v3810
        %vm3812 = vweird.f32 %v3682
        %vm3813 = vweird.f32 %v3806
        %vm3814 = vmor %vm3812, %vm3813
        %v3815 = vsel %vm3814, %v3806, %v3811
        %v3816 = vrsqrt.pop %v3683
        %v3817 = vmul.f32 %v3816, %v3683
        %v3818 = vmul.f32 %v3817, %v3816
        %v3819 = vmul.f32 0.5, %v3818
        %v3820 = vsub.f32 1.5, %v3819
        %v3821 = vmul.f32 %v3816, %v3820
        %vm3822 = vweird.f32 %v3683
        %vm3823 = vweird.f32 %v3816
        %vm3824 = vmor %vm3822, %vm3823
        %v3825 = vsel %vm3824, %v3816, %v3821
        %v3826 = vrsqrt.pop %v3684
        %v3827 = vmul.f32 %v3826, %v3684
        %v3828 = vmul.f32 %v3827, %v3826
        %v3829 = vmul.f32 0.5, %v3828
        %v3830 = vsub.f32 1.5, %v3829
        %v3831 = vmul.f32 %v3826, %v3830
        %vm3832 = vweird.f32 %v3684
        %vm3833 = vweird.f32 %v3826
        %vm3834 = vmor %vm3832, %vm3833
        %v3835 = vsel %vm3834, %v3826, %v3831
        %v3836 = vrsqrt.pop %v3685
        %v3837 = vmul.f32 %v3836, %v3685
        %v3838 = vmul.f32 %v3837, %v3836
        %v3839 = vmul.f32 0.5, %v3838
        %v3840 = vsub.f32 1.5, %v3839
        %v3841 = vmul.f32 %v3836, %v3840
        %vm3842 = vweird.f32 %v3685
        %vm3843 = vweird.f32 %v3836
        %vm3844 = vmor %vm3842, %vm3843
        %v3845 = vsel %vm3844, %v3836, %v3841
        %v3846 = vmul.f32 %v3574, %v3695
        %v3847 = vmul.f32 %v3575, %v3705
        %v3848 = vmul.f32 %v3576, %v3715
        %v3849 = vmul.f32 %v3577, %v3725
        %v3850 = vmul.f32 %v3578, %v3735
        %v3851 = vmul.f32 %v3579, %v3745
        %v3852 = vmul.f32 %v3580, %v3755
        %v3853 = vmul.f32 %v3581, %v3765
        %v3854 = vmul.f32 %v3582, %v3775
        %v3855 = vmul.f32 %v3583, %v3785
        %v3856 = vmul.f32 %v3584, %v3795
        %v3857 = vmul.f32 %v3585, %v3805
        %v3858 = vmul.f32 %v3586, %v3815
        %v3859 = vmul.f32 %v3587, %v3825
        %v3860 = vmul.f32 %v3588, %v3835
        %v3861 = vmul.f32 %v3589, %v3845
        %v3862 = vperm.slane %v366, 3
        %v3863 = vmul.f32 %v3846, %v3862
        %v3864 = vmul.f32 %v3847, %v3862
        %v3865 = vmul.f32 %v3848, %v3862
        %v3866 = vmul.f32 %v3849, %v3862
        %v3867 = vmul.f32 %v3850, %v3862
        %v3868 = vmul.f32 %v3851, %v3862
        %v3869 = vmul.f32 %v3852, %v3862
        %v3870 = vmul.f32 %v3853, %v3862
        %v3871 = vmul.f32 %v3854, %v3862
        %v3872 = vmul.f32 %v3855, %v3862
        %v3873 = vmul.f32 %v3856, %v3862
        %v3874 = vmul.f32 %v3857, %v3862
        %v3875 = vmul.f32 %v3858, %v3862
        %v3876 = vmul.f32 %v3859, %v3862
        %v3877 = vmul.f32 %v3860, %v3862
        %v3878 = vmul.f32 %v3861, %v3862
        %v3879 = vperm.slane %v366, 4
        %v3880 = vadd.f32 %v3863, %v3879
        %v3881 = vadd.f32 %v3864, %v3879
        %v3882 = vadd.f32 %v3865, %v3879
        %v3883 = vadd.f32 %v3866, %v3879
        %v3884 = vadd.f32 %v3867, %v3879
        %v3885 = vadd.f32 %v3868, %v3879
        %v3886 = vadd.f32 %v3869, %v3879
        %v3887 = vadd.f32 %v3870, %v3879
        %v3888 = vadd.f32 %v3871, %v3879
        %v3889 = vadd.f32 %v3872, %v3879
        %v3890 = vadd.f32 %v3873, %v3879
        %v3891 = vadd.f32 %v3874, %v3879
        %v3892 = vadd.f32 %v3875, %v3879
        %v3893 = vadd.f32 %v3876, %v3879
        %v3894 = vadd.f32 %v3877, %v3879
        %v3895 = vadd.f32 %v3878, %v3879
        %v3896 = vpack.c.bf16 %v3881, %v3880
        %v3897 = vpack.c.bf16 %v3883, %v3882
        %v3898 = vpack.c.bf16 %v3885, %v3884
        %v3899 = vpack.c.bf16 %v3887, %v3886
        %v3900 = vpack.c.bf16 %v3889, %v3888
        %v3901 = vpack.c.bf16 %v3891, %v3890
        %v3902 = vpack.c.bf16 %v3893, %v3892
        %v3903 = vpack.c.bf16 %v3895, %v3894
        %v3905 = vperm.slane %v367, 0
        %v3911 = vunpack.c.l.b16 %v346
        %v3912 = vunpack.c.l.b16 %v347
        %v3913 = vunpack.c.l.b16 %v348
        %v3914 = vunpack.c.l.b16 %v349
        %v3915 = vpack.c.b16 %v3912, %v3911
        %v3916 = vpack.c.b16 %v3914, %v3913
        %v3920 = vsel %vm368, %v3896, 0
        %v3923 = vsel %vm368, %v3897, 0
        %v3926 = vsel %vm368, %v3898, 0
        %v3929 = vsel %vm368, %v3899, 0
        %v3932 = vsel %vm368, %v3900, 0
        %v3935 = vsel %vm368, %v3901, 0
        %v3938 = vsel %vm368, %v3902, 0
        %v3941 = vsel %vm368, %v3903, 0
        %3943 = vmatpush.bf16.msra.mxu0 0
        %3944 = vmatpush.bf16.msra.mxu0 0
        %3945 = vmatpush.bf16.msra.mxu0 0
        %3946 = vmatpush.bf16.msra.mxu0 0
        %3947 = vmatpush.bf16.msra.mxu0 0
        %3948 = vmatpush.bf16.msra.mxu0 0
        %3949 = vmatpush.bf16.msra.mxu0 %v3916
        %3950 = vmatpush.bf16.msra.mxu0 %v3915
        %3951 = vmatmul.bf16.gmra.mxu0 %v3920
        %v3952 = vpop.f32.mrf.mxu0
        %v3953 = vadd.f32 %v3905, %v3952
        %v3954 = vpop.f32.mrf.mxu0
        %v3955 = vadd.f32 %v3905, %v3954
        %3956 = vmatmul.bf16.gmra.mxu0 %v3923
        %v3957 = vpop.f32.mrf.mxu0
        %v3958 = vadd.f32 %v3905, %v3957
        %v3959 = vpop.f32.mrf.mxu0
        %v3960 = vadd.f32 %v3905, %v3959
        %3961 = vmatmul.bf16.gmra.mxu0 %v3926
        %v3962 = vpop.f32.mrf.mxu0
        %v3963 = vadd.f32 %v3905, %v3962
        %v3964 = vpop.f32.mrf.mxu0
        %v3965 = vadd.f32 %v3905, %v3964
        %3966 = vmatmul.bf16.gmra.mxu0 %v3929
        %v3967 = vpop.f32.mrf.mxu0
        %v3968 = vadd.f32 %v3905, %v3967
        %v3969 = vpop.f32.mrf.mxu0
        %v3970 = vadd.f32 %v3905, %v3969
        %3971 = vmatmul.bf16.gmra.mxu0 %v3932
        %v3972 = vpop.f32.mrf.mxu0
        %v3973 = vadd.f32 %v3905, %v3972
        %v3974 = vpop.f32.mrf.mxu0
        %v3975 = vadd.f32 %v3905, %v3974
        %3976 = vmatmul.bf16.gmra.mxu0 %v3935
        %v3977 = vpop.f32.mrf.mxu0
        %v3978 = vadd.f32 %v3905, %v3977
        %v3979 = vpop.f32.mrf.mxu0
        %v3980 = vadd.f32 %v3905, %v3979
        %3981 = vmatmul.bf16.gmra.mxu0 %v3938
        %v3982 = vpop.f32.mrf.mxu0
        %v3983 = vadd.f32 %v3905, %v3982
        %v3984 = vpop.f32.mrf.mxu0
        %v3985 = vadd.f32 %v3905, %v3984
        %3986 = vmatmul.bf16.gmra.mxu0 %v3941
        %v3987 = vpop.f32.mrf.mxu0
        %v3988 = vadd.f32 %v3905, %v3987
        %v3989 = vpop.f32.mrf.mxu0
        %v3990 = vadd.f32 %v3905, %v3989
        %3991 = vdwg.mxu0
        %v3992 = vmul.f32 %v3953, 0.5
        %v3993 = vmul.f32 %v3955, 0.5
        %v3994 = vmul.f32 %v3958, 0.5
        %v3995 = vmul.f32 %v3960, 0.5
        %v3996 = vmul.f32 %v3963, 0.5
        %v3997 = vmul.f32 %v3965, 0.5
        %v3998 = vmul.f32 %v3968, 0.5
        %v3999 = vmul.f32 %v3970, 0.5
        %v4000 = vmul.f32 %v3973, 0.5
        %v4001 = vmul.f32 %v3975, 0.5
        %v4002 = vmul.f32 %v3978, 0.5
        %v4003 = vmul.f32 %v3980, 0.5
        %v4004 = vmul.f32 %v3983, 0.5
        %v4005 = vmul.f32 %v3985, 0.5
        %v4006 = vmul.f32 %v3988, 0.5
        %v4007 = vmul.f32 %v3990, 0.5
        %v4008 = vmul.f32 %v3953, 0.044715
        %v4009 = vmul.f32 %v3955, 0.044715
        %v4010 = vmul.f32 %v3958, 0.044715
        %v4011 = vmul.f32 %v3960, 0.044715
        %v4012 = vmul.f32 %v3963, 0.044715
        %v4013 = vmul.f32 %v3965, 0.044715
        %v4014 = vmul.f32 %v3968, 0.044715
        %v4015 = vmul.f32 %v3970, 0.044715
        %v4016 = vmul.f32 %v3973, 0.044715
        %v4017 = vmul.f32 %v3975, 0.044715
        %v4018 = vmul.f32 %v3978, 0.044715
        %v4019 = vmul.f32 %v3980, 0.044715
        %v4020 = vmul.f32 %v3983, 0.044715
        %v4021 = vmul.f32 %v3985, 0.044715
        %v4022 = vmul.f32 %v3988, 0.044715
        %v4023 = vmul.f32 %v3990, 0.044715
        %v4024 = vmul.f32 %v4008, %v3953
        %v4025 = vmul.f32 %v4009, %v3955
        %v4026 = vmul.f32 %v4010, %v3958
        %v4027 = vmul.f32 %v4011, %v3960
        %v4028 = vmul.f32 %v4012, %v3963
        %v4029 = vmul.f32 %v4013, %v3965
        %v4030 = vmul.f32 %v4014, %v3968
        %v4031 = vmul.f32 %v4015, %v3970
        %v4032 = vmul.f32 %v4016, %v3973
        %v4033 = vmul.f32 %v4017, %v3975
        %v4034 = vmul.f32 %v4018, %v3978
        %v4035 = vmul.f32 %v4019, %v3980
        %v4036 = vmul.f32 %v4020, %v3983
        %v4037 = vmul.f32 %v4021, %v3985
        %v4038 = vmul.f32 %v4022, %v3988
        %v4039 = vmul.f32 %v4023, %v3990
        %v4040 = vmul.f32 %v4024, %v3953
        %v4041 = vmul.f32 %v4025, %v3955
        %v4042 = vmul.f32 %v4026, %v3958
        %v4043 = vmul.f32 %v4027, %v3960
        %v4044 = vmul.f32 %v4028, %v3963
        %v4045 = vmul.f32 %v4029, %v3965
        %v4046 = vmul.f32 %v4030, %v3968
        %v4047 = vmul.f32 %v4031, %v3970
        %v4048 = vmul.f32 %v4032, %v3973
        %v4049 = vmul.f32 %v4033, %v3975
        %v4050 = vmul.f32 %v4034, %v3978
        %v4051 = vmul.f32 %v4035, %v3980
        %v4052 = vmul.f32 %v4036, %v3983
        %v4053 = vmul.f32 %v4037, %v3985
        %v4054 = vmul.f32 %v4038, %v3988
        %v4055 = vmul.f32 %v4039, %v3990
        %v4056 = vadd.f32 %v3953, %v4040
        %v4057 = vadd.f32 %v3955, %v4041
        %v4058 = vadd.f32 %v3958, %v4042
        %v4059 = vadd.f32 %v3960, %v4043
        %v4060 = vadd.f32 %v3963, %v4044
        %v4061 = vadd.f32 %v3965, %v4045
        %v4062 = vadd.f32 %v3968, %v4046
        %v4063 = vadd.f32 %v3970, %v4047
        %v4064 = vadd.f32 %v3973, %v4048
        %v4065 = vadd.f32 %v3975, %v4049
        %v4066 = vadd.f32 %v3978, %v4050
        %v4067 = vadd.f32 %v3980, %v4051
        %v4068 = vadd.f32 %v3983, %v4052
        %v4069 = vadd.f32 %v3985, %v4053
        %v4070 = vadd.f32 %v3988, %v4054
        %v4071 = vadd.f32 %v3990, %v4055
        %v4072 = vmul.f32 %v4056, 0.7978846
        %v4073 = vmul.f32 %v4057, 0.7978846
        %v4074 = vmul.f32 %v4058, 0.7978846
        %v4075 = vmul.f32 %v4059, 0.7978846
        %v4076 = vmul.f32 %v4060, 0.7978846
        %v4077 = vmul.f32 %v4061, 0.7978846
        %v4078 = vmul.f32 %v4062, 0.7978846
        %v4079 = vmul.f32 %v4063, 0.7978846
        %v4080 = vmul.f32 %v4064, 0.7978846
        %v4081 = vmul.f32 %v4065, 0.7978846
        %v4082 = vmul.f32 %v4066, 0.7978846
        %v4083 = vmul.f32 %v4067, 0.7978846
        %v4084 = vmul.f32 %v4068, 0.7978846
        %v4085 = vmul.f32 %v4069, 0.7978846
        %v4086 = vmul.f32 %v4070, 0.7978846
        %v4087 = vmul.f32 %v4071, 0.7978846
        %v4088 = vtanh.pop %v4072
        %v4089 = vtanh.pop %v4073
        %v4090 = vtanh.pop %v4074
        %v4091 = vtanh.pop %v4075
        %v4092 = vtanh.pop %v4076
        %v4093 = vtanh.pop %v4077
        %v4094 = vtanh.pop %v4078
        %v4095 = vtanh.pop %v4079
        %v4096 = vtanh.pop %v4080
        %v4097 = vtanh.pop %v4081
        %v4098 = vtanh.pop %v4082
        %v4099 = vtanh.pop %v4083
        %v4100 = vtanh.pop %v4084
        %v4101 = vtanh.pop %v4085
        %v4102 = vtanh.pop %v4086
        %v4103 = vtanh.pop %v4087
        %v4104 = vadd.f32 %v4088, 1.0
        %v4105 = vadd.f32 %v4089, 1.0
        %v4106 = vadd.f32 %v4090, 1.0
        %v4107 = vadd.f32 %v4091, 1.0
        %v4108 = vadd.f32 %v4092, 1.0
        %v4109 = vadd.f32 %v4093, 1.0
        %v4110 = vadd.f32 %v4094, 1.0
        %v4111 = vadd.f32 %v4095, 1.0
        %v4112 = vadd.f32 %v4096, 1.0
        %v4113 = vadd.f32 %v4097, 1.0
        %v4114 = vadd.f32 %v4098, 1.0
        %v4115 = vadd.f32 %v4099, 1.0
        %v4116 = vadd.f32 %v4100, 1.0
        %v4117 = vadd.f32 %v4101, 1.0
        %v4118 = vadd.f32 %v4102, 1.0
        %v4119 = vadd.f32 %v4103, 1.0
        %v4120 = vmul.f32 %v3992, %v4104
        %v4121 = vmul.f32 %v3993, %v4105
        %v4122 = vmul.f32 %v3994, %v4106
        %v4123 = vmul.f32 %v3995, %v4107
        %v4124 = vmul.f32 %v3996, %v4108
        %v4125 = vmul.f32 %v3997, %v4109
        %v4126 = vmul.f32 %v3998, %v4110
        %v4127 = vmul.f32 %v3999, %v4111
        %v4128 = vmul.f32 %v4000, %v4112
        %v4129 = vmul.f32 %v4001, %v4113
        %v4130 = vmul.f32 %v4002, %v4114
        %v4131 = vmul.f32 %v4003, %v4115
        %v4132 = vmul.f32 %v4004, %v4116
        %v4133 = vmul.f32 %v4005, %v4117
        %v4134 = vmul.f32 %v4006, %v4118
        %v4135 = vmul.f32 %v4007, %v4119
        %v4136 = vpack.c.bf16 %v4121, %v4120
        %v4137 = vpack.c.bf16 %v4123, %v4122
        %v4138 = vpack.c.bf16 %v4125, %v4124
        %v4139 = vpack.c.bf16 %v4127, %v4126
        %v4140 = vpack.c.bf16 %v4129, %v4128
        %v4141 = vpack.c.bf16 %v4131, %v4130
        %v4142 = vpack.c.bf16 %v4133, %v4132
        %v4143 = vpack.c.bf16 %v4135, %v4134
        %v4144 = vperm.slane %v366, 5
        %v4161 = vunpack.c.l.b16 %v350
        %v4162 = vunpack.c.l.b16 %v351
        %v4163 = vunpack.c.l.b16 %v352
        %v4164 = vunpack.c.l.b16 %v353
        %v4165 = vunpack.c.l.b16 %v354
        %v4166 = vunpack.c.l.b16 %v355
        %v4167 = vunpack.c.l.b16 %v356
        %v4168 = vunpack.c.l.b16 %v357
        %v4169 = vunpack.c.l.b16 %v358
        %v4170 = vunpack.c.l.b16 %v359
        %v4171 = vunpack.c.l.b16 %v360
        %v4172 = vunpack.c.l.b16 %v361
        %v4173 = vunpack.c.l.b16 %v362
        %v4174 = vunpack.c.l.b16 %v363
        %v4175 = vunpack.c.l.b16 %v364
        %v4176 = vunpack.c.l.b16 %v365
        %v4177 = vpack.c.b16 %v4162, %v4161
        %v4178 = vpack.c.b16 %v4164, %v4163
        %v4179 = vpack.c.b16 %v4166, %v4165
        %v4180 = vpack.c.b16 %v4168, %v4167
        %v4181 = vpack.c.b16 %v4170, %v4169
        %v4182 = vpack.c.b16 %v4172, %v4171
        %v4183 = vpack.c.b16 %v4174, %v4173
        %v4184 = vpack.c.b16 %v4176, %v4175
        %4193 = vmatpush.bf16.msra.mxu0 %v4184
        %4194 = vmatpush.bf16.msra.mxu0 %v4183
        %4195 = vmatpush.bf16.msra.mxu0 %v4182
        %4196 = vmatpush.bf16.msra.mxu0 %v4181
        %4197 = vmatpush.bf16.msra.mxu0 %v4180
        %4198 = vmatpush.bf16.msra.mxu0 %v4179
        %4199 = vmatpush.bf16.msra.mxu0 %v4178
        %4200 = vmatpush.bf16.msra.mxu0 %v4177
        %4201 = vmatmul.bf16.gmra.mxu0 %v4136
        %v4202 = vpop.f32.mrf.mxu0
        %v4203 = vadd.f32 %v4144, %v4202
        %v4204 = vpop.f32.mrf.mxu0
        %v4205 = vadd.f32 %v4144, %v4204
        %4206 = vmatmul.bf16.gmra.mxu0 %v4137
        %v4207 = vpop.f32.mrf.mxu0
        %v4208 = vadd.f32 %v4144, %v4207
        %v4209 = vpop.f32.mrf.mxu0
        %v4210 = vadd.f32 %v4144, %v4209
        %4211 = vmatmul.bf16.gmra.mxu0 %v4138
        %v4212 = vpop.f32.mrf.mxu0
        %v4213 = vadd.f32 %v4144, %v4212
        %v4214 = vpop.f32.mrf.mxu0
        %v4215 = vadd.f32 %v4144, %v4214
        %4216 = vmatmul.bf16.gmra.mxu0 %v4139
        %v4217 = vpop.f32.mrf.mxu0
        %v4218 = vadd.f32 %v4144, %v4217
        %v4219 = vpop.f32.mrf.mxu0
        %v4220 = vadd.f32 %v4144, %v4219
        %4221 = vmatmul.bf16.gmra.mxu0 %v4140
        %v4222 = vpop.f32.mrf.mxu0
        %v4223 = vadd.f32 %v4144, %v4222
        %v4224 = vpop.f32.mrf.mxu0
        %v4225 = vadd.f32 %v4144, %v4224
        %4226 = vmatmul.bf16.gmra.mxu0 %v4141
        %v4227 = vpop.f32.mrf.mxu0
        %v4228 = vadd.f32 %v4144, %v4227
        %v4229 = vpop.f32.mrf.mxu0
        %v4230 = vadd.f32 %v4144, %v4229
        %4231 = vmatmul.bf16.gmra.mxu0 %v4142
        %v4232 = vpop.f32.mrf.mxu0
        %v4233 = vadd.f32 %v4144, %v4232
        %v4234 = vpop.f32.mrf.mxu0
        %v4235 = vadd.f32 %v4144, %v4234
        %4236 = vmatmul.bf16.gmra.mxu0 %v4143
        %v4237 = vpop.f32.mrf.mxu0
        %v4238 = vadd.f32 %v4144, %v4237
        %v4239 = vpop.f32.mrf.mxu0
        %v4240 = vadd.f32 %v4144, %v4239
        %4241 = vdwg.mxu0
        %v4242 = vadd.f32 %v3494, %v4203
        %v4243 = vadd.f32 %v3495, %v4205
        %v4244 = vadd.f32 %v3496, %v4208
        %v4245 = vadd.f32 %v3497, %v4210
        %v4246 = vadd.f32 %v3498, %v4213
        %v4247 = vadd.f32 %v3499, %v4215
        %v4248 = vadd.f32 %v3500, %v4218
        %v4249 = vadd.f32 %v3501, %v4220
        %v4250 = vadd.f32 %v3502, %v4223
        %v4251 = vadd.f32 %v3503, %v4225
        %v4252 = vadd.f32 %v3504, %v4228
        %v4253 = vadd.f32 %v3505, %v4230
        %v4254 = vadd.f32 %v3506, %v4233
        %v4255 = vadd.f32 %v3507, %v4235
        %v4256 = vadd.f32 %v3508, %v4238
        %v4257 = vadd.f32 %v3509, %v4240
        %v4258 = vld [vmem:[#allocation2] sm:$0xff]
        %v4259 = vld [vmem:[#allocation2 + $0x8] sm:$0xff]
        %v4260 = vld [vmem:[#allocation2 + $0x10] sm:$0xff]
        %v4261 = vld [vmem:[#allocation2 + $0x18] sm:$0xff]
        %v4262 = vld [vmem:[#allocation2 + $0x20] sm:$0xff]
        %v4263 = vld [vmem:[#allocation2 + $0x28] sm:$0xff]
        %v4264 = vld [vmem:[#allocation2 + $0x30] sm:$0xff]
        %v4265 = vld [vmem:[#allocation2 + $0x38] sm:$0xff]
        %v4266 = vld [vmem:[#allocation2 + $0x40] sm:$0xff]
        %v4267 = vld [vmem:[#allocation2 + $0x48] sm:$0xff]
        %v4268 = vld [vmem:[#allocation2 + $0x50] sm:$0xff]
        %v4269 = vld [vmem:[#allocation2 + $0x58] sm:$0xff]
        %v4270 = vld [vmem:[#allocation2 + $0x60] sm:$0xff]
        %v4271 = vld [vmem:[#allocation2 + $0x68] sm:$0xff]
        %v4272 = vld [vmem:[#allocation2 + $0x70] sm:$0xff]
        %v4273 = vld [vmem:[#allocation2 + $0x78] sm:$0xff]
        %4274 = vmatpush.msra.mxu0 %v4257
        %4275 = vmatpush.msra.mxu0 %v4256
        %4276 = vmatpush.msra.mxu0 %v4255
        %4277 = vmatpush.msra.mxu0 %v4254
        %4278 = vmatpush.msra.mxu0 %v4253
        %4279 = vmatpush.msra.mxu0 %v4252
        %4280 = vmatpush.msra.mxu0 %v4251
        %4281 = vmatpush.msra.mxu0 %v4250
        %4282 = vmatpush.msra.mxu0 %v4249
        %4283 = vmatpush.msra.mxu0 %v4248
        %4284 = vmatpush.msra.mxu0 %v4247
        %4285 = vmatpush.msra.mxu0 %v4246
        %4286 = vmatpush.msra.mxu0 %v4245
        %4287 = vmatpush.msra.mxu0 %v4244
        %4288 = vmatpush.msra.mxu0 %v4243
        %4289 = vmatpush.msra.mxu0 %v4242
        %4290 = vmatmul.f32.gmra.mxu0 %v4258
        %v4291 = vpop.f32.mrf.mxu0
        %v4292 = vadd.f32 0.0, %v4291
        %4293 = vmatmul.f32.gmra.mxu0 %v4259
        %v4294 = vpop.f32.mrf.mxu0
        %v4295 = vadd.f32 0.0, %v4294
        %4296 = vmatmul.f32.gmra.mxu0 %v4260
        %v4297 = vpop.f32.mrf.mxu0
        %v4298 = vadd.f32 0.0, %v4297
        %4299 = vmatmul.f32.gmra.mxu0 %v4261
        %v4300 = vpop.f32.mrf.mxu0
        %v4301 = vadd.f32 0.0, %v4300
        %4302 = vmatmul.f32.gmra.mxu0 %v4262
        %v4303 = vpop.f32.mrf.mxu0
        %v4304 = vadd.f32 0.0, %v4303
        %4305 = vmatmul.f32.gmra.mxu0 %v4263
        %v4306 = vpop.f32.mrf.mxu0
        %v4307 = vadd.f32 0.0, %v4306
        %4308 = vmatmul.f32.gmra.mxu0 %v4264
        %v4309 = vpop.f32.mrf.mxu0
        %v4310 = vadd.f32 0.0, %v4309
        %4311 = vmatmul.f32.gmra.mxu0 %v4265
        %v4312 = vpop.f32.mrf.mxu0
        %v4313 = vadd.f32 0.0, %v4312
        %4314 = vmatmul.f32.gmra.mxu0 %v4266
        %v4315 = vpop.f32.mrf.mxu0
        %v4316 = vadd.f32 0.0, %v4315
        %4317 = vmatmul.f32.gmra.mxu0 %v4267
        %v4318 = vpop.f32.mrf.mxu0
        %v4319 = vadd.f32 0.0, %v4318
        %4320 = vmatmul.f32.gmra.mxu0 %v4268
        %v4321 = vpop.f32.mrf.mxu0
        %v4322 = vadd.f32 0.0, %v4321
        %4323 = vmatmul.f32.gmra.mxu0 %v4269
        %v4324 = vpop.f32.mrf.mxu0
        %v4325 = vadd.f32 0.0, %v4324
        %4326 = vmatmul.f32.gmra.mxu0 %v4270
        %v4327 = vpop.f32.mrf.mxu0
        %v4328 = vadd.f32 0.0, %v4327
        %4329 = vmatmul.f32.gmra.mxu0 %v4271
        %v4330 = vpop.f32.mrf.mxu0
        %v4331 = vadd.f32 0.0, %v4330
        %4332 = vmatmul.f32.gmra.mxu0 %v4272
        %v4333 = vpop.f32.mrf.mxu0
        %v4334 = vadd.f32 0.0, %v4333
        %4335 = vmatmul.f32.gmra.mxu0 %v4273
        %v4336 = vpop.f32.mrf.mxu0
        %v4337 = vadd.f32 0.0, %v4336
        %4338 = vdwg.mxu0
        %s4339 = scalar_lea.vmem %s1, 16
        %v4340 = vld [vmem:[%s4339] sm:$0xf]
        %v4341 = vld [vmem:[%s4339 + $0x4] sm:$0xf]
        %v4342 = vld [vmem:[%s4339 + $0x8] sm:$0xf]
        %v4343 = vld [vmem:[%s4339 + $0xc] sm:$0xf]
        %s4344 = scalar_lea.vmem %s2, 16
        %v4345 = vld [vmem:[%s4344] sm:$0xf]
        %v4346 = vld [vmem:[%s4344 + $0x4] sm:$0xf]
        %v4347 = vld [vmem:[%s4344 + $0x8] sm:$0xf]
        %v4348 = vld [vmem:[%s4344 + $0xc] sm:$0xf]
        %s4349 = scalar_lea.vmem %s3, 16
        %v4350 = vld [vmem:[%s4349] sm:$0xf]
        %v4351 = vld [vmem:[%s4349 + $0x4] sm:$0xf]
        %v4352 = vld [vmem:[%s4349 + $0x8] sm:$0xf]
        %v4353 = vld [vmem:[%s4349 + $0xc] sm:$0xf]
        %s4354 = scalar_lea.vmem %s4, 64
        %v4355 = vld [vmem:[%s4354] sm:$0xf]
        %v4356 = vld [vmem:[%s4354 + $0x4] sm:$0xf]
        %v4357 = vld [vmem:[%s4354 + $0x8] sm:$0xf]
        %v4358 = vld [vmem:[%s4354 + $0xc] sm:$0xf]
        %v4359 = vld [vmem:[%s4354 + $0x10] sm:$0xf]
        %v4360 = vld [vmem:[%s4354 + $0x14] sm:$0xf]
        %v4361 = vld [vmem:[%s4354 + $0x18] sm:$0xf]
        %v4362 = vld [vmem:[%s4354 + $0x1c] sm:$0xf]
        %v4363 = vld [vmem:[%s4354 + $0x20] sm:$0xf]
        %v4364 = vld [vmem:[%s4354 + $0x24] sm:$0xf]
        %v4365 = vld [vmem:[%s4354 + $0x28] sm:$0xf]
        %v4366 = vld [vmem:[%s4354 + $0x2c] sm:$0xf]
        %v4367 = vld [vmem:[%s4354 + $0x30] sm:$0xf]
        %v4368 = vld [vmem:[%s4354 + $0x34] sm:$0xf]
        %v4369 = vld [vmem:[%s4354 + $0x38] sm:$0xf]
        %v4370 = vld [vmem:[%s4354 + $0x3c] sm:$0xf]
        %s4371 = scalar_lea.vmem %s5, 8
        %v4372 = vld [vmem:[%s4371] sm:$0x3f]
        %s4373 = scalar_lea.vmem %s6, 1
        %v4374 = vld [vmem:[%s4373] sm:$0x1]
        %v4375 = vsel %vm368, %v4292, 0.0
        %4376 = vadd.xlane.f32.xlu0 %v4375
        %v4377 = vpop.xlane.xlu0 %4376
        %v4378 = vsel %vm368, %v4295, 0.0
        %4379 = vadd.xlane.f32.xlu0 %v4378
        %v4380 = vpop.xlane.xlu0 %4379
        %v4381 = vsel %vm368, %v4298, 0.0
        %4382 = vadd.xlane.f32.xlu0 %v4381
        %v4383 = vpop.xlane.xlu0 %4382
        %v4384 = vsel %vm368, %v4301, 0.0
        %4385 = vadd.xlane.f32.xlu0 %v4384
        %v4386 = vpop.xlane.xlu0 %4385
        %v4387 = vsel %vm368, %v4304, 0.0
        %4388 = vadd.xlane.f32.xlu0 %v4387
        %v4389 = vpop.xlane.xlu0 %4388
        %v4390 = vsel %vm368, %v4307, 0.0
        %4391 = vadd.xlane.f32.xlu0 %v4390
        %v4392 = vpop.xlane.xlu0 %4391
        %v4393 = vsel %vm368, %v4310, 0.0
        %4394 = vadd.xlane.f32.xlu0 %v4393
        %v4395 = vpop.xlane.xlu0 %4394
        %v4396 = vsel %vm368, %v4313, 0.0
        %4397 = vadd.xlane.f32.xlu0 %v4396
        %v4398 = vpop.xlane.xlu0 %4397
        %v4399 = vsel %vm368, %v4316, 0.0
        %4400 = vadd.xlane.f32.xlu0 %v4399
        %v4401 = vpop.xlane.xlu0 %4400
        %v4402 = vsel %vm368, %v4319, 0.0
        %4403 = vadd.xlane.f32.xlu0 %v4402
        %v4404 = vpop.xlane.xlu0 %4403
        %v4405 = vsel %vm368, %v4322, 0.0
        %4406 = vadd.xlane.f32.xlu0 %v4405
        %v4407 = vpop.xlane.xlu0 %4406
        %v4408 = vsel %vm368, %v4325, 0.0
        %4409 = vadd.xlane.f32.xlu0 %v4408
        %v4410 = vpop.xlane.xlu0 %4409
        %v4411 = vsel %vm368, %v4328, 0.0
        %4412 = vadd.xlane.f32.xlu0 %v4411
        %v4413 = vpop.xlane.xlu0 %4412
        %v4414 = vsel %vm368, %v4331, 0.0
        %4415 = vadd.xlane.f32.xlu0 %v4414
        %v4416 = vpop.xlane.xlu0 %4415
        %v4417 = vsel %vm368, %v4334, 0.0
        %4418 = vadd.xlane.f32.xlu0 %v4417
        %v4419 = vpop.xlane.xlu0 %4418
        %v4420 = vsel %vm368, %v4337, 0.0
        %4421 = vadd.xlane.f32.xlu0 %v4420
        %v4422 = vpop.xlane.xlu0 %4421
        %v4423 = vmul.f32 %v4377, %v423
        %v4424 = vmul.f32 %v4380, %v423
        %v4425 = vmul.f32 %v4383, %v423
        %v4426 = vmul.f32 %v4386, %v423
        %v4427 = vmul.f32 %v4389, %v423
        %v4428 = vmul.f32 %v4392, %v423
        %v4429 = vmul.f32 %v4395, %v423
        %v4430 = vmul.f32 %v4398, %v423
        %v4431 = vmul.f32 %v4401, %v423
        %v4432 = vmul.f32 %v4404, %v423
        %v4433 = vmul.f32 %v4407, %v423
        %v4434 = vmul.f32 %v4410, %v423
        %v4435 = vmul.f32 %v4413, %v423
        %v4436 = vmul.f32 %v4416, %v423
        %v4437 = vmul.f32 %v4419, %v423
        %v4438 = vmul.f32 %v4422, %v423
        %v4439 = vsub.f32 %v4292, %v4423
        %v4440 = vsub.f32 %v4295, %v4424
        %v4441 = vsub.f32 %v4298, %v4425
        %v4442 = vsub.f32 %v4301, %v4426
        %v4443 = vsub.f32 %v4304, %v4427
        %v4444 = vsub.f32 %v4307, %v4428
        %v4445 = vsub.f32 %v4310, %v4429
        %v4446 = vsub.f32 %v4313, %v4430
        %v4447 = vsub.f32 %v4316, %v4431
        %v4448 = vsub.f32 %v4319, %v4432
        %v4449 = vsub.f32 %v4322, %v4433
        %v4450 = vsub.f32 %v4325, %v4434
        %v4451 = vsub.f32 %v4328, %v4435
        %v4452 = vsub.f32 %v4331, %v4436
        %v4453 = vsub.f32 %v4334, %v4437
        %v4454 = vsub.f32 %v4337, %v4438
        %v4455 = vmul.f32 %v4439, %v4439
        %v4456 = vmul.f32 %v4440, %v4440
        %v4457 = vmul.f32 %v4441, %v4441
        %v4458 = vmul.f32 %v4442, %v4442
        %v4459 = vmul.f32 %v4443, %v4443
        %v4460 = vmul.f32 %v4444, %v4444
        %v4461 = vmul.f32 %v4445, %v4445
        %v4462 = vmul.f32 %v4446, %v4446
        %v4463 = vmul.f32 %v4447, %v4447
        %v4464 = vmul.f32 %v4448, %v4448
        %v4465 = vmul.f32 %v4449, %v4449
        %v4466 = vmul.f32 %v4450, %v4450
        %v4467 = vmul.f32 %v4451, %v4451
        %v4468 = vmul.f32 %v4452, %v4452
        %v4469 = vmul.f32 %v4453, %v4453
        %v4470 = vmul.f32 %v4454, %v4454
        %v4471 = vsel %vm368, %v4455, 0.0
        %4472 = vadd.xlane.f32.xlu0 %v4471
        %v4473 = vpop.xlane.xlu0 %4472
        %v4474 = vsel %vm368, %v4456, 0.0
        %4475 = vadd.xlane.f32.xlu0 %v4474
        %v4476 = vpop.xlane.xlu0 %4475
        %v4477 = vsel %vm368, %v4457, 0.0
        %4478 = vadd.xlane.f32.xlu0 %v4477
        %v4479 = vpop.xlane.xlu0 %4478
        %v4480 = vsel %vm368, %v4458, 0.0
        %4481 = vadd.xlane.f32.xlu0 %v4480
        %v4482 = vpop.xlane.xlu0 %4481
        %v4483 = vsel %vm368, %v4459, 0.0
        %4484 = vadd.xlane.f32.xlu0 %v4483
        %v4485 = vpop.xlane.xlu0 %4484
        %v4486 = vsel %vm368, %v4460, 0.0
        %4487 = vadd.xlane.f32.xlu0 %v4486
        %v4488 = vpop.xlane.xlu0 %4487
        %v4489 = vsel %vm368, %v4461, 0.0
        %4490 = vadd.xlane.f32.xlu0 %v4489
        %v4491 = vpop.xlane.xlu0 %4490
        %v4492 = vsel %vm368, %v4462, 0.0
        %4493 = vadd.xlane.f32.xlu0 %v4492
        %v4494 = vpop.xlane.xlu0 %4493
        %v4495 = vsel %vm368, %v4463, 0.0
        %4496 = vadd.xlane.f32.xlu0 %v4495
        %v4497 = vpop.xlane.xlu0 %4496
        %v4498 = vsel %vm368, %v4464, 0.0
        %4499 = vadd.xlane.f32.xlu0 %v4498
        %v4500 = vpop.xlane.xlu0 %4499
        %v4501 = vsel %vm368, %v4465, 0.0
        %4502 = vadd.xlane.f32.xlu0 %v4501
        %v4503 = vpop.xlane.xlu0 %4502
        %v4504 = vsel %vm368, %v4466, 0.0
        %4505 = vadd.xlane.f32.xlu0 %v4504
        %v4506 = vpop.xlane.xlu0 %4505
        %v4507 = vsel %vm368, %v4467, 0.0
        %4508 = vadd.xlane.f32.xlu0 %v4507
        %v4509 = vpop.xlane.xlu0 %4508
        %v4510 = vsel %vm368, %v4468, 0.0
        %4511 = vadd.xlane.f32.xlu0 %v4510
        %v4512 = vpop.xlane.xlu0 %4511
        %v4513 = vsel %vm368, %v4469, 0.0
        %4514 = vadd.xlane.f32.xlu0 %v4513
        %v4515 = vpop.xlane.xlu0 %4514
        %v4516 = vsel %vm368, %v4470, 0.0
        %4517 = vadd.xlane.f32.xlu0 %v4516
        %v4518 = vpop.xlane.xlu0 %4517
        %v4519 = vmul.f32 %v4473, %v423
        %v4520 = vmul.f32 %v4476, %v423
        %v4521 = vmul.f32 %v4479, %v423
        %v4522 = vmul.f32 %v4482, %v423
        %v4523 = vmul.f32 %v4485, %v423
        %v4524 = vmul.f32 %v4488, %v423
        %v4525 = vmul.f32 %v4491, %v423
        %v4526 = vmul.f32 %v4494, %v423
        %v4527 = vmul.f32 %v4497, %v423
        %v4528 = vmul.f32 %v4500, %v423
        %v4529 = vmul.f32 %v4503, %v423
        %v4530 = vmul.f32 %v4506, %v423
        %v4531 = vmul.f32 %v4509, %v423
        %v4532 = vmul.f32 %v4512, %v423
        %v4533 = vmul.f32 %v4515, %v423
        %v4534 = vmul.f32 %v4518, %v423
        %v4535 = vadd.f32 %v4519, 1e-05
        %v4536 = vadd.f32 %v4520, 1e-05
        %v4537 = vadd.f32 %v4521, 1e-05
        %v4538 = vadd.f32 %v4522, 1e-05
        %v4539 = vadd.f32 %v4523, 1e-05
        %v4540 = vadd.f32 %v4524, 1e-05
        %v4541 = vadd.f32 %v4525, 1e-05
        %v4542 = vadd.f32 %v4526, 1e-05
        %v4543 = vadd.f32 %v4527, 1e-05
        %v4544 = vadd.f32 %v4528, 1e-05
        %v4545 = vadd.f32 %v4529, 1e-05
        %v4546 = vadd.f32 %v4530, 1e-05
        %v4547 = vadd.f32 %v4531, 1e-05
        %v4548 = vadd.f32 %v4532, 1e-05
        %v4549 = vadd.f32 %v4533, 1e-05
        %v4550 = vadd.f32 %v4534, 1e-05
        %v4551 = vrsqrt.pop %v4535
        %v4552 = vmul.f32 %v4551, %v4535
        %v4553 = vmul.f32 %v4552, %v4551
        %v4554 = vmul.f32 0.5, %v4553
        %v4555 = vsub.f32 1.5, %v4554
        %v4556 = vmul.f32 %v4551, %v4555
        %vm4557 = vweird.f32 %v4535
        %vm4558 = vweird.f32 %v4551
        %vm4559 = vmor %vm4557, %vm4558
        %v4560 = vsel %vm4559, %v4551, %v4556
        %v4561 = vrsqrt.pop %v4536
        %v4562 = vmul.f32 %v4561, %v4536
        %v4563 = vmul.f32 %v4562, %v4561
        %v4564 = vmul.f32 0.5, %v4563
        %v4565 = vsub.f32 1.5, %v4564
        %v4566 = vmul.f32 %v4561, %v4565
        %vm4567 = vweird.f32 %v4536
        %vm4568 = vweird.f32 %v4561
        %vm4569 = vmor %vm4567, %vm4568
        %v4570 = vsel %vm4569, %v4561, %v4566
        %v4571 = vrsqrt.pop %v4537
        %v4572 = vmul.f32 %v4571, %v4537
        %v4573 = vmul.f32 %v4572, %v4571
        %v4574 = vmul.f32 0.5, %v4573
        %v4575 = vsub.f32 1.5, %v4574
        %v4576 = vmul.f32 %v4571, %v4575
        %vm4577 = vweird.f32 %v4537
        %vm4578 = vweird.f32 %v4571
        %vm4579 = vmor %vm4577, %vm4578
        %v4580 = vsel %vm4579, %v4571, %v4576
        %v4581 = vrsqrt.pop %v4538
        %v4582 = vmul.f32 %v4581, %v4538
        %v4583 = vmul.f32 %v4582, %v4581
        %v4584 = vmul.f32 0.5, %v4583
        %v4585 = vsub.f32 1.5, %v4584
        %v4586 = vmul.f32 %v4581, %v4585
        %vm4587 = vweird.f32 %v4538
        %vm4588 = vweird.f32 %v4581
        %vm4589 = vmor %vm4587, %vm4588
        %v4590 = vsel %vm4589, %v4581, %v4586
        %v4591 = vrsqrt.pop %v4539
        %v4592 = vmul.f32 %v4591, %v4539
        %v4593 = vmul.f32 %v4592, %v4591
        %v4594 = vmul.f32 0.5, %v4593
        %v4595 = vsub.f32 1.5, %v4594
        %v4596 = vmul.f32 %v4591, %v4595
        %vm4597 = vweird.f32 %v4539
        %vm4598 = vweird.f32 %v4591
        %vm4599 = vmor %vm4597, %vm4598
        %v4600 = vsel %vm4599, %v4591, %v4596
        %v4601 = vrsqrt.pop %v4540
        %v4602 = vmul.f32 %v4601, %v4540
        %v4603 = vmul.f32 %v4602, %v4601
        %v4604 = vmul.f32 0.5, %v4603
        %v4605 = vsub.f32 1.5, %v4604
        %v4606 = vmul.f32 %v4601, %v4605
        %vm4607 = vweird.f32 %v4540
        %vm4608 = vweird.f32 %v4601
        %vm4609 = vmor %vm4607, %vm4608
        %v4610 = vsel %vm4609, %v4601, %v4606
        %v4611 = vrsqrt.pop %v4541
        %v4612 = vmul.f32 %v4611, %v4541
        %v4613 = vmul.f32 %v4612, %v4611
        %v4614 = vmul.f32 0.5, %v4613
        %v4615 = vsub.f32 1.5, %v4614
        %v4616 = vmul.f32 %v4611, %v4615
        %vm4617 = vweird.f32 %v4541
        %vm4618 = vweird.f32 %v4611
        %vm4619 = vmor %vm4617, %vm4618
        %v4620 = vsel %vm4619, %v4611, %v4616
        %v4621 = vrsqrt.pop %v4542
        %v4622 = vmul.f32 %v4621, %v4542
        %v4623 = vmul.f32 %v4622, %v4621
        %v4624 = vmul.f32 0.5, %v4623
        %v4625 = vsub.f32 1.5, %v4624
        %v4626 = vmul.f32 %v4621, %v4625
        %vm4627 = vweird.f32 %v4542
        %vm4628 = vweird.f32 %v4621
        %vm4629 = vmor %vm4627, %vm4628
        %v4630 = vsel %vm4629, %v4621, %v4626
        %v4631 = vrsqrt.pop %v4543
        %v4632 = vmul.f32 %v4631, %v4543
        %v4633 = vmul.f32 %v4632, %v4631
        %v4634 = vmul.f32 0.5, %v4633
        %v4635 = vsub.f32 1.5, %v4634
        %v4636 = vmul.f32 %v4631, %v4635
        %vm4637 = vweird.f32 %v4543
        %vm4638 = vweird.f32 %v4631
        %vm4639 = vmor %vm4637, %vm4638
        %v4640 = vsel %vm4639, %v4631, %v4636
        %v4641 = vrsqrt.pop %v4544
        %v4642 = vmul.f32 %v4641, %v4544
        %v4643 = vmul.f32 %v4642, %v4641
        %v4644 = vmul.f32 0.5, %v4643
        %v4645 = vsub.f32 1.5, %v4644
        %v4646 = vmul.f32 %v4641, %v4645
        %vm4647 = vweird.f32 %v4544
        %vm4648 = vweird.f32 %v4641
        %vm4649 = vmor %vm4647, %vm4648
        %v4650 = vsel %vm4649, %v4641, %v4646
        %v4651 = vrsqrt.pop %v4545
        %v4652 = vmul.f32 %v4651, %v4545
        %v4653 = vmul.f32 %v4652, %v4651
        %v4654 = vmul.f32 0.5, %v4653
        %v4655 = vsub.f32 1.5, %v4654
        %v4656 = vmul.f32 %v4651, %v4655
        %vm4657 = vweird.f32 %v4545
        %vm4658 = vweird.f32 %v4651
        %vm4659 = vmor %vm4657, %vm4658
        %v4660 = vsel %vm4659, %v4651, %v4656
        %v4661 = vrsqrt.pop %v4546
        %v4662 = vmul.f32 %v4661, %v4546
        %v4663 = vmul.f32 %v4662, %v4661
        %v4664 = vmul.f32 0.5, %v4663
        %v4665 = vsub.f32 1.5, %v4664
        %v4666 = vmul.f32 %v4661, %v4665
        %vm4667 = vweird.f32 %v4546
        %vm4668 = vweird.f32 %v4661
        %vm4669 = vmor %vm4667, %vm4668
        %v4670 = vsel %vm4669, %v4661, %v4666
        %v4671 = vrsqrt.pop %v4547
        %v4672 = vmul.f32 %v4671, %v4547
        %v4673 = vmul.f32 %v4672, %v4671
        %v4674 = vmul.f32 0.5, %v4673
        %v4675 = vsub.f32 1.5, %v4674
        %v4676 = vmul.f32 %v4671, %v4675
        %vm4677 = vweird.f32 %v4547
        %vm4678 = vweird.f32 %v4671
        %vm4679 = vmor %vm4677, %vm4678
        %v4680 = vsel %vm4679, %v4671, %v4676
        %v4681 = vrsqrt.pop %v4548
        %v4682 = vmul.f32 %v4681, %v4548
        %v4683 = vmul.f32 %v4682, %v4681
        %v4684 = vmul.f32 0.5, %v4683
        %v4685 = vsub.f32 1.5, %v4684
        %v4686 = vmul.f32 %v4681, %v4685
        %vm4687 = vweird.f32 %v4548
        %vm4688 = vweird.f32 %v4681
        %vm4689 = vmor %vm4687, %vm4688
        %v4690 = vsel %vm4689, %v4681, %v4686
        %v4691 = vrsqrt.pop %v4549
        %v4692 = vmul.f32 %v4691, %v4549
        %v4693 = vmul.f32 %v4692, %v4691
        %v4694 = vmul.f32 0.5, %v4693
        %v4695 = vsub.f32 1.5, %v4694
        %v4696 = vmul.f32 %v4691, %v4695
        %vm4697 = vweird.f32 %v4549
        %vm4698 = vweird.f32 %v4691
        %vm4699 = vmor %vm4697, %vm4698
        %v4700 = vsel %vm4699, %v4691, %v4696
        %v4701 = vrsqrt.pop %v4550
        %v4702 = vmul.f32 %v4701, %v4550
        %v4703 = vmul.f32 %v4702, %v4701
        %v4704 = vmul.f32 0.5, %v4703
        %v4705 = vsub.f32 1.5, %v4704
        %v4706 = vmul.f32 %v4701, %v4705
        %vm4707 = vweird.f32 %v4550
        %vm4708 = vweird.f32 %v4701
        %vm4709 = vmor %vm4707, %vm4708
        %v4710 = vsel %vm4709, %v4701, %v4706
        %v4711 = vmul.f32 %v4439, %v4560
        %v4712 = vmul.f32 %v4440, %v4570
        %v4713 = vmul.f32 %v4441, %v4580
        %v4714 = vmul.f32 %v4442, %v4590
        %v4715 = vmul.f32 %v4443, %v4600
        %v4716 = vmul.f32 %v4444, %v4610
        %v4717 = vmul.f32 %v4445, %v4620
        %v4718 = vmul.f32 %v4446, %v4630
        %v4719 = vmul.f32 %v4447, %v4640
        %v4720 = vmul.f32 %v4448, %v4650
        %v4721 = vmul.f32 %v4449, %v4660
        %v4722 = vmul.f32 %v4450, %v4670
        %v4723 = vmul.f32 %v4451, %v4680
        %v4724 = vmul.f32 %v4452, %v4690
        %v4725 = vmul.f32 %v4453, %v4700
        %v4726 = vmul.f32 %v4454, %v4710
        %v4727 = vperm.slane %v4372, 0
        %v4728 = vmul.f32 %v4711, %v4727
        %v4729 = vmul.f32 %v4712, %v4727
        %v4730 = vmul.f32 %v4713, %v4727
        %v4731 = vmul.f32 %v4714, %v4727
        %v4732 = vmul.f32 %v4715, %v4727
        %v4733 = vmul.f32 %v4716, %v4727
        %v4734 = vmul.f32 %v4717, %v4727
        %v4735 = vmul.f32 %v4718, %v4727
        %v4736 = vmul.f32 %v4719, %v4727
        %v4737 = vmul.f32 %v4720, %v4727
        %v4738 = vmul.f32 %v4721, %v4727
        %v4739 = vmul.f32 %v4722, %v4727
        %v4740 = vmul.f32 %v4723, %v4727
        %v4741 = vmul.f32 %v4724, %v4727
        %v4742 = vmul.f32 %v4725, %v4727
        %v4743 = vmul.f32 %v4726, %v4727
        %v4744 = vperm.slane %v4372, 1
        %v4745 = vadd.f32 %v4728, %v4744
        %v4746 = vadd.f32 %v4729, %v4744
        %v4747 = vadd.f32 %v4730, %v4744
        %v4748 = vadd.f32 %v4731, %v4744
        %v4749 = vadd.f32 %v4732, %v4744
        %v4750 = vadd.f32 %v4733, %v4744
        %v4751 = vadd.f32 %v4734, %v4744
        %v4752 = vadd.f32 %v4735, %v4744
        %v4753 = vadd.f32 %v4736, %v4744
        %v4754 = vadd.f32 %v4737, %v4744
        %v4755 = vadd.f32 %v4738, %v4744
        %v4756 = vadd.f32 %v4739, %v4744
        %v4757 = vadd.f32 %v4740, %v4744
        %v4758 = vadd.f32 %v4741, %v4744
        %v4759 = vadd.f32 %v4742, %v4744
        %v4760 = vadd.f32 %v4743, %v4744
        %v4761 = vpack.c.bf16 %v4746, %v4745
        %v4762 = vpack.c.bf16 %v4748, %v4747
        %v4763 = vpack.c.bf16 %v4750, %v4749
        %v4764 = vpack.c.bf16 %v4752, %v4751
        %v4765 = vpack.c.bf16 %v4754, %v4753
        %v4766 = vpack.c.bf16 %v4756, %v4755
        %v4767 = vpack.c.bf16 %v4758, %v4757
        %v4768 = vpack.c.bf16 %v4760, %v4759
        %v4773 = vunpack.c.l.b16 %v4340
        %v4774 = vunpack.c.l.b16 %v4341
        %v4775 = vunpack.c.l.b16 %v4342
        %v4776 = vunpack.c.l.b16 %v4343
        %v4777 = vpack.c.b16 %v4774, %v4773
        %v4778 = vpack.c.b16 %v4776, %v4775
        %v4782 = vsel %vm368, %v4761, 0
        %v4785 = vsel %vm368, %v4762, 0
        %v4788 = vsel %vm368, %v4763, 0
        %v4791 = vsel %vm368, %v4764, 0
        %v4794 = vsel %vm368, %v4765, 0
        %v4797 = vsel %vm368, %v4766, 0
        %v4800 = vsel %vm368, %v4767, 0
        %v4803 = vsel %vm368, %v4768, 0
        %4805 = vmatpush.bf16.msra.mxu0 0
        %4806 = vmatpush.bf16.msra.mxu0 0
        %4807 = vmatpush.bf16.msra.mxu0 0
        %4808 = vmatpush.bf16.msra.mxu0 0
        %4809 = vmatpush.bf16.msra.mxu0 0
        %4810 = vmatpush.bf16.msra.mxu0 0
        %4811 = vmatpush.bf16.msra.mxu0 %v4778
        %4812 = vmatpush.bf16.msra.mxu0 %v4777
        %4813 = vmatmul.bf16.gmra.mxu0 %v4782
        %v4814 = vpop.f32.mrf.mxu0
        %v4815 = vadd.f32 0.0, %v4814
        %v4816 = vpop.f32.mrf.mxu0
        %v4817 = vadd.f32 0.0, %v4816
        %4818 = vmatmul.bf16.gmra.mxu0 %v4785
        %v4819 = vpop.f32.mrf.mxu0
        %v4820 = vadd.f32 0.0, %v4819
        %v4821 = vpop.f32.mrf.mxu0
        %v4822 = vadd.f32 0.0, %v4821
        %4823 = vmatmul.bf16.gmra.mxu0 %v4788
        %v4824 = vpop.f32.mrf.mxu0
        %v4825 = vadd.f32 0.0, %v4824
        %v4826 = vpop.f32.mrf.mxu0
        %v4827 = vadd.f32 0.0, %v4826
        %4828 = vmatmul.bf16.gmra.mxu0 %v4791
        %v4829 = vpop.f32.mrf.mxu0
        %v4830 = vadd.f32 0.0, %v4829
        %v4831 = vpop.f32.mrf.mxu0
        %v4832 = vadd.f32 0.0, %v4831
        %4833 = vmatmul.bf16.gmra.mxu0 %v4794
        %v4834 = vpop.f32.mrf.mxu0
        %v4835 = vadd.f32 0.0, %v4834
        %v4836 = vpop.f32.mrf.mxu0
        %v4837 = vadd.f32 0.0, %v4836
        %4838 = vmatmul.bf16.gmra.mxu0 %v4797
        %v4839 = vpop.f32.mrf.mxu0
        %v4840 = vadd.f32 0.0, %v4839
        %v4841 = vpop.f32.mrf.mxu0
        %v4842 = vadd.f32 0.0, %v4841
        %4843 = vmatmul.bf16.gmra.mxu0 %v4800
        %v4844 = vpop.f32.mrf.mxu0
        %v4845 = vadd.f32 0.0, %v4844
        %v4846 = vpop.f32.mrf.mxu0
        %v4847 = vadd.f32 0.0, %v4846
        %4848 = vmatmul.bf16.gmra.mxu0 %v4803
        %v4849 = vpop.f32.mrf.mxu0
        %v4850 = vadd.f32 0.0, %v4849
        %v4851 = vpop.f32.mrf.mxu0
        %v4852 = vadd.f32 0.0, %v4851
        %4853 = vdwg.mxu0
        %v4854 = vmul.f32 %v4815, %v906
        %v4855 = vmul.f32 %v4815, %v908
        %v4856 = vmul.f32 %v4815, %v910
        %v4857 = vmul.f32 %v4815, %v912
        %v4858 = vmul.f32 %v4815, %v914
        %v4859 = vmul.f32 %v4815, %v916
        %v4860 = vmul.f32 %v4815, %v918
        %v4861 = vmul.f32 %v4815, %v920
        %v4862 = vmul.f32 %v4817, %v906
        %v4863 = vmul.f32 %v4817, %v908
        %v4864 = vmul.f32 %v4817, %v910
        %v4865 = vmul.f32 %v4817, %v912
        %v4866 = vmul.f32 %v4817, %v914
        %v4867 = vmul.f32 %v4817, %v916
        %v4868 = vmul.f32 %v4817, %v918
        %v4869 = vmul.f32 %v4817, %v920
        %v4870 = vmul.f32 %v4820, %v906
        %v4871 = vmul.f32 %v4820, %v908
        %v4872 = vmul.f32 %v4820, %v910
        %v4873 = vmul.f32 %v4820, %v912
        %v4874 = vmul.f32 %v4820, %v914
        %v4875 = vmul.f32 %v4820, %v916
        %v4876 = vmul.f32 %v4820, %v918
        %v4877 = vmul.f32 %v4820, %v920
        %v4878 = vmul.f32 %v4822, %v906
        %v4879 = vmul.f32 %v4822, %v908
        %v4880 = vmul.f32 %v4822, %v910
        %v4881 = vmul.f32 %v4822, %v912
        %v4882 = vmul.f32 %v4822, %v914
        %v4883 = vmul.f32 %v4822, %v916
        %v4884 = vmul.f32 %v4822, %v918
        %v4885 = vmul.f32 %v4822, %v920
        %v4886 = vmul.f32 %v4825, %v906
        %v4887 = vmul.f32 %v4825, %v908
        %v4888 = vmul.f32 %v4825, %v910
        %v4889 = vmul.f32 %v4825, %v912
        %v4890 = vmul.f32 %v4825, %v914
        %v4891 = vmul.f32 %v4825, %v916
        %v4892 = vmul.f32 %v4825, %v918
        %v4893 = vmul.f32 %v4825, %v920
        %v4894 = vmul.f32 %v4827, %v906
        %v4895 = vmul.f32 %v4827, %v908
        %v4896 = vmul.f32 %v4827, %v910
        %v4897 = vmul.f32 %v4827, %v912
        %v4898 = vmul.f32 %v4827, %v914
        %v4899 = vmul.f32 %v4827, %v916
        %v4900 = vmul.f32 %v4827, %v918
        %v4901 = vmul.f32 %v4827, %v920
        %v4902 = vmul.f32 %v4830, %v906
        %v4903 = vmul.f32 %v4830, %v908
        %v4904 = vmul.f32 %v4830, %v910
        %v4905 = vmul.f32 %v4830, %v912
        %v4906 = vmul.f32 %v4830, %v914
        %v4907 = vmul.f32 %v4830, %v916
        %v4908 = vmul.f32 %v4830, %v918
        %v4909 = vmul.f32 %v4830, %v920
        %v4910 = vmul.f32 %v4832, %v906
        %v4911 = vmul.f32 %v4832, %v908
        %v4912 = vmul.f32 %v4832, %v910
        %v4913 = vmul.f32 %v4832, %v912
        %v4914 = vmul.f32 %v4832, %v914
        %v4915 = vmul.f32 %v4832, %v916
        %v4916 = vmul.f32 %v4832, %v918
        %v4917 = vmul.f32 %v4832, %v920
        %v4918 = vmul.f32 %v4835, %v906
        %v4919 = vmul.f32 %v4835, %v908
        %v4920 = vmul.f32 %v4835, %v910
        %v4921 = vmul.f32 %v4835, %v912
        %v4922 = vmul.f32 %v4835, %v914
        %v4923 = vmul.f32 %v4835, %v916
        %v4924 = vmul.f32 %v4835, %v918
        %v4925 = vmul.f32 %v4835, %v920
        %v4926 = vmul.f32 %v4837, %v906
        %v4927 = vmul.f32 %v4837, %v908
        %v4928 = vmul.f32 %v4837, %v910
        %v4929 = vmul.f32 %v4837, %v912
        %v4930 = vmul.f32 %v4837, %v914
        %v4931 = vmul.f32 %v4837, %v916
        %v4932 = vmul.f32 %v4837, %v918
        %v4933 = vmul.f32 %v4837, %v920
        %v4934 = vmul.f32 %v4840, %v906
        %v4935 = vmul.f32 %v4840, %v908
        %v4936 = vmul.f32 %v4840, %v910
        %v4937 = vmul.f32 %v4840, %v912
        %v4938 = vmul.f32 %v4840, %v914
        %v4939 = vmul.f32 %v4840, %v916
        %v4940 = vmul.f32 %v4840, %v918
        %v4941 = vmul.f32 %v4840, %v920
        %v4942 = vmul.f32 %v4842, %v906
        %v4943 = vmul.f32 %v4842, %v908
        %v4944 = vmul.f32 %v4842, %v910
        %v4945 = vmul.f32 %v4842, %v912
        %v4946 = vmul.f32 %v4842, %v914
        %v4947 = vmul.f32 %v4842, %v916
        %v4948 = vmul.f32 %v4842, %v918
        %v4949 = vmul.f32 %v4842, %v920
        %v4950 = vmul.f32 %v4845, %v906
        %v4951 = vmul.f32 %v4845, %v908
        %v4952 = vmul.f32 %v4845, %v910
        %v4953 = vmul.f32 %v4845, %v912
        %v4954 = vmul.f32 %v4845, %v914
        %v4955 = vmul.f32 %v4845, %v916
        %v4956 = vmul.f32 %v4845, %v918
        %v4957 = vmul.f32 %v4845, %v920
        %v4958 = vmul.f32 %v4847, %v906
        %v4959 = vmul.f32 %v4847, %v908
        %v4960 = vmul.f32 %v4847, %v910
        %v4961 = vmul.f32 %v4847, %v912
        %v4962 = vmul.f32 %v4847, %v914
        %v4963 = vmul.f32 %v4847, %v916
        %v4964 = vmul.f32 %v4847, %v918
        %v4965 = vmul.f32 %v4847, %v920
        %v4966 = vmul.f32 %v4850, %v906
        %v4967 = vmul.f32 %v4850, %v908
        %v4968 = vmul.f32 %v4850, %v910
        %v4969 = vmul.f32 %v4850, %v912
        %v4970 = vmul.f32 %v4850, %v914
        %v4971 = vmul.f32 %v4850, %v916
        %v4972 = vmul.f32 %v4850, %v918
        %v4973 = vmul.f32 %v4850, %v920
        %v4974 = vmul.f32 %v4852, %v906
        %v4975 = vmul.f32 %v4852, %v908
        %v4976 = vmul.f32 %v4852, %v910
        %v4977 = vmul.f32 %v4852, %v912
        %v4978 = vmul.f32 %v4852, %v914
        %v4979 = vmul.f32 %v4852, %v916
        %v4980 = vmul.f32 %v4852, %v918
        %v4981 = vmul.f32 %v4852, %v920
        %v4982 = vpack.c.bf16 %v4854, %v4854
        %v4983 = vpack.c.bf16 %v4855, %v4855
        %v4984 = vpack.c.bf16 %v4856, %v4856
        %v4985 = vpack.c.bf16 %v4857, %v4857
        %v4986 = vpack.c.bf16 %v4858, %v4858
        %v4987 = vpack.c.bf16 %v4859, %v4859
        %v4988 = vpack.c.bf16 %v4860, %v4860
        %v4989 = vpack.c.bf16 %v4861, %v4861
        %v4990 = vpack.c.bf16 %v4862, %v4862
        %v4991 = vpack.c.bf16 %v4863, %v4863
        %v4992 = vpack.c.bf16 %v4864, %v4864
        %v4993 = vpack.c.bf16 %v4865, %v4865
        %v4994 = vpack.c.bf16 %v4866, %v4866
        %v4995 = vpack.c.bf16 %v4867, %v4867
        %v4996 = vpack.c.bf16 %v4868, %v4868
        %v4997 = vpack.c.bf16 %v4869, %v4869
        %v4998 = vpack.c.bf16 %v4870, %v4870
        %v4999 = vpack.c.bf16 %v4871, %v4871
        %v5000 = vpack.c.bf16 %v4872, %v4872
        %v5001 = vpack.c.bf16 %v4873, %v4873
        %v5002 = vpack.c.bf16 %v4874, %v4874
        %v5003 = vpack.c.bf16 %v4875, %v4875
        %v5004 = vpack.c.bf16 %v4876, %v4876
        %v5005 = vpack.c.bf16 %v4877, %v4877
        %v5006 = vpack.c.bf16 %v4878, %v4878
        %v5007 = vpack.c.bf16 %v4879, %v4879
        %v5008 = vpack.c.bf16 %v4880, %v4880
        %v5009 = vpack.c.bf16 %v4881, %v4881
        %v5010 = vpack.c.bf16 %v4882, %v4882
        %v5011 = vpack.c.bf16 %v4883, %v4883
        %v5012 = vpack.c.bf16 %v4884, %v4884
        %v5013 = vpack.c.bf16 %v4885, %v4885
        %v5014 = vpack.c.bf16 %v4886, %v4886
        %v5015 = vpack.c.bf16 %v4887, %v4887
        %v5016 = vpack.c.bf16 %v4888, %v4888
        %v5017 = vpack.c.bf16 %v4889, %v4889
        %v5018 = vpack.c.bf16 %v4890, %v4890
        %v5019 = vpack.c.bf16 %v4891, %v4891
        %v5020 = vpack.c.bf16 %v4892, %v4892
        %v5021 = vpack.c.bf16 %v4893, %v4893
        %v5022 = vpack.c.bf16 %v4894, %v4894
        %v5023 = vpack.c.bf16 %v4895, %v4895
        %v5024 = vpack.c.bf16 %v4896, %v4896
        %v5025 = vpack.c.bf16 %v4897, %v4897
        %v5026 = vpack.c.bf16 %v4898, %v4898
        %v5027 = vpack.c.bf16 %v4899, %v4899
        %v5028 = vpack.c.bf16 %v4900, %v4900
        %v5029 = vpack.c.bf16 %v4901, %v4901
        %v5030 = vpack.c.bf16 %v4902, %v4902
        %v5031 = vpack.c.bf16 %v4903, %v4903
        %v5032 = vpack.c.bf16 %v4904, %v4904
        %v5033 = vpack.c.bf16 %v4905, %v4905
        %v5034 = vpack.c.bf16 %v4906, %v4906
        %v5035 = vpack.c.bf16 %v4907, %v4907
        %v5036 = vpack.c.bf16 %v4908, %v4908
        %v5037 = vpack.c.bf16 %v4909, %v4909
        %v5038 = vpack.c.bf16 %v4910, %v4910
        %v5039 = vpack.c.bf16 %v4911, %v4911
        %v5040 = vpack.c.bf16 %v4912, %v4912
        %v5041 = vpack.c.bf16 %v4913, %v4913
        %v5042 = vpack.c.bf16 %v4914, %v4914
        %v5043 = vpack.c.bf16 %v4915, %v4915
        %v5044 = vpack.c.bf16 %v4916, %v4916
        %v5045 = vpack.c.bf16 %v4917, %v4917
        %v5046 = vpack.c.bf16 %v4918, %v4918
        %v5047 = vpack.c.bf16 %v4919, %v4919
        %v5048 = vpack.c.bf16 %v4920, %v4920
        %v5049 = vpack.c.bf16 %v4921, %v4921
        %v5050 = vpack.c.bf16 %v4922, %v4922
        %v5051 = vpack.c.bf16 %v4923, %v4923
        %v5052 = vpack.c.bf16 %v4924, %v4924
        %v5053 = vpack.c.bf16 %v4925, %v4925
        %v5054 = vpack.c.bf16 %v4926, %v4926
        %v5055 = vpack.c.bf16 %v4927, %v4927
        %v5056 = vpack.c.bf16 %v4928, %v4928
        %v5057 = vpack.c.bf16 %v4929, %v4929
        %v5058 = vpack.c.bf16 %v4930, %v4930
        %v5059 = vpack.c.bf16 %v4931, %v4931
        %v5060 = vpack.c.bf16 %v4932, %v4932
        %v5061 = vpack.c.bf16 %v4933, %v4933
        %v5062 = vpack.c.bf16 %v4934, %v4934
        %v5063 = vpack.c.bf16 %v4935, %v4935
        %v5064 = vpack.c.bf16 %v4936, %v4936
        %v5065 = vpack.c.bf16 %v4937, %v4937
        %v5066 = vpack.c.bf16 %v4938, %v4938
        %v5067 = vpack.c.bf16 %v4939, %v4939
        %v5068 = vpack.c.bf16 %v4940, %v4940
        %v5069 = vpack.c.bf16 %v4941, %v4941
        %v5070 = vpack.c.bf16 %v4942, %v4942
        %v5071 = vpack.c.bf16 %v4943, %v4943
        %v5072 = vpack.c.bf16 %v4944, %v4944
        %v5073 = vpack.c.bf16 %v4945, %v4945
        %v5074 = vpack.c.bf16 %v4946, %v4946
        %v5075 = vpack.c.bf16 %v4947, %v4947
        %v5076 = vpack.c.bf16 %v4948, %v4948
        %v5077 = vpack.c.bf16 %v4949, %v4949
        %v5078 = vpack.c.bf16 %v4950, %v4950
        %v5079 = vpack.c.bf16 %v4951, %v4951
        %v5080 = vpack.c.bf16 %v4952, %v4952
        %v5081 = vpack.c.bf16 %v4953, %v4953
        %v5082 = vpack.c.bf16 %v4954, %v4954
        %v5083 = vpack.c.bf16 %v4955, %v4955
        %v5084 = vpack.c.bf16 %v4956, %v4956
        %v5085 = vpack.c.bf16 %v4957, %v4957
        %v5086 = vpack.c.bf16 %v4958, %v4958
        %v5087 = vpack.c.bf16 %v4959, %v4959
        %v5088 = vpack.c.bf16 %v4960, %v4960
        %v5089 = vpack.c.bf16 %v4961, %v4961
        %v5090 = vpack.c.bf16 %v4962, %v4962
        %v5091 = vpack.c.bf16 %v4963, %v4963
        %v5092 = vpack.c.bf16 %v4964, %v4964
        %v5093 = vpack.c.bf16 %v4965, %v4965
        %v5094 = vpack.c.bf16 %v4966, %v4966
        %v5095 = vpack.c.bf16 %v4967, %v4967
        %v5096 = vpack.c.bf16 %v4968, %v4968
        %v5097 = vpack.c.bf16 %v4969, %v4969
        %v5098 = vpack.c.bf16 %v4970, %v4970
        %v5099 = vpack.c.bf16 %v4971, %v4971
        %v5100 = vpack.c.bf16 %v4972, %v4972
        %v5101 = vpack.c.bf16 %v4973, %v4973
        %v5102 = vpack.c.bf16 %v4974, %v4974
        %v5103 = vpack.c.bf16 %v4975, %v4975
        %v5104 = vpack.c.bf16 %v4976, %v4976
        %v5105 = vpack.c.bf16 %v4977, %v4977
        %v5106 = vpack.c.bf16 %v4978, %v4978
        %v5107 = vpack.c.bf16 %v4979, %v4979
        %v5108 = vpack.c.bf16 %v4980, %v4980
        %v5109 = vpack.c.bf16 %v4981, %v4981
        %v5110 = vmul.f32 %v4815, %v1186
        %v5111 = vmul.f32 %v4815, %v1188
        %v5112 = vmul.f32 %v4815, %v1190
        %v5113 = vmul.f32 %v4815, %v1192
        %v5114 = vmul.f32 %v4815, %v1194
        %v5115 = vmul.f32 %v4815, %v1196
        %v5116 = vmul.f32 %v4815, %v1198
        %v5117 = vmul.f32 %v4815, %v1200
        %v5118 = vmul.f32 %v4817, %v1186
        %v5119 = vmul.f32 %v4817, %v1188
        %v5120 = vmul.f32 %v4817, %v1190
        %v5121 = vmul.f32 %v4817, %v1192
        %v5122 = vmul.f32 %v4817, %v1194
        %v5123 = vmul.f32 %v4817, %v1196
        %v5124 = vmul.f32 %v4817, %v1198
        %v5125 = vmul.f32 %v4817, %v1200
        %v5126 = vmul.f32 %v4820, %v1186
        %v5127 = vmul.f32 %v4820, %v1188
        %v5128 = vmul.f32 %v4820, %v1190
        %v5129 = vmul.f32 %v4820, %v1192
        %v5130 = vmul.f32 %v4820, %v1194
        %v5131 = vmul.f32 %v4820, %v1196
        %v5132 = vmul.f32 %v4820, %v1198
        %v5133 = vmul.f32 %v4820, %v1200
        %v5134 = vmul.f32 %v4822, %v1186
        %v5135 = vmul.f32 %v4822, %v1188
        %v5136 = vmul.f32 %v4822, %v1190
        %v5137 = vmul.f32 %v4822, %v1192
        %v5138 = vmul.f32 %v4822, %v1194
        %v5139 = vmul.f32 %v4822, %v1196
        %v5140 = vmul.f32 %v4822, %v1198
        %v5141 = vmul.f32 %v4822, %v1200
        %v5142 = vmul.f32 %v4825, %v1186
        %v5143 = vmul.f32 %v4825, %v1188
        %v5144 = vmul.f32 %v4825, %v1190
        %v5145 = vmul.f32 %v4825, %v1192
        %v5146 = vmul.f32 %v4825, %v1194
        %v5147 = vmul.f32 %v4825, %v1196
        %v5148 = vmul.f32 %v4825, %v1198
        %v5149 = vmul.f32 %v4825, %v1200
        %v5150 = vmul.f32 %v4827, %v1186
        %v5151 = vmul.f32 %v4827, %v1188
        %v5152 = vmul.f32 %v4827, %v1190
        %v5153 = vmul.f32 %v4827, %v1192
        %v5154 = vmul.f32 %v4827, %v1194
        %v5155 = vmul.f32 %v4827, %v1196
        %v5156 = vmul.f32 %v4827, %v1198
        %v5157 = vmul.f32 %v4827, %v1200
        %v5158 = vmul.f32 %v4830, %v1186
        %v5159 = vmul.f32 %v4830, %v1188
        %v5160 = vmul.f32 %v4830, %v1190
        %v5161 = vmul.f32 %v4830, %v1192
        %v5162 = vmul.f32 %v4830, %v1194
        %v5163 = vmul.f32 %v4830, %v1196
        %v5164 = vmul.f32 %v4830, %v1198
        %v5165 = vmul.f32 %v4830, %v1200
        %v5166 = vmul.f32 %v4832, %v1186
        %v5167 = vmul.f32 %v4832, %v1188
        %v5168 = vmul.f32 %v4832, %v1190
        %v5169 = vmul.f32 %v4832, %v1192
        %v5170 = vmul.f32 %v4832, %v1194
        %v5171 = vmul.f32 %v4832, %v1196
        %v5172 = vmul.f32 %v4832, %v1198
        %v5173 = vmul.f32 %v4832, %v1200
        %v5174 = vmul.f32 %v4835, %v1186
        %v5175 = vmul.f32 %v4835, %v1188
        %v5176 = vmul.f32 %v4835, %v1190
        %v5177 = vmul.f32 %v4835, %v1192
        %v5178 = vmul.f32 %v4835, %v1194
        %v5179 = vmul.f32 %v4835, %v1196
        %v5180 = vmul.f32 %v4835, %v1198
        %v5181 = vmul.f32 %v4835, %v1200
        %v5182 = vmul.f32 %v4837, %v1186
        %v5183 = vmul.f32 %v4837, %v1188
        %v5184 = vmul.f32 %v4837, %v1190
        %v5185 = vmul.f32 %v4837, %v1192
        %v5186 = vmul.f32 %v4837, %v1194
        %v5187 = vmul.f32 %v4837, %v1196
        %v5188 = vmul.f32 %v4837, %v1198
        %v5189 = vmul.f32 %v4837, %v1200
        %v5190 = vmul.f32 %v4840, %v1186
        %v5191 = vmul.f32 %v4840, %v1188
        %v5192 = vmul.f32 %v4840, %v1190
        %v5193 = vmul.f32 %v4840, %v1192
        %v5194 = vmul.f32 %v4840, %v1194
        %v5195 = vmul.f32 %v4840, %v1196
        %v5196 = vmul.f32 %v4840, %v1198
        %v5197 = vmul.f32 %v4840, %v1200
        %v5198 = vmul.f32 %v4842, %v1186
        %v5199 = vmul.f32 %v4842, %v1188
        %v5200 = vmul.f32 %v4842, %v1190
        %v5201 = vmul.f32 %v4842, %v1192
        %v5202 = vmul.f32 %v4842, %v1194
        %v5203 = vmul.f32 %v4842, %v1196
        %v5204 = vmul.f32 %v4842, %v1198
        %v5205 = vmul.f32 %v4842, %v1200
        %v5206 = vmul.f32 %v4845, %v1186
        %v5207 = vmul.f32 %v4845, %v1188
        %v5208 = vmul.f32 %v4845, %v1190
        %v5209 = vmul.f32 %v4845, %v1192
        %v5210 = vmul.f32 %v4845, %v1194
        %v5211 = vmul.f32 %v4845, %v1196
        %v5212 = vmul.f32 %v4845, %v1198
        %v5213 = vmul.f32 %v4845, %v1200
        %v5214 = vmul.f32 %v4847, %v1186
        %v5215 = vmul.f32 %v4847, %v1188
        %v5216 = vmul.f32 %v4847, %v1190
        %v5217 = vmul.f32 %v4847, %v1192
        %v5218 = vmul.f32 %v4847, %v1194
        %v5219 = vmul.f32 %v4847, %v1196
        %v5220 = vmul.f32 %v4847, %v1198
        %v5221 = vmul.f32 %v4847, %v1200
        %v5222 = vmul.f32 %v4850, %v1186
        %v5223 = vmul.f32 %v4850, %v1188
        %v5224 = vmul.f32 %v4850, %v1190
        %v5225 = vmul.f32 %v4850, %v1192
        %v5226 = vmul.f32 %v4850, %v1194
        %v5227 = vmul.f32 %v4850, %v1196
        %v5228 = vmul.f32 %v4850, %v1198
        %v5229 = vmul.f32 %v4850, %v1200
        %v5230 = vmul.f32 %v4852, %v1186
        %v5231 = vmul.f32 %v4852, %v1188
        %v5232 = vmul.f32 %v4852, %v1190
        %v5233 = vmul.f32 %v4852, %v1192
        %v5234 = vmul.f32 %v4852, %v1194
        %v5235 = vmul.f32 %v4852, %v1196
        %v5236 = vmul.f32 %v4852, %v1198
        %v5237 = vmul.f32 %v4852, %v1200
        %v5238 = vpack.c.bf16 %v5110, %v5110
        %v5239 = vpack.c.bf16 %v5111, %v5111
        %v5240 = vpack.c.bf16 %v5112, %v5112
        %v5241 = vpack.c.bf16 %v5113, %v5113
        %v5242 = vpack.c.bf16 %v5114, %v5114
        %v5243 = vpack.c.bf16 %v5115, %v5115
        %v5244 = vpack.c.bf16 %v5116, %v5116
        %v5245 = vpack.c.bf16 %v5117, %v5117
        %v5246 = vpack.c.bf16 %v5118, %v5118
        %v5247 = vpack.c.bf16 %v5119, %v5119
        %v5248 = vpack.c.bf16 %v5120, %v5120
        %v5249 = vpack.c.bf16 %v5121, %v5121
        %v5250 = vpack.c.bf16 %v5122, %v5122
        %v5251 = vpack.c.bf16 %v5123, %v5123
        %v5252 = vpack.c.bf16 %v5124, %v5124
        %v5253 = vpack.c.bf16 %v5125, %v5125
        %v5254 = vpack.c.bf16 %v5126, %v5126
        %v5255 = vpack.c.bf16 %v5127, %v5127
        %v5256 = vpack.c.bf16 %v5128, %v5128
        %v5257 = vpack.c.bf16 %v5129, %v5129
        %v5258 = vpack.c.bf16 %v5130, %v5130
        %v5259 = vpack.c.bf16 %v5131, %v5131
        %v5260 = vpack.c.bf16 %v5132, %v5132
        %v5261 = vpack.c.bf16 %v5133, %v5133
        %v5262 = vpack.c.bf16 %v5134, %v5134
        %v5263 = vpack.c.bf16 %v5135, %v5135
        %v5264 = vpack.c.bf16 %v5136, %v5136
        %v5265 = vpack.c.bf16 %v5137, %v5137
        %v5266 = vpack.c.bf16 %v5138, %v5138
        %v5267 = vpack.c.bf16 %v5139, %v5139
        %v5268 = vpack.c.bf16 %v5140, %v5140
        %v5269 = vpack.c.bf16 %v5141, %v5141
        %v5270 = vpack.c.bf16 %v5142, %v5142
        %v5271 = vpack.c.bf16 %v5143, %v5143
        %v5272 = vpack.c.bf16 %v5144, %v5144
        %v5273 = vpack.c.bf16 %v5145, %v5145
        %v5274 = vpack.c.bf16 %v5146, %v5146
        %v5275 = vpack.c.bf16 %v5147, %v5147
        %v5276 = vpack.c.bf16 %v5148, %v5148
        %v5277 = vpack.c.bf16 %v5149, %v5149
        %v5278 = vpack.c.bf16 %v5150, %v5150
        %v5279 = vpack.c.bf16 %v5151, %v5151
        %v5280 = vpack.c.bf16 %v5152, %v5152
        %v5281 = vpack.c.bf16 %v5153, %v5153
        %v5282 = vpack.c.bf16 %v5154, %v5154
        %v5283 = vpack.c.bf16 %v5155, %v5155
        %v5284 = vpack.c.bf16 %v5156, %v5156
        %v5285 = vpack.c.bf16 %v5157, %v5157
        %v5286 = vpack.c.bf16 %v5158, %v5158
        %v5287 = vpack.c.bf16 %v5159, %v5159
        %v5288 = vpack.c.bf16 %v5160, %v5160
        %v5289 = vpack.c.bf16 %v5161, %v5161
        %v5290 = vpack.c.bf16 %v5162, %v5162
        %v5291 = vpack.c.bf16 %v5163, %v5163
        %v5292 = vpack.c.bf16 %v5164, %v5164
        %v5293 = vpack.c.bf16 %v5165, %v5165
        %v5294 = vpack.c.bf16 %v5166, %v5166
        %v5295 = vpack.c.bf16 %v5167, %v5167
        %v5296 = vpack.c.bf16 %v5168, %v5168
        %v5297 = vpack.c.bf16 %v5169, %v5169
        %v5298 = vpack.c.bf16 %v5170, %v5170
        %v5299 = vpack.c.bf16 %v5171, %v5171
        %v5300 = vpack.c.bf16 %v5172, %v5172
        %v5301 = vpack.c.bf16 %v5173, %v5173
        %v5302 = vpack.c.bf16 %v5174, %v5174
        %v5303 = vpack.c.bf16 %v5175, %v5175
        %v5304 = vpack.c.bf16 %v5176, %v5176
        %v5305 = vpack.c.bf16 %v5177, %v5177
        %v5306 = vpack.c.bf16 %v5178, %v5178
        %v5307 = vpack.c.bf16 %v5179, %v5179
        %v5308 = vpack.c.bf16 %v5180, %v5180
        %v5309 = vpack.c.bf16 %v5181, %v5181
        %v5310 = vpack.c.bf16 %v5182, %v5182
        %v5311 = vpack.c.bf16 %v5183, %v5183
        %v5312 = vpack.c.bf16 %v5184, %v5184
        %v5313 = vpack.c.bf16 %v5185, %v5185
        %v5314 = vpack.c.bf16 %v5186, %v5186
        %v5315 = vpack.c.bf16 %v5187, %v5187
        %v5316 = vpack.c.bf16 %v5188, %v5188
        %v5317 = vpack.c.bf16 %v5189, %v5189
        %v5318 = vpack.c.bf16 %v5190, %v5190
        %v5319 = vpack.c.bf16 %v5191, %v5191
        %v5320 = vpack.c.bf16 %v5192, %v5192
        %v5321 = vpack.c.bf16 %v5193, %v5193
        %v5322 = vpack.c.bf16 %v5194, %v5194
        %v5323 = vpack.c.bf16 %v5195, %v5195
        %v5324 = vpack.c.bf16 %v5196, %v5196
        %v5325 = vpack.c.bf16 %v5197, %v5197
        %v5326 = vpack.c.bf16 %v5198, %v5198
        %v5327 = vpack.c.bf16 %v5199, %v5199
        %v5328 = vpack.c.bf16 %v5200, %v5200
        %v5329 = vpack.c.bf16 %v5201, %v5201
        %v5330 = vpack.c.bf16 %v5202, %v5202
        %v5331 = vpack.c.bf16 %v5203, %v5203
        %v5332 = vpack.c.bf16 %v5204, %v5204
        %v5333 = vpack.c.bf16 %v5205, %v5205
        %v5334 = vpack.c.bf16 %v5206, %v5206
        %v5335 = vpack.c.bf16 %v5207, %v5207
        %v5336 = vpack.c.bf16 %v5208, %v5208
        %v5337 = vpack.c.bf16 %v5209, %v5209
        %v5338 = vpack.c.bf16 %v5210, %v5210
        %v5339 = vpack.c.bf16 %v5211, %v5211
        %v5340 = vpack.c.bf16 %v5212, %v5212
        %v5341 = vpack.c.bf16 %v5213, %v5213
        %v5342 = vpack.c.bf16 %v5214, %v5214
        %v5343 = vpack.c.bf16 %v5215, %v5215
        %v5344 = vpack.c.bf16 %v5216, %v5216
        %v5345 = vpack.c.bf16 %v5217, %v5217
        %v5346 = vpack.c.bf16 %v5218, %v5218
        %v5347 = vpack.c.bf16 %v5219, %v5219
        %v5348 = vpack.c.bf16 %v5220, %v5220
        %v5349 = vpack.c.bf16 %v5221, %v5221
        %v5350 = vpack.c.bf16 %v5222, %v5222
        %v5351 = vpack.c.bf16 %v5223, %v5223
        %v5352 = vpack.c.bf16 %v5224, %v5224
        %v5353 = vpack.c.bf16 %v5225, %v5225
        %v5354 = vpack.c.bf16 %v5226, %v5226
        %v5355 = vpack.c.bf16 %v5227, %v5227
        %v5356 = vpack.c.bf16 %v5228, %v5228
        %v5357 = vpack.c.bf16 %v5229, %v5229
        %v5358 = vpack.c.bf16 %v5230, %v5230
        %v5359 = vpack.c.bf16 %v5231, %v5231
        %v5360 = vpack.c.bf16 %v5232, %v5232
        %v5361 = vpack.c.bf16 %v5233, %v5233
        %v5362 = vpack.c.bf16 %v5234, %v5234
        %v5363 = vpack.c.bf16 %v5235, %v5235
        %v5364 = vpack.c.bf16 %v5236, %v5236
        %v5365 = vpack.c.bf16 %v5237, %v5237
        %v5366 = vpack.c.bf16 %v4815, %v4815
        %v5367 = vpack.c.bf16 %v4817, %v4817
        %v5368 = vpack.c.bf16 %v4820, %v4820
        %v5369 = vpack.c.bf16 %v4822, %v4822
        %v5370 = vpack.c.bf16 %v4825, %v4825
        %v5371 = vpack.c.bf16 %v4827, %v4827
        %v5372 = vpack.c.bf16 %v4830, %v4830
        %v5373 = vpack.c.bf16 %v4832, %v4832
        %v5374 = vpack.c.bf16 %v4835, %v4835
        %v5375 = vpack.c.bf16 %v4837, %v4837
        %v5376 = vpack.c.bf16 %v4840, %v4840
        %v5377 = vpack.c.bf16 %v4842, %v4842
        %v5378 = vpack.c.bf16 %v4845, %v4845
        %v5379 = vpack.c.bf16 %v4847, %v4847
        %v5380 = vpack.c.bf16 %v4850, %v4850
        %v5381 = vpack.c.bf16 %v4852, %v4852
        %v5390 = vunpack.c.l.b16 %v4982
        %v5391 = vunpack.c.l.b16 %v4983
        %v5392 = vunpack.c.l.b16 %v4984
        %v5393 = vunpack.c.l.b16 %v4985
        %v5394 = vunpack.c.l.b16 %v4986
        %v5395 = vunpack.c.l.b16 %v4987
        %v5396 = vunpack.c.l.b16 %v4988
        %v5397 = vunpack.c.l.b16 %v4989
        %v5398 = vpack.c.b16 %v5391, %v5390
        %v5399 = vpack.c.b16 %v5393, %v5392
        %v5400 = vpack.c.b16 %v5395, %v5394
        %v5401 = vpack.c.b16 %v5397, %v5396
        %5402 = vrot.lane.b32.xlu0 %v5398, 96
        %v5403 = vpop.permute.xlu0 %5402
        %5404 = vrot.lane.b32.xlu0 %v5399, 96
        %v5405 = vpop.permute.xlu0 %5404
        %5406 = vrot.lane.b32.xlu0 %v5400, 96
        %v5407 = vpop.permute.xlu0 %5406
        %5408 = vrot.lane.b32.xlu0 %v5401, 96
        %v5409 = vpop.permute.xlu0 %5408
        %v5411 = vsel %vm368, %v5366, 0
        %v5414 = vsel %vm368, %v5403, 0
        %v5417 = vsel %vm368, %v5405, 0
        %v5420 = vsel %vm368, %v5407, 0
        %v5423 = vsel %vm368, %v5409, 0
        %5425 = vmatpush.bf16.xpose.msra.mxu0 0
        %5426 = vmatpush.bf16.xpose.msra.mxu0 0
        %5427 = vmatpush.bf16.xpose.msra.mxu0 0
        %5428 = vmatpush.bf16.xpose.msra.mxu0 0
        %5429 = vmatpush.bf16.xpose.msra.mxu0 %v5423
        %5430 = vmatpush.bf16.xpose.msra.mxu0 %v5420
        %5431 = vmatpush.bf16.xpose.msra.mxu0 %v5417
        %5432 = vmatpush.bf16.xpose.msra.mxu0 %v5414
        %5433 = vmatmul.bf16.gmra.mxu0 %v5411
        %v5434 = vpop.f32.mrf.mxu0
        %v5435 = vadd.f32 0.0, %v5434
        %v5436 = vpop.f32.mrf.mxu0
        %5437 = vdwg.mxu0
        %v5446 = vunpack.c.l.b16 %v4990
        %v5447 = vunpack.c.l.b16 %v4991
        %v5448 = vunpack.c.l.b16 %v4992
        %v5449 = vunpack.c.l.b16 %v4993
        %v5450 = vunpack.c.l.b16 %v4994
        %v5451 = vunpack.c.l.b16 %v4995
        %v5452 = vunpack.c.l.b16 %v4996
        %v5453 = vunpack.c.l.b16 %v4997
        %v5454 = vpack.c.b16 %v5447, %v5446
        %v5455 = vpack.c.b16 %v5449, %v5448
        %v5456 = vpack.c.b16 %v5451, %v5450
        %v5457 = vpack.c.b16 %v5453, %v5452
        %5458 = vrot.lane.b32.xlu0 %v5454, 96
        %v5459 = vpop.permute.xlu0 %5458
        %5460 = vrot.lane.b32.xlu0 %v5455, 96
        %v5461 = vpop.permute.xlu0 %5460
        %5462 = vrot.lane.b32.xlu0 %v5456, 96
        %v5463 = vpop.permute.xlu0 %5462
        %5464 = vrot.lane.b32.xlu0 %v5457, 96
        %v5465 = vpop.permute.xlu0 %5464
        %v5467 = vsel %vm368, %v5367, 0
        %v5470 = vsel %vm368, %v5459, 0
        %v5473 = vsel %vm368, %v5461, 0
        %v5476 = vsel %vm368, %v5463, 0
        %v5479 = vsel %vm368, %v5465, 0
        %5481 = vmatpush.bf16.xpose.msra.mxu0 0
        %5482 = vmatpush.bf16.xpose.msra.mxu0 0
        %5483 = vmatpush.bf16.xpose.msra.mxu0 0
        %5484 = vmatpush.bf16.xpose.msra.mxu0 0
        %5485 = vmatpush.bf16.xpose.msra.mxu0 %v5479
        %5486 = vmatpush.bf16.xpose.msra.mxu0 %v5476
        %5487 = vmatpush.bf16.xpose.msra.mxu0 %v5473
        %5488 = vmatpush.bf16.xpose.msra.mxu0 %v5470
        %5489 = vmatmul.bf16.gmra.mxu0 %v5467
        %v5490 = vpop.f32.mrf.mxu0
        %v5491 = vadd.f32 0.0, %v5490
        %v5492 = vpop.f32.mrf.mxu0
        %5493 = vdwg.mxu0
        %v5502 = vunpack.c.l.b16 %v4998
        %v5503 = vunpack.c.l.b16 %v4999
        %v5504 = vunpack.c.l.b16 %v5000
        %v5505 = vunpack.c.l.b16 %v5001
        %v5506 = vunpack.c.l.b16 %v5002
        %v5507 = vunpack.c.l.b16 %v5003
        %v5508 = vunpack.c.l.b16 %v5004
        %v5509 = vunpack.c.l.b16 %v5005
        %v5510 = vpack.c.b16 %v5503, %v5502
        %v5511 = vpack.c.b16 %v5505, %v5504
        %v5512 = vpack.c.b16 %v5507, %v5506
        %v5513 = vpack.c.b16 %v5509, %v5508
        %5514 = vrot.lane.b32.xlu0 %v5510, 96
        %v5515 = vpop.permute.xlu0 %5514
        %5516 = vrot.lane.b32.xlu0 %v5511, 96
        %v5517 = vpop.permute.xlu0 %5516
        %5518 = vrot.lane.b32.xlu0 %v5512, 96
        %v5519 = vpop.permute.xlu0 %5518
        %5520 = vrot.lane.b32.xlu0 %v5513, 96
        %v5521 = vpop.permute.xlu0 %5520
        %v5523 = vsel %vm368, %v5368, 0
        %v5526 = vsel %vm368, %v5515, 0
        %v5529 = vsel %vm368, %v5517, 0
        %v5532 = vsel %vm368, %v5519, 0
        %v5535 = vsel %vm368, %v5521, 0
        %5537 = vmatpush.bf16.xpose.msra.mxu0 0
        %5538 = vmatpush.bf16.xpose.msra.mxu0 0
        %5539 = vmatpush.bf16.xpose.msra.mxu0 0
        %5540 = vmatpush.bf16.xpose.msra.mxu0 0
        %5541 = vmatpush.bf16.xpose.msra.mxu0 %v5535
        %5542 = vmatpush.bf16.xpose.msra.mxu0 %v5532
        %5543 = vmatpush.bf16.xpose.msra.mxu0 %v5529
        %5544 = vmatpush.bf16.xpose.msra.mxu0 %v5526
        %5545 = vmatmul.bf16.gmra.mxu0 %v5523
        %v5546 = vpop.f32.mrf.mxu0
        %v5547 = vadd.f32 0.0, %v5546
        %v5548 = vpop.f32.mrf.mxu0
        %5549 = vdwg.mxu0
        %v5558 = vunpack.c.l.b16 %v5006
        %v5559 = vunpack.c.l.b16 %v5007
        %v5560 = vunpack.c.l.b16 %v5008
        %v5561 = vunpack.c.l.b16 %v5009
        %v5562 = vunpack.c.l.b16 %v5010
        %v5563 = vunpack.c.l.b16 %v5011
        %v5564 = vunpack.c.l.b16 %v5012
        %v5565 = vunpack.c.l.b16 %v5013
        %v5566 = vpack.c.b16 %v5559, %v5558
        %v5567 = vpack.c.b16 %v5561, %v5560
        %v5568 = vpack.c.b16 %v5563, %v5562
        %v5569 = vpack.c.b16 %v5565, %v5564
        %5570 = vrot.lane.b32.xlu0 %v5566, 96
        %v5571 = vpop.permute.xlu0 %5570
        %5572 = vrot.lane.b32.xlu0 %v5567, 96
        %v5573 = vpop.permute.xlu0 %5572
        %5574 = vrot.lane.b32.xlu0 %v5568, 96
        %v5575 = vpop.permute.xlu0 %5574
        %5576 = vrot.lane.b32.xlu0 %v5569, 96
        %v5577 = vpop.permute.xlu0 %5576
        %v5579 = vsel %vm368, %v5369, 0
        %v5582 = vsel %vm368, %v5571, 0
        %v5585 = vsel %vm368, %v5573, 0
        %v5588 = vsel %vm368, %v5575, 0
        %v5591 = vsel %vm368, %v5577, 0
        %5593 = vmatpush.bf16.xpose.msra.mxu0 0
        %5594 = vmatpush.bf16.xpose.msra.mxu0 0
        %5595 = vmatpush.bf16.xpose.msra.mxu0 0
        %5596 = vmatpush.bf16.xpose.msra.mxu0 0
        %5597 = vmatpush.bf16.xpose.msra.mxu0 %v5591
        %5598 = vmatpush.bf16.xpose.msra.mxu0 %v5588
        %5599 = vmatpush.bf16.xpose.msra.mxu0 %v5585
        %5600 = vmatpush.bf16.xpose.msra.mxu0 %v5582
        %5601 = vmatmul.bf16.gmra.mxu0 %v5579
        %v5602 = vpop.f32.mrf.mxu0
        %v5603 = vadd.f32 0.0, %v5602
        %v5604 = vpop.f32.mrf.mxu0
        %5605 = vdwg.mxu0
        %v5614 = vunpack.c.l.b16 %v5014
        %v5615 = vunpack.c.l.b16 %v5015
        %v5616 = vunpack.c.l.b16 %v5016
        %v5617 = vunpack.c.l.b16 %v5017
        %v5618 = vunpack.c.l.b16 %v5018
        %v5619 = vunpack.c.l.b16 %v5019
        %v5620 = vunpack.c.l.b16 %v5020
        %v5621 = vunpack.c.l.b16 %v5021
        %v5622 = vpack.c.b16 %v5615, %v5614
        %v5623 = vpack.c.b16 %v5617, %v5616
        %v5624 = vpack.c.b16 %v5619, %v5618
        %v5625 = vpack.c.b16 %v5621, %v5620
        %5626 = vrot.lane.b32.xlu0 %v5622, 96
        %v5627 = vpop.permute.xlu0 %5626
        %5628 = vrot.lane.b32.xlu0 %v5623, 96
        %v5629 = vpop.permute.xlu0 %5628
        %5630 = vrot.lane.b32.xlu0 %v5624, 96
        %v5631 = vpop.permute.xlu0 %5630
        %5632 = vrot.lane.b32.xlu0 %v5625, 96
        %v5633 = vpop.permute.xlu0 %5632
        %v5635 = vsel %vm368, %v5370, 0
        %v5638 = vsel %vm368, %v5627, 0
        %v5641 = vsel %vm368, %v5629, 0
        %v5644 = vsel %vm368, %v5631, 0
        %v5647 = vsel %vm368, %v5633, 0
        %5649 = vmatpush.bf16.xpose.msra.mxu0 0
        %5650 = vmatpush.bf16.xpose.msra.mxu0 0
        %5651 = vmatpush.bf16.xpose.msra.mxu0 0
        %5652 = vmatpush.bf16.xpose.msra.mxu0 0
        %5653 = vmatpush.bf16.xpose.msra.mxu0 %v5647
        %5654 = vmatpush.bf16.xpose.msra.mxu0 %v5644
        %5655 = vmatpush.bf16.xpose.msra.mxu0 %v5641
        %5656 = vmatpush.bf16.xpose.msra.mxu0 %v5638
        %5657 = vmatmul.bf16.gmra.mxu0 %v5635
        %v5658 = vpop.f32.mrf.mxu0
        %v5659 = vadd.f32 0.0, %v5658
        %v5660 = vpop.f32.mrf.mxu0
        %5661 = vdwg.mxu0
        %v5670 = vunpack.c.l.b16 %v5022
        %v5671 = vunpack.c.l.b16 %v5023
        %v5672 = vunpack.c.l.b16 %v5024
        %v5673 = vunpack.c.l.b16 %v5025
        %v5674 = vunpack.c.l.b16 %v5026
        %v5675 = vunpack.c.l.b16 %v5027
        %v5676 = vunpack.c.l.b16 %v5028
        %v5677 = vunpack.c.l.b16 %v5029
        %v5678 = vpack.c.b16 %v5671, %v5670
        %v5679 = vpack.c.b16 %v5673, %v5672
        %v5680 = vpack.c.b16 %v5675, %v5674
        %v5681 = vpack.c.b16 %v5677, %v5676
        %5682 = vrot.lane.b32.xlu0 %v5678, 96
        %v5683 = vpop.permute.xlu0 %5682
        %5684 = vrot.lane.b32.xlu0 %v5679, 96
        %v5685 = vpop.permute.xlu0 %5684
        %5686 = vrot.lane.b32.xlu0 %v5680, 96
        %v5687 = vpop.permute.xlu0 %5686
        %5688 = vrot.lane.b32.xlu0 %v5681, 96
        %v5689 = vpop.permute.xlu0 %5688
        %v5691 = vsel %vm368, %v5371, 0
        %v5694 = vsel %vm368, %v5683, 0
        %v5697 = vsel %vm368, %v5685, 0
        %v5700 = vsel %vm368, %v5687, 0
        %v5703 = vsel %vm368, %v5689, 0
        %5705 = vmatpush.bf16.xpose.msra.mxu0 0
        %5706 = vmatpush.bf16.xpose.msra.mxu0 0
        %5707 = vmatpush.bf16.xpose.msra.mxu0 0
        %5708 = vmatpush.bf16.xpose.msra.mxu0 0
        %5709 = vmatpush.bf16.xpose.msra.mxu0 %v5703
        %5710 = vmatpush.bf16.xpose.msra.mxu0 %v5700
        %5711 = vmatpush.bf16.xpose.msra.mxu0 %v5697
        %5712 = vmatpush.bf16.xpose.msra.mxu0 %v5694
        %5713 = vmatmul.bf16.gmra.mxu0 %v5691
        %v5714 = vpop.f32.mrf.mxu0
        %v5715 = vadd.f32 0.0, %v5714
        %v5716 = vpop.f32.mrf.mxu0
        %5717 = vdwg.mxu0
        %v5726 = vunpack.c.l.b16 %v5030
        %v5727 = vunpack.c.l.b16 %v5031
        %v5728 = vunpack.c.l.b16 %v5032
        %v5729 = vunpack.c.l.b16 %v5033
        %v5730 = vunpack.c.l.b16 %v5034
        %v5731 = vunpack.c.l.b16 %v5035
        %v5732 = vunpack.c.l.b16 %v5036
        %v5733 = vunpack.c.l.b16 %v5037
        %v5734 = vpack.c.b16 %v5727, %v5726
        %v5735 = vpack.c.b16 %v5729, %v5728
        %v5736 = vpack.c.b16 %v5731, %v5730
        %v5737 = vpack.c.b16 %v5733, %v5732
        %5738 = vrot.lane.b32.xlu0 %v5734, 96
        %v5739 = vpop.permute.xlu0 %5738
        %5740 = vrot.lane.b32.xlu0 %v5735, 96
        %v5741 = vpop.permute.xlu0 %5740
        %5742 = vrot.lane.b32.xlu0 %v5736, 96
        %v5743 = vpop.permute.xlu0 %5742
        %5744 = vrot.lane.b32.xlu0 %v5737, 96
        %v5745 = vpop.permute.xlu0 %5744
        %v5747 = vsel %vm368, %v5372, 0
        %v5750 = vsel %vm368, %v5739, 0
        %v5753 = vsel %vm368, %v5741, 0
        %v5756 = vsel %vm368, %v5743, 0
        %v5759 = vsel %vm368, %v5745, 0
        %5761 = vmatpush.bf16.xpose.msra.mxu0 0
        %5762 = vmatpush.bf16.xpose.msra.mxu0 0
        %5763 = vmatpush.bf16.xpose.msra.mxu0 0
        %5764 = vmatpush.bf16.xpose.msra.mxu0 0
        %5765 = vmatpush.bf16.xpose.msra.mxu0 %v5759
        %5766 = vmatpush.bf16.xpose.msra.mxu0 %v5756
        %5767 = vmatpush.bf16.xpose.msra.mxu0 %v5753
        %5768 = vmatpush.bf16.xpose.msra.mxu0 %v5750
        %5769 = vmatmul.bf16.gmra.mxu0 %v5747
        %v5770 = vpop.f32.mrf.mxu0
        %v5771 = vadd.f32 0.0, %v5770
        %v5772 = vpop.f32.mrf.mxu0
        %5773 = vdwg.mxu0
        %v5782 = vunpack.c.l.b16 %v5038
        %v5783 = vunpack.c.l.b16 %v5039
        %v5784 = vunpack.c.l.b16 %v5040
        %v5785 = vunpack.c.l.b16 %v5041
        %v5786 = vunpack.c.l.b16 %v5042
        %v5787 = vunpack.c.l.b16 %v5043
        %v5788 = vunpack.c.l.b16 %v5044
        %v5789 = vunpack.c.l.b16 %v5045
        %v5790 = vpack.c.b16 %v5783, %v5782
        %v5791 = vpack.c.b16 %v5785, %v5784
        %v5792 = vpack.c.b16 %v5787, %v5786
        %v5793 = vpack.c.b16 %v5789, %v5788
        %5794 = vrot.lane.b32.xlu0 %v5790, 96
        %v5795 = vpop.permute.xlu0 %5794
        %5796 = vrot.lane.b32.xlu0 %v5791, 96
        %v5797 = vpop.permute.xlu0 %5796
        %5798 = vrot.lane.b32.xlu0 %v5792, 96
        %v5799 = vpop.permute.xlu0 %5798
        %5800 = vrot.lane.b32.xlu0 %v5793, 96
        %v5801 = vpop.permute.xlu0 %5800
        %v5803 = vsel %vm368, %v5373, 0
        %v5806 = vsel %vm368, %v5795, 0
        %v5809 = vsel %vm368, %v5797, 0
        %v5812 = vsel %vm368, %v5799, 0
        %v5815 = vsel %vm368, %v5801, 0
        %5817 = vmatpush.bf16.xpose.msra.mxu0 0
        %5818 = vmatpush.bf16.xpose.msra.mxu0 0
        %5819 = vmatpush.bf16.xpose.msra.mxu0 0
        %5820 = vmatpush.bf16.xpose.msra.mxu0 0
        %5821 = vmatpush.bf16.xpose.msra.mxu0 %v5815
        %5822 = vmatpush.bf16.xpose.msra.mxu0 %v5812
        %5823 = vmatpush.bf16.xpose.msra.mxu0 %v5809
        %5824 = vmatpush.bf16.xpose.msra.mxu0 %v5806
        %5825 = vmatmul.bf16.gmra.mxu0 %v5803
        %v5826 = vpop.f32.mrf.mxu0
        %v5827 = vadd.f32 0.0, %v5826
        %v5828 = vpop.f32.mrf.mxu0
        %5829 = vdwg.mxu0
        %v5838 = vunpack.c.l.b16 %v5046
        %v5839 = vunpack.c.l.b16 %v5047
        %v5840 = vunpack.c.l.b16 %v5048
        %v5841 = vunpack.c.l.b16 %v5049
        %v5842 = vunpack.c.l.b16 %v5050
        %v5843 = vunpack.c.l.b16 %v5051
        %v5844 = vunpack.c.l.b16 %v5052
        %v5845 = vunpack.c.l.b16 %v5053
        %v5846 = vpack.c.b16 %v5839, %v5838
        %v5847 = vpack.c.b16 %v5841, %v5840
        %v5848 = vpack.c.b16 %v5843, %v5842
        %v5849 = vpack.c.b16 %v5845, %v5844
        %5850 = vrot.lane.b32.xlu0 %v5846, 96
        %v5851 = vpop.permute.xlu0 %5850
        %5852 = vrot.lane.b32.xlu0 %v5847, 96
        %v5853 = vpop.permute.xlu0 %5852
        %5854 = vrot.lane.b32.xlu0 %v5848, 96
        %v5855 = vpop.permute.xlu0 %5854
        %5856 = vrot.lane.b32.xlu0 %v5849, 96
        %v5857 = vpop.permute.xlu0 %5856
        %v5859 = vsel %vm368, %v5374, 0
        %v5862 = vsel %vm368, %v5851, 0
        %v5865 = vsel %vm368, %v5853, 0
        %v5868 = vsel %vm368, %v5855, 0
        %v5871 = vsel %vm368, %v5857, 0
        %5873 = vmatpush.bf16.xpose.msra.mxu0 0
        %5874 = vmatpush.bf16.xpose.msra.mxu0 0
        %5875 = vmatpush.bf16.xpose.msra.mxu0 0
        %5876 = vmatpush.bf16.xpose.msra.mxu0 0
        %5877 = vmatpush.bf16.xpose.msra.mxu0 %v5871
        %5878 = vmatpush.bf16.xpose.msra.mxu0 %v5868
        %5879 = vmatpush.bf16.xpose.msra.mxu0 %v5865
        %5880 = vmatpush.bf16.xpose.msra.mxu0 %v5862
        %5881 = vmatmul.bf16.gmra.mxu0 %v5859
        %v5882 = vpop.f32.mrf.mxu0
        %v5883 = vadd.f32 0.0, %v5882
        %v5884 = vpop.f32.mrf.mxu0
        %5885 = vdwg.mxu0
        %v5894 = vunpack.c.l.b16 %v5054
        %v5895 = vunpack.c.l.b16 %v5055
        %v5896 = vunpack.c.l.b16 %v5056
        %v5897 = vunpack.c.l.b16 %v5057
        %v5898 = vunpack.c.l.b16 %v5058
        %v5899 = vunpack.c.l.b16 %v5059
        %v5900 = vunpack.c.l.b16 %v5060
        %v5901 = vunpack.c.l.b16 %v5061
        %v5902 = vpack.c.b16 %v5895, %v5894
        %v5903 = vpack.c.b16 %v5897, %v5896
        %v5904 = vpack.c.b16 %v5899, %v5898
        %v5905 = vpack.c.b16 %v5901, %v5900
        %5906 = vrot.lane.b32.xlu0 %v5902, 96
        %v5907 = vpop.permute.xlu0 %5906
        %5908 = vrot.lane.b32.xlu0 %v5903, 96
        %v5909 = vpop.permute.xlu0 %5908
        %5910 = vrot.lane.b32.xlu0 %v5904, 96
        %v5911 = vpop.permute.xlu0 %5910
        %5912 = vrot.lane.b32.xlu0 %v5905, 96
        %v5913 = vpop.permute.xlu0 %5912
        %v5915 = vsel %vm368, %v5375, 0
        %v5918 = vsel %vm368, %v5907, 0
        %v5921 = vsel %vm368, %v5909, 0
        %v5924 = vsel %vm368, %v5911, 0
        %v5927 = vsel %vm368, %v5913, 0
        %5929 = vmatpush.bf16.xpose.msra.mxu0 0
        %5930 = vmatpush.bf16.xpose.msra.mxu0 0
        %5931 = vmatpush.bf16.xpose.msra.mxu0 0
        %5932 = vmatpush.bf16.xpose.msra.mxu0 0
        %5933 = vmatpush.bf16.xpose.msra.mxu0 %v5927
        %5934 = vmatpush.bf16.xpose.msra.mxu0 %v5924
        %5935 = vmatpush.bf16.xpose.msra.mxu0 %v5921
        %5936 = vmatpush.bf16.xpose.msra.mxu0 %v5918
        %5937 = vmatmul.bf16.gmra.mxu0 %v5915
        %v5938 = vpop.f32.mrf.mxu0
        %v5939 = vadd.f32 0.0, %v5938
        %v5940 = vpop.f32.mrf.mxu0
        %5941 = vdwg.mxu0
        %v5950 = vunpack.c.l.b16 %v5062
        %v5951 = vunpack.c.l.b16 %v5063
        %v5952 = vunpack.c.l.b16 %v5064
        %v5953 = vunpack.c.l.b16 %v5065
        %v5954 = vunpack.c.l.b16 %v5066
        %v5955 = vunpack.c.l.b16 %v5067
        %v5956 = vunpack.c.l.b16 %v5068
        %v5957 = vunpack.c.l.b16 %v5069
        %v5958 = vpack.c.b16 %v5951, %v5950
        %v5959 = vpack.c.b16 %v5953, %v5952
        %v5960 = vpack.c.b16 %v5955, %v5954
        %v5961 = vpack.c.b16 %v5957, %v5956
        %5962 = vrot.lane.b32.xlu0 %v5958, 96
        %v5963 = vpop.permute.xlu0 %5962
        %5964 = vrot.lane.b32.xlu0 %v5959, 96
        %v5965 = vpop.permute.xlu0 %5964
        %5966 = vrot.lane.b32.xlu0 %v5960, 96
        %v5967 = vpop.permute.xlu0 %5966
        %5968 = vrot.lane.b32.xlu0 %v5961, 96
        %v5969 = vpop.permute.xlu0 %5968
        %v5971 = vsel %vm368, %v5376, 0
        %v5974 = vsel %vm368, %v5963, 0
        %v5977 = vsel %vm368, %v5965, 0
        %v5980 = vsel %vm368, %v5967, 0
        %v5983 = vsel %vm368, %v5969, 0
        %5985 = vmatpush.bf16.xpose.msra.mxu0 0
        %5986 = vmatpush.bf16.xpose.msra.mxu0 0
        %5987 = vmatpush.bf16.xpose.msra.mxu0 0
        %5988 = vmatpush.bf16.xpose.msra.mxu0 0
        %5989 = vmatpush.bf16.xpose.msra.mxu0 %v5983
        %5990 = vmatpush.bf16.xpose.msra.mxu0 %v5980
        %5991 = vmatpush.bf16.xpose.msra.mxu0 %v5977
        %5992 = vmatpush.bf16.xpose.msra.mxu0 %v5974
        %5993 = vmatmul.bf16.gmra.mxu0 %v5971
        %v5994 = vpop.f32.mrf.mxu0
        %v5995 = vadd.f32 0.0, %v5994
        %v5996 = vpop.f32.mrf.mxu0
        %5997 = vdwg.mxu0
        %v6006 = vunpack.c.l.b16 %v5070
        %v6007 = vunpack.c.l.b16 %v5071
        %v6008 = vunpack.c.l.b16 %v5072
        %v6009 = vunpack.c.l.b16 %v5073
        %v6010 = vunpack.c.l.b16 %v5074
        %v6011 = vunpack.c.l.b16 %v5075
        %v6012 = vunpack.c.l.b16 %v5076
        %v6013 = vunpack.c.l.b16 %v5077
        %v6014 = vpack.c.b16 %v6007, %v6006
        %v6015 = vpack.c.b16 %v6009, %v6008
        %v6016 = vpack.c.b16 %v6011, %v6010
        %v6017 = vpack.c.b16 %v6013, %v6012
        %6018 = vrot.lane.b32.xlu0 %v6014, 96
        %v6019 = vpop.permute.xlu0 %6018
        %6020 = vrot.lane.b32.xlu0 %v6015, 96
        %v6021 = vpop.permute.xlu0 %6020
        %6022 = vrot.lane.b32.xlu0 %v6016, 96
        %v6023 = vpop.permute.xlu0 %6022
        %6024 = vrot.lane.b32.xlu0 %v6017, 96
        %v6025 = vpop.permute.xlu0 %6024
        %v6027 = vsel %vm368, %v5377, 0
        %v6030 = vsel %vm368, %v6019, 0
        %v6033 = vsel %vm368, %v6021, 0
        %v6036 = vsel %vm368, %v6023, 0
        %v6039 = vsel %vm368, %v6025, 0
        %6041 = vmatpush.bf16.xpose.msra.mxu0 0
        %6042 = vmatpush.bf16.xpose.msra.mxu0 0
        %6043 = vmatpush.bf16.xpose.msra.mxu0 0
        %6044 = vmatpush.bf16.xpose.msra.mxu0 0
        %6045 = vmatpush.bf16.xpose.msra.mxu0 %v6039
        %6046 = vmatpush.bf16.xpose.msra.mxu0 %v6036
        %6047 = vmatpush.bf16.xpose.msra.mxu0 %v6033
        %6048 = vmatpush.bf16.xpose.msra.mxu0 %v6030
        %6049 = vmatmul.bf16.gmra.mxu0 %v6027
        %v6050 = vpop.f32.mrf.mxu0
        %v6051 = vadd.f32 0.0, %v6050
        %v6052 = vpop.f32.mrf.mxu0
        %6053 = vdwg.mxu0
        %v6062 = vunpack.c.l.b16 %v5078
        %v6063 = vunpack.c.l.b16 %v5079
        %v6064 = vunpack.c.l.b16 %v5080
        %v6065 = vunpack.c.l.b16 %v5081
        %v6066 = vunpack.c.l.b16 %v5082
        %v6067 = vunpack.c.l.b16 %v5083
        %v6068 = vunpack.c.l.b16 %v5084
        %v6069 = vunpack.c.l.b16 %v5085
        %v6070 = vpack.c.b16 %v6063, %v6062
        %v6071 = vpack.c.b16 %v6065, %v6064
        %v6072 = vpack.c.b16 %v6067, %v6066
        %v6073 = vpack.c.b16 %v6069, %v6068
        %6074 = vrot.lane.b32.xlu0 %v6070, 96
        %v6075 = vpop.permute.xlu0 %6074
        %6076 = vrot.lane.b32.xlu0 %v6071, 96
        %v6077 = vpop.permute.xlu0 %6076
        %6078 = vrot.lane.b32.xlu0 %v6072, 96
        %v6079 = vpop.permute.xlu0 %6078
        %6080 = vrot.lane.b32.xlu0 %v6073, 96
        %v6081 = vpop.permute.xlu0 %6080
        %v6083 = vsel %vm368, %v5378, 0
        %v6086 = vsel %vm368, %v6075, 0
        %v6089 = vsel %vm368, %v6077, 0
        %v6092 = vsel %vm368, %v6079, 0
        %v6095 = vsel %vm368, %v6081, 0
        %6097 = vmatpush.bf16.xpose.msra.mxu0 0
        %6098 = vmatpush.bf16.xpose.msra.mxu0 0
        %6099 = vmatpush.bf16.xpose.msra.mxu0 0
        %6100 = vmatpush.bf16.xpose.msra.mxu0 0
        %6101 = vmatpush.bf16.xpose.msra.mxu0 %v6095
        %6102 = vmatpush.bf16.xpose.msra.mxu0 %v6092
        %6103 = vmatpush.bf16.xpose.msra.mxu0 %v6089
        %6104 = vmatpush.bf16.xpose.msra.mxu0 %v6086
        %6105 = vmatmul.bf16.gmra.mxu0 %v6083
        %v6106 = vpop.f32.mrf.mxu0
        %v6107 = vadd.f32 0.0, %v6106
        %v6108 = vpop.f32.mrf.mxu0
        %6109 = vdwg.mxu0
        %v6118 = vunpack.c.l.b16 %v5086
        %v6119 = vunpack.c.l.b16 %v5087
        %v6120 = vunpack.c.l.b16 %v5088
        %v6121 = vunpack.c.l.b16 %v5089
        %v6122 = vunpack.c.l.b16 %v5090
        %v6123 = vunpack.c.l.b16 %v5091
        %v6124 = vunpack.c.l.b16 %v5092
        %v6125 = vunpack.c.l.b16 %v5093
        %v6126 = vpack.c.b16 %v6119, %v6118
        %v6127 = vpack.c.b16 %v6121, %v6120
        %v6128 = vpack.c.b16 %v6123, %v6122
        %v6129 = vpack.c.b16 %v6125, %v6124
        %6130 = vrot.lane.b32.xlu0 %v6126, 96
        %v6131 = vpop.permute.xlu0 %6130
        %6132 = vrot.lane.b32.xlu0 %v6127, 96
        %v6133 = vpop.permute.xlu0 %6132
        %6134 = vrot.lane.b32.xlu0 %v6128, 96
        %v6135 = vpop.permute.xlu0 %6134
        %6136 = vrot.lane.b32.xlu0 %v6129, 96
        %v6137 = vpop.permute.xlu0 %6136
        %v6139 = vsel %vm368, %v5379, 0
        %v6142 = vsel %vm368, %v6131, 0
        %v6145 = vsel %vm368, %v6133, 0
        %v6148 = vsel %vm368, %v6135, 0
        %v6151 = vsel %vm368, %v6137, 0
        %6153 = vmatpush.bf16.xpose.msra.mxu0 0
        %6154 = vmatpush.bf16.xpose.msra.mxu0 0
        %6155 = vmatpush.bf16.xpose.msra.mxu0 0
        %6156 = vmatpush.bf16.xpose.msra.mxu0 0
        %6157 = vmatpush.bf16.xpose.msra.mxu0 %v6151
        %6158 = vmatpush.bf16.xpose.msra.mxu0 %v6148
        %6159 = vmatpush.bf16.xpose.msra.mxu0 %v6145
        %6160 = vmatpush.bf16.xpose.msra.mxu0 %v6142
        %6161 = vmatmul.bf16.gmra.mxu0 %v6139
        %v6162 = vpop.f32.mrf.mxu0
        %v6163 = vadd.f32 0.0, %v6162
        %v6164 = vpop.f32.mrf.mxu0
        %6165 = vdwg.mxu0
        %v6174 = vunpack.c.l.b16 %v5094
        %v6175 = vunpack.c.l.b16 %v5095
        %v6176 = vunpack.c.l.b16 %v5096
        %v6177 = vunpack.c.l.b16 %v5097
        %v6178 = vunpack.c.l.b16 %v5098
        %v6179 = vunpack.c.l.b16 %v5099
        %v6180 = vunpack.c.l.b16 %v5100
        %v6181 = vunpack.c.l.b16 %v5101
        %v6182 = vpack.c.b16 %v6175, %v6174
        %v6183 = vpack.c.b16 %v6177, %v6176
        %v6184 = vpack.c.b16 %v6179, %v6178
        %v6185 = vpack.c.b16 %v6181, %v6180
        %6186 = vrot.lane.b32.xlu0 %v6182, 96
        %v6187 = vpop.permute.xlu0 %6186
        %6188 = vrot.lane.b32.xlu0 %v6183, 96
        %v6189 = vpop.permute.xlu0 %6188
        %6190 = vrot.lane.b32.xlu0 %v6184, 96
        %v6191 = vpop.permute.xlu0 %6190
        %6192 = vrot.lane.b32.xlu0 %v6185, 96
        %v6193 = vpop.permute.xlu0 %6192
        %v6195 = vsel %vm368, %v5380, 0
        %v6198 = vsel %vm368, %v6187, 0
        %v6201 = vsel %vm368, %v6189, 0
        %v6204 = vsel %vm368, %v6191, 0
        %v6207 = vsel %vm368, %v6193, 0
        %6209 = vmatpush.bf16.xpose.msra.mxu0 0
        %6210 = vmatpush.bf16.xpose.msra.mxu0 0
        %6211 = vmatpush.bf16.xpose.msra.mxu0 0
        %6212 = vmatpush.bf16.xpose.msra.mxu0 0
        %6213 = vmatpush.bf16.xpose.msra.mxu0 %v6207
        %6214 = vmatpush.bf16.xpose.msra.mxu0 %v6204
        %6215 = vmatpush.bf16.xpose.msra.mxu0 %v6201
        %6216 = vmatpush.bf16.xpose.msra.mxu0 %v6198
        %6217 = vmatmul.bf16.gmra.mxu0 %v6195
        %v6218 = vpop.f32.mrf.mxu0
        %v6219 = vadd.f32 0.0, %v6218
        %v6220 = vpop.f32.mrf.mxu0
        %6221 = vdwg.mxu0
        %v6230 = vunpack.c.l.b16 %v5102
        %v6231 = vunpack.c.l.b16 %v5103
        %v6232 = vunpack.c.l.b16 %v5104
        %v6233 = vunpack.c.l.b16 %v5105
        %v6234 = vunpack.c.l.b16 %v5106
        %v6235 = vunpack.c.l.b16 %v5107
        %v6236 = vunpack.c.l.b16 %v5108
        %v6237 = vunpack.c.l.b16 %v5109
        %v6238 = vpack.c.b16 %v6231, %v6230
        %v6239 = vpack.c.b16 %v6233, %v6232
        %v6240 = vpack.c.b16 %v6235, %v6234
        %v6241 = vpack.c.b16 %v6237, %v6236
        %6242 = vrot.lane.b32.xlu0 %v6238, 96
        %v6243 = vpop.permute.xlu0 %6242
        %6244 = vrot.lane.b32.xlu0 %v6239, 96
        %v6245 = vpop.permute.xlu0 %6244
        %6246 = vrot.lane.b32.xlu0 %v6240, 96
        %v6247 = vpop.permute.xlu0 %6246
        %6248 = vrot.lane.b32.xlu0 %v6241, 96
        %v6249 = vpop.permute.xlu0 %6248
        %v6251 = vsel %vm368, %v5381, 0
        %v6254 = vsel %vm368, %v6243, 0
        %v6257 = vsel %vm368, %v6245, 0
        %v6260 = vsel %vm368, %v6247, 0
        %v6263 = vsel %vm368, %v6249, 0
        %6265 = vmatpush.bf16.xpose.msra.mxu0 0
        %6266 = vmatpush.bf16.xpose.msra.mxu0 0
        %6267 = vmatpush.bf16.xpose.msra.mxu0 0
        %6268 = vmatpush.bf16.xpose.msra.mxu0 0
        %6269 = vmatpush.bf16.xpose.msra.mxu0 %v6263
        %6270 = vmatpush.bf16.xpose.msra.mxu0 %v6260
        %6271 = vmatpush.bf16.xpose.msra.mxu0 %v6257
        %6272 = vmatpush.bf16.xpose.msra.mxu0 %v6254
        %6273 = vmatmul.bf16.gmra.mxu0 %v6251
        %v6274 = vpop.f32.mrf.mxu0
        %v6275 = vadd.f32 0.0, %v6274
        %v6276 = vpop.f32.mrf.mxu0
        %6277 = vdwg.mxu0
        %vm6278 = vcmask 523264
        %v6279 = vsel %vm6278, %v5435, -inf
        %6280 = vmax.xlane.f32.xlu0 %v6279
        %v6281 = vpop.xlane.xlu0 %6280
        %v6282 = vsel %vm6278, %v5491, -inf
        %6283 = vmax.xlane.f32.xlu0 %v6282
        %v6284 = vpop.xlane.xlu0 %6283
        %v6285 = vsel %vm6278, %v5547, -inf
        %6286 = vmax.xlane.f32.xlu0 %v6285
        %v6287 = vpop.xlane.xlu0 %6286
        %v6288 = vsel %vm6278, %v5603, -inf
        %6289 = vmax.xlane.f32.xlu0 %v6288
        %v6290 = vpop.xlane.xlu0 %6289
        %v6291 = vsel %vm6278, %v5659, -inf
        %6292 = vmax.xlane.f32.xlu0 %v6291
        %v6293 = vpop.xlane.xlu0 %6292
        %v6294 = vsel %vm6278, %v5715, -inf
        %6295 = vmax.xlane.f32.xlu0 %v6294
        %v6296 = vpop.xlane.xlu0 %6295
        %v6297 = vsel %vm6278, %v5771, -inf
        %6298 = vmax.xlane.f32.xlu0 %v6297
        %v6299 = vpop.xlane.xlu0 %6298
        %v6300 = vsel %vm6278, %v5827, -inf
        %6301 = vmax.xlane.f32.xlu0 %v6300
        %v6302 = vpop.xlane.xlu0 %6301
        %v6303 = vsel %vm6278, %v5883, -inf
        %6304 = vmax.xlane.f32.xlu0 %v6303
        %v6305 = vpop.xlane.xlu0 %6304
        %v6306 = vsel %vm6278, %v5939, -inf
        %6307 = vmax.xlane.f32.xlu0 %v6306
        %v6308 = vpop.xlane.xlu0 %6307
        %v6309 = vsel %vm6278, %v5995, -inf
        %6310 = vmax.xlane.f32.xlu0 %v6309
        %v6311 = vpop.xlane.xlu0 %6310
        %v6312 = vsel %vm6278, %v6051, -inf
        %6313 = vmax.xlane.f32.xlu0 %v6312
        %v6314 = vpop.xlane.xlu0 %6313
        %v6315 = vsel %vm6278, %v6107, -inf
        %6316 = vmax.xlane.f32.xlu0 %v6315
        %v6317 = vpop.xlane.xlu0 %6316
        %v6318 = vsel %vm6278, %v6163, -inf
        %6319 = vmax.xlane.f32.xlu0 %v6318
        %v6320 = vpop.xlane.xlu0 %6319
        %v6321 = vsel %vm6278, %v6219, -inf
        %6322 = vmax.xlane.f32.xlu0 %v6321
        %v6323 = vpop.xlane.xlu0 %6322
        %v6324 = vsel %vm6278, %v6275, -inf
        %6325 = vmax.xlane.f32.xlu0 %v6324
        %v6326 = vpop.xlane.xlu0 %6325
        %v6327 = vsub.f32 %v5435, %v6281
        %v6328 = vsub.f32 %v5491, %v6284
        %v6329 = vsub.f32 %v5547, %v6287
        %v6330 = vsub.f32 %v5603, %v6290
        %v6331 = vsub.f32 %v5659, %v6293
        %v6332 = vsub.f32 %v5715, %v6296
        %v6333 = vsub.f32 %v5771, %v6299
        %v6334 = vsub.f32 %v5827, %v6302
        %v6335 = vsub.f32 %v5883, %v6305
        %v6336 = vsub.f32 %v5939, %v6308
        %v6337 = vsub.f32 %v5995, %v6311
        %v6338 = vsub.f32 %v6051, %v6314
        %v6339 = vsub.f32 %v6107, %v6317
        %v6340 = vsub.f32 %v6163, %v6320
        %v6341 = vsub.f32 %v6219, %v6323
        %v6342 = vsub.f32 %v6275, %v6326
        %v6343 = vmul.f32 %v6327, 1.442695
        %v6344 = vpow.pop %v6343
        %v6345 = vmul.f32 %v6328, 1.442695
        %v6346 = vpow.pop %v6345
        %v6347 = vmul.f32 %v6329, 1.442695
        %v6348 = vpow.pop %v6347
        %v6349 = vmul.f32 %v6330, 1.442695
        %v6350 = vpow.pop %v6349
        %v6351 = vmul.f32 %v6331, 1.442695
        %v6352 = vpow.pop %v6351
        %v6353 = vmul.f32 %v6332, 1.442695
        %v6354 = vpow.pop %v6353
        %v6355 = vmul.f32 %v6333, 1.442695
        %v6356 = vpow.pop %v6355
        %v6357 = vmul.f32 %v6334, 1.442695
        %v6358 = vpow.pop %v6357
        %v6359 = vmul.f32 %v6335, 1.442695
        %v6360 = vpow.pop %v6359
        %v6361 = vmul.f32 %v6336, 1.442695
        %v6362 = vpow.pop %v6361
        %v6363 = vmul.f32 %v6337, 1.442695
        %v6364 = vpow.pop %v6363
        %v6365 = vmul.f32 %v6338, 1.442695
        %v6366 = vpow.pop %v6365
        %v6367 = vmul.f32 %v6339, 1.442695
        %v6368 = vpow.pop %v6367
        %v6369 = vmul.f32 %v6340, 1.442695
        %v6370 = vpow.pop %v6369
        %v6371 = vmul.f32 %v6341, 1.442695
        %v6372 = vpow.pop %v6371
        %v6373 = vmul.f32 %v6342, 1.442695
        %v6374 = vpow.pop %v6373
        %v6375 = vmul.u32 %v856, 8
        %vm6376 = vcmp.ge.s32.totalorder %v2378, %v6375
        %vm6377 = vcmp.ge.s32.totalorder %v2379, %v6375
        %vm6378 = vcmp.ge.s32.totalorder %v2380, %v6375
        %vm6379 = vcmp.ge.s32.totalorder %v2381, %v6375
        %vm6380 = vcmp.ge.s32.totalorder %v2382, %v6375
        %vm6381 = vcmp.ge.s32.totalorder %v2383, %v6375
        %vm6382 = vcmp.ge.s32.totalorder %v2384, %v6375
        %vm6383 = vcmp.ge.s32.totalorder %v2385, %v6375
        %v6384 = vmul.u32 %v2411, 8
        %vm6385 = vcmp.lt.s32.totalorder %v2378, %v6384
        %vm6386 = vcmp.lt.s32.totalorder %v2379, %v6384
        %vm6387 = vcmp.lt.s32.totalorder %v2380, %v6384
        %vm6388 = vcmp.lt.s32.totalorder %v2381, %v6384
        %vm6389 = vcmp.lt.s32.totalorder %v2382, %v6384
        %vm6390 = vcmp.lt.s32.totalorder %v2383, %v6384
        %vm6391 = vcmp.lt.s32.totalorder %v2384, %v6384
        %vm6392 = vcmp.lt.s32.totalorder %v2385, %v6384
        %vm6393 = vmand %vm6376, %vm6385
        %vm6394 = vmand %vm6377, %vm6386
        %vm6395 = vmand %vm6378, %vm6387
        %vm6396 = vmand %vm6379, %vm6388
        %vm6397 = vmand %vm6380, %vm6389
        %vm6398 = vmand %vm6381, %vm6390
        %vm6399 = vmand %vm6382, %vm6391
        %vm6400 = vmand %vm6383, %vm6392
        %v6401 = vsel %vm6393, 1, 0
        %v6402 = vsel %vm6394, 1, 0
        %v6403 = vsel %vm6395, 1, 0
        %v6404 = vsel %vm6396, 1, 0
        %v6405 = vsel %vm6397, 1, 0
        %v6406 = vsel %vm6398, 1, 0
        %v6407 = vsel %vm6399, 1, 0
        %v6408 = vsel %vm6400, 1, 0
        %v6409 = vcvt.s32.f32 %v6401
        %v6410 = vcvt.s32.f32 %v6402
        %v6411 = vcvt.s32.f32 %v6403
        %v6412 = vcvt.s32.f32 %v6404
        %v6413 = vcvt.s32.f32 %v6405
        %v6414 = vcvt.s32.f32 %v6406
        %v6415 = vcvt.s32.f32 %v6407
        %v6416 = vcvt.s32.f32 %v6408
        %v6417 = vmul.u32 %v2378, 8
        %vm6418 = vcmp.ge.s32.totalorder %v856, %v6417
        %v6419 = vmul.u32 %v2479, 8
        %vm6420 = vcmp.lt.s32.totalorder %v856, %v6419
        %vm6421 = vmand %vm6418, %vm6420
        %v6422 = vsel %vm6421, 1, 0
        %v6423 = vcvt.s32.f32 %v6422
        %v6425 = vsel %vm6278, %v6344, 0
        %v6428 = vsel %vm6278, %v6346, 0
        %v6431 = vsel %vm6278, %v6348, 0
        %v6434 = vsel %vm6278, %v6350, 0
        %v6437 = vsel %vm6278, %v6352, 0
        %v6440 = vsel %vm6278, %v6354, 0
        %v6443 = vsel %vm6278, %v6356, 0
        %v6446 = vsel %vm6278, %v6358, 0
        %v6449 = vsel %vm6278, %v6360, 0
        %v6452 = vsel %vm6278, %v6362, 0
        %v6455 = vsel %vm6278, %v6364, 0
        %v6458 = vsel %vm6278, %v6366, 0
        %v6461 = vsel %vm6278, %v6368, 0
        %v6464 = vsel %vm6278, %v6370, 0
        %v6467 = vsel %vm6278, %v6372, 0
        %v6470 = vsel %vm6278, %v6374, 0
        %6472 = vmatpush.msra.mxu0 0.0
        %6473 = vmatpush.msra.mxu0 0.0
        %6474 = vmatpush.msra.mxu0 0.0
        %6475 = vmatpush.msra.mxu0 0.0
        %6476 = vmatpush.msra.mxu0 0.0
        %6477 = vmatpush.msra.mxu0 0.0
        %6478 = vmatpush.msra.mxu0 0.0
        %6479 = vmatpush.msra.mxu0 0.0
        %6480 = vmatpush.msra.mxu0 %v6416
        %6481 = vmatpush.msra.mxu0 %v6415
        %6482 = vmatpush.msra.mxu0 %v6414
        %6483 = vmatpush.msra.mxu0 %v6413
        %6484 = vmatpush.msra.mxu0 %v6412
        %6485 = vmatpush.msra.mxu0 %v6411
        %6486 = vmatpush.msra.mxu0 %v6410
        %6487 = vmatpush.msra.mxu0 %v6409
        %6488 = vmatmul.f32.gmra.mxu0 %v6425
        %v6489 = vpop.f32.mrf.mxu0
        %v6490 = vadd.f32 0.0, %v6489
        %6491 = vmatmul.f32.gmra.mxu0 %v6428
        %v6492 = vpop.f32.mrf.mxu0
        %v6493 = vadd.f32 0.0, %v6492
        %6494 = vmatmul.f32.gmra.mxu0 %v6431
        %v6495 = vpop.f32.mrf.mxu0
        %v6496 = vadd.f32 0.0, %v6495
        %6497 = vmatmul.f32.gmra.mxu0 %v6434
        %v6498 = vpop.f32.mrf.mxu0
        %v6499 = vadd.f32 0.0, %v6498
        %6500 = vmatmul.f32.gmra.mxu0 %v6437
        %v6501 = vpop.f32.mrf.mxu0
        %v6502 = vadd.f32 0.0, %v6501
        %6503 = vmatmul.f32.gmra.mxu0 %v6440
        %v6504 = vpop.f32.mrf.mxu0
        %v6505 = vadd.f32 0.0, %v6504
        %6506 = vmatmul.f32.gmra.mxu0 %v6443
        %v6507 = vpop.f32.mrf.mxu0
        %v6508 = vadd.f32 0.0, %v6507
        %6509 = vmatmul.f32.gmra.mxu0 %v6446
        %v6510 = vpop.f32.mrf.mxu0
        %v6511 = vadd.f32 0.0, %v6510
        %6512 = vmatmul.f32.gmra.mxu0 %v6449
        %v6513 = vpop.f32.mrf.mxu0
        %v6514 = vadd.f32 0.0, %v6513
        %6515 = vmatmul.f32.gmra.mxu0 %v6452
        %v6516 = vpop.f32.mrf.mxu0
        %v6517 = vadd.f32 0.0, %v6516
        %6518 = vmatmul.f32.gmra.mxu0 %v6455
        %v6519 = vpop.f32.mrf.mxu0
        %v6520 = vadd.f32 0.0, %v6519
        %6521 = vmatmul.f32.gmra.mxu0 %v6458
        %v6522 = vpop.f32.mrf.mxu0
        %v6523 = vadd.f32 0.0, %v6522
        %6524 = vmatmul.f32.gmra.mxu0 %v6461
        %v6525 = vpop.f32.mrf.mxu0
        %v6526 = vadd.f32 0.0, %v6525
        %6527 = vmatmul.f32.gmra.mxu0 %v6464
        %v6528 = vpop.f32.mrf.mxu0
        %v6529 = vadd.f32 0.0, %v6528
        %6530 = vmatmul.f32.gmra.mxu0 %v6467
        %v6531 = vpop.f32.mrf.mxu0
        %v6532 = vadd.f32 0.0, %v6531
        %6533 = vmatmul.f32.gmra.mxu0 %v6470
        %v6534 = vpop.f32.mrf.mxu0
        %v6535 = vadd.f32 0.0, %v6534
        %6536 = vdwg.mxu0
        %v6538 = vsel %vm2550, %v6490, 0
        %v6541 = vsel %vm2550, %v6493, 0
        %v6544 = vsel %vm2550, %v6496, 0
        %v6547 = vsel %vm2550, %v6499, 0
        %v6550 = vsel %vm2550, %v6502, 0
        %v6553 = vsel %vm2550, %v6505, 0
        %v6556 = vsel %vm2550, %v6508, 0
        %v6559 = vsel %vm2550, %v6511, 0
        %v6562 = vsel %vm2550, %v6514, 0
        %v6565 = vsel %vm2550, %v6517, 0
        %v6568 = vsel %vm2550, %v6520, 0
        %v6571 = vsel %vm2550, %v6523, 0
        %v6574 = vsel %vm2550, %v6526, 0
        %v6577 = vsel %vm2550, %v6529, 0
        %v6580 = vsel %vm2550, %v6532, 0
        %v6583 = vsel %vm2550, %v6535, 0
        %6585 = vmatpush.msra.mxu0 0.0
        %6586 = vmatpush.msra.mxu0 0.0
        %6587 = vmatpush.msra.mxu0 0.0
        %6588 = vmatpush.msra.mxu0 0.0
        %6589 = vmatpush.msra.mxu0 0.0
        %6590 = vmatpush.msra.mxu0 0.0
        %6591 = vmatpush.msra.mxu0 0.0
        %6592 = vmatpush.msra.mxu0 0.0
        %6593 = vmatpush.msra.mxu0 0.0
        %6594 = vmatpush.msra.mxu0 0.0
        %6595 = vmatpush.msra.mxu0 0.0
        %6596 = vmatpush.msra.mxu0 0.0
        %6597 = vmatpush.msra.mxu0 0.0
        %6598 = vmatpush.msra.mxu0 0.0
        %6599 = vmatpush.msra.mxu0 0.0
        %6600 = vmatpush.msra.mxu0 %v6423
        %6601 = vmatmul.f32.gmra.mxu0 %v6538
        %v6602 = vpop.f32.mrf.mxu0
        %v6603 = vadd.f32 0.0, %v6602
        %6604 = vmatmul.f32.gmra.mxu0 %v6541
        %v6605 = vpop.f32.mrf.mxu0
        %v6606 = vadd.f32 0.0, %v6605
        %6607 = vmatmul.f32.gmra.mxu0 %v6544
        %v6608 = vpop.f32.mrf.mxu0
        %v6609 = vadd.f32 0.0, %v6608
        %6610 = vmatmul.f32.gmra.mxu0 %v6547
        %v6611 = vpop.f32.mrf.mxu0
        %v6612 = vadd.f32 0.0, %v6611
        %6613 = vmatmul.f32.gmra.mxu0 %v6550
        %v6614 = vpop.f32.mrf.mxu0
        %v6615 = vadd.f32 0.0, %v6614
        %6616 = vmatmul.f32.gmra.mxu0 %v6553
        %v6617 = vpop.f32.mrf.mxu0
        %v6618 = vadd.f32 0.0, %v6617
        %6619 = vmatmul.f32.gmra.mxu0 %v6556
        %v6620 = vpop.f32.mrf.mxu0
        %v6621 = vadd.f32 0.0, %v6620
        %6622 = vmatmul.f32.gmra.mxu0 %v6559
        %v6623 = vpop.f32.mrf.mxu0
        %v6624 = vadd.f32 0.0, %v6623
        %6625 = vmatmul.f32.gmra.mxu0 %v6562
        %v6626 = vpop.f32.mrf.mxu0
        %v6627 = vadd.f32 0.0, %v6626
        %6628 = vmatmul.f32.gmra.mxu0 %v6565
        %v6629 = vpop.f32.mrf.mxu0
        %v6630 = vadd.f32 0.0, %v6629
        %6631 = vmatmul.f32.gmra.mxu0 %v6568
        %v6632 = vpop.f32.mrf.mxu0
        %v6633 = vadd.f32 0.0, %v6632
        %6634 = vmatmul.f32.gmra.mxu0 %v6571
        %v6635 = vpop.f32.mrf.mxu0
        %v6636 = vadd.f32 0.0, %v6635
        %6637 = vmatmul.f32.gmra.mxu0 %v6574
        %v6638 = vpop.f32.mrf.mxu0
        %v6639 = vadd.f32 0.0, %v6638
        %6640 = vmatmul.f32.gmra.mxu0 %v6577
        %v6641 = vpop.f32.mrf.mxu0
        %v6642 = vadd.f32 0.0, %v6641
        %6643 = vmatmul.f32.gmra.mxu0 %v6580
        %v6644 = vpop.f32.mrf.mxu0
        %v6645 = vadd.f32 0.0, %v6644
        %6646 = vmatmul.f32.gmra.mxu0 %v6583
        %v6647 = vpop.f32.mrf.mxu0
        %v6648 = vadd.f32 0.0, %v6647
        %6649 = vdwg.mxu0
        %v6650 = vrcp.pop %v6603
        %v6651 = vrcp.pop %v6606
        %v6652 = vrcp.pop %v6609
        %v6653 = vrcp.pop %v6612
        %v6654 = vrcp.pop %v6615
        %v6655 = vrcp.pop %v6618
        %v6656 = vrcp.pop %v6621
        %v6657 = vrcp.pop %v6624
        %v6658 = vrcp.pop %v6627
        %v6659 = vrcp.pop %v6630
        %v6660 = vrcp.pop %v6633
        %v6661 = vrcp.pop %v6636
        %v6662 = vrcp.pop %v6639
        %v6663 = vrcp.pop %v6642
        %v6664 = vrcp.pop %v6645
        %v6665 = vrcp.pop %v6648
        %v6666 = vmul.f32 %v6344, %v6650
        %v6667 = vmul.f32 %v6346, %v6651
        %v6668 = vmul.f32 %v6348, %v6652
        %v6669 = vmul.f32 %v6350, %v6653
        %v6670 = vmul.f32 %v6352, %v6654
        %v6671 = vmul.f32 %v6354, %v6655
        %v6672 = vmul.f32 %v6356, %v6656
        %v6673 = vmul.f32 %v6358, %v6657
        %v6674 = vmul.f32 %v6360, %v6658
        %v6675 = vmul.f32 %v6362, %v6659
        %v6676 = vmul.f32 %v6364, %v6660
        %v6677 = vmul.f32 %v6366, %v6661
        %v6678 = vmul.f32 %v6368, %v6662
        %v6679 = vmul.f32 %v6370, %v6663
        %v6680 = vmul.f32 %v6372, %v6664
        %v6681 = vmul.f32 %v6374, %v6665
        %v6682 = vpack.c.bf16 %v6666, %v6666
        %v6683 = vpack.c.bf16 %v6667, %v6667
        %v6684 = vpack.c.bf16 %v6668, %v6668
        %v6685 = vpack.c.bf16 %v6669, %v6669
        %v6686 = vpack.c.bf16 %v6670, %v6670
        %v6687 = vpack.c.bf16 %v6671, %v6671
        %v6688 = vpack.c.bf16 %v6672, %v6672
        %v6689 = vpack.c.bf16 %v6673, %v6673
        %v6690 = vpack.c.bf16 %v6674, %v6674
        %v6691 = vpack.c.bf16 %v6675, %v6675
        %v6692 = vpack.c.bf16 %v6676, %v6676
        %v6693 = vpack.c.bf16 %v6677, %v6677
        %v6694 = vpack.c.bf16 %v6678, %v6678
        %v6695 = vpack.c.bf16 %v6679, %v6679
        %v6696 = vpack.c.bf16 %v6680, %v6680
        %v6697 = vpack.c.bf16 %v6681, %v6681
        %v6706 = vunpack.c.l.b16 %v5238
        %v6707 = vunpack.c.l.b16 %v5239
        %v6708 = vunpack.c.l.b16 %v5240
        %v6709 = vunpack.c.l.b16 %v5241
        %v6710 = vunpack.c.l.b16 %v5242
        %v6711 = vunpack.c.l.b16 %v5243
        %v6712 = vunpack.c.l.b16 %v5244
        %v6713 = vunpack.c.l.b16 %v5245
        %v6714 = vpack.c.b16 %v6707, %v6706
        %v6715 = vpack.c.b16 %v6709, %v6708
        %v6716 = vpack.c.b16 %v6711, %v6710
        %v6717 = vpack.c.b16 %v6713, %v6712
        %6718 = vrot.lane.b32.xlu0 %v6714, 64
        %v6719 = vpop.permute.xlu0 %6718
        %6720 = vrot.lane.b32.xlu0 %v6715, 64
        %v6721 = vpop.permute.xlu0 %6720
        %6722 = vrot.lane.b32.xlu0 %v6716, 64
        %v6723 = vpop.permute.xlu0 %6722
        %6724 = vrot.lane.b32.xlu0 %v6717, 64
        %v6725 = vpop.permute.xlu0 %6724
        %v6731 = vsel %vm6278, %v6682, 0
        %6733 = vmatpush.bf16.msra.mxu0 0
        %6734 = vmatpush.bf16.msra.mxu0 0
        %6735 = vmatpush.bf16.msra.mxu0 0
        %6736 = vmatpush.bf16.msra.mxu0 0
        %6737 = vmatpush.bf16.msra.mxu0 %v6725
        %6738 = vmatpush.bf16.msra.mxu0 %v6723
        %6739 = vmatpush.bf16.msra.mxu0 %v6721
        %6740 = vmatpush.bf16.msra.mxu0 %v6719
        %6741 = vmatmul.bf16.gmra.mxu0 %v6731
        %v6742 = vpop.f32.mrf.mxu0
        %v6743 = vadd.f32 0.0, %v6742
        %v6744 = vpop.f32.mrf.mxu0
        %6745 = vdwg.mxu0
        %v6754 = vunpack.c.l.b16 %v5246
        %v6755 = vunpack.c.l.b16 %v5247
        %v6756 = vunpack.c.l.b16 %v5248
        %v6757 = vunpack.c.l.b16 %v5249
        %v6758 = vunpack.c.l.b16 %v5250
        %v6759 = vunpack.c.l.b16 %v5251
        %v6760 = vunpack.c.l.b16 %v5252
        %v6761 = vunpack.c.l.b16 %v5253
        %v6762 = vpack.c.b16 %v6755, %v6754
        %v6763 = vpack.c.b16 %v6757, %v6756
        %v6764 = vpack.c.b16 %v6759, %v6758
        %v6765 = vpack.c.b16 %v6761, %v6760
        %6766 = vrot.lane.b32.xlu0 %v6762, 64
        %v6767 = vpop.permute.xlu0 %6766
        %6768 = vrot.lane.b32.xlu0 %v6763, 64
        %v6769 = vpop.permute.xlu0 %6768
        %6770 = vrot.lane.b32.xlu0 %v6764, 64
        %v6771 = vpop.permute.xlu0 %6770
        %6772 = vrot.lane.b32.xlu0 %v6765, 64
        %v6773 = vpop.permute.xlu0 %6772
        %v6779 = vsel %vm6278, %v6683, 0
        %6781 = vmatpush.bf16.msra.mxu0 0
        %6782 = vmatpush.bf16.msra.mxu0 0
        %6783 = vmatpush.bf16.msra.mxu0 0
        %6784 = vmatpush.bf16.msra.mxu0 0
        %6785 = vmatpush.bf16.msra.mxu0 %v6773
        %6786 = vmatpush.bf16.msra.mxu0 %v6771
        %6787 = vmatpush.bf16.msra.mxu0 %v6769
        %6788 = vmatpush.bf16.msra.mxu0 %v6767
        %6789 = vmatmul.bf16.gmra.mxu0 %v6779
        %v6790 = vpop.f32.mrf.mxu0
        %v6791 = vadd.f32 0.0, %v6790
        %v6792 = vpop.f32.mrf.mxu0
        %6793 = vdwg.mxu0
        %v6802 = vunpack.c.l.b16 %v5254
        %v6803 = vunpack.c.l.b16 %v5255
        %v6804 = vunpack.c.l.b16 %v5256
        %v6805 = vunpack.c.l.b16 %v5257
        %v6806 = vunpack.c.l.b16 %v5258
        %v6807 = vunpack.c.l.b16 %v5259
        %v6808 = vunpack.c.l.b16 %v5260
        %v6809 = vunpack.c.l.b16 %v5261
        %v6810 = vpack.c.b16 %v6803, %v6802
        %v6811 = vpack.c.b16 %v6805, %v6804
        %v6812 = vpack.c.b16 %v6807, %v6806
        %v6813 = vpack.c.b16 %v6809, %v6808
        %6814 = vrot.lane.b32.xlu0 %v6810, 64
        %v6815 = vpop.permute.xlu0 %6814
        %6816 = vrot.lane.b32.xlu0 %v6811, 64
        %v6817 = vpop.permute.xlu0 %6816
        %6818 = vrot.lane.b32.xlu0 %v6812, 64
        %v6819 = vpop.permute.xlu0 %6818
        %6820 = vrot.lane.b32.xlu0 %v6813, 64
        %v6821 = vpop.permute.xlu0 %6820
        %v6827 = vsel %vm6278, %v6684, 0
        %6829 = vmatpush.bf16.msra.mxu0 0
        %6830 = vmatpush.bf16.msra.mxu0 0
        %6831 = vmatpush.bf16.msra.mxu0 0
        %6832 = vmatpush.bf16.msra.mxu0 0
        %6833 = vmatpush.bf16.msra.mxu0 %v6821
        %6834 = vmatpush.bf16.msra.mxu0 %v6819
        %6835 = vmatpush.bf16.msra.mxu0 %v6817
        %6836 = vmatpush.bf16.msra.mxu0 %v6815
        %6837 = vmatmul.bf16.gmra.mxu0 %v6827
        %v6838 = vpop.f32.mrf.mxu0
        %v6839 = vadd.f32 0.0, %v6838
        %v6840 = vpop.f32.mrf.mxu0
        %6841 = vdwg.mxu0
        %v6850 = vunpack.c.l.b16 %v5262
        %v6851 = vunpack.c.l.b16 %v5263
        %v6852 = vunpack.c.l.b16 %v5264
        %v6853 = vunpack.c.l.b16 %v5265
        %v6854 = vunpack.c.l.b16 %v5266
        %v6855 = vunpack.c.l.b16 %v5267
        %v6856 = vunpack.c.l.b16 %v5268
        %v6857 = vunpack.c.l.b16 %v5269
        %v6858 = vpack.c.b16 %v6851, %v6850
        %v6859 = vpack.c.b16 %v6853, %v6852
        %v6860 = vpack.c.b16 %v6855, %v6854
        %v6861 = vpack.c.b16 %v6857, %v6856
        %6862 = vrot.lane.b32.xlu0 %v6858, 64
        %v6863 = vpop.permute.xlu0 %6862
        %6864 = vrot.lane.b32.xlu0 %v6859, 64
        %v6865 = vpop.permute.xlu0 %6864
        %6866 = vrot.lane.b32.xlu0 %v6860, 64
        %v6867 = vpop.permute.xlu0 %6866
        %6868 = vrot.lane.b32.xlu0 %v6861, 64
        %v6869 = vpop.permute.xlu0 %6868
        %v6875 = vsel %vm6278, %v6685, 0
        %6877 = vmatpush.bf16.msra.mxu0 0
        %6878 = vmatpush.bf16.msra.mxu0 0
        %6879 = vmatpush.bf16.msra.mxu0 0
        %6880 = vmatpush.bf16.msra.mxu0 0
        %6881 = vmatpush.bf16.msra.mxu0 %v6869
        %6882 = vmatpush.bf16.msra.mxu0 %v6867
        %6883 = vmatpush.bf16.msra.mxu0 %v6865
        %6884 = vmatpush.bf16.msra.mxu0 %v6863
        %6885 = vmatmul.bf16.gmra.mxu0 %v6875
        %v6886 = vpop.f32.mrf.mxu0
        %v6887 = vadd.f32 0.0, %v6886
        %v6888 = vpop.f32.mrf.mxu0
        %6889 = vdwg.mxu0
        %v6898 = vunpack.c.l.b16 %v5270
        %v6899 = vunpack.c.l.b16 %v5271
        %v6900 = vunpack.c.l.b16 %v5272
        %v6901 = vunpack.c.l.b16 %v5273
        %v6902 = vunpack.c.l.b16 %v5274
        %v6903 = vunpack.c.l.b16 %v5275
        %v6904 = vunpack.c.l.b16 %v5276
        %v6905 = vunpack.c.l.b16 %v5277
        %v6906 = vpack.c.b16 %v6899, %v6898
        %v6907 = vpack.c.b16 %v6901, %v6900
        %v6908 = vpack.c.b16 %v6903, %v6902
        %v6909 = vpack.c.b16 %v6905, %v6904
        %6910 = vrot.lane.b32.xlu0 %v6906, 64
        %v6911 = vpop.permute.xlu0 %6910
        %6912 = vrot.lane.b32.xlu0 %v6907, 64
        %v6913 = vpop.permute.xlu0 %6912
        %6914 = vrot.lane.b32.xlu0 %v6908, 64
        %v6915 = vpop.permute.xlu0 %6914
        %6916 = vrot.lane.b32.xlu0 %v6909, 64
        %v6917 = vpop.permute.xlu0 %6916
        %v6923 = vsel %vm6278, %v6686, 0
        %6925 = vmatpush.bf16.msra.mxu0 0
        %6926 = vmatpush.bf16.msra.mxu0 0
        %6927 = vmatpush.bf16.msra.mxu0 0
        %6928 = vmatpush.bf16.msra.mxu0 0
        %6929 = vmatpush.bf16.msra.mxu0 %v6917
        %6930 = vmatpush.bf16.msra.mxu0 %v6915
        %6931 = vmatpush.bf16.msra.mxu0 %v6913
        %6932 = vmatpush.bf16.msra.mxu0 %v6911
        %6933 = vmatmul.bf16.gmra.mxu0 %v6923
        %v6934 = vpop.f32.mrf.mxu0
        %v6935 = vadd.f32 0.0, %v6934
        %v6936 = vpop.f32.mrf.mxu0
        %6937 = vdwg.mxu0
        %v6946 = vunpack.c.l.b16 %v5278
        %v6947 = vunpack.c.l.b16 %v5279
        %v6948 = vunpack.c.l.b16 %v5280
        %v6949 = vunpack.c.l.b16 %v5281
        %v6950 = vunpack.c.l.b16 %v5282
        %v6951 = vunpack.c.l.b16 %v5283
        %v6952 = vunpack.c.l.b16 %v5284
        %v6953 = vunpack.c.l.b16 %v5285
        %v6954 = vpack.c.b16 %v6947, %v6946
        %v6955 = vpack.c.b16 %v6949, %v6948
        %v6956 = vpack.c.b16 %v6951, %v6950
        %v6957 = vpack.c.b16 %v6953, %v6952
        %6958 = vrot.lane.b32.xlu0 %v6954, 64
        %v6959 = vpop.permute.xlu0 %6958
        %6960 = vrot.lane.b32.xlu0 %v6955, 64
        %v6961 = vpop.permute.xlu0 %6960
        %6962 = vrot.lane.b32.xlu0 %v6956, 64
        %v6963 = vpop.permute.xlu0 %6962
        %6964 = vrot.lane.b32.xlu0 %v6957, 64
        %v6965 = vpop.permute.xlu0 %6964
        %v6971 = vsel %vm6278, %v6687, 0
        %6973 = vmatpush.bf16.msra.mxu0 0
        %6974 = vmatpush.bf16.msra.mxu0 0
        %6975 = vmatpush.bf16.msra.mxu0 0
        %6976 = vmatpush.bf16.msra.mxu0 0
        %6977 = vmatpush.bf16.msra.mxu0 %v6965
        %6978 = vmatpush.bf16.msra.mxu0 %v6963
        %6979 = vmatpush.bf16.msra.mxu0 %v6961
        %6980 = vmatpush.bf16.msra.mxu0 %v6959
        %6981 = vmatmul.bf16.gmra.mxu0 %v6971
        %v6982 = vpop.f32.mrf.mxu0
        %v6983 = vadd.f32 0.0, %v6982
        %v6984 = vpop.f32.mrf.mxu0
        %6985 = vdwg.mxu0
        %v6994 = vunpack.c.l.b16 %v5286
        %v6995 = vunpack.c.l.b16 %v5287
        %v6996 = vunpack.c.l.b16 %v5288
        %v6997 = vunpack.c.l.b16 %v5289
        %v6998 = vunpack.c.l.b16 %v5290
        %v6999 = vunpack.c.l.b16 %v5291
        %v7000 = vunpack.c.l.b16 %v5292
        %v7001 = vunpack.c.l.b16 %v5293
        %v7002 = vpack.c.b16 %v6995, %v6994
        %v7003 = vpack.c.b16 %v6997, %v6996
        %v7004 = vpack.c.b16 %v6999, %v6998
        %v7005 = vpack.c.b16 %v7001, %v7000
        %7006 = vrot.lane.b32.xlu0 %v7002, 64
        %v7007 = vpop.permute.xlu0 %7006
        %7008 = vrot.lane.b32.xlu0 %v7003, 64
        %v7009 = vpop.permute.xlu0 %7008
        %7010 = vrot.lane.b32.xlu0 %v7004, 64
        %v7011 = vpop.permute.xlu0 %7010
        %7012 = vrot.lane.b32.xlu0 %v7005, 64
        %v7013 = vpop.permute.xlu0 %7012
        %v7019 = vsel %vm6278, %v6688, 0
        %7021 = vmatpush.bf16.msra.mxu0 0
        %7022 = vmatpush.bf16.msra.mxu0 0
        %7023 = vmatpush.bf16.msra.mxu0 0
        %7024 = vmatpush.bf16.msra.mxu0 0
        %7025 = vmatpush.bf16.msra.mxu0 %v7013
        %7026 = vmatpush.bf16.msra.mxu0 %v7011
        %7027 = vmatpush.bf16.msra.mxu0 %v7009
        %7028 = vmatpush.bf16.msra.mxu0 %v7007
        %7029 = vmatmul.bf16.gmra.mxu0 %v7019
        %v7030 = vpop.f32.mrf.mxu0
        %v7031 = vadd.f32 0.0, %v7030
        %v7032 = vpop.f32.mrf.mxu0
        %7033 = vdwg.mxu0
        %v7042 = vunpack.c.l.b16 %v5294
        %v7043 = vunpack.c.l.b16 %v5295
        %v7044 = vunpack.c.l.b16 %v5296
        %v7045 = vunpack.c.l.b16 %v5297
        %v7046 = vunpack.c.l.b16 %v5298
        %v7047 = vunpack.c.l.b16 %v5299
        %v7048 = vunpack.c.l.b16 %v5300
        %v7049 = vunpack.c.l.b16 %v5301
        %v7050 = vpack.c.b16 %v7043, %v7042
        %v7051 = vpack.c.b16 %v7045, %v7044
        %v7052 = vpack.c.b16 %v7047, %v7046
        %v7053 = vpack.c.b16 %v7049, %v7048
        %7054 = vrot.lane.b32.xlu0 %v7050, 64
        %v7055 = vpop.permute.xlu0 %7054
        %7056 = vrot.lane.b32.xlu0 %v7051, 64
        %v7057 = vpop.permute.xlu0 %7056
        %7058 = vrot.lane.b32.xlu0 %v7052, 64
        %v7059 = vpop.permute.xlu0 %7058
        %7060 = vrot.lane.b32.xlu0 %v7053, 64
        %v7061 = vpop.permute.xlu0 %7060
        %v7067 = vsel %vm6278, %v6689, 0
        %7069 = vmatpush.bf16.msra.mxu0 0
        %7070 = vmatpush.bf16.msra.mxu0 0
        %7071 = vmatpush.bf16.msra.mxu0 0
        %7072 = vmatpush.bf16.msra.mxu0 0
        %7073 = vmatpush.bf16.msra.mxu0 %v7061
        %7074 = vmatpush.bf16.msra.mxu0 %v7059
        %7075 = vmatpush.bf16.msra.mxu0 %v7057
        %7076 = vmatpush.bf16.msra.mxu0 %v7055
        %7077 = vmatmul.bf16.gmra.mxu0 %v7067
        %v7078 = vpop.f32.mrf.mxu0
        %v7079 = vadd.f32 0.0, %v7078
        %v7080 = vpop.f32.mrf.mxu0
        %7081 = vdwg.mxu0
        %v7090 = vunpack.c.l.b16 %v5302
        %v7091 = vunpack.c.l.b16 %v5303
        %v7092 = vunpack.c.l.b16 %v5304
        %v7093 = vunpack.c.l.b16 %v5305
        %v7094 = vunpack.c.l.b16 %v5306
        %v7095 = vunpack.c.l.b16 %v5307
        %v7096 = vunpack.c.l.b16 %v5308
        %v7097 = vunpack.c.l.b16 %v5309
        %v7098 = vpack.c.b16 %v7091, %v7090
        %v7099 = vpack.c.b16 %v7093, %v7092
        %v7100 = vpack.c.b16 %v7095, %v7094
        %v7101 = vpack.c.b16 %v7097, %v7096
        %7102 = vrot.lane.b32.xlu0 %v7098, 64
        %v7103 = vpop.permute.xlu0 %7102
        %7104 = vrot.lane.b32.xlu0 %v7099, 64
        %v7105 = vpop.permute.xlu0 %7104
        %7106 = vrot.lane.b32.xlu0 %v7100, 64
        %v7107 = vpop.permute.xlu0 %7106
        %7108 = vrot.lane.b32.xlu0 %v7101, 64
        %v7109 = vpop.permute.xlu0 %7108
        %v7115 = vsel %vm6278, %v6690, 0
        %7117 = vmatpush.bf16.msra.mxu0 0
        %7118 = vmatpush.bf16.msra.mxu0 0
        %7119 = vmatpush.bf16.msra.mxu0 0
        %7120 = vmatpush.bf16.msra.mxu0 0
        %7121 = vmatpush.bf16.msra.mxu0 %v7109
        %7122 = vmatpush.bf16.msra.mxu0 %v7107
        %7123 = vmatpush.bf16.msra.mxu0 %v7105
        %7124 = vmatpush.bf16.msra.mxu0 %v7103
        %7125 = vmatmul.bf16.gmra.mxu0 %v7115
        %v7126 = vpop.f32.mrf.mxu0
        %v7127 = vadd.f32 0.0, %v7126
        %v7128 = vpop.f32.mrf.mxu0
        %7129 = vdwg.mxu0
        %v7138 = vunpack.c.l.b16 %v5310
        %v7139 = vunpack.c.l.b16 %v5311
        %v7140 = vunpack.c.l.b16 %v5312
        %v7141 = vunpack.c.l.b16 %v5313
        %v7142 = vunpack.c.l.b16 %v5314
        %v7143 = vunpack.c.l.b16 %v5315
        %v7144 = vunpack.c.l.b16 %v5316
        %v7145 = vunpack.c.l.b16 %v5317
        %v7146 = vpack.c.b16 %v7139, %v7138
        %v7147 = vpack.c.b16 %v7141, %v7140
        %v7148 = vpack.c.b16 %v7143, %v7142
        %v7149 = vpack.c.b16 %v7145, %v7144
        %7150 = vrot.lane.b32.xlu0 %v7146, 64
        %v7151 = vpop.permute.xlu0 %7150
        %7152 = vrot.lane.b32.xlu0 %v7147, 64
        %v7153 = vpop.permute.xlu0 %7152
        %7154 = vrot.lane.b32.xlu0 %v7148, 64
        %v7155 = vpop.permute.xlu0 %7154
        %7156 = vrot.lane.b32.xlu0 %v7149, 64
        %v7157 = vpop.permute.xlu0 %7156
        %v7163 = vsel %vm6278, %v6691, 0
        %7165 = vmatpush.bf16.msra.mxu0 0
        %7166 = vmatpush.bf16.msra.mxu0 0
        %7167 = vmatpush.bf16.msra.mxu0 0
        %7168 = vmatpush.bf16.msra.mxu0 0
        %7169 = vmatpush.bf16.msra.mxu0 %v7157
        %7170 = vmatpush.bf16.msra.mxu0 %v7155
        %7171 = vmatpush.bf16.msra.mxu0 %v7153
        %7172 = vmatpush.bf16.msra.mxu0 %v7151
        %7173 = vmatmul.bf16.gmra.mxu0 %v7163
        %v7174 = vpop.f32.mrf.mxu0
        %v7175 = vadd.f32 0.0, %v7174
        %v7176 = vpop.f32.mrf.mxu0
        %7177 = vdwg.mxu0
        %v7186 = vunpack.c.l.b16 %v5318
        %v7187 = vunpack.c.l.b16 %v5319
        %v7188 = vunpack.c.l.b16 %v5320
        %v7189 = vunpack.c.l.b16 %v5321
        %v7190 = vunpack.c.l.b16 %v5322
        %v7191 = vunpack.c.l.b16 %v5323
        %v7192 = vunpack.c.l.b16 %v5324
        %v7193 = vunpack.c.l.b16 %v5325
        %v7194 = vpack.c.b16 %v7187, %v7186
        %v7195 = vpack.c.b16 %v7189, %v7188
        %v7196 = vpack.c.b16 %v7191, %v7190
        %v7197 = vpack.c.b16 %v7193, %v7192
        %7198 = vrot.lane.b32.xlu0 %v7194, 64
        %v7199 = vpop.permute.xlu0 %7198
        %7200 = vrot.lane.b32.xlu0 %v7195, 64
        %v7201 = vpop.permute.xlu0 %7200
        %7202 = vrot.lane.b32.xlu0 %v7196, 64
        %v7203 = vpop.permute.xlu0 %7202
        %7204 = vrot.lane.b32.xlu0 %v7197, 64
        %v7205 = vpop.permute.xlu0 %7204
        %v7211 = vsel %vm6278, %v6692, 0
        %7213 = vmatpush.bf16.msra.mxu0 0
        %7214 = vmatpush.bf16.msra.mxu0 0
        %7215 = vmatpush.bf16.msra.mxu0 0
        %7216 = vmatpush.bf16.msra.mxu0 0
        %7217 = vmatpush.bf16.msra.mxu0 %v7205
        %7218 = vmatpush.bf16.msra.mxu0 %v7203
        %7219 = vmatpush.bf16.msra.mxu0 %v7201
        %7220 = vmatpush.bf16.msra.mxu0 %v7199
        %7221 = vmatmul.bf16.gmra.mxu0 %v7211
        %v7222 = vpop.f32.mrf.mxu0
        %v7223 = vadd.f32 0.0, %v7222
        %v7224 = vpop.f32.mrf.mxu0
        %7225 = vdwg.mxu0
        %v7234 = vunpack.c.l.b16 %v5326
        %v7235 = vunpack.c.l.b16 %v5327
        %v7236 = vunpack.c.l.b16 %v5328
        %v7237 = vunpack.c.l.b16 %v5329
        %v7238 = vunpack.c.l.b16 %v5330
        %v7239 = vunpack.c.l.b16 %v5331
        %v7240 = vunpack.c.l.b16 %v5332
        %v7241 = vunpack.c.l.b16 %v5333
        %v7242 = vpack.c.b16 %v7235, %v7234
        %v7243 = vpack.c.b16 %v7237, %v7236
        %v7244 = vpack.c.b16 %v7239, %v7238
        %v7245 = vpack.c.b16 %v7241, %v7240
        %7246 = vrot.lane.b32.xlu0 %v7242, 64
        %v7247 = vpop.permute.xlu0 %7246
        %7248 = vrot.lane.b32.xlu0 %v7243, 64
        %v7249 = vpop.permute.xlu0 %7248
        %7250 = vrot.lane.b32.xlu0 %v7244, 64
        %v7251 = vpop.permute.xlu0 %7250
        %7252 = vrot.lane.b32.xlu0 %v7245, 64
        %v7253 = vpop.permute.xlu0 %7252
        %v7259 = vsel %vm6278, %v6693, 0
        %7261 = vmatpush.bf16.msra.mxu0 0
        %7262 = vmatpush.bf16.msra.mxu0 0
        %7263 = vmatpush.bf16.msra.mxu0 0
        %7264 = vmatpush.bf16.msra.mxu0 0
        %7265 = vmatpush.bf16.msra.mxu0 %v7253
        %7266 = vmatpush.bf16.msra.mxu0 %v7251
        %7267 = vmatpush.bf16.msra.mxu0 %v7249
        %7268 = vmatpush.bf16.msra.mxu0 %v7247
        %7269 = vmatmul.bf16.gmra.mxu0 %v7259
        %v7270 = vpop.f32.mrf.mxu0
        %v7271 = vadd.f32 0.0, %v7270
        %v7272 = vpop.f32.mrf.mxu0
        %7273 = vdwg.mxu0
        %v7282 = vunpack.c.l.b16 %v5334
        %v7283 = vunpack.c.l.b16 %v5335
        %v7284 = vunpack.c.l.b16 %v5336
        %v7285 = vunpack.c.l.b16 %v5337
        %v7286 = vunpack.c.l.b16 %v5338
        %v7287 = vunpack.c.l.b16 %v5339
        %v7288 = vunpack.c.l.b16 %v5340
        %v7289 = vunpack.c.l.b16 %v5341
        %v7290 = vpack.c.b16 %v7283, %v7282
        %v7291 = vpack.c.b16 %v7285, %v7284
        %v7292 = vpack.c.b16 %v7287, %v7286
        %v7293 = vpack.c.b16 %v7289, %v7288
        %7294 = vrot.lane.b32.xlu0 %v7290, 64
        %v7295 = vpop.permute.xlu0 %7294
        %7296 = vrot.lane.b32.xlu0 %v7291, 64
        %v7297 = vpop.permute.xlu0 %7296
        %7298 = vrot.lane.b32.xlu0 %v7292, 64
        %v7299 = vpop.permute.xlu0 %7298
        %7300 = vrot.lane.b32.xlu0 %v7293, 64
        %v7301 = vpop.permute.xlu0 %7300
        %v7307 = vsel %vm6278, %v6694, 0
        %7309 = vmatpush.bf16.msra.mxu0 0
        %7310 = vmatpush.bf16.msra.mxu0 0
        %7311 = vmatpush.bf16.msra.mxu0 0
        %7312 = vmatpush.bf16.msra.mxu0 0
        %7313 = vmatpush.bf16.msra.mxu0 %v7301
        %7314 = vmatpush.bf16.msra.mxu0 %v7299
        %7315 = vmatpush.bf16.msra.mxu0 %v7297
        %7316 = vmatpush.bf16.msra.mxu0 %v7295
        %7317 = vmatmul.bf16.gmra.mxu0 %v7307
        %v7318 = vpop.f32.mrf.mxu0
        %v7319 = vadd.f32 0.0, %v7318
        %v7320 = vpop.f32.mrf.mxu0
        %7321 = vdwg.mxu0
        %v7330 = vunpack.c.l.b16 %v5342
        %v7331 = vunpack.c.l.b16 %v5343
        %v7332 = vunpack.c.l.b16 %v5344
        %v7333 = vunpack.c.l.b16 %v5345
        %v7334 = vunpack.c.l.b16 %v5346
        %v7335 = vunpack.c.l.b16 %v5347
        %v7336 = vunpack.c.l.b16 %v5348
        %v7337 = vunpack.c.l.b16 %v5349
        %v7338 = vpack.c.b16 %v7331, %v7330
        %v7339 = vpack.c.b16 %v7333, %v7332
        %v7340 = vpack.c.b16 %v7335, %v7334
        %v7341 = vpack.c.b16 %v7337, %v7336
        %7342 = vrot.lane.b32.xlu0 %v7338, 64
        %v7343 = vpop.permute.xlu0 %7342
        %7344 = vrot.lane.b32.xlu0 %v7339, 64
        %v7345 = vpop.permute.xlu0 %7344
        %7346 = vrot.lane.b32.xlu0 %v7340, 64
        %v7347 = vpop.permute.xlu0 %7346
        %7348 = vrot.lane.b32.xlu0 %v7341, 64
        %v7349 = vpop.permute.xlu0 %7348
        %v7355 = vsel %vm6278, %v6695, 0
        %7357 = vmatpush.bf16.msra.mxu0 0
        %7358 = vmatpush.bf16.msra.mxu0 0
        %7359 = vmatpush.bf16.msra.mxu0 0
        %7360 = vmatpush.bf16.msra.mxu0 0
        %7361 = vmatpush.bf16.msra.mxu0 %v7349
        %7362 = vmatpush.bf16.msra.mxu0 %v7347
        %7363 = vmatpush.bf16.msra.mxu0 %v7345
        %7364 = vmatpush.bf16.msra.mxu0 %v7343
        %7365 = vmatmul.bf16.gmra.mxu0 %v7355
        %v7366 = vpop.f32.mrf.mxu0
        %v7367 = vadd.f32 0.0, %v7366
        %v7368 = vpop.f32.mrf.mxu0
        %7369 = vdwg.mxu0
        %v7378 = vunpack.c.l.b16 %v5350
        %v7379 = vunpack.c.l.b16 %v5351
        %v7380 = vunpack.c.l.b16 %v5352
        %v7381 = vunpack.c.l.b16 %v5353
        %v7382 = vunpack.c.l.b16 %v5354
        %v7383 = vunpack.c.l.b16 %v5355
        %v7384 = vunpack.c.l.b16 %v5356
        %v7385 = vunpack.c.l.b16 %v5357
        %v7386 = vpack.c.b16 %v7379, %v7378
        %v7387 = vpack.c.b16 %v7381, %v7380
        %v7388 = vpack.c.b16 %v7383, %v7382
        %v7389 = vpack.c.b16 %v7385, %v7384
        %7390 = vrot.lane.b32.xlu0 %v7386, 64
        %v7391 = vpop.permute.xlu0 %7390
        %7392 = vrot.lane.b32.xlu0 %v7387, 64
        %v7393 = vpop.permute.xlu0 %7392
        %7394 = vrot.lane.b32.xlu0 %v7388, 64
        %v7395 = vpop.permute.xlu0 %7394
        %7396 = vrot.lane.b32.xlu0 %v7389, 64
        %v7397 = vpop.permute.xlu0 %7396
        %v7403 = vsel %vm6278, %v6696, 0
        %7405 = vmatpush.bf16.msra.mxu0 0
        %7406 = vmatpush.bf16.msra.mxu0 0
        %7407 = vmatpush.bf16.msra.mxu0 0
        %7408 = vmatpush.bf16.msra.mxu0 0
        %7409 = vmatpush.bf16.msra.mxu0 %v7397
        %7410 = vmatpush.bf16.msra.mxu0 %v7395
        %7411 = vmatpush.bf16.msra.mxu0 %v7393
        %7412 = vmatpush.bf16.msra.mxu0 %v7391
        %7413 = vmatmul.bf16.gmra.mxu0 %v7403
        %v7414 = vpop.f32.mrf.mxu0
        %v7415 = vadd.f32 0.0, %v7414
        %v7416 = vpop.f32.mrf.mxu0
        %7417 = vdwg.mxu0
        %v7426 = vunpack.c.l.b16 %v5358
        %v7427 = vunpack.c.l.b16 %v5359
        %v7428 = vunpack.c.l.b16 %v5360
        %v7429 = vunpack.c.l.b16 %v5361
        %v7430 = vunpack.c.l.b16 %v5362
        %v7431 = vunpack.c.l.b16 %v5363
        %v7432 = vunpack.c.l.b16 %v5364
        %v7433 = vunpack.c.l.b16 %v5365
        %v7434 = vpack.c.b16 %v7427, %v7426
        %v7435 = vpack.c.b16 %v7429, %v7428
        %v7436 = vpack.c.b16 %v7431, %v7430
        %v7437 = vpack.c.b16 %v7433, %v7432
        %7438 = vrot.lane.b32.xlu0 %v7434, 64
        %v7439 = vpop.permute.xlu0 %7438
        %7440 = vrot.lane.b32.xlu0 %v7435, 64
        %v7441 = vpop.permute.xlu0 %7440
        %7442 = vrot.lane.b32.xlu0 %v7436, 64
        %v7443 = vpop.permute.xlu0 %7442
        %7444 = vrot.lane.b32.xlu0 %v7437, 64
        %v7445 = vpop.permute.xlu0 %7444
        %v7451 = vsel %vm6278, %v6697, 0
        %7453 = vmatpush.bf16.msra.mxu0 0
        %7454 = vmatpush.bf16.msra.mxu0 0
        %7455 = vmatpush.bf16.msra.mxu0 0
        %7456 = vmatpush.bf16.msra.mxu0 0
        %7457 = vmatpush.bf16.msra.mxu0 %v7445
        %7458 = vmatpush.bf16.msra.mxu0 %v7443
        %7459 = vmatpush.bf16.msra.mxu0 %v7441
        %7460 = vmatpush.bf16.msra.mxu0 %v7439
        %7461 = vmatmul.bf16.gmra.mxu0 %v7451
        %v7462 = vpop.f32.mrf.mxu0
        %v7463 = vadd.f32 0.0, %v7462
        %v7464 = vpop.f32.mrf.mxu0
        %7465 = vdwg.mxu0
        %v7466 = vperm.slane %v4372, 2
        %v7467 = vadd.f32 %v4292, %v7466
        %v7468 = vadd.f32 %v4295, %v7466
        %v7469 = vadd.f32 %v4298, %v7466
        %v7470 = vadd.f32 %v4301, %v7466
        %v7471 = vadd.f32 %v4304, %v7466
        %v7472 = vadd.f32 %v4307, %v7466
        %v7473 = vadd.f32 %v4310, %v7466
        %v7474 = vadd.f32 %v4313, %v7466
        %v7475 = vadd.f32 %v4316, %v7466
        %v7476 = vadd.f32 %v4319, %v7466
        %v7477 = vadd.f32 %v4322, %v7466
        %v7478 = vadd.f32 %v4325, %v7466
        %v7479 = vadd.f32 %v4328, %v7466
        %v7480 = vadd.f32 %v4331, %v7466
        %v7481 = vadd.f32 %v4334, %v7466
        %v7482 = vadd.f32 %v4337, %v7466
        %v7483 = vpack.c.bf16 %v6791, %v6743
        %v7484 = vpack.c.bf16 %v6887, %v6839
        %v7485 = vpack.c.bf16 %v6983, %v6935
        %v7486 = vpack.c.bf16 %v7079, %v7031
        %v7487 = vpack.c.bf16 %v7175, %v7127
        %v7488 = vpack.c.bf16 %v7271, %v7223
        %v7489 = vpack.c.bf16 %v7367, %v7319
        %v7490 = vpack.c.bf16 %v7463, %v7415
        %v7495 = vunpack.c.l.b16 %v4345
        %v7496 = vunpack.c.l.b16 %v4346
        %v7497 = vunpack.c.l.b16 %v4347
        %v7498 = vunpack.c.l.b16 %v4348
        %v7499 = vpack.c.b16 %v7496, %v7495
        %v7500 = vpack.c.b16 %v7498, %v7497
        %v7504 = vsel %vm368, %v7483, 0
        %v7507 = vsel %vm368, %v7484, 0
        %v7510 = vsel %vm368, %v7485, 0
        %v7513 = vsel %vm368, %v7486, 0
        %v7516 = vsel %vm368, %v7487, 0
        %v7519 = vsel %vm368, %v7488, 0
        %v7522 = vsel %vm368, %v7489, 0
        %v7525 = vsel %vm368, %v7490, 0
        %7527 = vmatpush.bf16.msra.mxu0 0
        %7528 = vmatpush.bf16.msra.mxu0 0
        %7529 = vmatpush.bf16.msra.mxu0 0
        %7530 = vmatpush.bf16.msra.mxu0 0
        %7531 = vmatpush.bf16.msra.mxu0 0
        %7532 = vmatpush.bf16.msra.mxu0 0
        %7533 = vmatpush.bf16.msra.mxu0 %v7500
        %7534 = vmatpush.bf16.msra.mxu0 %v7499
        %7535 = vmatmul.bf16.gmra.mxu0 %v7504
        %v7536 = vpop.f32.mrf.mxu0
        %v7537 = vadd.f32 0.0, %v7536
        %v7538 = vpop.f32.mrf.mxu0
        %v7539 = vadd.f32 0.0, %v7538
        %7540 = vmatmul.bf16.gmra.mxu0 %v7507
        %v7541 = vpop.f32.mrf.mxu0
        %v7542 = vadd.f32 0.0, %v7541
        %v7543 = vpop.f32.mrf.mxu0
        %v7544 = vadd.f32 0.0, %v7543
        %7545 = vmatmul.bf16.gmra.mxu0 %v7510
        %v7546 = vpop.f32.mrf.mxu0
        %v7547 = vadd.f32 0.0, %v7546
        %v7548 = vpop.f32.mrf.mxu0
        %v7549 = vadd.f32 0.0, %v7548
        %7550 = vmatmul.bf16.gmra.mxu0 %v7513
        %v7551 = vpop.f32.mrf.mxu0
        %v7552 = vadd.f32 0.0, %v7551
        %v7553 = vpop.f32.mrf.mxu0
        %v7554 = vadd.f32 0.0, %v7553
        %7555 = vmatmul.bf16.gmra.mxu0 %v7516
        %v7556 = vpop.f32.mrf.mxu0
        %v7557 = vadd.f32 0.0, %v7556
        %v7558 = vpop.f32.mrf.mxu0
        %v7559 = vadd.f32 0.0, %v7558
        %7560 = vmatmul.bf16.gmra.mxu0 %v7519
        %v7561 = vpop.f32.mrf.mxu0
        %v7562 = vadd.f32 0.0, %v7561
        %v7563 = vpop.f32.mrf.mxu0
        %v7564 = vadd.f32 0.0, %v7563
        %7565 = vmatmul.bf16.gmra.mxu0 %v7522
        %v7566 = vpop.f32.mrf.mxu0
        %v7567 = vadd.f32 0.0, %v7566
        %v7568 = vpop.f32.mrf.mxu0
        %v7569 = vadd.f32 0.0, %v7568
        %7570 = vmatmul.bf16.gmra.mxu0 %v7525
        %v7571 = vpop.f32.mrf.mxu0
        %v7572 = vadd.f32 0.0, %v7571
        %v7573 = vpop.f32.mrf.mxu0
        %v7574 = vadd.f32 0.0, %v7573
        %7575 = vdwg.mxu0
        %v7576 = vadd.f32 %v7467, %v7537
        %v7577 = vadd.f32 %v7468, %v7539
        %v7578 = vadd.f32 %v7469, %v7542
        %v7579 = vadd.f32 %v7470, %v7544
        %v7580 = vadd.f32 %v7471, %v7547
        %v7581 = vadd.f32 %v7472, %v7549
        %v7582 = vadd.f32 %v7473, %v7552
        %v7583 = vadd.f32 %v7474, %v7554
        %v7584 = vadd.f32 %v7475, %v7557
        %v7585 = vadd.f32 %v7476, %v7559
        %v7586 = vadd.f32 %v7477, %v7562
        %v7587 = vadd.f32 %v7478, %v7564
        %v7588 = vadd.f32 %v7479, %v7567
        %v7589 = vadd.f32 %v7480, %v7569
        %v7590 = vadd.f32 %v7481, %v7572
        %v7591 = vadd.f32 %v7482, %v7574
        %v7592 = vsel %vm368, %v7576, 0.0
        %7593 = vadd.xlane.f32.xlu0 %v7592
        %v7594 = vpop.xlane.xlu0 %7593
        %v7595 = vsel %vm368, %v7577, 0.0
        %7596 = vadd.xlane.f32.xlu0 %v7595
        %v7597 = vpop.xlane.xlu0 %7596
        %v7598 = vsel %vm368, %v7578, 0.0
        %7599 = vadd.xlane.f32.xlu0 %v7598
        %v7600 = vpop.xlane.xlu0 %7599
        %v7601 = vsel %vm368, %v7579, 0.0
        %7602 = vadd.xlane.f32.xlu0 %v7601
        %v7603 = vpop.xlane.xlu0 %7602
        %v7604 = vsel %vm368, %v7580, 0.0
        %7605 = vadd.xlane.f32.xlu0 %v7604
        %v7606 = vpop.xlane.xlu0 %7605
        %v7607 = vsel %vm368, %v7581, 0.0
        %7608 = vadd.xlane.f32.xlu0 %v7607
        %v7609 = vpop.xlane.xlu0 %7608
        %v7610 = vsel %vm368, %v7582, 0.0
        %7611 = vadd.xlane.f32.xlu0 %v7610
        %v7612 = vpop.xlane.xlu0 %7611
        %v7613 = vsel %vm368, %v7583, 0.0
        %7614 = vadd.xlane.f32.xlu0 %v7613
        %v7615 = vpop.xlane.xlu0 %7614
        %v7616 = vsel %vm368, %v7584, 0.0
        %7617 = vadd.xlane.f32.xlu0 %v7616
        %v7618 = vpop.xlane.xlu0 %7617
        %v7619 = vsel %vm368, %v7585, 0.0
        %7620 = vadd.xlane.f32.xlu0 %v7619
        %v7621 = vpop.xlane.xlu0 %7620
        %v7622 = vsel %vm368, %v7586, 0.0
        %7623 = vadd.xlane.f32.xlu0 %v7622
        %v7624 = vpop.xlane.xlu0 %7623
        %v7625 = vsel %vm368, %v7587, 0.0
        %7626 = vadd.xlane.f32.xlu0 %v7625
        %v7627 = vpop.xlane.xlu0 %7626
        %v7628 = vsel %vm368, %v7588, 0.0
        %7629 = vadd.xlane.f32.xlu0 %v7628
        %v7630 = vpop.xlane.xlu0 %7629
        %v7631 = vsel %vm368, %v7589, 0.0
        %7632 = vadd.xlane.f32.xlu0 %v7631
        %v7633 = vpop.xlane.xlu0 %7632
        %v7634 = vsel %vm368, %v7590, 0.0
        %7635 = vadd.xlane.f32.xlu0 %v7634
        %v7636 = vpop.xlane.xlu0 %7635
        %v7637 = vsel %vm368, %v7591, 0.0
        %7638 = vadd.xlane.f32.xlu0 %v7637
        %v7639 = vpop.xlane.xlu0 %7638
        %v7640 = vmul.f32 %v7594, %v423
        %v7641 = vmul.f32 %v7597, %v423
        %v7642 = vmul.f32 %v7600, %v423
        %v7643 = vmul.f32 %v7603, %v423
        %v7644 = vmul.f32 %v7606, %v423
        %v7645 = vmul.f32 %v7609, %v423
        %v7646 = vmul.f32 %v7612, %v423
        %v7647 = vmul.f32 %v7615, %v423
        %v7648 = vmul.f32 %v7618, %v423
        %v7649 = vmul.f32 %v7621, %v423
        %v7650 = vmul.f32 %v7624, %v423
        %v7651 = vmul.f32 %v7627, %v423
        %v7652 = vmul.f32 %v7630, %v423
        %v7653 = vmul.f32 %v7633, %v423
        %v7654 = vmul.f32 %v7636, %v423
        %v7655 = vmul.f32 %v7639, %v423
        %v7656 = vsub.f32 %v7576, %v7640
        %v7657 = vsub.f32 %v7577, %v7641
        %v7658 = vsub.f32 %v7578, %v7642
        %v7659 = vsub.f32 %v7579, %v7643
        %v7660 = vsub.f32 %v7580, %v7644
        %v7661 = vsub.f32 %v7581, %v7645
        %v7662 = vsub.f32 %v7582, %v7646
        %v7663 = vsub.f32 %v7583, %v7647
        %v7664 = vsub.f32 %v7584, %v7648
        %v7665 = vsub.f32 %v7585, %v7649
        %v7666 = vsub.f32 %v7586, %v7650
        %v7667 = vsub.f32 %v7587, %v7651
        %v7668 = vsub.f32 %v7588, %v7652
        %v7669 = vsub.f32 %v7589, %v7653
        %v7670 = vsub.f32 %v7590, %v7654
        %v7671 = vsub.f32 %v7591, %v7655
        %v7672 = vmul.f32 %v7656, %v7656
        %v7673 = vmul.f32 %v7657, %v7657
        %v7674 = vmul.f32 %v7658, %v7658
        %v7675 = vmul.f32 %v7659, %v7659
        %v7676 = vmul.f32 %v7660, %v7660
        %v7677 = vmul.f32 %v7661, %v7661
        %v7678 = vmul.f32 %v7662, %v7662
        %v7679 = vmul.f32 %v7663, %v7663
        %v7680 = vmul.f32 %v7664, %v7664
        %v7681 = vmul.f32 %v7665, %v7665
        %v7682 = vmul.f32 %v7666, %v7666
        %v7683 = vmul.f32 %v7667, %v7667
        %v7684 = vmul.f32 %v7668, %v7668
        %v7685 = vmul.f32 %v7669, %v7669
        %v7686 = vmul.f32 %v7670, %v7670
        %v7687 = vmul.f32 %v7671, %v7671
        %v7688 = vsel %vm368, %v7672, 0.0
        %7689 = vadd.xlane.f32.xlu0 %v7688
        %v7690 = vpop.xlane.xlu0 %7689
        %v7691 = vsel %vm368, %v7673, 0.0
        %7692 = vadd.xlane.f32.xlu0 %v7691
        %v7693 = vpop.xlane.xlu0 %7692
        %v7694 = vsel %vm368, %v7674, 0.0
        %7695 = vadd.xlane.f32.xlu0 %v7694
        %v7696 = vpop.xlane.xlu0 %7695
        %v7697 = vsel %vm368, %v7675, 0.0
        %7698 = vadd.xlane.f32.xlu0 %v7697
        %v7699 = vpop.xlane.xlu0 %7698
        %v7700 = vsel %vm368, %v7676, 0.0
        %7701 = vadd.xlane.f32.xlu0 %v7700
        %v7702 = vpop.xlane.xlu0 %7701
        %v7703 = vsel %vm368, %v7677, 0.0
        %7704 = vadd.xlane.f32.xlu0 %v7703
        %v7705 = vpop.xlane.xlu0 %7704
        %v7706 = vsel %vm368, %v7678, 0.0
        %7707 = vadd.xlane.f32.xlu0 %v7706
        %v7708 = vpop.xlane.xlu0 %7707
        %v7709 = vsel %vm368, %v7679, 0.0
        %7710 = vadd.xlane.f32.xlu0 %v7709
        %v7711 = vpop.xlane.xlu0 %7710
        %v7712 = vsel %vm368, %v7680, 0.0
        %7713 = vadd.xlane.f32.xlu0 %v7712
        %v7714 = vpop.xlane.xlu0 %7713
        %v7715 = vsel %vm368, %v7681, 0.0
        %7716 = vadd.xlane.f32.xlu0 %v7715
        %v7717 = vpop.xlane.xlu0 %7716
        %v7718 = vsel %vm368, %v7682, 0.0
        %7719 = vadd.xlane.f32.xlu0 %v7718
        %v7720 = vpop.xlane.xlu0 %7719
        %v7721 = vsel %vm368, %v7683, 0.0
        %7722 = vadd.xlane.f32.xlu0 %v7721
        %v7723 = vpop.xlane.xlu0 %7722
        %v7724 = vsel %vm368, %v7684, 0.0
        %7725 = vadd.xlane.f32.xlu0 %v7724
        %v7726 = vpop.xlane.xlu0 %7725
        %v7727 = vsel %vm368, %v7685, 0.0
        %7728 = vadd.xlane.f32.xlu0 %v7727
        %v7729 = vpop.xlane.xlu0 %7728
        %v7730 = vsel %vm368, %v7686, 0.0
        %7731 = vadd.xlane.f32.xlu0 %v7730
        %v7732 = vpop.xlane.xlu0 %7731
        %v7733 = vsel %vm368, %v7687, 0.0
        %7734 = vadd.xlane.f32.xlu0 %v7733
        %v7735 = vpop.xlane.xlu0 %7734
        %v7736 = vmul.f32 %v7690, %v423
        %v7737 = vmul.f32 %v7693, %v423
        %v7738 = vmul.f32 %v7696, %v423
        %v7739 = vmul.f32 %v7699, %v423
        %v7740 = vmul.f32 %v7702, %v423
        %v7741 = vmul.f32 %v7705, %v423
        %v7742 = vmul.f32 %v7708, %v423
        %v7743 = vmul.f32 %v7711, %v423
        %v7744 = vmul.f32 %v7714, %v423
        %v7745 = vmul.f32 %v7717, %v423
        %v7746 = vmul.f32 %v7720, %v423
        %v7747 = vmul.f32 %v7723, %v423
        %v7748 = vmul.f32 %v7726, %v423
        %v7749 = vmul.f32 %v7729, %v423
        %v7750 = vmul.f32 %v7732, %v423
        %v7751 = vmul.f32 %v7735, %v423
        %v7752 = vadd.f32 %v7736, 1e-05
        %v7753 = vadd.f32 %v7737, 1e-05
        %v7754 = vadd.f32 %v7738, 1e-05
        %v7755 = vadd.f32 %v7739, 1e-05
        %v7756 = vadd.f32 %v7740, 1e-05
        %v7757 = vadd.f32 %v7741, 1e-05
        %v7758 = vadd.f32 %v7742, 1e-05
        %v7759 = vadd.f32 %v7743, 1e-05
        %v7760 = vadd.f32 %v7744, 1e-05
        %v7761 = vadd.f32 %v7745, 1e-05
        %v7762 = vadd.f32 %v7746, 1e-05
        %v7763 = vadd.f32 %v7747, 1e-05
        %v7764 = vadd.f32 %v7748, 1e-05
        %v7765 = vadd.f32 %v7749, 1e-05
        %v7766 = vadd.f32 %v7750, 1e-05
        %v7767 = vadd.f32 %v7751, 1e-05
        %v7768 = vrsqrt.pop %v7752
        %v7769 = vmul.f32 %v7768, %v7752
        %v7770 = vmul.f32 %v7769, %v7768
        %v7771 = vmul.f32 0.5, %v7770
        %v7772 = vsub.f32 1.5, %v7771
        %v7773 = vmul.f32 %v7768, %v7772
        %vm7774 = vweird.f32 %v7752
        %vm7775 = vweird.f32 %v7768
        %vm7776 = vmor %vm7774, %vm7775
        %v7777 = vsel %vm7776, %v7768, %v7773
        %v7778 = vrsqrt.pop %v7753
        %v7779 = vmul.f32 %v7778, %v7753
        %v7780 = vmul.f32 %v7779, %v7778
        %v7781 = vmul.f32 0.5, %v7780
        %v7782 = vsub.f32 1.5, %v7781
        %v7783 = vmul.f32 %v7778, %v7782
        %vm7784 = vweird.f32 %v7753
        %vm7785 = vweird.f32 %v7778
        %vm7786 = vmor %vm7784, %vm7785
        %v7787 = vsel %vm7786, %v7778, %v7783
        %v7788 = vrsqrt.pop %v7754
        %v7789 = vmul.f32 %v7788, %v7754
        %v7790 = vmul.f32 %v7789, %v7788
        %v7791 = vmul.f32 0.5, %v7790
        %v7792 = vsub.f32 1.5, %v7791
        %v7793 = vmul.f32 %v7788, %v7792
        %vm7794 = vweird.f32 %v7754
        %vm7795 = vweird.f32 %v7788
        %vm7796 = vmor %vm7794, %vm7795
        %v7797 = vsel %vm7796, %v7788, %v7793
        %v7798 = vrsqrt.pop %v7755
        %v7799 = vmul.f32 %v7798, %v7755
        %v7800 = vmul.f32 %v7799, %v7798
        %v7801 = vmul.f32 0.5, %v7800
        %v7802 = vsub.f32 1.5, %v7801
        %v7803 = vmul.f32 %v7798, %v7802
        %vm7804 = vweird.f32 %v7755
        %vm7805 = vweird.f32 %v7798
        %vm7806 = vmor %vm7804, %vm7805
        %v7807 = vsel %vm7806, %v7798, %v7803
        %v7808 = vrsqrt.pop %v7756
        %v7809 = vmul.f32 %v7808, %v7756
        %v7810 = vmul.f32 %v7809, %v7808
        %v7811 = vmul.f32 0.5, %v7810
        %v7812 = vsub.f32 1.5, %v7811
        %v7813 = vmul.f32 %v7808, %v7812
        %vm7814 = vweird.f32 %v7756
        %vm7815 = vweird.f32 %v7808
        %vm7816 = vmor %vm7814, %vm7815
        %v7817 = vsel %vm7816, %v7808, %v7813
        %v7818 = vrsqrt.pop %v7757
        %v7819 = vmul.f32 %v7818, %v7757
        %v7820 = vmul.f32 %v7819, %v7818
        %v7821 = vmul.f32 0.5, %v7820
        %v7822 = vsub.f32 1.5, %v7821
        %v7823 = vmul.f32 %v7818, %v7822
        %vm7824 = vweird.f32 %v7757
        %vm7825 = vweird.f32 %v7818
        %vm7826 = vmor %vm7824, %vm7825
        %v7827 = vsel %vm7826, %v7818, %v7823
        %v7828 = vrsqrt.pop %v7758
        %v7829 = vmul.f32 %v7828, %v7758
        %v7830 = vmul.f32 %v7829, %v7828
        %v7831 = vmul.f32 0.5, %v7830
        %v7832 = vsub.f32 1.5, %v7831
        %v7833 = vmul.f32 %v7828, %v7832
        %vm7834 = vweird.f32 %v7758
        %vm7835 = vweird.f32 %v7828
        %vm7836 = vmor %vm7834, %vm7835
        %v7837 = vsel %vm7836, %v7828, %v7833
        %v7838 = vrsqrt.pop %v7759
        %v7839 = vmul.f32 %v7838, %v7759
        %v7840 = vmul.f32 %v7839, %v7838
        %v7841 = vmul.f32 0.5, %v7840
        %v7842 = vsub.f32 1.5, %v7841
        %v7843 = vmul.f32 %v7838, %v7842
        %vm7844 = vweird.f32 %v7759
        %vm7845 = vweird.f32 %v7838
        %vm7846 = vmor %vm7844, %vm7845
        %v7847 = vsel %vm7846, %v7838, %v7843
        %v7848 = vrsqrt.pop %v7760
        %v7849 = vmul.f32 %v7848, %v7760
        %v7850 = vmul.f32 %v7849, %v7848
        %v7851 = vmul.f32 0.5, %v7850
        %v7852 = vsub.f32 1.5, %v7851
        %v7853 = vmul.f32 %v7848, %v7852
        %vm7854 = vweird.f32 %v7760
        %vm7855 = vweird.f32 %v7848
        %vm7856 = vmor %vm7854, %vm7855
        %v7857 = vsel %vm7856, %v7848, %v7853
        %v7858 = vrsqrt.pop %v7761
        %v7859 = vmul.f32 %v7858, %v7761
        %v7860 = vmul.f32 %v7859, %v7858
        %v7861 = vmul.f32 0.5, %v7860
        %v7862 = vsub.f32 1.5, %v7861
        %v7863 = vmul.f32 %v7858, %v7862
        %vm7864 = vweird.f32 %v7761
        %vm7865 = vweird.f32 %v7858
        %vm7866 = vmor %vm7864, %vm7865
        %v7867 = vsel %vm7866, %v7858, %v7863
        %v7868 = vrsqrt.pop %v7762
        %v7869 = vmul.f32 %v7868, %v7762
        %v7870 = vmul.f32 %v7869, %v7868
        %v7871 = vmul.f32 0.5, %v7870
        %v7872 = vsub.f32 1.5, %v7871
        %v7873 = vmul.f32 %v7868, %v7872
        %vm7874 = vweird.f32 %v7762
        %vm7875 = vweird.f32 %v7868
        %vm7876 = vmor %vm7874, %vm7875
        %v7877 = vsel %vm7876, %v7868, %v7873
        %v7878 = vrsqrt.pop %v7763
        %v7879 = vmul.f32 %v7878, %v7763
        %v7880 = vmul.f32 %v7879, %v7878
        %v7881 = vmul.f32 0.5, %v7880
        %v7882 = vsub.f32 1.5, %v7881
        %v7883 = vmul.f32 %v7878, %v7882
        %vm7884 = vweird.f32 %v7763
        %vm7885 = vweird.f32 %v7878
        %vm7886 = vmor %vm7884, %vm7885
        %v7887 = vsel %vm7886, %v7878, %v7883
        %v7888 = vrsqrt.pop %v7764
        %v7889 = vmul.f32 %v7888, %v7764
        %v7890 = vmul.f32 %v7889, %v7888
        %v7891 = vmul.f32 0.5, %v7890
        %v7892 = vsub.f32 1.5, %v7891
        %v7893 = vmul.f32 %v7888, %v7892
        %vm7894 = vweird.f32 %v7764
        %vm7895 = vweird.f32 %v7888
        %vm7896 = vmor %vm7894, %vm7895
        %v7897 = vsel %vm7896, %v7888, %v7893
        %v7898 = vrsqrt.pop %v7765
        %v7899 = vmul.f32 %v7898, %v7765
        %v7900 = vmul.f32 %v7899, %v7898
        %v7901 = vmul.f32 0.5, %v7900
        %v7902 = vsub.f32 1.5, %v7901
        %v7903 = vmul.f32 %v7898, %v7902
        %vm7904 = vweird.f32 %v7765
        %vm7905 = vweird.f32 %v7898
        %vm7906 = vmor %vm7904, %vm7905
        %v7907 = vsel %vm7906, %v7898, %v7903
        %v7908 = vrsqrt.pop %v7766
        %v7909 = vmul.f32 %v7908, %v7766
        %v7910 = vmul.f32 %v7909, %v7908
        %v7911 = vmul.f32 0.5, %v7910
        %v7912 = vsub.f32 1.5, %v7911
        %v7913 = vmul.f32 %v7908, %v7912
        %vm7914 = vweird.f32 %v7766
        %vm7915 = vweird.f32 %v7908
        %vm7916 = vmor %vm7914, %vm7915
        %v7917 = vsel %vm7916, %v7908, %v7913
        %v7918 = vrsqrt.pop %v7767
        %v7919 = vmul.f32 %v7918, %v7767
        %v7920 = vmul.f32 %v7919, %v7918
        %v7921 = vmul.f32 0.5, %v7920
        %v7922 = vsub.f32 1.5, %v7921
        %v7923 = vmul.f32 %v7918, %v7922
        %vm7924 = vweird.f32 %v7767
        %vm7925 = vweird.f32 %v7918
        %vm7926 = vmor %vm7924, %vm7925
        %v7927 = vsel %vm7926, %v7918, %v7923
        %v7928 = vmul.f32 %v7656, %v7777
        %v7929 = vmul.f32 %v7657, %v7787
        %v7930 = vmul.f32 %v7658, %v7797
        %v7931 = vmul.f32 %v7659, %v7807
        %v7932 = vmul.f32 %v7660, %v7817
        %v7933 = vmul.f32 %v7661, %v7827
        %v7934 = vmul.f32 %v7662, %v7837
        %v7935 = vmul.f32 %v7663, %v7847
        %v7936 = vmul.f32 %v7664, %v7857
        %v7937 = vmul.f32 %v7665, %v7867
        %v7938 = vmul.f32 %v7666, %v7877
        %v7939 = vmul.f32 %v7667, %v7887
        %v7940 = vmul.f32 %v7668, %v7897
        %v7941 = vmul.f32 %v7669, %v7907
        %v7942 = vmul.f32 %v7670, %v7917
        %v7943 = vmul.f32 %v7671, %v7927
        %v7944 = vperm.slane %v4372, 3
        %v7945 = vmul.f32 %v7928, %v7944
        %v7946 = vmul.f32 %v7929, %v7944
        %v7947 = vmul.f32 %v7930, %v7944
        %v7948 = vmul.f32 %v7931, %v7944
        %v7949 = vmul.f32 %v7932, %v7944
        %v7950 = vmul.f32 %v7933, %v7944
        %v7951 = vmul.f32 %v7934, %v7944
        %v7952 = vmul.f32 %v7935, %v7944
        %v7953 = vmul.f32 %v7936, %v7944
        %v7954 = vmul.f32 %v7937, %v7944
        %v7955 = vmul.f32 %v7938, %v7944
        %v7956 = vmul.f32 %v7939, %v7944
        %v7957 = vmul.f32 %v7940, %v7944
        %v7958 = vmul.f32 %v7941, %v7944
        %v7959 = vmul.f32 %v7942, %v7944
        %v7960 = vmul.f32 %v7943, %v7944
        %v7961 = vperm.slane %v4372, 4
        %v7962 = vadd.f32 %v7945, %v7961
        %v7963 = vadd.f32 %v7946, %v7961
        %v7964 = vadd.f32 %v7947, %v7961
        %v7965 = vadd.f32 %v7948, %v7961
        %v7966 = vadd.f32 %v7949, %v7961
        %v7967 = vadd.f32 %v7950, %v7961
        %v7968 = vadd.f32 %v7951, %v7961
        %v7969 = vadd.f32 %v7952, %v7961
        %v7970 = vadd.f32 %v7953, %v7961
        %v7971 = vadd.f32 %v7954, %v7961
        %v7972 = vadd.f32 %v7955, %v7961
        %v7973 = vadd.f32 %v7956, %v7961
        %v7974 = vadd.f32 %v7957, %v7961
        %v7975 = vadd.f32 %v7958, %v7961
        %v7976 = vadd.f32 %v7959, %v7961
        %v7977 = vadd.f32 %v7960, %v7961
        %v7978 = vpack.c.bf16 %v7963, %v7962
        %v7979 = vpack.c.bf16 %v7965, %v7964
        %v7980 = vpack.c.bf16 %v7967, %v7966
        %v7981 = vpack.c.bf16 %v7969, %v7968
        %v7982 = vpack.c.bf16 %v7971, %v7970
        %v7983 = vpack.c.bf16 %v7973, %v7972
        %v7984 = vpack.c.bf16 %v7975, %v7974
        %v7985 = vpack.c.bf16 %v7977, %v7976
        %v7987 = vperm.slane %v4374, 0
        %v7993 = vunpack.c.l.b16 %v4350
        %v7994 = vunpack.c.l.b16 %v4351
        %v7995 = vunpack.c.l.b16 %v4352
        %v7996 = vunpack.c.l.b16 %v4353
        %v7997 = vpack.c.b16 %v7994, %v7993
        %v7998 = vpack.c.b16 %v7996, %v7995
        %v8002 = vsel %vm368, %v7978, 0
        %v8005 = vsel %vm368, %v7979, 0
        %v8008 = vsel %vm368, %v7980, 0
        %v8011 = vsel %vm368, %v7981, 0
        %v8014 = vsel %vm368, %v7982, 0
        %v8017 = vsel %vm368, %v7983, 0
        %v8020 = vsel %vm368, %v7984, 0
        %v8023 = vsel %vm368, %v7985, 0
        %8025 = vmatpush.bf16.msra.mxu0 0
        %8026 = vmatpush.bf16.msra.mxu0 0
        %8027 = vmatpush.bf16.msra.mxu0 0
        %8028 = vmatpush.bf16.msra.mxu0 0
        %8029 = vmatpush.bf16.msra.mxu0 0
        %8030 = vmatpush.bf16.msra.mxu0 0
        %8031 = vmatpush.bf16.msra.mxu0 %v7998
        %8032 = vmatpush.bf16.msra.mxu0 %v7997
        %8033 = vmatmul.bf16.gmra.mxu0 %v8002
        %v8034 = vpop.f32.mrf.mxu0
        %v8035 = vadd.f32 %v7987, %v8034
        %v8036 = vpop.f32.mrf.mxu0
        %v8037 = vadd.f32 %v7987, %v8036
        %8038 = vmatmul.bf16.gmra.mxu0 %v8005
        %v8039 = vpop.f32.mrf.mxu0
        %v8040 = vadd.f32 %v7987, %v8039
        %v8041 = vpop.f32.mrf.mxu0
        %v8042 = vadd.f32 %v7987, %v8041
        %8043 = vmatmul.bf16.gmra.mxu0 %v8008
        %v8044 = vpop.f32.mrf.mxu0
        %v8045 = vadd.f32 %v7987, %v8044
        %v8046 = vpop.f32.mrf.mxu0
        %v8047 = vadd.f32 %v7987, %v8046
        %8048 = vmatmul.bf16.gmra.mxu0 %v8011
        %v8049 = vpop.f32.mrf.mxu0
        %v8050 = vadd.f32 %v7987, %v8049
        %v8051 = vpop.f32.mrf.mxu0
        %v8052 = vadd.f32 %v7987, %v8051
        %8053 = vmatmul.bf16.gmra.mxu0 %v8014
        %v8054 = vpop.f32.mrf.mxu0
        %v8055 = vadd.f32 %v7987, %v8054
        %v8056 = vpop.f32.mrf.mxu0
        %v8057 = vadd.f32 %v7987, %v8056
        %8058 = vmatmul.bf16.gmra.mxu0 %v8017
        %v8059 = vpop.f32.mrf.mxu0
        %v8060 = vadd.f32 %v7987, %v8059
        %v8061 = vpop.f32.mrf.mxu0
        %v8062 = vadd.f32 %v7987, %v8061
        %8063 = vmatmul.bf16.gmra.mxu0 %v8020
        %v8064 = vpop.f32.mrf.mxu0
        %v8065 = vadd.f32 %v7987, %v8064
        %v8066 = vpop.f32.mrf.mxu0
        %v8067 = vadd.f32 %v7987, %v8066
        %8068 = vmatmul.bf16.gmra.mxu0 %v8023
        %v8069 = vpop.f32.mrf.mxu0
        %v8070 = vadd.f32 %v7987, %v8069
        %v8071 = vpop.f32.mrf.mxu0
        %v8072 = vadd.f32 %v7987, %v8071
        %8073 = vdwg.mxu0
        %v8074 = vmul.f32 %v8035, 0.5
        %v8075 = vmul.f32 %v8037, 0.5
        %v8076 = vmul.f32 %v8040, 0.5
        %v8077 = vmul.f32 %v8042, 0.5
        %v8078 = vmul.f32 %v8045, 0.5
        %v8079 = vmul.f32 %v8047, 0.5
        %v8080 = vmul.f32 %v8050, 0.5
        %v8081 = vmul.f32 %v8052, 0.5
        %v8082 = vmul.f32 %v8055, 0.5
        %v8083 = vmul.f32 %v8057, 0.5
        %v8084 = vmul.f32 %v8060, 0.5
        %v8085 = vmul.f32 %v8062, 0.5
        %v8086 = vmul.f32 %v8065, 0.5
        %v8087 = vmul.f32 %v8067, 0.5
        %v8088 = vmul.f32 %v8070, 0.5
        %v8089 = vmul.f32 %v8072, 0.5
        %v8090 = vmul.f32 %v8035, 0.044715
        %v8091 = vmul.f32 %v8037, 0.044715
        %v8092 = vmul.f32 %v8040, 0.044715
        %v8093 = vmul.f32 %v8042, 0.044715
        %v8094 = vmul.f32 %v8045, 0.044715
        %v8095 = vmul.f32 %v8047, 0.044715
        %v8096 = vmul.f32 %v8050, 0.044715
        %v8097 = vmul.f32 %v8052, 0.044715
        %v8098 = vmul.f32 %v8055, 0.044715
        %v8099 = vmul.f32 %v8057, 0.044715
        %v8100 = vmul.f32 %v8060, 0.044715
        %v8101 = vmul.f32 %v8062, 0.044715
        %v8102 = vmul.f32 %v8065, 0.044715
        %v8103 = vmul.f32 %v8067, 0.044715
        %v8104 = vmul.f32 %v8070, 0.044715
        %v8105 = vmul.f32 %v8072, 0.044715
        %v8106 = vmul.f32 %v8090, %v8035
        %v8107 = vmul.f32 %v8091, %v8037
        %v8108 = vmul.f32 %v8092, %v8040
        %v8109 = vmul.f32 %v8093, %v8042
        %v8110 = vmul.f32 %v8094, %v8045
        %v8111 = vmul.f32 %v8095, %v8047
        %v8112 = vmul.f32 %v8096, %v8050
        %v8113 = vmul.f32 %v8097, %v8052
        %v8114 = vmul.f32 %v8098, %v8055
        %v8115 = vmul.f32 %v8099, %v8057
        %v8116 = vmul.f32 %v8100, %v8060
        %v8117 = vmul.f32 %v8101, %v8062
        %v8118 = vmul.f32 %v8102, %v8065
        %v8119 = vmul.f32 %v8103, %v8067
        %v8120 = vmul.f32 %v8104, %v8070
        %v8121 = vmul.f32 %v8105, %v8072
        %v8122 = vmul.f32 %v8106, %v8035
        %v8123 = vmul.f32 %v8107, %v8037
        %v8124 = vmul.f32 %v8108, %v8040
        %v8125 = vmul.f32 %v8109, %v8042
        %v8126 = vmul.f32 %v8110, %v8045
        %v8127 = vmul.f32 %v8111, %v8047
        %v8128 = vmul.f32 %v8112, %v8050
        %v8129 = vmul.f32 %v8113, %v8052
        %v8130 = vmul.f32 %v8114, %v8055
        %v8131 = vmul.f32 %v8115, %v8057
        %v8132 = vmul.f32 %v8116, %v8060
        %v8133 = vmul.f32 %v8117, %v8062
        %v8134 = vmul.f32 %v8118, %v8065
        %v8135 = vmul.f32 %v8119, %v8067
        %v8136 = vmul.f32 %v8120, %v8070
        %v8137 = vmul.f32 %v8121, %v8072
        %v8138 = vadd.f32 %v8035, %v8122
        %v8139 = vadd.f32 %v8037, %v8123
        %v8140 = vadd.f32 %v8040, %v8124
        %v8141 = vadd.f32 %v8042, %v8125
        %v8142 = vadd.f32 %v8045, %v8126
        %v8143 = vadd.f32 %v8047, %v8127
        %v8144 = vadd.f32 %v8050, %v8128
        %v8145 = vadd.f32 %v8052, %v8129
        %v8146 = vadd.f32 %v8055, %v8130
        %v8147 = vadd.f32 %v8057, %v8131
        %v8148 = vadd.f32 %v8060, %v8132
        %v8149 = vadd.f32 %v8062, %v8133
        %v8150 = vadd.f32 %v8065, %v8134
        %v8151 = vadd.f32 %v8067, %v8135
        %v8152 = vadd.f32 %v8070, %v8136
        %v8153 = vadd.f32 %v8072, %v8137
        %v8154 = vmul.f32 %v8138, 0.7978846
        %v8155 = vmul.f32 %v8139, 0.7978846
        %v8156 = vmul.f32 %v8140, 0.7978846
        %v8157 = vmul.f32 %v8141, 0.7978846
        %v8158 = vmul.f32 %v8142, 0.7978846
        %v8159 = vmul.f32 %v8143, 0.7978846
        %v8160 = vmul.f32 %v8144, 0.7978846
        %v8161 = vmul.f32 %v8145, 0.7978846
        %v8162 = vmul.f32 %v8146, 0.7978846
        %v8163 = vmul.f32 %v8147, 0.7978846
        %v8164 = vmul.f32 %v8148, 0.7978846
        %v8165 = vmul.f32 %v8149, 0.7978846
        %v8166 = vmul.f32 %v8150, 0.7978846
        %v8167 = vmul.f32 %v8151, 0.7978846
        %v8168 = vmul.f32 %v8152, 0.7978846
        %v8169 = vmul.f32 %v8153, 0.7978846
        %v8170 = vtanh.pop %v8154
        %v8171 = vtanh.pop %v8155
        %v8172 = vtanh.pop %v8156
        %v8173 = vtanh.pop %v8157
        %v8174 = vtanh.pop %v8158
        %v8175 = vtanh.pop %v8159
        %v8176 = vtanh.pop %v8160
        %v8177 = vtanh.pop %v8161
        %v8178 = vtanh.pop %v8162
        %v8179 = vtanh.pop %v8163
        %v8180 = vtanh.pop %v8164
        %v8181 = vtanh.pop %v8165
        %v8182 = vtanh.pop %v8166
        %v8183 = vtanh.pop %v8167
        %v8184 = vtanh.pop %v8168
        %v8185 = vtanh.pop %v8169
        %v8186 = vadd.f32 %v8170, 1.0
        %v8187 = vadd.f32 %v8171, 1.0
        %v8188 = vadd.f32 %v8172, 1.0
        %v8189 = vadd.f32 %v8173, 1.0
        %v8190 = vadd.f32 %v8174, 1.0
        %v8191 = vadd.f32 %v8175, 1.0
        %v8192 = vadd.f32 %v8176, 1.0
        %v8193 = vadd.f32 %v8177, 1.0
        %v8194 = vadd.f32 %v8178, 1.0
        %v8195 = vadd.f32 %v8179, 1.0
        %v8196 = vadd.f32 %v8180, 1.0
        %v8197 = vadd.f32 %v8181, 1.0
        %v8198 = vadd.f32 %v8182, 1.0
        %v8199 = vadd.f32 %v8183, 1.0
        %v8200 = vadd.f32 %v8184, 1.0
        %v8201 = vadd.f32 %v8185, 1.0
        %v8202 = vmul.f32 %v8074, %v8186
        %v8203 = vmul.f32 %v8075, %v8187
        %v8204 = vmul.f32 %v8076, %v8188
        %v8205 = vmul.f32 %v8077, %v8189
        %v8206 = vmul.f32 %v8078, %v8190
        %v8207 = vmul.f32 %v8079, %v8191
        %v8208 = vmul.f32 %v8080, %v8192
        %v8209 = vmul.f32 %v8081, %v8193
        %v8210 = vmul.f32 %v8082, %v8194
        %v8211 = vmul.f32 %v8083, %v8195
        %v8212 = vmul.f32 %v8084, %v8196
        %v8213 = vmul.f32 %v8085, %v8197
        %v8214 = vmul.f32 %v8086, %v8198
        %v8215 = vmul.f32 %v8087, %v8199
        %v8216 = vmul.f32 %v8088, %v8200
        %v8217 = vmul.f32 %v8089, %v8201
        %v8218 = vpack.c.bf16 %v8203, %v8202
        %v8219 = vpack.c.bf16 %v8205, %v8204
        %v8220 = vpack.c.bf16 %v8207, %v8206
        %v8221 = vpack.c.bf16 %v8209, %v8208
        %v8222 = vpack.c.bf16 %v8211, %v8210
        %v8223 = vpack.c.bf16 %v8213, %v8212
        %v8224 = vpack.c.bf16 %v8215, %v8214
        %v8225 = vpack.c.bf16 %v8217, %v8216
        %v8226 = vperm.slane %v4372, 5
        %v8243 = vunpack.c.l.b16 %v4355
        %v8244 = vunpack.c.l.b16 %v4356
        %v8245 = vunpack.c.l.b16 %v4357
        %v8246 = vunpack.c.l.b16 %v4358
        %v8247 = vunpack.c.l.b16 %v4359
        %v8248 = vunpack.c.l.b16 %v4360
        %v8249 = vunpack.c.l.b16 %v4361
        %v8250 = vunpack.c.l.b16 %v4362
        %v8251 = vunpack.c.l.b16 %v4363
        %v8252 = vunpack.c.l.b16 %v4364
        %v8253 = vunpack.c.l.b16 %v4365
        %v8254 = vunpack.c.l.b16 %v4366
        %v8255 = vunpack.c.l.b16 %v4367
        %v8256 = vunpack.c.l.b16 %v4368
        %v8257 = vunpack.c.l.b16 %v4369
        %v8258 = vunpack.c.l.b16 %v4370
        %v8259 = vpack.c.b16 %v8244, %v8243
        %v8260 = vpack.c.b16 %v8246, %v8245
        %v8261 = vpack.c.b16 %v8248, %v8247
        %v8262 = vpack.c.b16 %v8250, %v8249
        %v8263 = vpack.c.b16 %v8252, %v8251
        %v8264 = vpack.c.b16 %v8254, %v8253
        %v8265 = vpack.c.b16 %v8256, %v8255
        %v8266 = vpack.c.b16 %v8258, %v8257
        %8275 = vmatpush.bf16.msra.mxu0 %v8266
        %8276 = vmatpush.bf16.msra.mxu0 %v8265
        %8277 = vmatpush.bf16.msra.mxu0 %v8264
        %8278 = vmatpush.bf16.msra.mxu0 %v8263
        %8279 = vmatpush.bf16.msra.mxu0 %v8262
        %8280 = vmatpush.bf16.msra.mxu0 %v8261
        %8281 = vmatpush.bf16.msra.mxu0 %v8260
        %8282 = vmatpush.bf16.msra.mxu0 %v8259
        %8283 = vmatmul.bf16.gmra.mxu0 %v8218
        %v8284 = vpop.f32.mrf.mxu0
        %v8285 = vadd.f32 %v8226, %v8284
        %v8286 = vpop.f32.mrf.mxu0
        %v8287 = vadd.f32 %v8226, %v8286
        %8288 = vmatmul.bf16.gmra.mxu0 %v8219
        %v8289 = vpop.f32.mrf.mxu0
        %v8290 = vadd.f32 %v8226, %v8289
        %v8291 = vpop.f32.mrf.mxu0
        %v8292 = vadd.f32 %v8226, %v8291
        %8293 = vmatmul.bf16.gmra.mxu0 %v8220
        %v8294 = vpop.f32.mrf.mxu0
        %v8295 = vadd.f32 %v8226, %v8294
        %v8296 = vpop.f32.mrf.mxu0
        %v8297 = vadd.f32 %v8226, %v8296
        %8298 = vmatmul.bf16.gmra.mxu0 %v8221
        %v8299 = vpop.f32.mrf.mxu0
        %v8300 = vadd.f32 %v8226, %v8299
        %v8301 = vpop.f32.mrf.mxu0
        %v8302 = vadd.f32 %v8226, %v8301
        %8303 = vmatmul.bf16.gmra.mxu0 %v8222
        %v8304 = vpop.f32.mrf.mxu0
        %v8305 = vadd.f32 %v8226, %v8304
        %v8306 = vpop.f32.mrf.mxu0
        %v8307 = vadd.f32 %v8226, %v8306
        %8308 = vmatmul.bf16.gmra.mxu0 %v8223
        %v8309 = vpop.f32.mrf.mxu0
        %v8310 = vadd.f32 %v8226, %v8309
        %v8311 = vpop.f32.mrf.mxu0
        %v8312 = vadd.f32 %v8226, %v8311
        %8313 = vmatmul.bf16.gmra.mxu0 %v8224
        %v8314 = vpop.f32.mrf.mxu0
        %v8315 = vadd.f32 %v8226, %v8314
        %v8316 = vpop.f32.mrf.mxu0
        %v8317 = vadd.f32 %v8226, %v8316
        %8318 = vmatmul.bf16.gmra.mxu0 %v8225
        %v8319 = vpop.f32.mrf.mxu0
        %v8320 = vadd.f32 %v8226, %v8319
        %v8321 = vpop.f32.mrf.mxu0
        %v8322 = vadd.f32 %v8226, %v8321
        %8323 = vdwg.mxu0
        %v8324 = vadd.f32 %v7576, %v8285
        %v8325 = vadd.f32 %v7577, %v8287
        %v8326 = vadd.f32 %v7578, %v8290
        %v8327 = vadd.f32 %v7579, %v8292
        %v8328 = vadd.f32 %v7580, %v8295
        %v8329 = vadd.f32 %v7581, %v8297
        %v8330 = vadd.f32 %v7582, %v8300
        %v8331 = vadd.f32 %v7583, %v8302
        %v8332 = vadd.f32 %v7584, %v8305
        %v8333 = vadd.f32 %v7585, %v8307
        %v8334 = vadd.f32 %v7586, %v8310
        %v8335 = vadd.f32 %v7587, %v8312
        %v8336 = vadd.f32 %v7588, %v8315
        %v8337 = vadd.f32 %v7589, %v8317
        %v8338 = vadd.f32 %v7590, %v8320
        %v8339 = vadd.f32 %v7591, %v8322
        %s8340 = scalar_lea.vmem [#allocation2], 128
        %v8341 = vld [vmem:[%s8340] sm:$0xff]
        %v8342 = vld [vmem:[%s8340 + $0x8] sm:$0xff]
        %v8343 = vld [vmem:[%s8340 + $0x10] sm:$0xff]
        %v8344 = vld [vmem:[%s8340 + $0x18] sm:$0xff]
        %v8345 = vld [vmem:[%s8340 + $0x20] sm:$0xff]
        %v8346 = vld [vmem:[%s8340 + $0x28] sm:$0xff]
        %v8347 = vld [vmem:[%s8340 + $0x30] sm:$0xff]
        %v8348 = vld [vmem:[%s8340 + $0x38] sm:$0xff]
        %v8349 = vld [vmem:[%s8340 + $0x40] sm:$0xff]
        %v8350 = vld [vmem:[%s8340 + $0x48] sm:$0xff]
        %v8351 = vld [vmem:[%s8340 + $0x50] sm:$0xff]
        %v8352 = vld [vmem:[%s8340 + $0x58] sm:$0xff]
        %v8353 = vld [vmem:[%s8340 + $0x60] sm:$0xff]
        %v8354 = vld [vmem:[%s8340 + $0x68] sm:$0xff]
        %v8355 = vld [vmem:[%s8340 + $0x70] sm:$0xff]
        %v8356 = vld [vmem:[%s8340 + $0x78] sm:$0xff]
        %8357 = vmatpush.msra.mxu0 %v8339
        %8358 = vmatpush.msra.mxu0 %v8338
        %8359 = vmatpush.msra.mxu0 %v8337
        %8360 = vmatpush.msra.mxu0 %v8336
        %8361 = vmatpush.msra.mxu0 %v8335
        %8362 = vmatpush.msra.mxu0 %v8334
        %8363 = vmatpush.msra.mxu0 %v8333
        %8364 = vmatpush.msra.mxu0 %v8332
        %8365 = vmatpush.msra.mxu0 %v8331
        %8366 = vmatpush.msra.mxu0 %v8330
        %8367 = vmatpush.msra.mxu0 %v8329
        %8368 = vmatpush.msra.mxu0 %v8328
        %8369 = vmatpush.msra.mxu0 %v8327
        %8370 = vmatpush.msra.mxu0 %v8326
        %8371 = vmatpush.msra.mxu0 %v8325
        %8372 = vmatpush.msra.mxu0 %v8324
        %8373 = vmatmul.f32.gmra.mxu0 %v8341
        %v8374 = vpop.f32.mrf.mxu0
        %v8375 = vadd.f32 0.0, %v8374
        %8376 = vmatmul.f32.gmra.mxu0 %v8342
        %v8377 = vpop.f32.mrf.mxu0
        %v8378 = vadd.f32 0.0, %v8377
        %8379 = vmatmul.f32.gmra.mxu0 %v8343
        %v8380 = vpop.f32.mrf.mxu0
        %v8381 = vadd.f32 0.0, %v8380
        %8382 = vmatmul.f32.gmra.mxu0 %v8344
        %v8383 = vpop.f32.mrf.mxu0
        %v8384 = vadd.f32 0.0, %v8383
        %8385 = vmatmul.f32.gmra.mxu0 %v8345
        %v8386 = vpop.f32.mrf.mxu0
        %v8387 = vadd.f32 0.0, %v8386
        %8388 = vmatmul.f32.gmra.mxu0 %v8346
        %v8389 = vpop.f32.mrf.mxu0
        %v8390 = vadd.f32 0.0, %v8389
        %8391 = vmatmul.f32.gmra.mxu0 %v8347
        %v8392 = vpop.f32.mrf.mxu0
        %v8393 = vadd.f32 0.0, %v8392
        %8394 = vmatmul.f32.gmra.mxu0 %v8348
        %v8395 = vpop.f32.mrf.mxu0
        %v8396 = vadd.f32 0.0, %v8395
        %8397 = vmatmul.f32.gmra.mxu0 %v8349
        %v8398 = vpop.f32.mrf.mxu0
        %v8399 = vadd.f32 0.0, %v8398
        %8400 = vmatmul.f32.gmra.mxu0 %v8350
        %v8401 = vpop.f32.mrf.mxu0
        %v8402 = vadd.f32 0.0, %v8401
        %8403 = vmatmul.f32.gmra.mxu0 %v8351
        %v8404 = vpop.f32.mrf.mxu0
        %v8405 = vadd.f32 0.0, %v8404
        %8406 = vmatmul.f32.gmra.mxu0 %v8352
        %v8407 = vpop.f32.mrf.mxu0
        %v8408 = vadd.f32 0.0, %v8407
        %8409 = vmatmul.f32.gmra.mxu0 %v8353
        %v8410 = vpop.f32.mrf.mxu0
        %v8411 = vadd.f32 0.0, %v8410
        %8412 = vmatmul.f32.gmra.mxu0 %v8354
        %v8413 = vpop.f32.mrf.mxu0
        %v8414 = vadd.f32 0.0, %v8413
        %8415 = vmatmul.f32.gmra.mxu0 %v8355
        %v8416 = vpop.f32.mrf.mxu0
        %v8417 = vadd.f32 0.0, %v8416
        %8418 = vmatmul.f32.gmra.mxu0 %v8356
        %v8419 = vpop.f32.mrf.mxu0
        %v8420 = vadd.f32 0.0, %v8419
        %8421 = vdwg.mxu0
        %8422 = vst.msk [vmem:[%s315] sm:$0xff] %vm368, %v8375
        %8423 = vst.msk [vmem:[%s315 + $0x8] sm:$0xff] %vm368, %v8378
        %8424 = vst.msk [vmem:[%s315 + $0x10] sm:$0xff] %vm368, %v8381
        %8425 = vst.msk [vmem:[%s315 + $0x18] sm:$0xff] %vm368, %v8384
        %8426 = vst.msk [vmem:[%s315 + $0x20] sm:$0xff] %vm368, %v8387
        %8427 = vst.msk [vmem:[%s315 + $0x28] sm:$0xff] %vm368, %v8390
        %8428 = vst.msk [vmem:[%s315 + $0x30] sm:$0xff] %vm368, %v8393
        %8429 = vst.msk [vmem:[%s315 + $0x38] sm:$0xff] %vm368, %v8396
        %8430 = vst.msk [vmem:[%s315 + $0x40] sm:$0xff] %vm368, %v8399
        %8431 = vst.msk [vmem:[%s315 + $0x48] sm:$0xff] %vm368, %v8402
        %8432 = vst.msk [vmem:[%s315 + $0x50] sm:$0xff] %vm368, %v8405
        %8433 = vst.msk [vmem:[%s315 + $0x58] sm:$0xff] %vm368, %v8408
        %8434 = vst.msk [vmem:[%s315 + $0x60] sm:$0xff] %vm368, %v8411
        %8435 = vst.msk [vmem:[%s315 + $0x68] sm:$0xff] %vm368, %v8414
        %8436 = vst.msk [vmem:[%s315 + $0x70] sm:$0xff] %vm368, %v8417
        %8437 = vst.msk [vmem:[%s315 + $0x78] sm:$0xff] %vm368, %v8420
        %s8438 = sand.u32 %s204, 1
        %s8439 = scalar_lea.sflag [#allocation4], %s8438
        %s8440 = sand.u32 %s204, 1
        %s8441 = smul.addr %s8440, 128
        %s8442 = scalar_lea.vmem [#allocation5], %s8441
        // Predicated region
        $region57: #{motion_agformer_block.1} parent=51 // pred_check
          %p8443 = pneg %p214
        $region58: #{motion_agformer_block.1} parent=51 // pred_check_branch
          %8445 = sbr.rel (%p8443) target = $region60
        $region59: #{motion_agformer_block.1} parent=51 // pred_region
          %8447 = vsyncadd %s8439, 0
          %s8448 = smul.addr %s23, 16
          %s8449 = smul.addr %s8448, 8
          %s8450 = scalar_lea.hbm %s8, %s8449
          %s8451 = sshll.u32 %s8442, 4
          %s8452 = int_to_ptr.vmem [resolvable:$true] %s8451
          %s8453 = sshll.u32 %s8450, 4
          %s8454 = int_to_ptr.hbm [resolvable:$true] %s8453
          %8459 = dma.vmem_to_hbm [thread:$0]  %s8452, 2048, %s8454, %s8439, 128, 128, 8
        $region60: #{motion_agformer_block.1} parent=51 // pred_fallthru
          _
      $region52: #{motion_agformer_block.1} parent=5 // pred_fallthru
        _
      %p8460 = scmp.le.s32.totalorder 2, %s18
      // Predicated region
      $region61: #{motion_agformer_block.1} parent=5 // pred_check
        %p8461 = pneg %p8460
      $region62: #{motion_agformer_block.1} parent=5 // pred_check_branch
        %8463 = sbr.rel (%p8461) target = $region64
      $region63: #{motion_agformer_block.1} parent=5 // pred_region
        %s8464 = ssub.s32 %s18, 2
        // Predicated region
        $region65: #{motion_agformer_block.1} parent=63 // pred_check
          %p8465 = pneg %p220
        $region66: #{motion_agformer_block.1} parent=63 // pred_check_branch
          %8467 = sbr.rel (%p8465) target = $region68
        $region67: #{motion_agformer_block.1} parent=63 // pred_region
          %s8468 = sand.u32 %s205, 1
          %s8469 = scalar_lea.sflag [#allocation4], %s8468
          %s8470 = sand.u32 %s205, 1
          %s8471 = smul.addr %s8470, 128
          %s8472 = scalar_lea.vmem [#allocation5], %s8471
          %8474 = dma.done %s8469, 2048
        $region68: #{motion_agformer_block.1} parent=63 // pred_fallthru
          _
      $region64: #{motion_agformer_block.1} parent=5 // pred_fallthru
        _
    $region6: #{motion_agformer_block.1} parent=1 // loop_footer
      %s22 = sadd.s32 1, %s18
    $region7: #{motion_agformer_block.1} parent=1 // loop_footer_branch
      %17 = sbr.rel target = $region3
    $region8: #{motion_agformer_block.1} parent=1 // loop_exit
      _
    %8475 = vsyncpa [#allocation3], 1
    %s8476 = scalar_lea.sflag [#allocation3], 1
    %8477 = vsyncpa %s8476, 1
    %8478 = vsyncpa [#allocation4], 1
    %s8479 = scalar_lea.sflag [#allocation4], 1
    %8480 = vsyncpa %s8479, 1

</llo_original>
